<compile_context>
chip_gen: v7x
topology: tpu7x:2x2x1
jax: 0.10.0
libtpu: 0.0.40
codegen_flags: <defaults>
</compile_context>

<pallas_src>
import math

import jax
import jax.numpy as jnp
from jax.experimental import pallas as pl
from jax.experimental.pallas import tpu as pltpu

# ----------------------------- model config ---------------------------------
B = 2             # batch
IN_CH = 3         # image channels (RGB, as torchvision models expect)
IMG = 16          # spatial size
PATCH = 8         # patch size
HIDDEN = 128      # hidden dim D (lane-dense: multiple of 128)
NUM_HEADS = 4
HEAD_DIM = HIDDEN // NUM_HEADS
NUM_LAYERS = 2
MLP_DIM = 256     # lane-dense MLP width
NUM_PATCHES = (IMG // PATCH) ** 2
SEQ = NUM_PATCHES + 1   # +1 class token
LN_EPS = 1e-6           # torchvision ViT uses eps=1e-6


# ----------------------------- fused Pallas kernel ---------------------------
def _fused_vit_kernel(p_ref, convw_ref, emb_ref,
                      ln1g_ref, ln1b_ref,
                      wq_ref, bq_ref, wk_ref, bk_ref, wv_ref, bv_ref,
                      wo_ref, bo_ref,
                      ln2g_ref, ln2b_ref,
                      m1w_ref, m1b_ref, m2w_ref, m2b_ref,
                      lnfg_ref, lnfb_ref,
                      o_ref):
    """Whole ViT-encoder forward for one image (grid axis 0 = batch)."""
    f32 = jnp.float32

    def layer_norm(v, g, b):
        mu = jnp.mean(v, axis=-1, keepdims=True)
        var = jnp.mean(jnp.square(v - mu), axis=-1, keepdims=True)
        return (v - mu) * jax.lax.rsqrt(var + LN_EPS) * g + b

    def erf(z):
        # Abramowitz & Stegun 7.1.26 (|err| < 1.5e-7): exact-GELU parity using
        # only exp/mul/add/where, i.e. no reliance on an erf lowering.
        az = jnp.where(z >= 0.0, z, -z)
        t = 1.0 / (1.0 + 0.3275911 * az)
        poly = ((((1.061405429 * t - 1.453152027) * t + 1.421413741) * t
                 - 0.284496736) * t + 0.254829592) * t
        e = 1.0 - poly * jnp.exp(-az * az)
        return jnp.where(z >= 0.0, e, -e)

    scale = f32(1.0 / math.sqrt(HEAD_DIM))
    inv_sqrt2 = f32(1.0 / math.sqrt(2.0))

    # conv_proj (patch embedding) + class token + positional embedding.
    # Row 0 of p_ref is an all-zero "patch", so row 0 of x becomes just
    # class_token + pos[0]; rows 1.. become patch@W + conv_b + pos[i]
    # (class token / conv bias / pos embedding are folded into emb_ref).
    x = jnp.dot(p_ref[0], convw_ref[...], preferred_element_type=f32) + emb_ref[...]

    for l in range(NUM_LAYERS):          # static unroll; weights stay VMEM-resident
        # ---- self-attention block: x = x + out_proj(MHA(LN1(x))) ----
        y = layer_norm(x, ln1g_ref[l], ln1b_ref[l])
        attn = jnp.zeros_like(x)
        for h in range(NUM_HEADS):       # per-head weights -> no lane slicing needed
            q = jnp.dot(y, wq_ref[l, h], preferred_element_type=f32) + bq_ref[l, h]
            k = jnp.dot(y, wk_ref[l, h], preferred_element_type=f32) + bk_ref[l, h]
            v = jnp.dot(y, wv_ref[l, h], preferred_element_type=f32) + bv_ref[l, h]
            s = jnp.dot(q, k.T, preferred_element_type=f32) * scale     # (S, S)
            s = s - jnp.max(s, axis=-1, keepdims=True)
            p = jnp.exp(s)
            p = p * pl.reciprocal(jnp.sum(p, axis=-1, keepdims=True), approx=True)
            head = jnp.dot(p, v, preferred_element_type=f32)            # (S, HD)
            # out_proj(concat(heads)) == sum_h head_h @ Wo_h  (no concat needed)
            attn = attn + jnp.dot(head, wo_ref[l, h], preferred_element_type=f32)
        x = x + attn + bo_ref[l]

        # ---- MLP block: x = x + W2 @ GELU(W1 @ LN2(x)) ----
        y = layer_norm(x, ln2g_ref[l], ln2b_ref[l])
        hdn = jnp.dot(y, m1w_ref[l], preferred_element_type=f32) + m1b_ref[l]
        hdn = 0.5 * hdn * (1.0 + erf(hdn * inv_sqrt2))                  # exact GELU
        x = x + jnp.dot(hdn, m2w_ref[l], preferred_element_type=f32) + m2b_ref[l]

    # final encoder LayerNorm on the class-token row only (heads removed => identity)
    cls = layer_norm(x[0:1, :], lnfg_ref[...], lnfb_ref[...])
    o_ref[0] = cls.astype(o_ref.dtype)


# ----------------------------- host wrapper ----------------------------------
def image_encoder_forward(x, params):
    """x: (B, C, H, W) NCHW float32 -> (B, HIDDEN) class-token features."""
    Bn, C, H, W = x.shape
    P = PATCH
    Hn, Wn = H // P, W // P
    NP = Hn * Wn
    CPP = C * P * P
    D = HIDDEN
    S = NP + 1

    # ---- one-time host-side prep (everything else is a single fused kernel) ----
    # Patch flattening order (c, p, q) matches Conv2d weight (D, C, P, P) flatten.
    patches = x.reshape(Bn, C, Hn, P, Wn, P).transpose(0, 2, 4, 1, 3, 5)
    patches = patches.reshape(Bn, NP, CPP)
    # Prepend an all-zero "patch" row for the class token position.
    patches = jnp.pad(patches, ((0, 0), (1, 0), (0, 0)))                 # (B, S, CPP)
    # Additive table: row 0 = class_token + pos[0]; rows 1.. = conv_b + pos[i].
    embed_add = jnp.concatenate(
        [params["class_token"],
         jnp.broadcast_to(params["conv_b"].reshape(1, D), (NP, D))], axis=0)
    embed_add = embed_add + params["pos_embedding"]                      # (S, D)

    def w_spec(arr):  # full-block, grid-invariant (VMEM-resident) weight input
        zeros = (0,) * arr.ndim
        return pl.BlockSpec(arr.shape, lambda b, z=zeros: z)

    weights = (params["conv_w"], embed_add,
               params["ln1_g"], params["ln1_b"],
               params["wq"], params["bq"], params["wk"], params["bk"],
               params["wv"], params["bv"], params["wo"], params["bo"],
               params["ln2_g"], params["ln2_b"],
               params["mlp1_w"], params["mlp1_b"],
               params["mlp2_w"], params["mlp2_b"],
               params["ln_g"], params["ln_b"])

    out = pl.pallas_call(
        _fused_vit_kernel,
        grid=(Bn,),
        in_specs=[pl.BlockSpec((1, S, CPP), lambda b: (b, 0, 0))]
                 + [w_spec(w) for w in weights],
        out_specs=pl.BlockSpec((1, 1, D), lambda b: (b, 0, 0)),
        out_shape=jax.ShapeDtypeStruct((Bn, 1, D), jnp.float32),
        compiler_params=pltpu.CompilerParams(
            dimension_semantics=("parallel",)),   # batch across TCs (v7x megacore)
    )(patches, *weights)
    return out.reshape(Bn, D)


# ----------------------------- parameters ------------------------------------
def init_params(key):
    D, MLP, L, Hh, HD = HIDDEN, MLP_DIM, NUM_LAYERS, NUM_HEADS, HEAD_DIM
    CPP = IN_CH * PATCH * PATCH
    keys = jax.random.split(key, 16)

    def nrm(k, shape):
        return (0.02 * jax.random.normal(k, shape)).astype(jnp.float32)

    return {
        "conv_w": nrm(keys[0], (CPP, D)),         # conv_proj as (C*P*P, D)
        "conv_b": nrm(keys[1], (D,)),
        "class_token": nrm(keys[2], (1, D)),
        "pos_embedding": nrm(keys[3], (SEQ, D)),
        "ln_g": jnp.ones((1, D), jnp.float32),    # final encoder LayerNorm
        "ln_b": jnp.zeros((1, D), jnp.float32),
        "ln1_g": jnp.ones((L, 1, D), jnp.float32),
        "ln1_b": jnp.zeros((L, 1, D), jnp.float32),
        "wq": nrm(keys[4], (L, Hh, D, HD)),       # per-head q/k/v projections
        "wk": nrm(keys[5], (L, Hh, D, HD)),
        "wv": nrm(keys[6], (L, Hh, D, HD)),
        "bq": nrm(keys[7], (L, Hh, 1, HD)),
        "bk": nrm(keys[8], (L, Hh, 1, HD)),
        "bv": nrm(keys[9], (L, Hh, 1, HD)),
        "wo": nrm(keys[10], (L, Hh, HD, D)),      # out_proj split per head (rows)
        "bo": nrm(keys[11], (L, 1, D)),
        "ln2_g": jnp.ones((L, 1, D), jnp.float32),
        "ln2_b": jnp.zeros((L, 1, D), jnp.float32),
        "mlp1_w": nrm(keys[12], (L, D, MLP)),
        "mlp1_b": nrm(keys[13], (L, 1, MLP)),
        "mlp2_w": nrm(keys[14], (L, MLP, D)),
        "mlp2_b": nrm(keys[15], (L, 1, D)),
    }


# ----------------------------- pure-JAX reference -----------------------------
def reference_forward(x, params):
    Bn, C, H, W = x.shape
    P = PATCH
    Hn, Wn = H // P, W // P
    patches = x.reshape(Bn, C, Hn, P, Wn, P).transpose(0, 2, 4, 1, 3, 5)
    patches = patches.reshape(Bn, Hn * Wn, C * P * P)
    tok = patches @ params["conv_w"] + params["conv_b"]
    cls = jnp.broadcast_to(params["class_token"][None], (Bn, 1, HIDDEN))
    tok = jnp.concatenate([cls, tok], axis=1) + params["pos_embedding"][None]

    def ln(v, g, b):
        mu = v.mean(-1, keepdims=True)
        var = jnp.square(v - mu).mean(-1, keepdims=True)
        return (v - mu) * jax.lax.rsqrt(var + LN_EPS) * g + b

    for l in range(NUM_LAYERS):
        y = ln(tok, params["ln1_g"][l], params["ln1_b"][l])
        attn = jnp.zeros_like(tok)
        for h in range(NUM_HEADS):
            q = jnp.einsum("bsd,de->bse", y, params["wq"][l, h]) + params["bq"][l, h]
            k = jnp.einsum("bsd,de->bse", y, params["wk"][l, h]) + params["bk"][l, h]
            v = jnp.einsum("bsd,de->bse", y, params["wv"][l, h]) + params["bv"][l, h]
            s = jnp.einsum("bqe,bke->bqk", q, k) / math.sqrt(HEAD_DIM)
            p = jax.nn.softmax(s, axis=-1)
            head = jnp.einsum("bqk,bke->bqe", p, v)
            attn = attn + jnp.einsum("bse,ed->bsd", head, params["wo"][l, h])
        tok = tok + attn + params["bo"][l]
        y = ln(tok, params["ln2_g"][l], params["ln2_b"][l])
        hdn = y @ params["mlp1_w"][l] + params["mlp1_b"][l]
        hdn = 0.5 * hdn * (1.0 + jax.lax.erf(hdn / math.sqrt(2.0)))      # exact GELU
        tok = tok + hdn @ params["mlp2_w"][l] + params["mlp2_b"][l]
    y = ln(tok, params["ln_g"], params["ln_b"])
    return y[:, 0]


# ----------------------------- main -------------------------------------------
if __name__ == "__main__":
    key = jax.random.PRNGKey(0)
    pkey, xkey = jax.random.split(key)
    params = init_params(pkey)
    x = jax.random.normal(xkey, (B, IN_CH, IMG, IMG), dtype=jnp.float32)

    y = image_encoder_forward(x, params)
    y = jax.block_until_ready(y)

    assert y.shape == (B, HIDDEN), y.shape
    assert bool(jnp.all(jnp.isfinite(y)))

    # Correctness check against a pure-JAX reference (loose tol: the kernel uses
    # an approximate EUP reciprocal in softmax and a polynomial erf).
    y_ref = reference_forward(x, params)
    assert bool(jnp.allclose(y, y_ref, atol=2e-2, rtol=2e-2)), \
        float(jnp.max(jnp.abs(y - y_ref)))

    print("KERNEL_OK")
</pallas_src>

<mosaic_0001>
module attributes {stable_mosaic.version = 11 : i64} {
  func.func @_fused_vit_kernel(%arg0: i32, %arg1: memref<1x5x192xf32, #tpu.memory_space<vmem>>, %arg2: memref<192x128xf32, #tpu.memory_space<vmem>>, %arg3: memref<5x128xf32, #tpu.memory_space<vmem>>, %arg4: memref<2x1x128xf32, #tpu.memory_space<vmem>>, %arg5: memref<2x1x128xf32, #tpu.memory_space<vmem>>, %arg6: memref<2x4x128x32xf32, #tpu.memory_space<vmem>>, %arg7: memref<2x4x1x32xf32, #tpu.memory_space<vmem>>, %arg8: memref<2x4x128x32xf32, #tpu.memory_space<vmem>>, %arg9: memref<2x4x1x32xf32, #tpu.memory_space<vmem>>, %arg10: memref<2x4x128x32xf32, #tpu.memory_space<vmem>>, %arg11: memref<2x4x1x32xf32, #tpu.memory_space<vmem>>, %arg12: memref<2x4x32x128xf32, #tpu.memory_space<vmem>>, %arg13: memref<2x1x128xf32, #tpu.memory_space<vmem>>, %arg14: memref<2x1x128xf32, #tpu.memory_space<vmem>>, %arg15: memref<2x1x128xf32, #tpu.memory_space<vmem>>, %arg16: memref<2x128x256xf32, #tpu.memory_space<vmem>>, %arg17: memref<2x1x256xf32, #tpu.memory_space<vmem>>, %arg18: memref<2x256x128xf32, #tpu.memory_space<vmem>>, %arg19: memref<2x1x128xf32, #tpu.memory_space<vmem>>, %arg20: memref<1x128xf32, #tpu.memory_space<vmem>>, %arg21: memref<1x128xf32, #tpu.memory_space<vmem>>, %arg22: memref<1x1x128xf32, #tpu.memory_space<vmem>>) attributes {dimension_semantics = [#tpu.dimension_semantics<parallel>], iteration_bounds = array<i64: 2>, scalar_prefetch = 0 : i64, scratch_operands = 0 : i64, tpu.core_type = #tpu.core_type<tc>, window_params = [{transform_indices = @transform_0, window_bounds = array<i64: 1, 5, 192>}, {pipeline_mode = #tpu.pipeline_mode<synchronous>, transform_indices = @transform_1, window_bounds = array<i64: 192, 128>}, {pipeline_mode = #tpu.pipeline_mode<synchronous>, transform_indices = @transform_2, window_bounds = array<i64: 5, 128>}, {pipeline_mode = #tpu.pipeline_mode<synchronous>, transform_indices = @transform_3, window_bounds = array<i64: 2, 1, 128>}, {pipeline_mode = #tpu.pipeline_mode<synchronous>, transform_indices = @transform_4, window_bounds = array<i64: 2, 1, 128>}, {pipeline_mode = #tpu.pipeline_mode<synchronous>, transform_indices = @transform_5, window_bounds = array<i64: 2, 4, 128, 32>}, {pipeline_mode = #tpu.pipeline_mode<synchronous>, transform_indices = @transform_6, window_bounds = array<i64: 2, 4, 1, 32>}, {pipeline_mode = #tpu.pipeline_mode<synchronous>, transform_indices = @transform_7, window_bounds = array<i64: 2, 4, 128, 32>}, {pipeline_mode = #tpu.pipeline_mode<synchronous>, transform_indices = @transform_8, window_bounds = array<i64: 2, 4, 1, 32>}, {pipeline_mode = #tpu.pipeline_mode<synchronous>, transform_indices = @transform_9, window_bounds = array<i64: 2, 4, 128, 32>}, {pipeline_mode = #tpu.pipeline_mode<synchronous>, transform_indices = @transform_10, window_bounds = array<i64: 2, 4, 1, 32>}, {pipeline_mode = #tpu.pipeline_mode<synchronous>, transform_indices = @transform_11, window_bounds = array<i64: 2, 4, 32, 128>}, {pipeline_mode = #tpu.pipeline_mode<synchronous>, transform_indices = @transform_12, window_bounds = array<i64: 2, 1, 128>}, {pipeline_mode = #tpu.pipeline_mode<synchronous>, transform_indices = @transform_13, window_bounds = array<i64: 2, 1, 128>}, {pipeline_mode = #tpu.pipeline_mode<synchronous>, transform_indices = @transform_14, window_bounds = array<i64: 2, 1, 128>}, {pipeline_mode = #tpu.pipeline_mode<synchronous>, transform_indices = @transform_15, window_bounds = array<i64: 2, 128, 256>}, {pipeline_mode = #tpu.pipeline_mode<synchronous>, transform_indices = @transform_16, window_bounds = array<i64: 2, 1, 256>}, {pipeline_mode = #tpu.pipeline_mode<synchronous>, transform_indices = @transform_17, window_bounds = array<i64: 2, 256, 128>}, {pipeline_mode = #tpu.pipeline_mode<synchronous>, transform_indices = @transform_18, window_bounds = array<i64: 2, 1, 128>}, {pipeline_mode = #tpu.pipeline_mode<synchronous>, transform_indices = @transform_19, window_bounds = array<i64: 1, 128>}, {pipeline_mode = #tpu.pipeline_mode<synchronous>, transform_indices = @transform_20, window_bounds = array<i64: 1, 128>}, {transform_indices = @transform_21, window_bounds = array<i64: 1, 1, 128>}]} {
    %c0 = arith.constant 0 : index
    %c0_0 = arith.constant 0 : index
    %c0_1 = arith.constant 0 : index
    %0 = vector.load %arg1[%c0, %c0_0, %c0_1] : memref<1x5x192xf32, #tpu.memory_space<vmem>>, vector<1x5x192xf32>
    %1 = vector.shape_cast %0 : vector<1x5x192xf32> to vector<5x192xf32>
    %c0_2 = arith.constant 0 : index
    %c0_3 = arith.constant 0 : index
    %2 = vector.load %arg2[%c0_2, %c0_3] : memref<192x128xf32, #tpu.memory_space<vmem>>, vector<192x128xf32>
    %cst = arith.constant dense<0.000000e+00> : vector<5x128xf32>
    %3 = tpu.matmul %1, %2, %cst {dimension_numbers = #tpu.dot_dimension_numbers<[1], [0], [0], [1], [0, 0, 1, 1], [], []>} : vector<5x192xf32>, vector<192x128xf32>, vector<5x128xf32> -> vector<5x128xf32>
    %c0_4 = arith.constant 0 : index
    %c0_5 = arith.constant 0 : index
    %4 = vector.load %arg3[%c0_4, %c0_5] : memref<5x128xf32, #tpu.memory_space<vmem>>, vector<5x128xf32>
    %5 = arith.addf %3, %4 : vector<5x128xf32>
    %c0_6 = arith.constant 0 : index
    %c0_7 = arith.constant 0 : index
    %c0_8 = arith.constant 0 : index
    %6 = vector.load %arg4[%c0_6, %c0_7, %c0_8] : memref<2x1x128xf32, #tpu.memory_space<vmem>>, vector<1x1x128xf32>
    %7 = vector.shape_cast %6 : vector<1x1x128xf32> to vector<1x128xf32>
    %c0_9 = arith.constant 0 : index
    %c0_10 = arith.constant 0 : index
    %c0_11 = arith.constant 0 : index
    %8 = vector.load %arg5[%c0_9, %c0_10, %c0_11] : memref<2x1x128xf32, #tpu.memory_space<vmem>>, vector<1x1x128xf32>
    %9 = vector.shape_cast %8 : vector<1x1x128xf32> to vector<1x128xf32>
    %cst_12 = arith.constant dense<0.000000e+00> : vector<5xf32>
    %10 = vector.multi_reduction <add>, %5, %cst_12 [1] : vector<5x128xf32> to vector<5xf32>
    %11 = vector.shape_cast %10 : vector<5xf32> to vector<5x1xf32>
    %cst_13 = arith.constant 1.280000e+02 : f32
    %12 = vector.broadcast %cst_13 : f32 to vector<5x1xf32>
    %13 = arith.divf %11, %12 : vector<5x1xf32>
    %14 = vector.broadcast %13 : vector<5x1xf32> to vector<5x128xf32>
    %15 = arith.subf %5, %14 : vector<5x128xf32>
    %16 = arith.mulf %15, %15 : vector<5x128xf32>
    %cst_14 = arith.constant dense<0.000000e+00> : vector<5xf32>
    %17 = vector.multi_reduction <add>, %16, %cst_14 [1] : vector<5x128xf32> to vector<5xf32>
    %18 = vector.shape_cast %17 : vector<5xf32> to vector<5x1xf32>
    %cst_15 = arith.constant 1.280000e+02 : f32
    %19 = vector.broadcast %cst_15 : f32 to vector<5x1xf32>
    %20 = arith.divf %18, %19 : vector<5x1xf32>
    %21 = vector.broadcast %13 : vector<5x1xf32> to vector<5x128xf32>
    %22 = arith.subf %5, %21 : vector<5x128xf32>
    %cst_16 = arith.constant 9.99999997E-7 : f32
    %23 = vector.broadcast %cst_16 : f32 to vector<5x1xf32>
    %24 = arith.addf %20, %23 : vector<5x1xf32>
    %25 = math.rsqrt %24 : vector<5x1xf32>
    %26 = vector.broadcast %25 : vector<5x1xf32> to vector<5x128xf32>
    %27 = arith.mulf %22, %26 : vector<5x128xf32>
    %28 = vector.broadcast %7 : vector<1x128xf32> to vector<5x128xf32>
    %29 = arith.mulf %27, %28 : vector<5x128xf32>
    %30 = vector.broadcast %9 : vector<1x128xf32> to vector<5x128xf32>
    %31 = arith.addf %29, %30 : vector<5x128xf32>
    %cst_17 = arith.constant 0.000000e+00 : f32
    %32 = vector.broadcast %cst_17 : f32 to vector<5x128xf32>
    %c0_18 = arith.constant 0 : index
    %c0_19 = arith.constant 0 : index
    %c0_20 = arith.constant 0 : index
    %c0_21 = arith.constant 0 : index
    %33 = vector.load %arg6[%c0_18, %c0_19, %c0_20, %c0_21] : memref<2x4x128x32xf32, #tpu.memory_space<vmem>>, vector<1x1x128x32xf32>
    %34 = vector.shape_cast %33 : vector<1x1x128x32xf32> to vector<128x32xf32>
    %cst_22 = arith.constant dense<0.000000e+00> : vector<5x32xf32>
    %35 = tpu.matmul %31, %34, %cst_22 {dimension_numbers = #tpu.dot_dimension_numbers<[1], [0], [0], [1], [0, 0, 1, 1], [], []>} : vector<5x128xf32>, vector<128x32xf32>, vector<5x32xf32> -> vector<5x32xf32>
    %c0_23 = arith.constant 0 : index
    %c0_24 = arith.constant 0 : index
    %c0_25 = arith.constant 0 : index
    %c0_26 = arith.constant 0 : index
    %36 = vector.load %arg7[%c0_23, %c0_24, %c0_25, %c0_26] : memref<2x4x1x32xf32, #tpu.memory_space<vmem>>, vector<1x1x1x32xf32>
    %37 = vector.shape_cast %36 : vector<1x1x1x32xf32> to vector<1x32xf32>
    %38 = vector.broadcast %37 : vector<1x32xf32> to vector<5x32xf32>
    %39 = arith.addf %35, %38 : vector<5x32xf32>
    %c0_27 = arith.constant 0 : index
    %c0_28 = arith.constant 0 : index
    %c0_29 = arith.constant 0 : index
    %c0_30 = arith.constant 0 : index
    %40 = vector.load %arg8[%c0_27, %c0_28, %c0_29, %c0_30] : memref<2x4x128x32xf32, #tpu.memory_space<vmem>>, vector<1x1x128x32xf32>
    %41 = vector.shape_cast %40 : vector<1x1x128x32xf32> to vector<128x32xf32>
    %cst_31 = arith.constant dense<0.000000e+00> : vector<5x32xf32>
    %42 = tpu.matmul %31, %41, %cst_31 {dimension_numbers = #tpu.dot_dimension_numbers<[1], [0], [0], [1], [0, 0, 1, 1], [], []>} : vector<5x128xf32>, vector<128x32xf32>, vector<5x32xf32> -> vector<5x32xf32>
    %c0_32 = arith.constant 0 : index
    %c0_33 = arith.constant 0 : index
    %c0_34 = arith.constant 0 : index
    %c0_35 = arith.constant 0 : index
    %43 = vector.load %arg9[%c0_32, %c0_33, %c0_34, %c0_35] : memref<2x4x1x32xf32, #tpu.memory_space<vmem>>, vector<1x1x1x32xf32>
    %44 = vector.shape_cast %43 : vector<1x1x1x32xf32> to vector<1x32xf32>
    %45 = vector.broadcast %44 : vector<1x32xf32> to vector<5x32xf32>
    %46 = arith.addf %42, %45 : vector<5x32xf32>
    %c0_36 = arith.constant 0 : index
    %c0_37 = arith.constant 0 : index
    %c0_38 = arith.constant 0 : index
    %c0_39 = arith.constant 0 : index
    %47 = vector.load %arg10[%c0_36, %c0_37, %c0_38, %c0_39] : memref<2x4x128x32xf32, #tpu.memory_space<vmem>>, vector<1x1x128x32xf32>
    %48 = vector.shape_cast %47 : vector<1x1x128x32xf32> to vector<128x32xf32>
    %cst_40 = arith.constant dense<0.000000e+00> : vector<5x32xf32>
    %49 = tpu.matmul %31, %48, %cst_40 {dimension_numbers = #tpu.dot_dimension_numbers<[1], [0], [0], [1], [0, 0, 1, 1], [], []>} : vector<5x128xf32>, vector<128x32xf32>, vector<5x32xf32> -> vector<5x32xf32>
    %c0_41 = arith.constant 0 : index
    %c0_42 = arith.constant 0 : index
    %c0_43 = arith.constant 0 : index
    %c0_44 = arith.constant 0 : index
    %50 = vector.load %arg11[%c0_41, %c0_42, %c0_43, %c0_44] : memref<2x4x1x32xf32, #tpu.memory_space<vmem>>, vector<1x1x1x32xf32>
    %51 = vector.shape_cast %50 : vector<1x1x1x32xf32> to vector<1x32xf32>
    %52 = vector.broadcast %51 : vector<1x32xf32> to vector<5x32xf32>
    %53 = arith.addf %49, %52 : vector<5x32xf32>
    %54 = tpu.transpose %46, [1, 0] : vector<5x32xf32> -> vector<32x5xf32>
    %cst_45 = arith.constant dense<0.000000e+00> : vector<5x5xf32>
    %55 = tpu.matmul %39, %54, %cst_45 {dimension_numbers = #tpu.dot_dimension_numbers<[1], [0], [0], [1], [0, 0, 1, 1], [], []>} : vector<5x32xf32>, vector<32x5xf32>, vector<5x5xf32> -> vector<5x5xf32>
    %cst_46 = arith.constant 0.176776692 : f32
    %56 = vector.broadcast %cst_46 : f32 to vector<5x5xf32>
    %57 = arith.mulf %55, %56 : vector<5x5xf32>
    %cst_47 = arith.constant dense<0xFF800000> : vector<5xf32>
    %58 = vector.multi_reduction <maximumf>, %57, %cst_47 [1] : vector<5x5xf32> to vector<5xf32>
    %59 = vector.shape_cast %58 : vector<5xf32> to vector<5x1xf32>
    %60 = vector.broadcast %59 : vector<5x1xf32> to vector<5x5xf32>
    %61 = arith.subf %57, %60 : vector<5x5xf32>
    %62 = math.exp %61 : vector<5x5xf32>
    %cst_48 = arith.constant dense<0.000000e+00> : vector<5xf32>
    %63 = vector.multi_reduction <add>, %62, %cst_48 [1] : vector<5x5xf32> to vector<5xf32>
    %64 = vector.shape_cast %63 : vector<5xf32> to vector<5x1xf32>
    %65 = tpu.reciprocal %64 {approx = true} : vector<5x1xf32> -> vector<5x1xf32>
    %66 = vector.broadcast %65 : vector<5x1xf32> to vector<5x5xf32>
    %67 = arith.mulf %62, %66 : vector<5x5xf32>
    %cst_49 = arith.constant dense<0.000000e+00> : vector<5x32xf32>
    %68 = tpu.matmul %67, %53, %cst_49 {dimension_numbers = #tpu.dot_dimension_numbers<[1], [0], [0], [1], [0, 0, 1, 1], [], []>} : vector<5x5xf32>, vector<5x32xf32>, vector<5x32xf32> -> vector<5x32xf32>
    %c0_50 = arith.constant 0 : index
    %c0_51 = arith.constant 0 : index
    %c0_52 = arith.constant 0 : index
    %c0_53 = arith.constant 0 : index
    %69 = vector.load %arg12[%c0_50, %c0_51, %c0_52, %c0_53] : memref<2x4x32x128xf32, #tpu.memory_space<vmem>>, vector<1x1x32x128xf32>
    %70 = vector.shape_cast %69 : vector<1x1x32x128xf32> to vector<32x128xf32>
    %cst_54 = arith.constant dense<0.000000e+00> : vector<5x128xf32>
    %71 = tpu.matmul %68, %70, %cst_54 {dimension_numbers = #tpu.dot_dimension_numbers<[1], [0], [0], [1], [0, 0, 1, 1], [], []>} : vector<5x32xf32>, vector<32x128xf32>, vector<5x128xf32> -> vector<5x128xf32>
    %72 = arith.addf %32, %71 : vector<5x128xf32>
    %c0_55 = arith.constant 0 : index
    %c1 = arith.constant 1 : index
    %c0_56 = arith.constant 0 : index
    %c0_57 = arith.constant 0 : index
    %73 = vector.load %arg6[%c0_55, %c1, %c0_56, %c0_57] : memref<2x4x128x32xf32, #tpu.memory_space<vmem>>, vector<1x1x128x32xf32>
    %74 = vector.shape_cast %73 : vector<1x1x128x32xf32> to vector<128x32xf32>
    %cst_58 = arith.constant dense<0.000000e+00> : vector<5x32xf32>
    %75 = tpu.matmul %31, %74, %cst_58 {dimension_numbers = #tpu.dot_dimension_numbers<[1], [0], [0], [1], [0, 0, 1, 1], [], []>} : vector<5x128xf32>, vector<128x32xf32>, vector<5x32xf32> -> vector<5x32xf32>
    %c0_59 = arith.constant 0 : index
    %c1_60 = arith.constant 1 : index
    %c0_61 = arith.constant 0 : index
    %c0_62 = arith.constant 0 : index
    %76 = vector.load %arg7[%c0_59, %c1_60, %c0_61, %c0_62] : memref<2x4x1x32xf32, #tpu.memory_space<vmem>>, vector<1x1x1x32xf32>
    %77 = vector.shape_cast %76 : vector<1x1x1x32xf32> to vector<1x32xf32>
    %78 = vector.broadcast %77 : vector<1x32xf32> to vector<5x32xf32>
    %79 = arith.addf %75, %78 : vector<5x32xf32>
    %c0_63 = arith.constant 0 : index
    %c1_64 = arith.constant 1 : index
    %c0_65 = arith.constant 0 : index
    %c0_66 = arith.constant 0 : index
    %80 = vector.load %arg8[%c0_63, %c1_64, %c0_65, %c0_66] : memref<2x4x128x32xf32, #tpu.memory_space<vmem>>, vector<1x1x128x32xf32>
    %81 = vector.shape_cast %80 : vector<1x1x128x32xf32> to vector<128x32xf32>
    %cst_67 = arith.constant dense<0.000000e+00> : vector<5x32xf32>
    %82 = tpu.matmul %31, %81, %cst_67 {dimension_numbers = #tpu.dot_dimension_numbers<[1], [0], [0], [1], [0, 0, 1, 1], [], []>} : vector<5x128xf32>, vector<128x32xf32>, vector<5x32xf32> -> vector<5x32xf32>
    %c0_68 = arith.constant 0 : index
    %c1_69 = arith.constant 1 : index
    %c0_70 = arith.constant 0 : index
    %c0_71 = arith.constant 0 : index
    %83 = vector.load %arg9[%c0_68, %c1_69, %c0_70, %c0_71] : memref<2x4x1x32xf32, #tpu.memory_space<vmem>>, vector<1x1x1x32xf32>
    %84 = vector.shape_cast %83 : vector<1x1x1x32xf32> to vector<1x32xf32>
    %85 = vector.broadcast %84 : vector<1x32xf32> to vector<5x32xf32>
    %86 = arith.addf %82, %85 : vector<5x32xf32>
    %c0_72 = arith.constant 0 : index
    %c1_73 = arith.constant 1 : index
    %c0_74 = arith.constant 0 : index
    %c0_75 = arith.constant 0 : index
    %87 = vector.load %arg10[%c0_72, %c1_73, %c0_74, %c0_75] : memref<2x4x128x32xf32, #tpu.memory_space<vmem>>, vector<1x1x128x32xf32>
    %88 = vector.shape_cast %87 : vector<1x1x128x32xf32> to vector<128x32xf32>
    %cst_76 = arith.constant dense<0.000000e+00> : vector<5x32xf32>
    %89 = tpu.matmul %31, %88, %cst_76 {dimension_numbers = #tpu.dot_dimension_numbers<[1], [0], [0], [1], [0, 0, 1, 1], [], []>} : vector<5x128xf32>, vector<128x32xf32>, vector<5x32xf32> -> vector<5x32xf32>
    %c0_77 = arith.constant 0 : index
    %c1_78 = arith.constant 1 : index
    %c0_79 = arith.constant 0 : index
    %c0_80 = arith.constant 0 : index
    %90 = vector.load %arg11[%c0_77, %c1_78, %c0_79, %c0_80] : memref<2x4x1x32xf32, #tpu.memory_space<vmem>>, vector<1x1x1x32xf32>
    %91 = vector.shape_cast %90 : vector<1x1x1x32xf32> to vector<1x32xf32>
    %92 = vector.broadcast %91 : vector<1x32xf32> to vector<5x32xf32>
    %93 = arith.addf %89, %92 : vector<5x32xf32>
    %94 = tpu.transpose %86, [1, 0] : vector<5x32xf32> -> vector<32x5xf32>
    %cst_81 = arith.constant dense<0.000000e+00> : vector<5x5xf32>
    %95 = tpu.matmul %79, %94, %cst_81 {dimension_numbers = #tpu.dot_dimension_numbers<[1], [0], [0], [1], [0, 0, 1, 1], [], []>} : vector<5x32xf32>, vector<32x5xf32>, vector<5x5xf32> -> vector<5x5xf32>
    %cst_82 = arith.constant 0.176776692 : f32
    %96 = vector.broadcast %cst_82 : f32 to vector<5x5xf32>
    %97 = arith.mulf %95, %96 : vector<5x5xf32>
    %cst_83 = arith.constant dense<0xFF800000> : vector<5xf32>
    %98 = vector.multi_reduction <maximumf>, %97, %cst_83 [1] : vector<5x5xf32> to vector<5xf32>
    %99 = vector.shape_cast %98 : vector<5xf32> to vector<5x1xf32>
    %100 = vector.broadcast %99 : vector<5x1xf32> to vector<5x5xf32>
    %101 = arith.subf %97, %100 : vector<5x5xf32>
    %102 = math.exp %101 : vector<5x5xf32>
    %cst_84 = arith.constant dense<0.000000e+00> : vector<5xf32>
    %103 = vector.multi_reduction <add>, %102, %cst_84 [1] : vector<5x5xf32> to vector<5xf32>
    %104 = vector.shape_cast %103 : vector<5xf32> to vector<5x1xf32>
    %105 = tpu.reciprocal %104 {approx = true} : vector<5x1xf32> -> vector<5x1xf32>
    %106 = vector.broadcast %105 : vector<5x1xf32> to vector<5x5xf32>
    %107 = arith.mulf %102, %106 : vector<5x5xf32>
    %cst_85 = arith.constant dense<0.000000e+00> : vector<5x32xf32>
    %108 = tpu.matmul %107, %93, %cst_85 {dimension_numbers = #tpu.dot_dimension_numbers<[1], [0], [0], [1], [0, 0, 1, 1], [], []>} : vector<5x5xf32>, vector<5x32xf32>, vector<5x32xf32> -> vector<5x32xf32>
    %c0_86 = arith.constant 0 : index
    %c1_87 = arith.constant 1 : index
    %c0_88 = arith.constant 0 : index
    %c0_89 = arith.constant 0 : index
    %109 = vector.load %arg12[%c0_86, %c1_87, %c0_88, %c0_89] : memref<2x4x32x128xf32, #tpu.memory_space<vmem>>, vector<1x1x32x128xf32>
    %110 = vector.shape_cast %109 : vector<1x1x32x128xf32> to vector<32x128xf32>
    %cst_90 = arith.constant dense<0.000000e+00> : vector<5x128xf32>
    %111 = tpu.matmul %108, %110, %cst_90 {dimension_numbers = #tpu.dot_dimension_numbers<[1], [0], [0], [1], [0, 0, 1, 1], [], []>} : vector<5x32xf32>, vector<32x128xf32>, vector<5x128xf32> -> vector<5x128xf32>
    %112 = arith.addf %72, %111 : vector<5x128xf32>
    %c0_91 = arith.constant 0 : index
    %c2 = arith.constant 2 : index
    %c0_92 = arith.constant 0 : index
    %c0_93 = arith.constant 0 : index
    %113 = vector.load %arg6[%c0_91, %c2, %c0_92, %c0_93] : memref<2x4x128x32xf32, #tpu.memory_space<vmem>>, vector<1x1x128x32xf32>
    %114 = vector.shape_cast %113 : vector<1x1x128x32xf32> to vector<128x32xf32>
    %cst_94 = arith.constant dense<0.000000e+00> : vector<5x32xf32>
    %115 = tpu.matmul %31, %114, %cst_94 {dimension_numbers = #tpu.dot_dimension_numbers<[1], [0], [0], [1], [0, 0, 1, 1], [], []>} : vector<5x128xf32>, vector<128x32xf32>, vector<5x32xf32> -> vector<5x32xf32>
    %c0_95 = arith.constant 0 : index
    %c2_96 = arith.constant 2 : index
    %c0_97 = arith.constant 0 : index
    %c0_98 = arith.constant 0 : index
    %116 = vector.load %arg7[%c0_95, %c2_96, %c0_97, %c0_98] : memref<2x4x1x32xf32, #tpu.memory_space<vmem>>, vector<1x1x1x32xf32>
    %117 = vector.shape_cast %116 : vector<1x1x1x32xf32> to vector<1x32xf32>
    %118 = vector.broadcast %117 : vector<1x32xf32> to vector<5x32xf32>
    %119 = arith.addf %115, %118 : vector<5x32xf32>
    %c0_99 = arith.constant 0 : index
    %c2_100 = arith.constant 2 : index
    %c0_101 = arith.constant 0 : index
    %c0_102 = arith.constant 0 : index
    %120 = vector.load %arg8[%c0_99, %c2_100, %c0_101, %c0_102] : memref<2x4x128x32xf32, #tpu.memory_space<vmem>>, vector<1x1x128x32xf32>
    %121 = vector.shape_cast %120 : vector<1x1x128x32xf32> to vector<128x32xf32>
    %cst_103 = arith.constant dense<0.000000e+00> : vector<5x32xf32>
    %122 = tpu.matmul %31, %121, %cst_103 {dimension_numbers = #tpu.dot_dimension_numbers<[1], [0], [0], [1], [0, 0, 1, 1], [], []>} : vector<5x128xf32>, vector<128x32xf32>, vector<5x32xf32> -> vector<5x32xf32>
    %c0_104 = arith.constant 0 : index
    %c2_105 = arith.constant 2 : index
    %c0_106 = arith.constant 0 : index
    %c0_107 = arith.constant 0 : index
    %123 = vector.load %arg9[%c0_104, %c2_105, %c0_106, %c0_107] : memref<2x4x1x32xf32, #tpu.memory_space<vmem>>, vector<1x1x1x32xf32>
    %124 = vector.shape_cast %123 : vector<1x1x1x32xf32> to vector<1x32xf32>
    %125 = vector.broadcast %124 : vector<1x32xf32> to vector<5x32xf32>
    %126 = arith.addf %122, %125 : vector<5x32xf32>
    %c0_108 = arith.constant 0 : index
    %c2_109 = arith.constant 2 : index
    %c0_110 = arith.constant 0 : index
    %c0_111 = arith.constant 0 : index
    %127 = vector.load %arg10[%c0_108, %c2_109, %c0_110, %c0_111] : memref<2x4x128x32xf32, #tpu.memory_space<vmem>>, vector<1x1x128x32xf32>
    %128 = vector.shape_cast %127 : vector<1x1x128x32xf32> to vector<128x32xf32>
    %cst_112 = arith.constant dense<0.000000e+00> : vector<5x32xf32>
    %129 = tpu.matmul %31, %128, %cst_112 {dimension_numbers = #tpu.dot_dimension_numbers<[1], [0], [0], [1], [0, 0, 1, 1], [], []>} : vector<5x128xf32>, vector<128x32xf32>, vector<5x32xf32> -> vector<5x32xf32>
    %c0_113 = arith.constant 0 : index
    %c2_114 = arith.constant 2 : index
    %c0_115 = arith.constant 0 : index
    %c0_116 = arith.constant 0 : index
    %130 = vector.load %arg11[%c0_113, %c2_114, %c0_115, %c0_116] : memref<2x4x1x32xf32, #tpu.memory_space<vmem>>, vector<1x1x1x32xf32>
    %131 = vector.shape_cast %130 : vector<1x1x1x32xf32> to vector<1x32xf32>
    %132 = vector.broadcast %131 : vector<1x32xf32> to vector<5x32xf32>
    %133 = arith.addf %129, %132 : vector<5x32xf32>
    %134 = tpu.transpose %126, [1, 0] : vector<5x32xf32> -> vector<32x5xf32>
    %cst_117 = arith.constant dense<0.000000e+00> : vector<5x5xf32>
    %135 = tpu.matmul %119, %134, %cst_117 {dimension_numbers = #tpu.dot_dimension_numbers<[1], [0], [0], [1], [0, 0, 1, 1], [], []>} : vector<5x32xf32>, vector<32x5xf32>, vector<5x5xf32> -> vector<5x5xf32>
    %cst_118 = arith.constant 0.176776692 : f32
    %136 = vector.broadcast %cst_118 : f32 to vector<5x5xf32>
    %137 = arith.mulf %135, %136 : vector<5x5xf32>
    %cst_119 = arith.constant dense<0xFF800000> : vector<5xf32>
    %138 = vector.multi_reduction <maximumf>, %137, %cst_119 [1] : vector<5x5xf32> to vector<5xf32>
    %139 = vector.shape_cast %138 : vector<5xf32> to vector<5x1xf32>
    %140 = vector.broadcast %139 : vector<5x1xf32> to vector<5x5xf32>
    %141 = arith.subf %137, %140 : vector<5x5xf32>
    %142 = math.exp %141 : vector<5x5xf32>
    %cst_120 = arith.constant dense<0.000000e+00> : vector<5xf32>
    %143 = vector.multi_reduction <add>, %142, %cst_120 [1] : vector<5x5xf32> to vector<5xf32>
    %144 = vector.shape_cast %143 : vector<5xf32> to vector<5x1xf32>
    %145 = tpu.reciprocal %144 {approx = true} : vector<5x1xf32> -> vector<5x1xf32>
    %146 = vector.broadcast %145 : vector<5x1xf32> to vector<5x5xf32>
    %147 = arith.mulf %142, %146 : vector<5x5xf32>
    %cst_121 = arith.constant dense<0.000000e+00> : vector<5x32xf32>
    %148 = tpu.matmul %147, %133, %cst_121 {dimension_numbers = #tpu.dot_dimension_numbers<[1], [0], [0], [1], [0, 0, 1, 1], [], []>} : vector<5x5xf32>, vector<5x32xf32>, vector<5x32xf32> -> vector<5x32xf32>
    %c0_122 = arith.constant 0 : index
    %c2_123 = arith.constant 2 : index
    %c0_124 = arith.constant 0 : index
    %c0_125 = arith.constant 0 : index
    %149 = vector.load %arg12[%c0_122, %c2_123, %c0_124, %c0_125] : memref<2x4x32x128xf32, #tpu.memory_space<vmem>>, vector<1x1x32x128xf32>
    %150 = vector.shape_cast %149 : vector<1x1x32x128xf32> to vector<32x128xf32>
    %cst_126 = arith.constant dense<0.000000e+00> : vector<5x128xf32>
    %151 = tpu.matmul %148, %150, %cst_126 {dimension_numbers = #tpu.dot_dimension_numbers<[1], [0], [0], [1], [0, 0, 1, 1], [], []>} : vector<5x32xf32>, vector<32x128xf32>, vector<5x128xf32> -> vector<5x128xf32>
    %152 = arith.addf %112, %151 : vector<5x128xf32>
    %c0_127 = arith.constant 0 : index
    %c3 = arith.constant 3 : index
    %c0_128 = arith.constant 0 : index
    %c0_129 = arith.constant 0 : index
    %153 = vector.load %arg6[%c0_127, %c3, %c0_128, %c0_129] : memref<2x4x128x32xf32, #tpu.memory_space<vmem>>, vector<1x1x128x32xf32>
    %154 = vector.shape_cast %153 : vector<1x1x128x32xf32> to vector<128x32xf32>
    %cst_130 = arith.constant dense<0.000000e+00> : vector<5x32xf32>
    %155 = tpu.matmul %31, %154, %cst_130 {dimension_numbers = #tpu.dot_dimension_numbers<[1], [0], [0], [1], [0, 0, 1, 1], [], []>} : vector<5x128xf32>, vector<128x32xf32>, vector<5x32xf32> -> vector<5x32xf32>
    %c0_131 = arith.constant 0 : index
    %c3_132 = arith.constant 3 : index
    %c0_133 = arith.constant 0 : index
    %c0_134 = arith.constant 0 : index
    %156 = vector.load %arg7[%c0_131, %c3_132, %c0_133, %c0_134] : memref<2x4x1x32xf32, #tpu.memory_space<vmem>>, vector<1x1x1x32xf32>
    %157 = vector.shape_cast %156 : vector<1x1x1x32xf32> to vector<1x32xf32>
    %158 = vector.broadcast %157 : vector<1x32xf32> to vector<5x32xf32>
    %159 = arith.addf %155, %158 : vector<5x32xf32>
    %c0_135 = arith.constant 0 : index
    %c3_136 = arith.constant 3 : index
    %c0_137 = arith.constant 0 : index
    %c0_138 = arith.constant 0 : index
    %160 = vector.load %arg8[%c0_135, %c3_136, %c0_137, %c0_138] : memref<2x4x128x32xf32, #tpu.memory_space<vmem>>, vector<1x1x128x32xf32>
    %161 = vector.shape_cast %160 : vector<1x1x128x32xf32> to vector<128x32xf32>
    %cst_139 = arith.constant dense<0.000000e+00> : vector<5x32xf32>
    %162 = tpu.matmul %31, %161, %cst_139 {dimension_numbers = #tpu.dot_dimension_numbers<[1], [0], [0], [1], [0, 0, 1, 1], [], []>} : vector<5x128xf32>, vector<128x32xf32>, vector<5x32xf32> -> vector<5x32xf32>
    %c0_140 = arith.constant 0 : index
    %c3_141 = arith.constant 3 : index
    %c0_142 = arith.constant 0 : index
    %c0_143 = arith.constant 0 : index
    %163 = vector.load %arg9[%c0_140, %c3_141, %c0_142, %c0_143] : memref<2x4x1x32xf32, #tpu.memory_space<vmem>>, vector<1x1x1x32xf32>
    %164 = vector.shape_cast %163 : vector<1x1x1x32xf32> to vector<1x32xf32>
    %165 = vector.broadcast %164 : vector<1x32xf32> to vector<5x32xf32>
    %166 = arith.addf %162, %165 : vector<5x32xf32>
    %c0_144 = arith.constant 0 : index
    %c3_145 = arith.constant 3 : index
    %c0_146 = arith.constant 0 : index
    %c0_147 = arith.constant 0 : index
    %167 = vector.load %arg10[%c0_144, %c3_145, %c0_146, %c0_147] : memref<2x4x128x32xf32, #tpu.memory_space<vmem>>, vector<1x1x128x32xf32>
    %168 = vector.shape_cast %167 : vector<1x1x128x32xf32> to vector<128x32xf32>
    %cst_148 = arith.constant dense<0.000000e+00> : vector<5x32xf32>
    %169 = tpu.matmul %31, %168, %cst_148 {dimension_numbers = #tpu.dot_dimension_numbers<[1], [0], [0], [1], [0, 0, 1, 1], [], []>} : vector<5x128xf32>, vector<128x32xf32>, vector<5x32xf32> -> vector<5x32xf32>
    %c0_149 = arith.constant 0 : index
    %c3_150 = arith.constant 3 : index
    %c0_151 = arith.constant 0 : index
    %c0_152 = arith.constant 0 : index
    %170 = vector.load %arg11[%c0_149, %c3_150, %c0_151, %c0_152] : memref<2x4x1x32xf32, #tpu.memory_space<vmem>>, vector<1x1x1x32xf32>
    %171 = vector.shape_cast %170 : vector<1x1x1x32xf32> to vector<1x32xf32>
    %172 = vector.broadcast %171 : vector<1x32xf32> to vector<5x32xf32>
    %173 = arith.addf %169, %172 : vector<5x32xf32>
    %174 = tpu.transpose %166, [1, 0] : vector<5x32xf32> -> vector<32x5xf32>
    %cst_153 = arith.constant dense<0.000000e+00> : vector<5x5xf32>
    %175 = tpu.matmul %159, %174, %cst_153 {dimension_numbers = #tpu.dot_dimension_numbers<[1], [0], [0], [1], [0, 0, 1, 1], [], []>} : vector<5x32xf32>, vector<32x5xf32>, vector<5x5xf32> -> vector<5x5xf32>
    %cst_154 = arith.constant 0.176776692 : f32
    %176 = vector.broadcast %cst_154 : f32 to vector<5x5xf32>
    %177 = arith.mulf %175, %176 : vector<5x5xf32>
    %cst_155 = arith.constant dense<0xFF800000> : vector<5xf32>
    %178 = vector.multi_reduction <maximumf>, %177, %cst_155 [1] : vector<5x5xf32> to vector<5xf32>
    %179 = vector.shape_cast %178 : vector<5xf32> to vector<5x1xf32>
    %180 = vector.broadcast %179 : vector<5x1xf32> to vector<5x5xf32>
    %181 = arith.subf %177, %180 : vector<5x5xf32>
    %182 = math.exp %181 : vector<5x5xf32>
    %cst_156 = arith.constant dense<0.000000e+00> : vector<5xf32>
    %183 = vector.multi_reduction <add>, %182, %cst_156 [1] : vector<5x5xf32> to vector<5xf32>
    %184 = vector.shape_cast %183 : vector<5xf32> to vector<5x1xf32>
    %185 = tpu.reciprocal %184 {approx = true} : vector<5x1xf32> -> vector<5x1xf32>
    %186 = vector.broadcast %185 : vector<5x1xf32> to vector<5x5xf32>
    %187 = arith.mulf %182, %186 : vector<5x5xf32>
    %cst_157 = arith.constant dense<0.000000e+00> : vector<5x32xf32>
    %188 = tpu.matmul %187, %173, %cst_157 {dimension_numbers = #tpu.dot_dimension_numbers<[1], [0], [0], [1], [0, 0, 1, 1], [], []>} : vector<5x5xf32>, vector<5x32xf32>, vector<5x32xf32> -> vector<5x32xf32>
    %c0_158 = arith.constant 0 : index
    %c3_159 = arith.constant 3 : index
    %c0_160 = arith.constant 0 : index
    %c0_161 = arith.constant 0 : index
    %189 = vector.load %arg12[%c0_158, %c3_159, %c0_160, %c0_161] : memref<2x4x32x128xf32, #tpu.memory_space<vmem>>, vector<1x1x32x128xf32>
    %190 = vector.shape_cast %189 : vector<1x1x32x128xf32> to vector<32x128xf32>
    %cst_162 = arith.constant dense<0.000000e+00> : vector<5x128xf32>
    %191 = tpu.matmul %188, %190, %cst_162 {dimension_numbers = #tpu.dot_dimension_numbers<[1], [0], [0], [1], [0, 0, 1, 1], [], []>} : vector<5x32xf32>, vector<32x128xf32>, vector<5x128xf32> -> vector<5x128xf32>
    %192 = arith.addf %152, %191 : vector<5x128xf32>
    %193 = arith.addf %5, %192 : vector<5x128xf32>
    %c0_163 = arith.constant 0 : index
    %c0_164 = arith.constant 0 : index
    %c0_165 = arith.constant 0 : index
    %194 = vector.load %arg13[%c0_163, %c0_164, %c0_165] : memref<2x1x128xf32, #tpu.memory_space<vmem>>, vector<1x1x128xf32>
    %195 = vector.shape_cast %194 : vector<1x1x128xf32> to vector<1x128xf32>
    %196 = vector.broadcast %195 : vector<1x128xf32> to vector<5x128xf32>
    %197 = arith.addf %193, %196 : vector<5x128xf32>
    %c0_166 = arith.constant 0 : index
    %c0_167 = arith.constant 0 : index
    %c0_168 = arith.constant 0 : index
    %198 = vector.load %arg14[%c0_166, %c0_167, %c0_168] : memref<2x1x128xf32, #tpu.memory_space<vmem>>, vector<1x1x128xf32>
    %199 = vector.shape_cast %198 : vector<1x1x128xf32> to vector<1x128xf32>
    %c0_169 = arith.constant 0 : index
    %c0_170 = arith.constant 0 : index
    %c0_171 = arith.constant 0 : index
    %200 = vector.load %arg15[%c0_169, %c0_170, %c0_171] : memref<2x1x128xf32, #tpu.memory_space<vmem>>, vector<1x1x128xf32>
    %201 = vector.shape_cast %200 : vector<1x1x128xf32> to vector<1x128xf32>
    %cst_172 = arith.constant dense<0.000000e+00> : vector<5xf32>
    %202 = vector.multi_reduction <add>, %197, %cst_172 [1] : vector<5x128xf32> to vector<5xf32>
    %203 = vector.shape_cast %202 : vector<5xf32> to vector<5x1xf32>
    %cst_173 = arith.constant 1.280000e+02 : f32
    %204 = vector.broadcast %cst_173 : f32 to vector<5x1xf32>
    %205 = arith.divf %203, %204 : vector<5x1xf32>
    %206 = vector.broadcast %205 : vector<5x1xf32> to vector<5x128xf32>
    %207 = arith.subf %197, %206 : vector<5x128xf32>
    %208 = arith.mulf %207, %207 : vector<5x128xf32>
    %cst_174 = arith.constant dense<0.000000e+00> : vector<5xf32>
    %209 = vector.multi_reduction <add>, %208, %cst_174 [1] : vector<5x128xf32> to vector<5xf32>
    %210 = vector.shape_cast %209 : vector<5xf32> to vector<5x1xf32>
    %cst_175 = arith.constant 1.280000e+02 : f32
    %211 = vector.broadcast %cst_175 : f32 to vector<5x1xf32>
    %212 = arith.divf %210, %211 : vector<5x1xf32>
    %213 = vector.broadcast %205 : vector<5x1xf32> to vector<5x128xf32>
    %214 = arith.subf %197, %213 : vector<5x128xf32>
    %cst_176 = arith.constant 9.99999997E-7 : f32
    %215 = vector.broadcast %cst_176 : f32 to vector<5x1xf32>
    %216 = arith.addf %212, %215 : vector<5x1xf32>
    %217 = math.rsqrt %216 : vector<5x1xf32>
    %218 = vector.broadcast %217 : vector<5x1xf32> to vector<5x128xf32>
    %219 = arith.mulf %214, %218 : vector<5x128xf32>
    %220 = vector.broadcast %199 : vector<1x128xf32> to vector<5x128xf32>
    %221 = arith.mulf %219, %220 : vector<5x128xf32>
    %222 = vector.broadcast %201 : vector<1x128xf32> to vector<5x128xf32>
    %223 = arith.addf %221, %222 : vector<5x128xf32>
    %c0_177 = arith.constant 0 : index
    %c0_178 = arith.constant 0 : index
    %c0_179 = arith.constant 0 : index
    %224 = vector.load %arg16[%c0_177, %c0_178, %c0_179] : memref<2x128x256xf32, #tpu.memory_space<vmem>>, vector<1x128x256xf32>
    %225 = vector.shape_cast %224 : vector<1x128x256xf32> to vector<128x256xf32>
    %cst_180 = arith.constant dense<0.000000e+00> : vector<5x256xf32>
    %226 = tpu.matmul %223, %225, %cst_180 {dimension_numbers = #tpu.dot_dimension_numbers<[1], [0], [0], [1], [0, 0, 1, 1], [], []>} : vector<5x128xf32>, vector<128x256xf32>, vector<5x256xf32> -> vector<5x256xf32>
    %c0_181 = arith.constant 0 : index
    %c0_182 = arith.constant 0 : index
    %c0_183 = arith.constant 0 : index
    %227 = vector.load %arg17[%c0_181, %c0_182, %c0_183] : memref<2x1x256xf32, #tpu.memory_space<vmem>>, vector<1x1x256xf32>
    %228 = vector.shape_cast %227 : vector<1x1x256xf32> to vector<1x256xf32>
    %229 = vector.broadcast %228 : vector<1x256xf32> to vector<5x256xf32>
    %230 = arith.addf %226, %229 : vector<5x256xf32>
    %cst_184 = arith.constant 5.000000e-01 : f32
    %231 = vector.broadcast %cst_184 : f32 to vector<5x256xf32>
    %232 = arith.mulf %231, %230 : vector<5x256xf32>
    %cst_185 = arith.constant 0.707106769 : f32
    %233 = vector.broadcast %cst_185 : f32 to vector<5x256xf32>
    %234 = arith.mulf %230, %233 : vector<5x256xf32>
    %cst_186 = arith.constant 0.000000e+00 : f32
    %235 = vector.broadcast %cst_186 : f32 to vector<5x256xf32>
    %236 = arith.cmpf oge, %234, %235 : vector<5x256xf32>
    %cst_187 = arith.constant 0.000000e+00 : f32
    %237 = vector.broadcast %cst_187 : f32 to vector<5x256xf32>
    %238 = arith.subf %237, %234 : vector<5x256xf32>
    %239 = arith.select %236, %234, %238 : vector<5x256xi1>, vector<5x256xf32>
    %cst_188 = arith.constant 0.327591091 : f32
    %240 = vector.broadcast %cst_188 : f32 to vector<5x256xf32>
    %241 = arith.mulf %240, %239 : vector<5x256xf32>
    %cst_189 = arith.constant 1.000000e+00 : f32
    %242 = vector.broadcast %cst_189 : f32 to vector<5x256xf32>
    %243 = arith.addf %242, %241 : vector<5x256xf32>
    %cst_190 = arith.constant 1.000000e+00 : f32
    %244 = vector.broadcast %cst_190 : f32 to vector<5x256xf32>
    %245 = arith.divf %244, %243 : vector<5x256xf32>
    %cst_191 = arith.constant 1.06140542 : f32
    %246 = vector.broadcast %cst_191 : f32 to vector<5x256xf32>
    %247 = arith.mulf %246, %245 : vector<5x256xf32>
    %cst_192 = arith.constant 1.45315206 : f32
    %248 = vector.broadcast %cst_192 : f32 to vector<5x256xf32>
    %249 = arith.subf %247, %248 : vector<5x256xf32>
    %250 = arith.mulf %249, %245 : vector<5x256xf32>
    %cst_193 = arith.constant 1.42141378 : f32
    %251 = vector.broadcast %cst_193 : f32 to vector<5x256xf32>
    %252 = arith.addf %250, %251 : vector<5x256xf32>
    %253 = arith.mulf %252, %245 : vector<5x256xf32>
    %cst_194 = arith.constant 0.284496725 : f32
    %254 = vector.broadcast %cst_194 : f32 to vector<5x256xf32>
    %255 = arith.subf %253, %254 : vector<5x256xf32>
    %256 = arith.mulf %255, %245 : vector<5x256xf32>
    %cst_195 = arith.constant 0.254829586 : f32
    %257 = vector.broadcast %cst_195 : f32 to vector<5x256xf32>
    %258 = arith.addf %256, %257 : vector<5x256xf32>
    %259 = arith.mulf %258, %245 : vector<5x256xf32>
    %cst_196 = arith.constant 0.000000e+00 : f32
    %260 = vector.broadcast %cst_196 : f32 to vector<5x256xf32>
    %261 = arith.subf %260, %239 : vector<5x256xf32>
    %262 = arith.mulf %261, %239 : vector<5x256xf32>
    %263 = math.exp %262 : vector<5x256xf32>
    %264 = arith.mulf %259, %263 : vector<5x256xf32>
    %cst_197 = arith.constant 1.000000e+00 : f32
    %265 = vector.broadcast %cst_197 : f32 to vector<5x256xf32>
    %266 = arith.subf %265, %264 : vector<5x256xf32>
    %cst_198 = arith.constant 0.000000e+00 : f32
    %267 = vector.broadcast %cst_198 : f32 to vector<5x256xf32>
    %268 = arith.cmpf oge, %234, %267 : vector<5x256xf32>
    %cst_199 = arith.constant 0.000000e+00 : f32
    %269 = vector.broadcast %cst_199 : f32 to vector<5x256xf32>
    %270 = arith.subf %269, %266 : vector<5x256xf32>
    %271 = arith.select %268, %266, %270 : vector<5x256xi1>, vector<5x256xf32>
    %cst_200 = arith.constant 1.000000e+00 : f32
    %272 = vector.broadcast %cst_200 : f32 to vector<5x256xf32>
    %273 = arith.addf %272, %271 : vector<5x256xf32>
    %274 = arith.mulf %232, %273 : vector<5x256xf32>
    %c0_201 = arith.constant 0 : index
    %c0_202 = arith.constant 0 : index
    %c0_203 = arith.constant 0 : index
    %275 = vector.load %arg18[%c0_201, %c0_202, %c0_203] : memref<2x256x128xf32, #tpu.memory_space<vmem>>, vector<1x256x128xf32>
    %276 = vector.shape_cast %275 : vector<1x256x128xf32> to vector<256x128xf32>
    %cst_204 = arith.constant dense<0.000000e+00> : vector<5x128xf32>
    %277 = tpu.matmul %274, %276, %cst_204 {dimension_numbers = #tpu.dot_dimension_numbers<[1], [0], [0], [1], [0, 0, 1, 1], [], []>} : vector<5x256xf32>, vector<256x128xf32>, vector<5x128xf32> -> vector<5x128xf32>
    %278 = arith.addf %197, %277 : vector<5x128xf32>
    %c0_205 = arith.constant 0 : index
    %c0_206 = arith.constant 0 : index
    %c0_207 = arith.constant 0 : index
    %279 = vector.load %arg19[%c0_205, %c0_206, %c0_207] : memref<2x1x128xf32, #tpu.memory_space<vmem>>, vector<1x1x128xf32>
    %280 = vector.shape_cast %279 : vector<1x1x128xf32> to vector<1x128xf32>
    %281 = vector.broadcast %280 : vector<1x128xf32> to vector<5x128xf32>
    %282 = arith.addf %278, %281 : vector<5x128xf32>
    %c1_208 = arith.constant 1 : index
    %c0_209 = arith.constant 0 : index
    %c0_210 = arith.constant 0 : index
    %283 = vector.load %arg4[%c1_208, %c0_209, %c0_210] : memref<2x1x128xf32, #tpu.memory_space<vmem>>, vector<1x1x128xf32>
    %284 = vector.shape_cast %283 : vector<1x1x128xf32> to vector<1x128xf32>
    %c1_211 = arith.constant 1 : index
    %c0_212 = arith.constant 0 : index
    %c0_213 = arith.constant 0 : index
    %285 = vector.load %arg5[%c1_211, %c0_212, %c0_213] : memref<2x1x128xf32, #tpu.memory_space<vmem>>, vector<1x1x128xf32>
    %286 = vector.shape_cast %285 : vector<1x1x128xf32> to vector<1x128xf32>
    %cst_214 = arith.constant dense<0.000000e+00> : vector<5xf32>
    %287 = vector.multi_reduction <add>, %282, %cst_214 [1] : vector<5x128xf32> to vector<5xf32>
    %288 = vector.shape_cast %287 : vector<5xf32> to vector<5x1xf32>
    %cst_215 = arith.constant 1.280000e+02 : f32
    %289 = vector.broadcast %cst_215 : f32 to vector<5x1xf32>
    %290 = arith.divf %288, %289 : vector<5x1xf32>
    %291 = vector.broadcast %290 : vector<5x1xf32> to vector<5x128xf32>
    %292 = arith.subf %282, %291 : vector<5x128xf32>
    %293 = arith.mulf %292, %292 : vector<5x128xf32>
    %cst_216 = arith.constant dense<0.000000e+00> : vector<5xf32>
    %294 = vector.multi_reduction <add>, %293, %cst_216 [1] : vector<5x128xf32> to vector<5xf32>
    %295 = vector.shape_cast %294 : vector<5xf32> to vector<5x1xf32>
    %cst_217 = arith.constant 1.280000e+02 : f32
    %296 = vector.broadcast %cst_217 : f32 to vector<5x1xf32>
    %297 = arith.divf %295, %296 : vector<5x1xf32>
    %298 = vector.broadcast %290 : vector<5x1xf32> to vector<5x128xf32>
    %299 = arith.subf %282, %298 : vector<5x128xf32>
    %cst_218 = arith.constant 9.99999997E-7 : f32
    %300 = vector.broadcast %cst_218 : f32 to vector<5x1xf32>
    %301 = arith.addf %297, %300 : vector<5x1xf32>
    %302 = math.rsqrt %301 : vector<5x1xf32>
    %303 = vector.broadcast %302 : vector<5x1xf32> to vector<5x128xf32>
    %304 = arith.mulf %299, %303 : vector<5x128xf32>
    %305 = vector.broadcast %284 : vector<1x128xf32> to vector<5x128xf32>
    %306 = arith.mulf %304, %305 : vector<5x128xf32>
    %307 = vector.broadcast %286 : vector<1x128xf32> to vector<5x128xf32>
    %308 = arith.addf %306, %307 : vector<5x128xf32>
    %cst_219 = arith.constant 0.000000e+00 : f32
    %309 = vector.broadcast %cst_219 : f32 to vector<5x128xf32>
    %c1_220 = arith.constant 1 : index
    %c0_221 = arith.constant 0 : index
    %c0_222 = arith.constant 0 : index
    %c0_223 = arith.constant 0 : index
    %310 = vector.load %arg6[%c1_220, %c0_221, %c0_222, %c0_223] : memref<2x4x128x32xf32, #tpu.memory_space<vmem>>, vector<1x1x128x32xf32>
    %311 = vector.shape_cast %310 : vector<1x1x128x32xf32> to vector<128x32xf32>
    %cst_224 = arith.constant dense<0.000000e+00> : vector<5x32xf32>
    %312 = tpu.matmul %308, %311, %cst_224 {dimension_numbers = #tpu.dot_dimension_numbers<[1], [0], [0], [1], [0, 0, 1, 1], [], []>} : vector<5x128xf32>, vector<128x32xf32>, vector<5x32xf32> -> vector<5x32xf32>
    %c1_225 = arith.constant 1 : index
    %c0_226 = arith.constant 0 : index
    %c0_227 = arith.constant 0 : index
    %c0_228 = arith.constant 0 : index
    %313 = vector.load %arg7[%c1_225, %c0_226, %c0_227, %c0_228] : memref<2x4x1x32xf32, #tpu.memory_space<vmem>>, vector<1x1x1x32xf32>
    %314 = vector.shape_cast %313 : vector<1x1x1x32xf32> to vector<1x32xf32>
    %315 = vector.broadcast %314 : vector<1x32xf32> to vector<5x32xf32>
    %316 = arith.addf %312, %315 : vector<5x32xf32>
    %c1_229 = arith.constant 1 : index
    %c0_230 = arith.constant 0 : index
    %c0_231 = arith.constant 0 : index
    %c0_232 = arith.constant 0 : index
    %317 = vector.load %arg8[%c1_229, %c0_230, %c0_231, %c0_232] : memref<2x4x128x32xf32, #tpu.memory_space<vmem>>, vector<1x1x128x32xf32>
    %318 = vector.shape_cast %317 : vector<1x1x128x32xf32> to vector<128x32xf32>
    %cst_233 = arith.constant dense<0.000000e+00> : vector<5x32xf32>
    %319 = tpu.matmul %308, %318, %cst_233 {dimension_numbers = #tpu.dot_dimension_numbers<[1], [0], [0], [1], [0, 0, 1, 1], [], []>} : vector<5x128xf32>, vector<128x32xf32>, vector<5x32xf32> -> vector<5x32xf32>
    %c1_234 = arith.constant 1 : index
    %c0_235 = arith.constant 0 : index
    %c0_236 = arith.constant 0 : index
    %c0_237 = arith.constant 0 : index
    %320 = vector.load %arg9[%c1_234, %c0_235, %c0_236, %c0_237] : memref<2x4x1x32xf32, #tpu.memory_space<vmem>>, vector<1x1x1x32xf32>
    %321 = vector.shape_cast %320 : vector<1x1x1x32xf32> to vector<1x32xf32>
    %322 = vector.broadcast %321 : vector<1x32xf32> to vector<5x32xf32>
    %323 = arith.addf %319, %322 : vector<5x32xf32>
    %c1_238 = arith.constant 1 : index
    %c0_239 = arith.constant 0 : index
    %c0_240 = arith.constant 0 : index
    %c0_241 = arith.constant 0 : index
    %324 = vector.load %arg10[%c1_238, %c0_239, %c0_240, %c0_241] : memref<2x4x128x32xf32, #tpu.memory_space<vmem>>, vector<1x1x128x32xf32>
    %325 = vector.shape_cast %324 : vector<1x1x128x32xf32> to vector<128x32xf32>
    %cst_242 = arith.constant dense<0.000000e+00> : vector<5x32xf32>
    %326 = tpu.matmul %308, %325, %cst_242 {dimension_numbers = #tpu.dot_dimension_numbers<[1], [0], [0], [1], [0, 0, 1, 1], [], []>} : vector<5x128xf32>, vector<128x32xf32>, vector<5x32xf32> -> vector<5x32xf32>
    %c1_243 = arith.constant 1 : index
    %c0_244 = arith.constant 0 : index
    %c0_245 = arith.constant 0 : index
    %c0_246 = arith.constant 0 : index
    %327 = vector.load %arg11[%c1_243, %c0_244, %c0_245, %c0_246] : memref<2x4x1x32xf32, #tpu.memory_space<vmem>>, vector<1x1x1x32xf32>
    %328 = vector.shape_cast %327 : vector<1x1x1x32xf32> to vector<1x32xf32>
    %329 = vector.broadcast %328 : vector<1x32xf32> to vector<5x32xf32>
    %330 = arith.addf %326, %329 : vector<5x32xf32>
    %331 = tpu.transpose %323, [1, 0] : vector<5x32xf32> -> vector<32x5xf32>
    %cst_247 = arith.constant dense<0.000000e+00> : vector<5x5xf32>
    %332 = tpu.matmul %316, %331, %cst_247 {dimension_numbers = #tpu.dot_dimension_numbers<[1], [0], [0], [1], [0, 0, 1, 1], [], []>} : vector<5x32xf32>, vector<32x5xf32>, vector<5x5xf32> -> vector<5x5xf32>
    %cst_248 = arith.constant 0.176776692 : f32
    %333 = vector.broadcast %cst_248 : f32 to vector<5x5xf32>
    %334 = arith.mulf %332, %333 : vector<5x5xf32>
    %cst_249 = arith.constant dense<0xFF800000> : vector<5xf32>
    %335 = vector.multi_reduction <maximumf>, %334, %cst_249 [1] : vector<5x5xf32> to vector<5xf32>
    %336 = vector.shape_cast %335 : vector<5xf32> to vector<5x1xf32>
    %337 = vector.broadcast %336 : vector<5x1xf32> to vector<5x5xf32>
    %338 = arith.subf %334, %337 : vector<5x5xf32>
    %339 = math.exp %338 : vector<5x5xf32>
    %cst_250 = arith.constant dense<0.000000e+00> : vector<5xf32>
    %340 = vector.multi_reduction <add>, %339, %cst_250 [1] : vector<5x5xf32> to vector<5xf32>
    %341 = vector.shape_cast %340 : vector<5xf32> to vector<5x1xf32>
    %342 = tpu.reciprocal %341 {approx = true} : vector<5x1xf32> -> vector<5x1xf32>
    %343 = vector.broadcast %342 : vector<5x1xf32> to vector<5x5xf32>
    %344 = arith.mulf %339, %343 : vector<5x5xf32>
    %cst_251 = arith.constant dense<0.000000e+00> : vector<5x32xf32>
    %345 = tpu.matmul %344, %330, %cst_251 {dimension_numbers = #tpu.dot_dimension_numbers<[1], [0], [0], [1], [0, 0, 1, 1], [], []>} : vector<5x5xf32>, vector<5x32xf32>, vector<5x32xf32> -> vector<5x32xf32>
    %c1_252 = arith.constant 1 : index
    %c0_253 = arith.constant 0 : index
    %c0_254 = arith.constant 0 : index
    %c0_255 = arith.constant 0 : index
    %346 = vector.load %arg12[%c1_252, %c0_253, %c0_254, %c0_255] : memref<2x4x32x128xf32, #tpu.memory_space<vmem>>, vector<1x1x32x128xf32>
    %347 = vector.shape_cast %346 : vector<1x1x32x128xf32> to vector<32x128xf32>
    %cst_256 = arith.constant dense<0.000000e+00> : vector<5x128xf32>
    %348 = tpu.matmul %345, %347, %cst_256 {dimension_numbers = #tpu.dot_dimension_numbers<[1], [0], [0], [1], [0, 0, 1, 1], [], []>} : vector<5x32xf32>, vector<32x128xf32>, vector<5x128xf32> -> vector<5x128xf32>
    %349 = arith.addf %309, %348 : vector<5x128xf32>
    %c1_257 = arith.constant 1 : index
    %c1_258 = arith.constant 1 : index
    %c0_259 = arith.constant 0 : index
    %c0_260 = arith.constant 0 : index
    %350 = vector.load %arg6[%c1_257, %c1_258, %c0_259, %c0_260] : memref<2x4x128x32xf32, #tpu.memory_space<vmem>>, vector<1x1x128x32xf32>
    %351 = vector.shape_cast %350 : vector<1x1x128x32xf32> to vector<128x32xf32>
    %cst_261 = arith.constant dense<0.000000e+00> : vector<5x32xf32>
    %352 = tpu.matmul %308, %351, %cst_261 {dimension_numbers = #tpu.dot_dimension_numbers<[1], [0], [0], [1], [0, 0, 1, 1], [], []>} : vector<5x128xf32>, vector<128x32xf32>, vector<5x32xf32> -> vector<5x32xf32>
    %c1_262 = arith.constant 1 : index
    %c1_263 = arith.constant 1 : index
    %c0_264 = arith.constant 0 : index
    %c0_265 = arith.constant 0 : index
    %353 = vector.load %arg7[%c1_262, %c1_263, %c0_264, %c0_265] : memref<2x4x1x32xf32, #tpu.memory_space<vmem>>, vector<1x1x1x32xf32>
    %354 = vector.shape_cast %353 : vector<1x1x1x32xf32> to vector<1x32xf32>
    %355 = vector.broadcast %354 : vector<1x32xf32> to vector<5x32xf32>
    %356 = arith.addf %352, %355 : vector<5x32xf32>
    %c1_266 = arith.constant 1 : index
    %c1_267 = arith.constant 1 : index
    %c0_268 = arith.constant 0 : index
    %c0_269 = arith.constant 0 : index
    %357 = vector.load %arg8[%c1_266, %c1_267, %c0_268, %c0_269] : memref<2x4x128x32xf32, #tpu.memory_space<vmem>>, vector<1x1x128x32xf32>
    %358 = vector.shape_cast %357 : vector<1x1x128x32xf32> to vector<128x32xf32>
    %cst_270 = arith.constant dense<0.000000e+00> : vector<5x32xf32>
    %359 = tpu.matmul %308, %358, %cst_270 {dimension_numbers = #tpu.dot_dimension_numbers<[1], [0], [0], [1], [0, 0, 1, 1], [], []>} : vector<5x128xf32>, vector<128x32xf32>, vector<5x32xf32> -> vector<5x32xf32>
    %c1_271 = arith.constant 1 : index
    %c1_272 = arith.constant 1 : index
    %c0_273 = arith.constant 0 : index
    %c0_274 = arith.constant 0 : index
    %360 = vector.load %arg9[%c1_271, %c1_272, %c0_273, %c0_274] : memref<2x4x1x32xf32, #tpu.memory_space<vmem>>, vector<1x1x1x32xf32>
    %361 = vector.shape_cast %360 : vector<1x1x1x32xf32> to vector<1x32xf32>
    %362 = vector.broadcast %361 : vector<1x32xf32> to vector<5x32xf32>
    %363 = arith.addf %359, %362 : vector<5x32xf32>
    %c1_275 = arith.constant 1 : index
    %c1_276 = arith.constant 1 : index
    %c0_277 = arith.constant 0 : index
    %c0_278 = arith.constant 0 : index
    %364 = vector.load %arg10[%c1_275, %c1_276, %c0_277, %c0_278] : memref<2x4x128x32xf32, #tpu.memory_space<vmem>>, vector<1x1x128x32xf32>
    %365 = vector.shape_cast %364 : vector<1x1x128x32xf32> to vector<128x32xf32>
    %cst_279 = arith.constant dense<0.000000e+00> : vector<5x32xf32>
    %366 = tpu.matmul %308, %365, %cst_279 {dimension_numbers = #tpu.dot_dimension_numbers<[1], [0], [0], [1], [0, 0, 1, 1], [], []>} : vector<5x128xf32>, vector<128x32xf32>, vector<5x32xf32> -> vector<5x32xf32>
    %c1_280 = arith.constant 1 : index
    %c1_281 = arith.constant 1 : index
    %c0_282 = arith.constant 0 : index
    %c0_283 = arith.constant 0 : index
    %367 = vector.load %arg11[%c1_280, %c1_281, %c0_282, %c0_283] : memref<2x4x1x32xf32, #tpu.memory_space<vmem>>, vector<1x1x1x32xf32>
    %368 = vector.shape_cast %367 : vector<1x1x1x32xf32> to vector<1x32xf32>
    %369 = vector.broadcast %368 : vector<1x32xf32> to vector<5x32xf32>
    %370 = arith.addf %366, %369 : vector<5x32xf32>
    %371 = tpu.transpose %363, [1, 0] : vector<5x32xf32> -> vector<32x5xf32>
    %cst_284 = arith.constant dense<0.000000e+00> : vector<5x5xf32>
    %372 = tpu.matmul %356, %371, %cst_284 {dimension_numbers = #tpu.dot_dimension_numbers<[1], [0], [0], [1], [0, 0, 1, 1], [], []>} : vector<5x32xf32>, vector<32x5xf32>, vector<5x5xf32> -> vector<5x5xf32>
    %cst_285 = arith.constant 0.176776692 : f32
    %373 = vector.broadcast %cst_285 : f32 to vector<5x5xf32>
    %374 = arith.mulf %372, %373 : vector<5x5xf32>
    %cst_286 = arith.constant dense<0xFF800000> : vector<5xf32>
    %375 = vector.multi_reduction <maximumf>, %374, %cst_286 [1] : vector<5x5xf32> to vector<5xf32>
    %376 = vector.shape_cast %375 : vector<5xf32> to vector<5x1xf32>
    %377 = vector.broadcast %376 : vector<5x1xf32> to vector<5x5xf32>
    %378 = arith.subf %374, %377 : vector<5x5xf32>
    %379 = math.exp %378 : vector<5x5xf32>
    %cst_287 = arith.constant dense<0.000000e+00> : vector<5xf32>
    %380 = vector.multi_reduction <add>, %379, %cst_287 [1] : vector<5x5xf32> to vector<5xf32>
    %381 = vector.shape_cast %380 : vector<5xf32> to vector<5x1xf32>
    %382 = tpu.reciprocal %381 {approx = true} : vector<5x1xf32> -> vector<5x1xf32>
    %383 = vector.broadcast %382 : vector<5x1xf32> to vector<5x5xf32>
    %384 = arith.mulf %379, %383 : vector<5x5xf32>
    %cst_288 = arith.constant dense<0.000000e+00> : vector<5x32xf32>
    %385 = tpu.matmul %384, %370, %cst_288 {dimension_numbers = #tpu.dot_dimension_numbers<[1], [0], [0], [1], [0, 0, 1, 1], [], []>} : vector<5x5xf32>, vector<5x32xf32>, vector<5x32xf32> -> vector<5x32xf32>
    %c1_289 = arith.constant 1 : index
    %c1_290 = arith.constant 1 : index
    %c0_291 = arith.constant 0 : index
    %c0_292 = arith.constant 0 : index
    %386 = vector.load %arg12[%c1_289, %c1_290, %c0_291, %c0_292] : memref<2x4x32x128xf32, #tpu.memory_space<vmem>>, vector<1x1x32x128xf32>
    %387 = vector.shape_cast %386 : vector<1x1x32x128xf32> to vector<32x128xf32>
    %cst_293 = arith.constant dense<0.000000e+00> : vector<5x128xf32>
    %388 = tpu.matmul %385, %387, %cst_293 {dimension_numbers = #tpu.dot_dimension_numbers<[1], [0], [0], [1], [0, 0, 1, 1], [], []>} : vector<5x32xf32>, vector<32x128xf32>, vector<5x128xf32> -> vector<5x128xf32>
    %389 = arith.addf %349, %388 : vector<5x128xf32>
    %c1_294 = arith.constant 1 : index
    %c2_295 = arith.constant 2 : index
    %c0_296 = arith.constant 0 : index
    %c0_297 = arith.constant 0 : index
    %390 = vector.load %arg6[%c1_294, %c2_295, %c0_296, %c0_297] : memref<2x4x128x32xf32, #tpu.memory_space<vmem>>, vector<1x1x128x32xf32>
    %391 = vector.shape_cast %390 : vector<1x1x128x32xf32> to vector<128x32xf32>
    %cst_298 = arith.constant dense<0.000000e+00> : vector<5x32xf32>
    %392 = tpu.matmul %308, %391, %cst_298 {dimension_numbers = #tpu.dot_dimension_numbers<[1], [0], [0], [1], [0, 0, 1, 1], [], []>} : vector<5x128xf32>, vector<128x32xf32>, vector<5x32xf32> -> vector<5x32xf32>
    %c1_299 = arith.constant 1 : index
    %c2_300 = arith.constant 2 : index
    %c0_301 = arith.constant 0 : index
    %c0_302 = arith.constant 0 : index
    %393 = vector.load %arg7[%c1_299, %c2_300, %c0_301, %c0_302] : memref<2x4x1x32xf32, #tpu.memory_space<vmem>>, vector<1x1x1x32xf32>
    %394 = vector.shape_cast %393 : vector<1x1x1x32xf32> to vector<1x32xf32>
    %395 = vector.broadcast %394 : vector<1x32xf32> to vector<5x32xf32>
    %396 = arith.addf %392, %395 : vector<5x32xf32>
    %c1_303 = arith.constant 1 : index
    %c2_304 = arith.constant 2 : index
    %c0_305 = arith.constant 0 : index
    %c0_306 = arith.constant 0 : index
    %397 = vector.load %arg8[%c1_303, %c2_304, %c0_305, %c0_306] : memref<2x4x128x32xf32, #tpu.memory_space<vmem>>, vector<1x1x128x32xf32>
    %398 = vector.shape_cast %397 : vector<1x1x128x32xf32> to vector<128x32xf32>
    %cst_307 = arith.constant dense<0.000000e+00> : vector<5x32xf32>
    %399 = tpu.matmul %308, %398, %cst_307 {dimension_numbers = #tpu.dot_dimension_numbers<[1], [0], [0], [1], [0, 0, 1, 1], [], []>} : vector<5x128xf32>, vector<128x32xf32>, vector<5x32xf32> -> vector<5x32xf32>
    %c1_308 = arith.constant 1 : index
    %c2_309 = arith.constant 2 : index
    %c0_310 = arith.constant 0 : index
    %c0_311 = arith.constant 0 : index
    %400 = vector.load %arg9[%c1_308, %c2_309, %c0_310, %c0_311] : memref<2x4x1x32xf32, #tpu.memory_space<vmem>>, vector<1x1x1x32xf32>
    %401 = vector.shape_cast %400 : vector<1x1x1x32xf32> to vector<1x32xf32>
    %402 = vector.broadcast %401 : vector<1x32xf32> to vector<5x32xf32>
    %403 = arith.addf %399, %402 : vector<5x32xf32>
    %c1_312 = arith.constant 1 : index
    %c2_313 = arith.constant 2 : index
    %c0_314 = arith.constant 0 : index
    %c0_315 = arith.constant 0 : index
    %404 = vector.load %arg10[%c1_312, %c2_313, %c0_314, %c0_315] : memref<2x4x128x32xf32, #tpu.memory_space<vmem>>, vector<1x1x128x32xf32>
    %405 = vector.shape_cast %404 : vector<1x1x128x32xf32> to vector<128x32xf32>
    %cst_316 = arith.constant dense<0.000000e+00> : vector<5x32xf32>
    %406 = tpu.matmul %308, %405, %cst_316 {dimension_numbers = #tpu.dot_dimension_numbers<[1], [0], [0], [1], [0, 0, 1, 1], [], []>} : vector<5x128xf32>, vector<128x32xf32>, vector<5x32xf32> -> vector<5x32xf32>
    %c1_317 = arith.constant 1 : index
    %c2_318 = arith.constant 2 : index
    %c0_319 = arith.constant 0 : index
    %c0_320 = arith.constant 0 : index
    %407 = vector.load %arg11[%c1_317, %c2_318, %c0_319, %c0_320] : memref<2x4x1x32xf32, #tpu.memory_space<vmem>>, vector<1x1x1x32xf32>
    %408 = vector.shape_cast %407 : vector<1x1x1x32xf32> to vector<1x32xf32>
    %409 = vector.broadcast %408 : vector<1x32xf32> to vector<5x32xf32>
    %410 = arith.addf %406, %409 : vector<5x32xf32>
    %411 = tpu.transpose %403, [1, 0] : vector<5x32xf32> -> vector<32x5xf32>
    %cst_321 = arith.constant dense<0.000000e+00> : vector<5x5xf32>
    %412 = tpu.matmul %396, %411, %cst_321 {dimension_numbers = #tpu.dot_dimension_numbers<[1], [0], [0], [1], [0, 0, 1, 1], [], []>} : vector<5x32xf32>, vector<32x5xf32>, vector<5x5xf32> -> vector<5x5xf32>
    %cst_322 = arith.constant 0.176776692 : f32
    %413 = vector.broadcast %cst_322 : f32 to vector<5x5xf32>
    %414 = arith.mulf %412, %413 : vector<5x5xf32>
    %cst_323 = arith.constant dense<0xFF800000> : vector<5xf32>
    %415 = vector.multi_reduction <maximumf>, %414, %cst_323 [1] : vector<5x5xf32> to vector<5xf32>
    %416 = vector.shape_cast %415 : vector<5xf32> to vector<5x1xf32>
    %417 = vector.broadcast %416 : vector<5x1xf32> to vector<5x5xf32>
    %418 = arith.subf %414, %417 : vector<5x5xf32>
    %419 = math.exp %418 : vector<5x5xf32>
    %cst_324 = arith.constant dense<0.000000e+00> : vector<5xf32>
    %420 = vector.multi_reduction <add>, %419, %cst_324 [1] : vector<5x5xf32> to vector<5xf32>
    %421 = vector.shape_cast %420 : vector<5xf32> to vector<5x1xf32>
    %422 = tpu.reciprocal %421 {approx = true} : vector<5x1xf32> -> vector<5x1xf32>
    %423 = vector.broadcast %422 : vector<5x1xf32> to vector<5x5xf32>
    %424 = arith.mulf %419, %423 : vector<5x5xf32>
    %cst_325 = arith.constant dense<0.000000e+00> : vector<5x32xf32>
    %425 = tpu.matmul %424, %410, %cst_325 {dimension_numbers = #tpu.dot_dimension_numbers<[1], [0], [0], [1], [0, 0, 1, 1], [], []>} : vector<5x5xf32>, vector<5x32xf32>, vector<5x32xf32> -> vector<5x32xf32>
    %c1_326 = arith.constant 1 : index
    %c2_327 = arith.constant 2 : index
    %c0_328 = arith.constant 0 : index
    %c0_329 = arith.constant 0 : index
    %426 = vector.load %arg12[%c1_326, %c2_327, %c0_328, %c0_329] : memref<2x4x32x128xf32, #tpu.memory_space<vmem>>, vector<1x1x32x128xf32>
    %427 = vector.shape_cast %426 : vector<1x1x32x128xf32> to vector<32x128xf32>
    %cst_330 = arith.constant dense<0.000000e+00> : vector<5x128xf32>
    %428 = tpu.matmul %425, %427, %cst_330 {dimension_numbers = #tpu.dot_dimension_numbers<[1], [0], [0], [1], [0, 0, 1, 1], [], []>} : vector<5x32xf32>, vector<32x128xf32>, vector<5x128xf32> -> vector<5x128xf32>
    %429 = arith.addf %389, %428 : vector<5x128xf32>
    %c1_331 = arith.constant 1 : index
    %c3_332 = arith.constant 3 : index
    %c0_333 = arith.constant 0 : index
    %c0_334 = arith.constant 0 : index
    %430 = vector.load %arg6[%c1_331, %c3_332, %c0_333, %c0_334] : memref<2x4x128x32xf32, #tpu.memory_space<vmem>>, vector<1x1x128x32xf32>
    %431 = vector.shape_cast %430 : vector<1x1x128x32xf32> to vector<128x32xf32>
    %cst_335 = arith.constant dense<0.000000e+00> : vector<5x32xf32>
    %432 = tpu.matmul %308, %431, %cst_335 {dimension_numbers = #tpu.dot_dimension_numbers<[1], [0], [0], [1], [0, 0, 1, 1], [], []>} : vector<5x128xf32>, vector<128x32xf32>, vector<5x32xf32> -> vector<5x32xf32>
    %c1_336 = arith.constant 1 : index
    %c3_337 = arith.constant 3 : index
    %c0_338 = arith.constant 0 : index
    %c0_339 = arith.constant 0 : index
    %433 = vector.load %arg7[%c1_336, %c3_337, %c0_338, %c0_339] : memref<2x4x1x32xf32, #tpu.memory_space<vmem>>, vector<1x1x1x32xf32>
    %434 = vector.shape_cast %433 : vector<1x1x1x32xf32> to vector<1x32xf32>
    %435 = vector.broadcast %434 : vector<1x32xf32> to vector<5x32xf32>
    %436 = arith.addf %432, %435 : vector<5x32xf32>
    %c1_340 = arith.constant 1 : index
    %c3_341 = arith.constant 3 : index
    %c0_342 = arith.constant 0 : index
    %c0_343 = arith.constant 0 : index
    %437 = vector.load %arg8[%c1_340, %c3_341, %c0_342, %c0_343] : memref<2x4x128x32xf32, #tpu.memory_space<vmem>>, vector<1x1x128x32xf32>
    %438 = vector.shape_cast %437 : vector<1x1x128x32xf32> to vector<128x32xf32>
    %cst_344 = arith.constant dense<0.000000e+00> : vector<5x32xf32>
    %439 = tpu.matmul %308, %438, %cst_344 {dimension_numbers = #tpu.dot_dimension_numbers<[1], [0], [0], [1], [0, 0, 1, 1], [], []>} : vector<5x128xf32>, vector<128x32xf32>, vector<5x32xf32> -> vector<5x32xf32>
    %c1_345 = arith.constant 1 : index
    %c3_346 = arith.constant 3 : index
    %c0_347 = arith.constant 0 : index
    %c0_348 = arith.constant 0 : index
    %440 = vector.load %arg9[%c1_345, %c3_346, %c0_347, %c0_348] : memref<2x4x1x32xf32, #tpu.memory_space<vmem>>, vector<1x1x1x32xf32>
    %441 = vector.shape_cast %440 : vector<1x1x1x32xf32> to vector<1x32xf32>
    %442 = vector.broadcast %441 : vector<1x32xf32> to vector<5x32xf32>
    %443 = arith.addf %439, %442 : vector<5x32xf32>
    %c1_349 = arith.constant 1 : index
    %c3_350 = arith.constant 3 : index
    %c0_351 = arith.constant 0 : index
    %c0_352 = arith.constant 0 : index
    %444 = vector.load %arg10[%c1_349, %c3_350, %c0_351, %c0_352] : memref<2x4x128x32xf32, #tpu.memory_space<vmem>>, vector<1x1x128x32xf32>
    %445 = vector.shape_cast %444 : vector<1x1x128x32xf32> to vector<128x32xf32>
    %cst_353 = arith.constant dense<0.000000e+00> : vector<5x32xf32>
    %446 = tpu.matmul %308, %445, %cst_353 {dimension_numbers = #tpu.dot_dimension_numbers<[1], [0], [0], [1], [0, 0, 1, 1], [], []>} : vector<5x128xf32>, vector<128x32xf32>, vector<5x32xf32> -> vector<5x32xf32>
    %c1_354 = arith.constant 1 : index
    %c3_355 = arith.constant 3 : index
    %c0_356 = arith.constant 0 : index
    %c0_357 = arith.constant 0 : index
    %447 = vector.load %arg11[%c1_354, %c3_355, %c0_356, %c0_357] : memref<2x4x1x32xf32, #tpu.memory_space<vmem>>, vector<1x1x1x32xf32>
    %448 = vector.shape_cast %447 : vector<1x1x1x32xf32> to vector<1x32xf32>
    %449 = vector.broadcast %448 : vector<1x32xf32> to vector<5x32xf32>
    %450 = arith.addf %446, %449 : vector<5x32xf32>
    %451 = tpu.transpose %443, [1, 0] : vector<5x32xf32> -> vector<32x5xf32>
    %cst_358 = arith.constant dense<0.000000e+00> : vector<5x5xf32>
    %452 = tpu.matmul %436, %451, %cst_358 {dimension_numbers = #tpu.dot_dimension_numbers<[1], [0], [0], [1], [0, 0, 1, 1], [], []>} : vector<5x32xf32>, vector<32x5xf32>, vector<5x5xf32> -> vector<5x5xf32>
    %cst_359 = arith.constant 0.176776692 : f32
    %453 = vector.broadcast %cst_359 : f32 to vector<5x5xf32>
    %454 = arith.mulf %452, %453 : vector<5x5xf32>
    %cst_360 = arith.constant dense<0xFF800000> : vector<5xf32>
    %455 = vector.multi_reduction <maximumf>, %454, %cst_360 [1] : vector<5x5xf32> to vector<5xf32>
    %456 = vector.shape_cast %455 : vector<5xf32> to vector<5x1xf32>
    %457 = vector.broadcast %456 : vector<5x1xf32> to vector<5x5xf32>
    %458 = arith.subf %454, %457 : vector<5x5xf32>
    %459 = math.exp %458 : vector<5x5xf32>
    %cst_361 = arith.constant dense<0.000000e+00> : vector<5xf32>
    %460 = vector.multi_reduction <add>, %459, %cst_361 [1] : vector<5x5xf32> to vector<5xf32>
    %461 = vector.shape_cast %460 : vector<5xf32> to vector<5x1xf32>
    %462 = tpu.reciprocal %461 {approx = true} : vector<5x1xf32> -> vector<5x1xf32>
    %463 = vector.broadcast %462 : vector<5x1xf32> to vector<5x5xf32>
    %464 = arith.mulf %459, %463 : vector<5x5xf32>
    %cst_362 = arith.constant dense<0.000000e+00> : vector<5x32xf32>
    %465 = tpu.matmul %464, %450, %cst_362 {dimension_numbers = #tpu.dot_dimension_numbers<[1], [0], [0], [1], [0, 0, 1, 1], [], []>} : vector<5x5xf32>, vector<5x32xf32>, vector<5x32xf32> -> vector<5x32xf32>
    %c1_363 = arith.constant 1 : index
    %c3_364 = arith.constant 3 : index
    %c0_365 = arith.constant 0 : index
    %c0_366 = arith.constant 0 : index
    %466 = vector.load %arg12[%c1_363, %c3_364, %c0_365, %c0_366] : memref<2x4x32x128xf32, #tpu.memory_space<vmem>>, vector<1x1x32x128xf32>
    %467 = vector.shape_cast %466 : vector<1x1x32x128xf32> to vector<32x128xf32>
    %cst_367 = arith.constant dense<0.000000e+00> : vector<5x128xf32>
    %468 = tpu.matmul %465, %467, %cst_367 {dimension_numbers = #tpu.dot_dimension_numbers<[1], [0], [0], [1], [0, 0, 1, 1], [], []>} : vector<5x32xf32>, vector<32x128xf32>, vector<5x128xf32> -> vector<5x128xf32>
    %469 = arith.addf %429, %468 : vector<5x128xf32>
    %470 = arith.addf %282, %469 : vector<5x128xf32>
    %c1_368 = arith.constant 1 : index
    %c0_369 = arith.constant 0 : index
    %c0_370 = arith.constant 0 : index
    %471 = vector.load %arg13[%c1_368, %c0_369, %c0_370] : memref<2x1x128xf32, #tpu.memory_space<vmem>>, vector<1x1x128xf32>
    %472 = vector.shape_cast %471 : vector<1x1x128xf32> to vector<1x128xf32>
    %473 = vector.broadcast %472 : vector<1x128xf32> to vector<5x128xf32>
    %474 = arith.addf %470, %473 : vector<5x128xf32>
    %c1_371 = arith.constant 1 : index
    %c0_372 = arith.constant 0 : index
    %c0_373 = arith.constant 0 : index
    %475 = vector.load %arg14[%c1_371, %c0_372, %c0_373] : memref<2x1x128xf32, #tpu.memory_space<vmem>>, vector<1x1x128xf32>
    %476 = vector.shape_cast %475 : vector<1x1x128xf32> to vector<1x128xf32>
    %c1_374 = arith.constant 1 : index
    %c0_375 = arith.constant 0 : index
    %c0_376 = arith.constant 0 : index
    %477 = vector.load %arg15[%c1_374, %c0_375, %c0_376] : memref<2x1x128xf32, #tpu.memory_space<vmem>>, vector<1x1x128xf32>
    %478 = vector.shape_cast %477 : vector<1x1x128xf32> to vector<1x128xf32>
    %cst_377 = arith.constant dense<0.000000e+00> : vector<5xf32>
    %479 = vector.multi_reduction <add>, %474, %cst_377 [1] : vector<5x128xf32> to vector<5xf32>
    %480 = vector.shape_cast %479 : vector<5xf32> to vector<5x1xf32>
    %cst_378 = arith.constant 1.280000e+02 : f32
    %481 = vector.broadcast %cst_378 : f32 to vector<5x1xf32>
    %482 = arith.divf %480, %481 : vector<5x1xf32>
    %483 = vector.broadcast %482 : vector<5x1xf32> to vector<5x128xf32>
    %484 = arith.subf %474, %483 : vector<5x128xf32>
    %485 = arith.mulf %484, %484 : vector<5x128xf32>
    %cst_379 = arith.constant dense<0.000000e+00> : vector<5xf32>
    %486 = vector.multi_reduction <add>, %485, %cst_379 [1] : vector<5x128xf32> to vector<5xf32>
    %487 = vector.shape_cast %486 : vector<5xf32> to vector<5x1xf32>
    %cst_380 = arith.constant 1.280000e+02 : f32
    %488 = vector.broadcast %cst_380 : f32 to vector<5x1xf32>
    %489 = arith.divf %487, %488 : vector<5x1xf32>
    %490 = vector.broadcast %482 : vector<5x1xf32> to vector<5x128xf32>
    %491 = arith.subf %474, %490 : vector<5x128xf32>
    %cst_381 = arith.constant 9.99999997E-7 : f32
    %492 = vector.broadcast %cst_381 : f32 to vector<5x1xf32>
    %493 = arith.addf %489, %492 : vector<5x1xf32>
    %494 = math.rsqrt %493 : vector<5x1xf32>
    %495 = vector.broadcast %494 : vector<5x1xf32> to vector<5x128xf32>
    %496 = arith.mulf %491, %495 : vector<5x128xf32>
    %497 = vector.broadcast %476 : vector<1x128xf32> to vector<5x128xf32>
    %498 = arith.mulf %496, %497 : vector<5x128xf32>
    %499 = vector.broadcast %478 : vector<1x128xf32> to vector<5x128xf32>
    %500 = arith.addf %498, %499 : vector<5x128xf32>
    %c1_382 = arith.constant 1 : index
    %c0_383 = arith.constant 0 : index
    %c0_384 = arith.constant 0 : index
    %501 = vector.load %arg16[%c1_382, %c0_383, %c0_384] : memref<2x128x256xf32, #tpu.memory_space<vmem>>, vector<1x128x256xf32>
    %502 = vector.shape_cast %501 : vector<1x128x256xf32> to vector<128x256xf32>
    %cst_385 = arith.constant dense<0.000000e+00> : vector<5x256xf32>
    %503 = tpu.matmul %500, %502, %cst_385 {dimension_numbers = #tpu.dot_dimension_numbers<[1], [0], [0], [1], [0, 0, 1, 1], [], []>} : vector<5x128xf32>, vector<128x256xf32>, vector<5x256xf32> -> vector<5x256xf32>
    %c1_386 = arith.constant 1 : index
    %c0_387 = arith.constant 0 : index
    %c0_388 = arith.constant 0 : index
    %504 = vector.load %arg17[%c1_386, %c0_387, %c0_388] : memref<2x1x256xf32, #tpu.memory_space<vmem>>, vector<1x1x256xf32>
    %505 = vector.shape_cast %504 : vector<1x1x256xf32> to vector<1x256xf32>
    %506 = vector.broadcast %505 : vector<1x256xf32> to vector<5x256xf32>
    %507 = arith.addf %503, %506 : vector<5x256xf32>
    %cst_389 = arith.constant 5.000000e-01 : f32
    %508 = vector.broadcast %cst_389 : f32 to vector<5x256xf32>
    %509 = arith.mulf %508, %507 : vector<5x256xf32>
    %cst_390 = arith.constant 0.707106769 : f32
    %510 = vector.broadcast %cst_390 : f32 to vector<5x256xf32>
    %511 = arith.mulf %507, %510 : vector<5x256xf32>
    %cst_391 = arith.constant 0.000000e+00 : f32
    %512 = vector.broadcast %cst_391 : f32 to vector<5x256xf32>
    %513 = arith.cmpf oge, %511, %512 : vector<5x256xf32>
    %cst_392 = arith.constant 0.000000e+00 : f32
    %514 = vector.broadcast %cst_392 : f32 to vector<5x256xf32>
    %515 = arith.subf %514, %511 : vector<5x256xf32>
    %516 = arith.select %513, %511, %515 : vector<5x256xi1>, vector<5x256xf32>
    %cst_393 = arith.constant 0.327591091 : f32
    %517 = vector.broadcast %cst_393 : f32 to vector<5x256xf32>
    %518 = arith.mulf %517, %516 : vector<5x256xf32>
    %cst_394 = arith.constant 1.000000e+00 : f32
    %519 = vector.broadcast %cst_394 : f32 to vector<5x256xf32>
    %520 = arith.addf %519, %518 : vector<5x256xf32>
    %cst_395 = arith.constant 1.000000e+00 : f32
    %521 = vector.broadcast %cst_395 : f32 to vector<5x256xf32>
    %522 = arith.divf %521, %520 : vector<5x256xf32>
    %cst_396 = arith.constant 1.06140542 : f32
    %523 = vector.broadcast %cst_396 : f32 to vector<5x256xf32>
    %524 = arith.mulf %523, %522 : vector<5x256xf32>
    %cst_397 = arith.constant 1.45315206 : f32
    %525 = vector.broadcast %cst_397 : f32 to vector<5x256xf32>
    %526 = arith.subf %524, %525 : vector<5x256xf32>
    %527 = arith.mulf %526, %522 : vector<5x256xf32>
    %cst_398 = arith.constant 1.42141378 : f32
    %528 = vector.broadcast %cst_398 : f32 to vector<5x256xf32>
    %529 = arith.addf %527, %528 : vector<5x256xf32>
    %530 = arith.mulf %529, %522 : vector<5x256xf32>
    %cst_399 = arith.constant 0.284496725 : f32
    %531 = vector.broadcast %cst_399 : f32 to vector<5x256xf32>
    %532 = arith.subf %530, %531 : vector<5x256xf32>
    %533 = arith.mulf %532, %522 : vector<5x256xf32>
    %cst_400 = arith.constant 0.254829586 : f32
    %534 = vector.broadcast %cst_400 : f32 to vector<5x256xf32>
    %535 = arith.addf %533, %534 : vector<5x256xf32>
    %536 = arith.mulf %535, %522 : vector<5x256xf32>
    %cst_401 = arith.constant 0.000000e+00 : f32
    %537 = vector.broadcast %cst_401 : f32 to vector<5x256xf32>
    %538 = arith.subf %537, %516 : vector<5x256xf32>
    %539 = arith.mulf %538, %516 : vector<5x256xf32>
    %540 = math.exp %539 : vector<5x256xf32>
    %541 = arith.mulf %536, %540 : vector<5x256xf32>
    %cst_402 = arith.constant 1.000000e+00 : f32
    %542 = vector.broadcast %cst_402 : f32 to vector<5x256xf32>
    %543 = arith.subf %542, %541 : vector<5x256xf32>
    %cst_403 = arith.constant 0.000000e+00 : f32
    %544 = vector.broadcast %cst_403 : f32 to vector<5x256xf32>
    %545 = arith.cmpf oge, %511, %544 : vector<5x256xf32>
    %cst_404 = arith.constant 0.000000e+00 : f32
    %546 = vector.broadcast %cst_404 : f32 to vector<5x256xf32>
    %547 = arith.subf %546, %543 : vector<5x256xf32>
    %548 = arith.select %545, %543, %547 : vector<5x256xi1>, vector<5x256xf32>
    %cst_405 = arith.constant 1.000000e+00 : f32
    %549 = vector.broadcast %cst_405 : f32 to vector<5x256xf32>
    %550 = arith.addf %549, %548 : vector<5x256xf32>
    %551 = arith.mulf %509, %550 : vector<5x256xf32>
    %c1_406 = arith.constant 1 : index
    %c0_407 = arith.constant 0 : index
    %c0_408 = arith.constant 0 : index
    %552 = vector.load %arg18[%c1_406, %c0_407, %c0_408] : memref<2x256x128xf32, #tpu.memory_space<vmem>>, vector<1x256x128xf32>
    %553 = vector.shape_cast %552 : vector<1x256x128xf32> to vector<256x128xf32>
    %cst_409 = arith.constant dense<0.000000e+00> : vector<5x128xf32>
    %554 = tpu.matmul %551, %553, %cst_409 {dimension_numbers = #tpu.dot_dimension_numbers<[1], [0], [0], [1], [0, 0, 1, 1], [], []>} : vector<5x256xf32>, vector<256x128xf32>, vector<5x128xf32> -> vector<5x128xf32>
    %555 = arith.addf %474, %554 : vector<5x128xf32>
    %c1_410 = arith.constant 1 : index
    %c0_411 = arith.constant 0 : index
    %c0_412 = arith.constant 0 : index
    %556 = vector.load %arg19[%c1_410, %c0_411, %c0_412] : memref<2x1x128xf32, #tpu.memory_space<vmem>>, vector<1x1x128xf32>
    %557 = vector.shape_cast %556 : vector<1x1x128xf32> to vector<1x128xf32>
    %558 = vector.broadcast %557 : vector<1x128xf32> to vector<5x128xf32>
    %559 = arith.addf %555, %558 : vector<5x128xf32>
    %560 = vector.extract_strided_slice %559 {offsets = [0, 0], sizes = [1, 128], strides = [1, 1]} : vector<5x128xf32> to vector<1x128xf32>
    %c0_413 = arith.constant 0 : index
    %c0_414 = arith.constant 0 : index
    %561 = vector.load %arg20[%c0_413, %c0_414] : memref<1x128xf32, #tpu.memory_space<vmem>>, vector<1x128xf32>
    %c0_415 = arith.constant 0 : index
    %c0_416 = arith.constant 0 : index
    %562 = vector.load %arg21[%c0_415, %c0_416] : memref<1x128xf32, #tpu.memory_space<vmem>>, vector<1x128xf32>
    %cst_417 = arith.constant dense<0.000000e+00> : vector<1xf32>
    %563 = vector.multi_reduction <add>, %560, %cst_417 [1] : vector<1x128xf32> to vector<1xf32>
    %564 = vector.shape_cast %563 : vector<1xf32> to vector<1x1xf32>
    %cst_418 = arith.constant 1.280000e+02 : f32
    %565 = vector.broadcast %cst_418 : f32 to vector<1x1xf32>
    %566 = arith.divf %564, %565 : vector<1x1xf32>
    %567 = vector.broadcast %566 : vector<1x1xf32> to vector<1x128xf32>
    %568 = arith.subf %560, %567 : vector<1x128xf32>
    %569 = arith.mulf %568, %568 : vector<1x128xf32>
    %cst_419 = arith.constant dense<0.000000e+00> : vector<1xf32>
    %570 = vector.multi_reduction <add>, %569, %cst_419 [1] : vector<1x128xf32> to vector<1xf32>
    %571 = vector.shape_cast %570 : vector<1xf32> to vector<1x1xf32>
    %cst_420 = arith.constant 1.280000e+02 : f32
    %572 = vector.broadcast %cst_420 : f32 to vector<1x1xf32>
    %573 = arith.divf %571, %572 : vector<1x1xf32>
    %574 = vector.broadcast %566 : vector<1x1xf32> to vector<1x128xf32>
    %575 = arith.subf %560, %574 : vector<1x128xf32>
    %cst_421 = arith.constant 9.99999997E-7 : f32
    %576 = vector.broadcast %cst_421 : f32 to vector<1x1xf32>
    %577 = arith.addf %573, %576 : vector<1x1xf32>
    %578 = math.rsqrt %577 : vector<1x1xf32>
    %579 = vector.broadcast %578 : vector<1x1xf32> to vector<1x128xf32>
    %580 = arith.mulf %575, %579 : vector<1x128xf32>
    %581 = arith.mulf %580, %561 : vector<1x128xf32>
    %582 = arith.addf %581, %562 : vector<1x128xf32>
    %c0_422 = arith.constant 0 : index
    %c0_423 = arith.constant 0 : index
    %c0_424 = arith.constant 0 : index
    %583 = vector.load %arg22[%c0_422, %c0_423, %c0_424] : memref<1x1x128xf32, #tpu.memory_space<vmem>>, vector<1x1x128xf32>
    %584 = vector.shape_cast %583 : vector<1x1x128xf32> to vector<1x128xf32>
    %585 = vector.shape_cast %582 : vector<1x128xf32> to vector<1x1x128xf32>
    tpu.vector_store %arg22[%c0_422, %c0_423, %c0_424], %585 {strides = array<i32>} : memref<1x1x128xf32, #tpu.memory_space<vmem>>, vector<1x1x128xf32>,
    return
  }
  func.func @transform_0(%arg0: i32) -> (i32, i32, i32) {
    %c0_i32 = arith.constant 0 : i32
    %c0_i32_0 = arith.constant 0 : i32
    %c0_i32_1 = arith.constant 0 : i32
    return %arg0, %c0_i32, %c0_i32_0 : i32, i32, i32
  }
  func.func @transform_1(%arg0: i32) -> (i32, i32) {
    %c0_i32 = arith.constant 0 : i32
    %c0_i32_0 = arith.constant 0 : i32
    %c0_i32_1 = arith.constant 0 : i32
    return %c0_i32, %c0_i32_0 : i32, i32
  }
  func.func @transform_2(%arg0: i32) -> (i32, i32) {
    %c0_i32 = arith.constant 0 : i32
    %c0_i32_0 = arith.constant 0 : i32
    %c0_i32_1 = arith.constant 0 : i32
    return %c0_i32, %c0_i32_0 : i32, i32
  }
  func.func @transform_3(%arg0: i32) -> (i32, i32, i32) {
    %c0_i32 = arith.constant 0 : i32
    %c0_i32_0 = arith.constant 0 : i32
    %c0_i32_1 = arith.constant 0 : i32
    %c0_i32_2 = arith.constant 0 : i32
    return %c0_i32, %c0_i32_0, %c0_i32_1 : i32, i32, i32
  }
  func.func @transform_4(%arg0: i32) -> (i32, i32, i32) {
    %c0_i32 = arith.constant 0 : i32
    %c0_i32_0 = arith.constant 0 : i32
    %c0_i32_1 = arith.constant 0 : i32
    %c0_i32_2 = arith.constant 0 : i32
    return %c0_i32, %c0_i32_0, %c0_i32_1 : i32, i32, i32
  }
  func.func @transform_5(%arg0: i32) -> (i32, i32, i32, i32) {
    %c0_i32 = arith.constant 0 : i32
    %c0_i32_0 = arith.constant 0 : i32
    %c0_i32_1 = arith.constant 0 : i32
    %c0_i32_2 = arith.constant 0 : i32
    %c0_i32_3 = arith.constant 0 : i32
    return %c0_i32, %c0_i32_0, %c0_i32_1, %c0_i32_2 : i32, i32, i32, i32
  }
  func.func @transform_6(%arg0: i32) -> (i32, i32, i32, i32) {
    %c0_i32 = arith.constant 0 : i32
    %c0_i32_0 = arith.constant 0 : i32
    %c0_i32_1 = arith.constant 0 : i32
    %c0_i32_2 = arith.constant 0 : i32
    %c0_i32_3 = arith.constant 0 : i32
    return %c0_i32, %c0_i32_0, %c0_i32_1, %c0_i32_2 : i32, i32, i32, i32
  }
  func.func @transform_7(%arg0: i32) -> (i32, i32, i32, i32) {
    %c0_i32 = arith.constant 0 : i32
    %c0_i32_0 = arith.constant 0 : i32
    %c0_i32_1 = arith.constant 0 : i32
    %c0_i32_2 = arith.constant 0 : i32
    %c0_i32_3 = arith.constant 0 : i32
    return %c0_i32, %c0_i32_0, %c0_i32_1, %c0_i32_2 : i32, i32, i32, i32
  }
  func.func @transform_8(%arg0: i32) -> (i32, i32, i32, i32) {
    %c0_i32 = arith.constant 0 : i32
    %c0_i32_0 = arith.constant 0 : i32
    %c0_i32_1 = arith.constant 0 : i32
    %c0_i32_2 = arith.constant 0 : i32
    %c0_i32_3 = arith.constant 0 : i32
    return %c0_i32, %c0_i32_0, %c0_i32_1, %c0_i32_2 : i32, i32, i32, i32
  }
  func.func @transform_9(%arg0: i32) -> (i32, i32, i32, i32) {
    %c0_i32 = arith.constant 0 : i32
    %c0_i32_0 = arith.constant 0 : i32
    %c0_i32_1 = arith.constant 0 : i32
    %c0_i32_2 = arith.constant 0 : i32
    %c0_i32_3 = arith.constant 0 : i32
    return %c0_i32, %c0_i32_0, %c0_i32_1, %c0_i32_2 : i32, i32, i32, i32
  }
  func.func @transform_10(%arg0: i32) -> (i32, i32, i32, i32) {
    %c0_i32 = arith.constant 0 : i32
    %c0_i32_0 = arith.constant 0 : i32
    %c0_i32_1 = arith.constant 0 : i32
    %c0_i32_2 = arith.constant 0 : i32
    %c0_i32_3 = arith.constant 0 : i32
    return %c0_i32, %c0_i32_0, %c0_i32_1, %c0_i32_2 : i32, i32, i32, i32
  }
  func.func @transform_11(%arg0: i32) -> (i32, i32, i32, i32) {
    %c0_i32 = arith.constant 0 : i32
    %c0_i32_0 = arith.constant 0 : i32
    %c0_i32_1 = arith.constant 0 : i32
    %c0_i32_2 = arith.constant 0 : i32
    %c0_i32_3 = arith.constant 0 : i32
    return %c0_i32, %c0_i32_0, %c0_i32_1, %c0_i32_2 : i32, i32, i32, i32
  }
  func.func @transform_12(%arg0: i32) -> (i32, i32, i32) {
    %c0_i32 = arith.constant 0 : i32
    %c0_i32_0 = arith.constant 0 : i32
    %c0_i32_1 = arith.constant 0 : i32
    %c0_i32_2 = arith.constant 0 : i32
    return %c0_i32, %c0_i32_0, %c0_i32_1 : i32, i32, i32
  }
  func.func @transform_13(%arg0: i32) -> (i32, i32, i32) {
    %c0_i32 = arith.constant 0 : i32
    %c0_i32_0 = arith.constant 0 : i32
    %c0_i32_1 = arith.constant 0 : i32
    %c0_i32_2 = arith.constant 0 : i32
    return %c0_i32, %c0_i32_0, %c0_i32_1 : i32, i32, i32
  }
  func.func @transform_14(%arg0: i32) -> (i32, i32, i32) {
    %c0_i32 = arith.constant 0 : i32
    %c0_i32_0 = arith.constant 0 : i32
    %c0_i32_1 = arith.constant 0 : i32
    %c0_i32_2 = arith.constant 0 : i32
    return %c0_i32, %c0_i32_0, %c0_i32_1 : i32, i32, i32
  }
  func.func @transform_15(%arg0: i32) -> (i32, i32, i32) {
    %c0_i32 = arith.constant 0 : i32
    %c0_i32_0 = arith.constant 0 : i32
    %c0_i32_1 = arith.constant 0 : i32
    %c0_i32_2 = arith.constant 0 : i32
    return %c0_i32, %c0_i32_0, %c0_i32_1 : i32, i32, i32
  }
  func.func @transform_16(%arg0: i32) -> (i32, i32, i32) {
    %c0_i32 = arith.constant 0 : i32
    %c0_i32_0 = arith.constant 0 : i32
    %c0_i32_1 = arith.constant 0 : i32
    %c0_i32_2 = arith.constant 0 : i32
    return %c0_i32, %c0_i32_0, %c0_i32_1 : i32, i32, i32
  }
  func.func @transform_17(%arg0: i32) -> (i32, i32, i32) {
    %c0_i32 = arith.constant 0 : i32
    %c0_i32_0 = arith.constant 0 : i32
    %c0_i32_1 = arith.constant 0 : i32
    %c0_i32_2 = arith.constant 0 : i32
    return %c0_i32, %c0_i32_0, %c0_i32_1 : i32, i32, i32
  }
  func.func @transform_18(%arg0: i32) -> (i32, i32, i32) {
    %c0_i32 = arith.constant 0 : i32
    %c0_i32_0 = arith.constant 0 : i32
    %c0_i32_1 = arith.constant 0 : i32
    %c0_i32_2 = arith.constant 0 : i32
    return %c0_i32, %c0_i32_0, %c0_i32_1 : i32, i32, i32
  }
  func.func @transform_19(%arg0: i32) -> (i32, i32) {
    %c0_i32 = arith.constant 0 : i32
    %c0_i32_0 = arith.constant 0 : i32
    %c0_i32_1 = arith.constant 0 : i32
    return %c0_i32, %c0_i32_0 : i32, i32
  }
  func.func @transform_20(%arg0: i32) -> (i32, i32) {
    %c0_i32 = arith.constant 0 : i32
    %c0_i32_0 = arith.constant 0 : i32
    %c0_i32_1 = arith.constant 0 : i32
    return %c0_i32, %c0_i32_0 : i32, i32
  }
  func.func @transform_21(%arg0: i32) -> (i32, i32, i32) {
    %c0_i32 = arith.constant 0 : i32
    %c0_i32_0 = arith.constant 0 : i32
    %c0_i32_1 = arith.constant 0 : i32
    return %arg0, %c0_i32, %c0_i32_0 : i32, i32, i32
  }
}

</mosaic_0001>

<llo_original>
// kernel: tpu_custom_call.1
$region0: #{tpu_custom_call.1}
  #allocation0 [shape = 'u32[]', space=smem, size = 0x4, offset = 0x4, fixed_abs, tag = 'smem constant byte address 0x4 - core index']
  #allocation1 [shape = 'u32[144,128]{1,0:T(1,128)}', space=vmem, size = 0x12000, scoped, tag = 'internal scratch']
  %s0 = inlined_call_operand.vmem [shape: f32[2,5,192], index: 0, kind: input, shape index: {}]
  %s1 = inlined_call_operand.vmem [shape: f32[192,128], index: 1, kind: input, shape index: {}]
  %s2 = inlined_call_operand.vmem [shape: f32[5,128], index: 2, kind: input, shape index: {}]
  %s3 = inlined_call_operand.vmem [shape: f32[2,1,128], index: 3, kind: input, shape index: {}]
  %s4 = inlined_call_operand.vmem [shape: f32[2,1,128], index: 4, kind: input, shape index: {}]
  %s5 = inlined_call_operand.vmem [shape: f32[2,4,128,32], index: 5, kind: input, shape index: {}]
  %s6 = inlined_call_operand.vmem [shape: f32[2,4,1,32], index: 6, kind: input, shape index: {}]
  %s7 = inlined_call_operand.vmem [shape: f32[2,4,128,32], index: 7, kind: input, shape index: {}]
  %s8 = inlined_call_operand.vmem [shape: f32[2,4,1,32], index: 8, kind: input, shape index: {}]
  %s9 = inlined_call_operand.vmem [shape: f32[2,4,128,32], index: 9, kind: input, shape index: {}]
  %s10 = inlined_call_operand.vmem [shape: f32[2,4,1,32], index: 10, kind: input, shape index: {}]
  %s11 = inlined_call_operand.vmem [shape: f32[2,4,32,128], index: 11, kind: input, shape index: {}]
  %s12 = inlined_call_operand.vmem [shape: f32[2,1,128], index: 12, kind: input, shape index: {}]
  %s13 = inlined_call_operand.vmem [shape: f32[2,1,128], index: 13, kind: input, shape index: {}]
  %s14 = inlined_call_operand.vmem [shape: f32[2,1,128], index: 14, kind: input, shape index: {}]
  %s15 = inlined_call_operand.vmem [shape: f32[2,128,256], index: 15, kind: input, shape index: {}]
  %s16 = inlined_call_operand.vmem [shape: f32[2,1,256], index: 16, kind: input, shape index: {}]
  %s17 = inlined_call_operand.vmem [shape: f32[2,256,128], index: 17, kind: input, shape index: {}]
  %s18 = inlined_call_operand.vmem [shape: f32[2,1,128], index: 18, kind: input, shape index: {}]
  %s19 = inlined_call_operand.vmem [shape: f32[1,128], index: 19, kind: input, shape index: {}]
  %s20 = inlined_call_operand.vmem [shape: f32[1,128], index: 20, kind: input, shape index: {}]
  %s21 = inlined_call_operand.hbm [shape: f32[2,1,128], index: 21, kind: output, shape index: {}]
  %s22 = sld [smem:[#allocation0]]
  $region117: #{tpu_custom_call.1} parent=0
    _
  %s24 = ssub.s32 1, %s22
  %s25 = scalar_select 0, %s24, %s22
  $region1: #{tpu_custom_call.1} parent=0
    #allocation2 [shape = 'u8[1024]{0}', space=vmem, size = 0x400, scoped, tag = 'output window, operand 0']
    #allocation3 [shape = 's32[2]{0}', space=sflag, size = 0x8, scoped, tag = 'scoped memory for tpu_custom_call.1']
    %26 = vsyncpa [#allocation3], 0
    %s27 = scalar_lea.sflag [#allocation3], 1
    %28 = vsyncpa %s27, 0
    loop: start=0, step=1, limit=4
    $region2: #{tpu_custom_call.1} parent=1 // loop_pre_header
      _
    $region3: #{tpu_custom_call.1} parent=1 // loop_header
      %s30 = sphi 0, %s34
      %p31 = scmp.ge.s32.totalorder %s30, 4
      %s40 = sphi 0, %s42
      %s43 = sphi 0, %s40
      %s44 = sphi 0, %s43
      %s60 = sphi 0, %s44
      %s64 = sphi 0, %s64
      %s66 = sphi 0, %s64
      %s67 = sphi 0, %s66
      %s81 = sphi 0, %s67
      %s85 = sphi 0, %s85
      %s87 = sphi 0, %s85
      %s88 = sphi 0, %s87
      %s102 = sphi 0, %s88
      %s106 = sphi 0, %s106
      %s108 = sphi 0, %s106
      %s109 = sphi 0, %s108
      %s123 = sphi 0, %s109
      %s127 = sphi 0, %s127
      %s129 = sphi 0, %s127
      %s130 = sphi 0, %s129
      %s144 = sphi 0, %s130
      %s148 = sphi 0, %s148
      %s150 = sphi 0, %s148
      %s151 = sphi 0, %s150
      %s165 = sphi 0, %s151
      %s169 = sphi 0, %s169
      %s171 = sphi 0, %s169
      %s172 = sphi 0, %s171
      %s186 = sphi 0, %s172
      %s190 = sphi 0, %s190
      %s192 = sphi 0, %s190
      %s193 = sphi 0, %s192
      %s207 = sphi 0, %s193
      %s211 = sphi 0, %s211
      %s213 = sphi 0, %s211
      %s214 = sphi 0, %s213
      %s228 = sphi 0, %s214
      %s232 = sphi 0, %s232
      %s234 = sphi 0, %s232
      %s235 = sphi 0, %s234
      %s249 = sphi 0, %s235
      %s253 = sphi 0, %s253
      %s255 = sphi 0, %s253
      %s256 = sphi 0, %s255
      %s270 = sphi 0, %s256
      %s274 = sphi 0, %s274
      %s276 = sphi 0, %s274
      %s277 = sphi 0, %s276
      %s291 = sphi 0, %s277
      %s295 = sphi 0, %s295
      %s297 = sphi 0, %s295
      %s298 = sphi 0, %s297
      %s312 = sphi 0, %s298
      %s316 = sphi 0, %s316
      %s318 = sphi 0, %s316
      %s319 = sphi 0, %s318
      %s333 = sphi 0, %s319
      %s337 = sphi 0, %s337
      %s339 = sphi 0, %s337
      %s340 = sphi 0, %s339
      %s354 = sphi 0, %s340
      %s358 = sphi 0, %s358
      %s360 = sphi 0, %s358
      %s361 = sphi 0, %s360
      %s375 = sphi 0, %s361
      %s379 = sphi 0, %s379
      %s381 = sphi 0, %s379
      %s382 = sphi 0, %s381
      %s396 = sphi 0, %s382
      %s400 = sphi 0, %s400
      %s402 = sphi 0, %s400
      %s403 = sphi 0, %s402
      %s417 = sphi 0, %s403
      %s421 = sphi 0, %s421
      %s423 = sphi 0, %s421
      %s424 = sphi 0, %s423
      %s438 = sphi 0, %s424
      %s442 = sphi 0, %s442
      %s444 = sphi 0, %s442
      %s445 = sphi 0, %s444
      %s459 = sphi 0, %s445
      %s463 = sphi 0, %s463
      %s465 = sphi 0, %s463
      %s466 = sphi 0, %s465
      %s480 = sphi 0, %s466
      %s486 = sphi 0, %s488
      %s489 = sphi 0, %s486
      %s490 = sphi 0, %s489
      %s506 = sphi 0, %s490
    $region4: #{tpu_custom_call.1} parent=1 // loop_header_branch
      %33 = sbr.rel (%p31) target = $region8
    $region5: #{tpu_custom_call.1} parent=1 // loop_body
      %s35 = ssub.s32 %s30, 1
      %s36 = ssub.s32 %s30, 2
      %s37 = sadd.s32 %s30, 1
      %s38 = ssub.s32 %s30, %s37
      %p39 = scmp.eq.s32.totalorder %s38, 0
      %s41 = sadd.s32 %s40, 1
      %s42 = scalar_select %p39, %s40, %s41
      %p45 = pneg %p39
      %p46 = scmp.eq.s32.totalorder %s30, 1
      %p47 = por %p45, %p46
      %p48 = scmp.ne.s32.totalorder %s40, %s43
      %p49 = scmp.eq.s32.totalorder %s30, 0
      %p50 = por %p48, %p49
      %p51 = scmp.ne.s32.totalorder %s40, %s43
      %p52 = scmp.eq.s32.totalorder %s35, 1
      %p53 = por %p51, %p52
      %p54 = scmp.ne.s32.totalorder %s43, %s44
      %p55 = scmp.eq.s32.totalorder %s35, 0
      %p56 = por %p54, %p55
      %p57 = scmp.ne.s32.totalorder %s43, %s44
      %p58 = scmp.eq.s32.totalorder %s36, 1
      %p59 = por %p57, %p58
      %p61 = scmp.ne.s32.totalorder %s44, %s60
      %p62 = scmp.eq.s32.totalorder %s36, 0
      %p63 = por %p61, %p62
      %s65 = sadd.s32 %s64, 1
      %p68 = scmp.eq.s32.totalorder %s30, 1
      %p69 = scmp.ne.s32.totalorder %s64, %s66
      %p70 = scmp.eq.s32.totalorder %s30, 0
      %p71 = por %p69, %p70
      %p72 = scmp.ne.s32.totalorder %s64, %s66
      %p73 = scmp.eq.s32.totalorder %s35, 1
      %p74 = por %p72, %p73
      %p75 = scmp.ne.s32.totalorder %s66, %s67
      %p76 = scmp.eq.s32.totalorder %s35, 0
      %p77 = por %p75, %p76
      %p78 = scmp.ne.s32.totalorder %s66, %s67
      %p79 = scmp.eq.s32.totalorder %s36, 1
      %p80 = por %p78, %p79
      %p82 = scmp.ne.s32.totalorder %s67, %s81
      %p83 = scmp.eq.s32.totalorder %s36, 0
      %p84 = por %p82, %p83
      %s86 = sadd.s32 %s85, 1
      %p89 = scmp.eq.s32.totalorder %s30, 1
      %p90 = scmp.ne.s32.totalorder %s85, %s87
      %p91 = scmp.eq.s32.totalorder %s30, 0
      %p92 = por %p90, %p91
      %p93 = scmp.ne.s32.totalorder %s85, %s87
      %p94 = scmp.eq.s32.totalorder %s35, 1
      %p95 = por %p93, %p94
      %p96 = scmp.ne.s32.totalorder %s87, %s88
      %p97 = scmp.eq.s32.totalorder %s35, 0
      %p98 = por %p96, %p97
      %p99 = scmp.ne.s32.totalorder %s87, %s88
      %p100 = scmp.eq.s32.totalorder %s36, 1
      %p101 = por %p99, %p100
      %p103 = scmp.ne.s32.totalorder %s88, %s102
      %p104 = scmp.eq.s32.totalorder %s36, 0
      %p105 = por %p103, %p104
      %s107 = sadd.s32 %s106, 1
      %p110 = scmp.eq.s32.totalorder %s30, 1
      %p111 = scmp.ne.s32.totalorder %s106, %s108
      %p112 = scmp.eq.s32.totalorder %s30, 0
      %p113 = por %p111, %p112
      %p114 = scmp.ne.s32.totalorder %s106, %s108
      %p115 = scmp.eq.s32.totalorder %s35, 1
      %p116 = por %p114, %p115
      %p117 = scmp.ne.s32.totalorder %s108, %s109
      %p118 = scmp.eq.s32.totalorder %s35, 0
      %p119 = por %p117, %p118
      %p120 = scmp.ne.s32.totalorder %s108, %s109
      %p121 = scmp.eq.s32.totalorder %s36, 1
      %p122 = por %p120, %p121
      %p124 = scmp.ne.s32.totalorder %s109, %s123
      %p125 = scmp.eq.s32.totalorder %s36, 0
      %p126 = por %p124, %p125
      %s128 = sadd.s32 %s127, 1
      %p131 = scmp.eq.s32.totalorder %s30, 1
      %p132 = scmp.ne.s32.totalorder %s127, %s129
      %p133 = scmp.eq.s32.totalorder %s30, 0
      %p134 = por %p132, %p133
      %p135 = scmp.ne.s32.totalorder %s127, %s129
      %p136 = scmp.eq.s32.totalorder %s35, 1
      %p137 = por %p135, %p136
      %p138 = scmp.ne.s32.totalorder %s129, %s130
      %p139 = scmp.eq.s32.totalorder %s35, 0
      %p140 = por %p138, %p139
      %p141 = scmp.ne.s32.totalorder %s129, %s130
      %p142 = scmp.eq.s32.totalorder %s36, 1
      %p143 = por %p141, %p142
      %p145 = scmp.ne.s32.totalorder %s130, %s144
      %p146 = scmp.eq.s32.totalorder %s36, 0
      %p147 = por %p145, %p146
      %s149 = sadd.s32 %s148, 1
      %p152 = scmp.eq.s32.totalorder %s30, 1
      %p153 = scmp.ne.s32.totalorder %s148, %s150
      %p154 = scmp.eq.s32.totalorder %s30, 0
      %p155 = por %p153, %p154
      %p156 = scmp.ne.s32.totalorder %s148, %s150
      %p157 = scmp.eq.s32.totalorder %s35, 1
      %p158 = por %p156, %p157
      %p159 = scmp.ne.s32.totalorder %s150, %s151
      %p160 = scmp.eq.s32.totalorder %s35, 0
      %p161 = por %p159, %p160
      %p162 = scmp.ne.s32.totalorder %s150, %s151
      %p163 = scmp.eq.s32.totalorder %s36, 1
      %p164 = por %p162, %p163
      %p166 = scmp.ne.s32.totalorder %s151, %s165
      %p167 = scmp.eq.s32.totalorder %s36, 0
      %p168 = por %p166, %p167
      %s170 = sadd.s32 %s169, 1
      %p173 = scmp.eq.s32.totalorder %s30, 1
      %p174 = scmp.ne.s32.totalorder %s169, %s171
      %p175 = scmp.eq.s32.totalorder %s30, 0
      %p176 = por %p174, %p175
      %p177 = scmp.ne.s32.totalorder %s169, %s171
      %p178 = scmp.eq.s32.totalorder %s35, 1
      %p179 = por %p177, %p178
      %p180 = scmp.ne.s32.totalorder %s171, %s172
      %p181 = scmp.eq.s32.totalorder %s35, 0
      %p182 = por %p180, %p181
      %p183 = scmp.ne.s32.totalorder %s171, %s172
      %p184 = scmp.eq.s32.totalorder %s36, 1
      %p185 = por %p183, %p184
      %p187 = scmp.ne.s32.totalorder %s172, %s186
      %p188 = scmp.eq.s32.totalorder %s36, 0
      %p189 = por %p187, %p188
      %s191 = sadd.s32 %s190, 1
      %p194 = scmp.eq.s32.totalorder %s30, 1
      %p195 = scmp.ne.s32.totalorder %s190, %s192
      %p196 = scmp.eq.s32.totalorder %s30, 0
      %p197 = por %p195, %p196
      %p198 = scmp.ne.s32.totalorder %s190, %s192
      %p199 = scmp.eq.s32.totalorder %s35, 1
      %p200 = por %p198, %p199
      %p201 = scmp.ne.s32.totalorder %s192, %s193
      %p202 = scmp.eq.s32.totalorder %s35, 0
      %p203 = por %p201, %p202
      %p204 = scmp.ne.s32.totalorder %s192, %s193
      %p205 = scmp.eq.s32.totalorder %s36, 1
      %p206 = por %p204, %p205
      %p208 = scmp.ne.s32.totalorder %s193, %s207
      %p209 = scmp.eq.s32.totalorder %s36, 0
      %p210 = por %p208, %p209
      %s212 = sadd.s32 %s211, 1
      %p215 = scmp.eq.s32.totalorder %s30, 1
      %p216 = scmp.ne.s32.totalorder %s211, %s213
      %p217 = scmp.eq.s32.totalorder %s30, 0
      %p218 = por %p216, %p217
      %p219 = scmp.ne.s32.totalorder %s211, %s213
      %p220 = scmp.eq.s32.totalorder %s35, 1
      %p221 = por %p219, %p220
      %p222 = scmp.ne.s32.totalorder %s213, %s214
      %p223 = scmp.eq.s32.totalorder %s35, 0
      %p224 = por %p222, %p223
      %p225 = scmp.ne.s32.totalorder %s213, %s214
      %p226 = scmp.eq.s32.totalorder %s36, 1
      %p227 = por %p225, %p226
      %p229 = scmp.ne.s32.totalorder %s214, %s228
      %p230 = scmp.eq.s32.totalorder %s36, 0
      %p231 = por %p229, %p230
      %s233 = sadd.s32 %s232, 1
      %p236 = scmp.eq.s32.totalorder %s30, 1
      %p237 = scmp.ne.s32.totalorder %s232, %s234
      %p238 = scmp.eq.s32.totalorder %s30, 0
      %p239 = por %p237, %p238
      %p240 = scmp.ne.s32.totalorder %s232, %s234
      %p241 = scmp.eq.s32.totalorder %s35, 1
      %p242 = por %p240, %p241
      %p243 = scmp.ne.s32.totalorder %s234, %s235
      %p244 = scmp.eq.s32.totalorder %s35, 0
      %p245 = por %p243, %p244
      %p246 = scmp.ne.s32.totalorder %s234, %s235
      %p247 = scmp.eq.s32.totalorder %s36, 1
      %p248 = por %p246, %p247
      %p250 = scmp.ne.s32.totalorder %s235, %s249
      %p251 = scmp.eq.s32.totalorder %s36, 0
      %p252 = por %p250, %p251
      %s254 = sadd.s32 %s253, 1
      %p257 = scmp.eq.s32.totalorder %s30, 1
      %p258 = scmp.ne.s32.totalorder %s253, %s255
      %p259 = scmp.eq.s32.totalorder %s30, 0
      %p260 = por %p258, %p259
      %p261 = scmp.ne.s32.totalorder %s253, %s255
      %p262 = scmp.eq.s32.totalorder %s35, 1
      %p263 = por %p261, %p262
      %p264 = scmp.ne.s32.totalorder %s255, %s256
      %p265 = scmp.eq.s32.totalorder %s35, 0
      %p266 = por %p264, %p265
      %p267 = scmp.ne.s32.totalorder %s255, %s256
      %p268 = scmp.eq.s32.totalorder %s36, 1
      %p269 = por %p267, %p268
      %p271 = scmp.ne.s32.totalorder %s256, %s270
      %p272 = scmp.eq.s32.totalorder %s36, 0
      %p273 = por %p271, %p272
      %s275 = sadd.s32 %s274, 1
      %p278 = scmp.eq.s32.totalorder %s30, 1
      %p279 = scmp.ne.s32.totalorder %s274, %s276
      %p280 = scmp.eq.s32.totalorder %s30, 0
      %p281 = por %p279, %p280
      %p282 = scmp.ne.s32.totalorder %s274, %s276
      %p283 = scmp.eq.s32.totalorder %s35, 1
      %p284 = por %p282, %p283
      %p285 = scmp.ne.s32.totalorder %s276, %s277
      %p286 = scmp.eq.s32.totalorder %s35, 0
      %p287 = por %p285, %p286
      %p288 = scmp.ne.s32.totalorder %s276, %s277
      %p289 = scmp.eq.s32.totalorder %s36, 1
      %p290 = por %p288, %p289
      %p292 = scmp.ne.s32.totalorder %s277, %s291
      %p293 = scmp.eq.s32.totalorder %s36, 0
      %p294 = por %p292, %p293
      %s296 = sadd.s32 %s295, 1
      %p299 = scmp.eq.s32.totalorder %s30, 1
      %p300 = scmp.ne.s32.totalorder %s295, %s297
      %p301 = scmp.eq.s32.totalorder %s30, 0
      %p302 = por %p300, %p301
      %p303 = scmp.ne.s32.totalorder %s295, %s297
      %p304 = scmp.eq.s32.totalorder %s35, 1
      %p305 = por %p303, %p304
      %p306 = scmp.ne.s32.totalorder %s297, %s298
      %p307 = scmp.eq.s32.totalorder %s35, 0
      %p308 = por %p306, %p307
      %p309 = scmp.ne.s32.totalorder %s297, %s298
      %p310 = scmp.eq.s32.totalorder %s36, 1
      %p311 = por %p309, %p310
      %p313 = scmp.ne.s32.totalorder %s298, %s312
      %p314 = scmp.eq.s32.totalorder %s36, 0
      %p315 = por %p313, %p314
      %s317 = sadd.s32 %s316, 1
      %p320 = scmp.eq.s32.totalorder %s30, 1
      %p321 = scmp.ne.s32.totalorder %s316, %s318
      %p322 = scmp.eq.s32.totalorder %s30, 0
      %p323 = por %p321, %p322
      %p324 = scmp.ne.s32.totalorder %s316, %s318
      %p325 = scmp.eq.s32.totalorder %s35, 1
      %p326 = por %p324, %p325
      %p327 = scmp.ne.s32.totalorder %s318, %s319
      %p328 = scmp.eq.s32.totalorder %s35, 0
      %p329 = por %p327, %p328
      %p330 = scmp.ne.s32.totalorder %s318, %s319
      %p331 = scmp.eq.s32.totalorder %s36, 1
      %p332 = por %p330, %p331
      %p334 = scmp.ne.s32.totalorder %s319, %s333
      %p335 = scmp.eq.s32.totalorder %s36, 0
      %p336 = por %p334, %p335
      %s338 = sadd.s32 %s337, 1
      %p341 = scmp.eq.s32.totalorder %s30, 1
      %p342 = scmp.ne.s32.totalorder %s337, %s339
      %p343 = scmp.eq.s32.totalorder %s30, 0
      %p344 = por %p342, %p343
      %p345 = scmp.ne.s32.totalorder %s337, %s339
      %p346 = scmp.eq.s32.totalorder %s35, 1
      %p347 = por %p345, %p346
      %p348 = scmp.ne.s32.totalorder %s339, %s340
      %p349 = scmp.eq.s32.totalorder %s35, 0
      %p350 = por %p348, %p349
      %p351 = scmp.ne.s32.totalorder %s339, %s340
      %p352 = scmp.eq.s32.totalorder %s36, 1
      %p353 = por %p351, %p352
      %p355 = scmp.ne.s32.totalorder %s340, %s354
      %p356 = scmp.eq.s32.totalorder %s36, 0
      %p357 = por %p355, %p356
      %s359 = sadd.s32 %s358, 1
      %p362 = scmp.eq.s32.totalorder %s30, 1
      %p363 = scmp.ne.s32.totalorder %s358, %s360
      %p364 = scmp.eq.s32.totalorder %s30, 0
      %p365 = por %p363, %p364
      %p366 = scmp.ne.s32.totalorder %s358, %s360
      %p367 = scmp.eq.s32.totalorder %s35, 1
      %p368 = por %p366, %p367
      %p369 = scmp.ne.s32.totalorder %s360, %s361
      %p370 = scmp.eq.s32.totalorder %s35, 0
      %p371 = por %p369, %p370
      %p372 = scmp.ne.s32.totalorder %s360, %s361
      %p373 = scmp.eq.s32.totalorder %s36, 1
      %p374 = por %p372, %p373
      %p376 = scmp.ne.s32.totalorder %s361, %s375
      %p377 = scmp.eq.s32.totalorder %s36, 0
      %p378 = por %p376, %p377
      %s380 = sadd.s32 %s379, 1
      %p383 = scmp.eq.s32.totalorder %s30, 1
      %p384 = scmp.ne.s32.totalorder %s379, %s381
      %p385 = scmp.eq.s32.totalorder %s30, 0
      %p386 = por %p384, %p385
      %p387 = scmp.ne.s32.totalorder %s379, %s381
      %p388 = scmp.eq.s32.totalorder %s35, 1
      %p389 = por %p387, %p388
      %p390 = scmp.ne.s32.totalorder %s381, %s382
      %p391 = scmp.eq.s32.totalorder %s35, 0
      %p392 = por %p390, %p391
      %p393 = scmp.ne.s32.totalorder %s381, %s382
      %p394 = scmp.eq.s32.totalorder %s36, 1
      %p395 = por %p393, %p394
      %p397 = scmp.ne.s32.totalorder %s382, %s396
      %p398 = scmp.eq.s32.totalorder %s36, 0
      %p399 = por %p397, %p398
      %s401 = sadd.s32 %s400, 1
      %p404 = scmp.eq.s32.totalorder %s30, 1
      %p405 = scmp.ne.s32.totalorder %s400, %s402
      %p406 = scmp.eq.s32.totalorder %s30, 0
      %p407 = por %p405, %p406
      %p408 = scmp.ne.s32.totalorder %s400, %s402
      %p409 = scmp.eq.s32.totalorder %s35, 1
      %p410 = por %p408, %p409
      %p411 = scmp.ne.s32.totalorder %s402, %s403
      %p412 = scmp.eq.s32.totalorder %s35, 0
      %p413 = por %p411, %p412
      %p414 = scmp.ne.s32.totalorder %s402, %s403
      %p415 = scmp.eq.s32.totalorder %s36, 1
      %p416 = por %p414, %p415
      %p418 = scmp.ne.s32.totalorder %s403, %s417
      %p419 = scmp.eq.s32.totalorder %s36, 0
      %p420 = por %p418, %p419
      %s422 = sadd.s32 %s421, 1
      %p425 = scmp.eq.s32.totalorder %s30, 1
      %p426 = scmp.ne.s32.totalorder %s421, %s423
      %p427 = scmp.eq.s32.totalorder %s30, 0
      %p428 = por %p426, %p427
      %p429 = scmp.ne.s32.totalorder %s421, %s423
      %p430 = scmp.eq.s32.totalorder %s35, 1
      %p431 = por %p429, %p430
      %p432 = scmp.ne.s32.totalorder %s423, %s424
      %p433 = scmp.eq.s32.totalorder %s35, 0
      %p434 = por %p432, %p433
      %p435 = scmp.ne.s32.totalorder %s423, %s424
      %p436 = scmp.eq.s32.totalorder %s36, 1
      %p437 = por %p435, %p436
      %p439 = scmp.ne.s32.totalorder %s424, %s438
      %p440 = scmp.eq.s32.totalorder %s36, 0
      %p441 = por %p439, %p440
      %s443 = sadd.s32 %s442, 1
      %p446 = scmp.eq.s32.totalorder %s30, 1
      %p447 = scmp.ne.s32.totalorder %s442, %s444
      %p448 = scmp.eq.s32.totalorder %s30, 0
      %p449 = por %p447, %p448
      %p450 = scmp.ne.s32.totalorder %s442, %s444
      %p451 = scmp.eq.s32.totalorder %s35, 1
      %p452 = por %p450, %p451
      %p453 = scmp.ne.s32.totalorder %s444, %s445
      %p454 = scmp.eq.s32.totalorder %s35, 0
      %p455 = por %p453, %p454
      %p456 = scmp.ne.s32.totalorder %s444, %s445
      %p457 = scmp.eq.s32.totalorder %s36, 1
      %p458 = por %p456, %p457
      %p460 = scmp.ne.s32.totalorder %s445, %s459
      %p461 = scmp.eq.s32.totalorder %s36, 0
      %p462 = por %p460, %p461
      %s464 = sadd.s32 %s463, 1
      %p467 = scmp.eq.s32.totalorder %s30, 1
      %p468 = scmp.ne.s32.totalorder %s463, %s465
      %p469 = scmp.eq.s32.totalorder %s30, 0
      %p470 = por %p468, %p469
      %p471 = scmp.ne.s32.totalorder %s463, %s465
      %p472 = scmp.eq.s32.totalorder %s35, 1
      %p473 = por %p471, %p472
      %p474 = scmp.ne.s32.totalorder %s465, %s466
      %p475 = scmp.eq.s32.totalorder %s35, 0
      %p476 = por %p474, %p475
      %p477 = scmp.ne.s32.totalorder %s465, %s466
      %p478 = scmp.eq.s32.totalorder %s36, 1
      %p479 = por %p477, %p478
      %p481 = scmp.ne.s32.totalorder %s466, %s480
      %p482 = scmp.eq.s32.totalorder %s36, 0
      %p483 = por %p481, %p482
      %s484 = ssub.s32 %s30, %s37
      %p485 = scmp.eq.s32.totalorder %s484, 0
      %s487 = sadd.s32 %s486, 1
      %s488 = scalar_select %p485, %s486, %s487
      %p491 = pneg %p485
      %p492 = scmp.eq.s32.totalorder %s30, 1
      %p493 = por %p491, %p492
      %p494 = scmp.ne.s32.totalorder %s486, %s489
      %p495 = scmp.eq.s32.totalorder %s30, 0
      %p496 = por %p494, %p495
      %p497 = scmp.ne.s32.totalorder %s486, %s489
      %p498 = scmp.eq.s32.totalorder %s35, 1
      %p499 = por %p497, %p498
      %p500 = scmp.ne.s32.totalorder %s489, %s490
      %p501 = scmp.eq.s32.totalorder %s35, 0
      %p502 = por %p500, %p501
      %p503 = scmp.ne.s32.totalorder %s489, %s490
      %p504 = scmp.eq.s32.totalorder %s36, 1
      %p505 = por %p503, %p504
      %p507 = scmp.ne.s32.totalorder %s490, %s506
      %p508 = scmp.eq.s32.totalorder %s36, 0
      %p509 = por %p507, %p508
      %p510 = scmp.le.s32.totalorder 1, %s30
      %p511 = scmp.lt.s32.totalorder %s30, 3
      %p512 = pnand %p510, %p511
      %p513 = pneg %p512
      // Predicated region
      $region9: #{tpu_custom_call.1} parent=5 // pred_check
        _
      $region10: #{tpu_custom_call.1} parent=5 // pred_check_branch
        %515 = sbr.rel (%p512) target = $region12
      $region11: #{tpu_custom_call.1} parent=5 // pred_region
        %s516 = ssub.s32 %s30, 1
        // Predicated region
        $region13: #{tpu_custom_call.1} parent=11 // pred_check
          %p517 = pneg %p77
        $region14: #{tpu_custom_call.1} parent=11 // pred_check_branch
          %519 = sbr.rel (%p517) target = $region16
        $region15: #{tpu_custom_call.1} parent=11 // pred_region
          _
        $region16: #{tpu_custom_call.1} parent=11 // pred_fallthru
          _
        // Predicated region
        $region17: #{tpu_custom_call.1} parent=11 // pred_check
          %p520 = pneg %p98
        $region18: #{tpu_custom_call.1} parent=11 // pred_check_branch
          %522 = sbr.rel (%p520) target = $region20
        $region19: #{tpu_custom_call.1} parent=11 // pred_region
          _
        $region20: #{tpu_custom_call.1} parent=11 // pred_fallthru
          _
        // Predicated region
        $region21: #{tpu_custom_call.1} parent=11 // pred_check
          %p523 = pneg %p119
        $region22: #{tpu_custom_call.1} parent=11 // pred_check_branch
          %525 = sbr.rel (%p523) target = $region24
        $region23: #{tpu_custom_call.1} parent=11 // pred_region
          _
        $region24: #{tpu_custom_call.1} parent=11 // pred_fallthru
          _
        // Predicated region
        $region25: #{tpu_custom_call.1} parent=11 // pred_check
          %p526 = pneg %p140
        $region26: #{tpu_custom_call.1} parent=11 // pred_check_branch
          %528 = sbr.rel (%p526) target = $region28
        $region27: #{tpu_custom_call.1} parent=11 // pred_region
          _
        $region28: #{tpu_custom_call.1} parent=11 // pred_fallthru
          _
        // Predicated region
        $region29: #{tpu_custom_call.1} parent=11 // pred_check
          %p529 = pneg %p161
        $region30: #{tpu_custom_call.1} parent=11 // pred_check_branch
          %531 = sbr.rel (%p529) target = $region32
        $region31: #{tpu_custom_call.1} parent=11 // pred_region
          _
        $region32: #{tpu_custom_call.1} parent=11 // pred_fallthru
          _
        // Predicated region
        $region33: #{tpu_custom_call.1} parent=11 // pred_check
          %p532 = pneg %p182
        $region34: #{tpu_custom_call.1} parent=11 // pred_check_branch
          %534 = sbr.rel (%p532) target = $region36
        $region35: #{tpu_custom_call.1} parent=11 // pred_region
          _
        $region36: #{tpu_custom_call.1} parent=11 // pred_fallthru
          _
        // Predicated region
        $region37: #{tpu_custom_call.1} parent=11 // pred_check
          %p535 = pneg %p203
        $region38: #{tpu_custom_call.1} parent=11 // pred_check_branch
          %537 = sbr.rel (%p535) target = $region40
        $region39: #{tpu_custom_call.1} parent=11 // pred_region
          _
        $region40: #{tpu_custom_call.1} parent=11 // pred_fallthru
          _
        // Predicated region
        $region41: #{tpu_custom_call.1} parent=11 // pred_check
          %p538 = pneg %p224
        $region42: #{tpu_custom_call.1} parent=11 // pred_check_branch
          %540 = sbr.rel (%p538) target = $region44
        $region43: #{tpu_custom_call.1} parent=11 // pred_region
          _
        $region44: #{tpu_custom_call.1} parent=11 // pred_fallthru
          _
        // Predicated region
        $region45: #{tpu_custom_call.1} parent=11 // pred_check
          %p541 = pneg %p245
        $region46: #{tpu_custom_call.1} parent=11 // pred_check_branch
          %543 = sbr.rel (%p541) target = $region48
        $region47: #{tpu_custom_call.1} parent=11 // pred_region
          _
        $region48: #{tpu_custom_call.1} parent=11 // pred_fallthru
          _
        // Predicated region
        $region49: #{tpu_custom_call.1} parent=11 // pred_check
          %p544 = pneg %p266
        $region50: #{tpu_custom_call.1} parent=11 // pred_check_branch
          %546 = sbr.rel (%p544) target = $region52
        $region51: #{tpu_custom_call.1} parent=11 // pred_region
          _
        $region52: #{tpu_custom_call.1} parent=11 // pred_fallthru
          _
        // Predicated region
        $region53: #{tpu_custom_call.1} parent=11 // pred_check
          %p547 = pneg %p287
        $region54: #{tpu_custom_call.1} parent=11 // pred_check_branch
          %549 = sbr.rel (%p547) target = $region56
        $region55: #{tpu_custom_call.1} parent=11 // pred_region
          _
        $region56: #{tpu_custom_call.1} parent=11 // pred_fallthru
          _
        // Predicated region
        $region57: #{tpu_custom_call.1} parent=11 // pred_check
          %p550 = pneg %p308
        $region58: #{tpu_custom_call.1} parent=11 // pred_check_branch
          %552 = sbr.rel (%p550) target = $region60
        $region59: #{tpu_custom_call.1} parent=11 // pred_region
          _
        $region60: #{tpu_custom_call.1} parent=11 // pred_fallthru
          _
        // Predicated region
        $region61: #{tpu_custom_call.1} parent=11 // pred_check
          %p553 = pneg %p329
        $region62: #{tpu_custom_call.1} parent=11 // pred_check_branch
          %555 = sbr.rel (%p553) target = $region64
        $region63: #{tpu_custom_call.1} parent=11 // pred_region
          _
        $region64: #{tpu_custom_call.1} parent=11 // pred_fallthru
          _
        // Predicated region
        $region65: #{tpu_custom_call.1} parent=11 // pred_check
          %p556 = pneg %p350
        $region66: #{tpu_custom_call.1} parent=11 // pred_check_branch
          %558 = sbr.rel (%p556) target = $region68
        $region67: #{tpu_custom_call.1} parent=11 // pred_region
          _
        $region68: #{tpu_custom_call.1} parent=11 // pred_fallthru
          _
        // Predicated region
        $region69: #{tpu_custom_call.1} parent=11 // pred_check
          %p559 = pneg %p371
        $region70: #{tpu_custom_call.1} parent=11 // pred_check_branch
          %561 = sbr.rel (%p559) target = $region72
        $region71: #{tpu_custom_call.1} parent=11 // pred_region
          _
        $region72: #{tpu_custom_call.1} parent=11 // pred_fallthru
          _
        // Predicated region
        $region73: #{tpu_custom_call.1} parent=11 // pred_check
          %p562 = pneg %p392
        $region74: #{tpu_custom_call.1} parent=11 // pred_check_branch
          %564 = sbr.rel (%p562) target = $region76
        $region75: #{tpu_custom_call.1} parent=11 // pred_region
          _
        $region76: #{tpu_custom_call.1} parent=11 // pred_fallthru
          _
        // Predicated region
        $region77: #{tpu_custom_call.1} parent=11 // pred_check
          %p565 = pneg %p413
        $region78: #{tpu_custom_call.1} parent=11 // pred_check_branch
          %567 = sbr.rel (%p565) target = $region80
        $region79: #{tpu_custom_call.1} parent=11 // pred_region
          _
        $region80: #{tpu_custom_call.1} parent=11 // pred_fallthru
          _
        // Predicated region
        $region81: #{tpu_custom_call.1} parent=11 // pred_check
          %p568 = pneg %p434
        $region82: #{tpu_custom_call.1} parent=11 // pred_check_branch
          %570 = sbr.rel (%p568) target = $region84
        $region83: #{tpu_custom_call.1} parent=11 // pred_region
          _
        $region84: #{tpu_custom_call.1} parent=11 // pred_fallthru
          _
        // Predicated region
        $region85: #{tpu_custom_call.1} parent=11 // pred_check
          %p571 = pneg %p455
        $region86: #{tpu_custom_call.1} parent=11 // pred_check_branch
          %573 = sbr.rel (%p571) target = $region88
        $region87: #{tpu_custom_call.1} parent=11 // pred_region
          _
        $region88: #{tpu_custom_call.1} parent=11 // pred_fallthru
          _
        // Predicated region
        $region89: #{tpu_custom_call.1} parent=11 // pred_check
          %p574 = pneg %p476
        $region90: #{tpu_custom_call.1} parent=11 // pred_check_branch
          %576 = sbr.rel (%p574) target = $region92
        $region91: #{tpu_custom_call.1} parent=11 // pred_region
          _
        $region92: #{tpu_custom_call.1} parent=11 // pred_fallthru
          _
      $region12: #{tpu_custom_call.1} parent=5 // pred_fallthru
        _
      %p577 = scmp.lt.s32.totalorder %s30, 2
      // Predicated region
      $region93: #{tpu_custom_call.1} parent=5 // pred_check
        %p578 = pneg %p577
      $region94: #{tpu_custom_call.1} parent=5 // pred_check_branch
        %580 = sbr.rel (%p578) target = $region96
      $region95: #{tpu_custom_call.1} parent=5 // pred_region
        // Predicated region
        $region97: #{tpu_custom_call.1} parent=95 // pred_check
          %p581 = pneg %p50
        $region98: #{tpu_custom_call.1} parent=95 // pred_check_branch
          %583 = sbr.rel (%p581) target = $region100
        $region99: #{tpu_custom_call.1} parent=95 // pred_region
          %p584 = scmp.lt.s32.totalorder %s30, 1
          %s585 = scalar_select %p584, %s30, 1
          %s586 = smul.addr %s585, 2
          %s587 = smul.addr %s586, 8
          %s588 = scalar_lea.vmem %s0, %s587
        $region100: #{tpu_custom_call.1} parent=95 // pred_fallthru
          _
      $region96: #{tpu_custom_call.1} parent=5 // pred_fallthru
        _
      %p589 = scmp.le.s32.totalorder 1, %s30
      %p590 = scmp.lt.s32.totalorder %s30, 3
      %p591 = pnand %p589, %p590
      %p592 = pneg %p591
      // Predicated region
      $region101: #{tpu_custom_call.1} parent=5 // pred_check
        _
      $region102: #{tpu_custom_call.1} parent=5 // pred_check_branch
        %594 = sbr.rel (%p591) target = $region104
      $region103: #{tpu_custom_call.1} parent=5 // pred_region
        %s595 = ssub.s32 %s30, 1
        %p596 = scmp.lt.s32.totalorder %s35, 1
        %s597 = scalar_select %p596, %s35, 1
        %s598 = smul.addr %s597, 2
        %s599 = smul.addr %s598, 8
        %s600 = scalar_lea.vmem %s0, %s599
        %p601 = pneg %p56
        %p602 = pneg %p53
        %p603 = pneg %p77
        %p604 = pneg %p74
        %p605 = pneg %p98
        %p606 = pneg %p95
        %p607 = pneg %p119
        %p608 = pneg %p116
        %p609 = pneg %p140
        %p610 = pneg %p137
        %p611 = pneg %p161
        %p612 = pneg %p158
        %p613 = pneg %p182
        %p614 = pneg %p179
        %p615 = pneg %p203
        %p616 = pneg %p200
        %p617 = pneg %p224
        %p618 = pneg %p221
        %p619 = pneg %p245
        %p620 = pneg %p242
        %p621 = pneg %p266
        %p622 = pneg %p263
        %p623 = pneg %p287
        %p624 = pneg %p284
        %p625 = pneg %p308
        %p626 = pneg %p305
        %p627 = pneg %p329
        %p628 = pneg %p326
        %p629 = pneg %p350
        %p630 = pneg %p347
        %p631 = pneg %p371
        %p632 = pneg %p368
        %p633 = pneg %p392
        %p634 = pneg %p389
        %p635 = pneg %p413
        %p636 = pneg %p410
        %p637 = pneg %p434
        %p638 = pneg %p431
        %p639 = pneg %p455
        %p640 = pneg %p452
        %p641 = pneg %p476
        %p642 = pneg %p473
        %p643 = pneg %p502
        %p644 = pneg %p499
        %s645 = sand.u32 %s489, 1
        %s646 = scalar_lea.sflag [#allocation3], %s645
        %s647 = sand.u32 %s489, 1
        %s648 = scalar_lea.vmem [#allocation2], %s647
        %p649 = scmp.lt.s32.totalorder %s35, 1
        %s650 = scalar_select %p649, %s35, 1
        %s651 = smul.addr %s650, 2
        %s652 = smul.addr %s651, 8
        %s653 = scalar_lea.vmem %s0, %s652
        %v654 = vld [vmem:[%s653] sm:$0x1f]
        %v655 = vld [vmem:[%s653 + $0x8] sm:$0x1f]
        %v656 = vld [vmem:[%s1] sm:$0xff]
        %v657 = vld [vmem:[%s1 + $0x8] sm:$0xff]
        %v658 = vld [vmem:[%s1 + $0x10] sm:$0xff]
        %v659 = vld [vmem:[%s1 + $0x18] sm:$0xff]
        %v660 = vld [vmem:[%s1 + $0x20] sm:$0xff]
        %v661 = vld [vmem:[%s1 + $0x28] sm:$0xff]
        %v662 = vld [vmem:[%s1 + $0x30] sm:$0xff]
        %v663 = vld [vmem:[%s1 + $0x38] sm:$0xff]
        %v664 = vld [vmem:[%s1 + $0x40] sm:$0xff]
        %v665 = vld [vmem:[%s1 + $0x48] sm:$0xff]
        %v666 = vld [vmem:[%s1 + $0x50] sm:$0xff]
        %v667 = vld [vmem:[%s1 + $0x58] sm:$0xff]
        %v668 = vld [vmem:[%s1 + $0x60] sm:$0xff]
        %v669 = vld [vmem:[%s1 + $0x68] sm:$0xff]
        %v670 = vld [vmem:[%s1 + $0x70] sm:$0xff]
        %v671 = vld [vmem:[%s1 + $0x78] sm:$0xff]
        %v672 = vld [vmem:[%s1 + $0x80] sm:$0xff]
        %v673 = vld [vmem:[%s1 + $0x88] sm:$0xff]
        %v674 = vld [vmem:[%s1 + $0x90] sm:$0xff]
        %v675 = vld [vmem:[%s1 + $0x98] sm:$0xff]
        %v676 = vld [vmem:[%s1 + $0xa0] sm:$0xff]
        %v677 = vld [vmem:[%s1 + $0xa8] sm:$0xff]
        %v678 = vld [vmem:[%s1 + $0xb0] sm:$0xff]
        %v679 = vld [vmem:[%s1 + $0xb8] sm:$0xff]
        %v680 = vld [vmem:[%s2] sm:$0x1f]
        %vm681 = vcmask 523264
        %v683 = vsel %vm681, %v655, 0
        %685 = vmatprep.subr.mxu0 0.0
        %686 = vmatpush1.msra.mxu0 %v656
        %687 = vmatprep.subr.mxu0 0.0
        %688 = vmatpush1.msra.mxu0 %v657
        %689 = vmatprep.subr.mxu0 0.0
        %690 = vmatpush1.msra.mxu0 %v658
        %691 = vmatprep.subr.mxu0 0.0
        %692 = vmatpush1.msra.mxu0 %v659
        %693 = vmatprep.subr.mxu0 0.0
        %694 = vmatpush1.msra.mxu0 %v660
        %695 = vmatprep.subr.mxu0 0.0
        %696 = vmatpush1.msra.mxu0 %v661
        %697 = vmatprep.subr.mxu0 0.0
        %698 = vmatpush1.msra.mxu0 %v662
        %699 = vmatprep.subr.mxu0 0.0
        %700 = vmatpush1.msra.mxu0 %v663
        %701 = vmatprep.subr.mxu0 0.0
        %702 = vmatpush1.msra.mxu0 %v664
        %703 = vmatprep.subr.mxu0 0.0
        %704 = vmatpush1.msra.mxu0 %v665
        %705 = vmatprep.subr.mxu0 0.0
        %706 = vmatpush1.msra.mxu0 %v666
        %707 = vmatprep.subr.mxu0 0.0
        %708 = vmatpush1.msra.mxu0 %v667
        %709 = vmatprep.subr.mxu0 0.0
        %710 = vmatpush1.msra.mxu0 %v668
        %711 = vmatprep.subr.mxu0 0.0
        %712 = vmatpush1.msra.mxu0 %v669
        %713 = vmatprep.subr.mxu0 0.0
        %714 = vmatpush1.msra.mxu0 %v670
        %715 = vmatprep.subr.mxu0 0.0
        %716 = vmatpush1.msra.mxu0 %v671
        %717 = vmatprep.subr.mxu0 0.0
        %718 = vmatpush1.msra.mxu0 %v672
        %719 = vmatprep.subr.mxu0 0.0
        %720 = vmatpush1.msra.mxu0 %v673
        %721 = vmatprep.subr.mxu0 0.0
        %722 = vmatpush1.msra.mxu0 %v674
        %723 = vmatprep.subr.mxu0 0.0
        %724 = vmatpush1.msra.mxu0 %v675
        %725 = vmatprep.subr.mxu0 0.0
        %726 = vmatpush1.msra.mxu0 %v676
        %727 = vmatprep.subr.mxu0 0.0
        %728 = vmatpush1.msra.mxu0 %v677
        %729 = vmatprep.subr.mxu0 0.0
        %730 = vmatpush1.msra.mxu0 %v678
        %731 = vmatprep.subr.mxu0 0.0
        %732 = vmatpush1.msra.mxu0 %v679
        %733 = vmatprep.subr.mxu0 0.0
        %734 = vmatpush1.msra.mxu0 0.0
        %735 = vmatprep.subr.mxu0 0.0
        %736 = vmatpush1.msra.mxu0 0.0
        %737 = vmatprep.subr.mxu0 0.0
        %738 = vmatpush1.msra.mxu0 0.0
        %739 = vmatprep.subr.mxu0 0.0
        %740 = vmatpush1.msra.mxu0 0.0
        %741 = vmatprep.subr.mxu0 0.0
        %742 = vmatpush1.msra.mxu0 0.0
        %743 = vmatprep.subr.mxu0 0.0
        %744 = vmatpush1.msra.mxu0 0.0
        %745 = vmatprep.subr.mxu0 0.0
        %746 = vmatpush1.msra.mxu0 0.0
        %747 = vmatprep.subr.mxu0 0.0
        %748 = vmatpush1.msra.mxu0 0.0
        %749 = vmatprep.mubr.f32.mxu0 %v683
        %750 = vmatmul.mubr.f32.gmra.mrb[0].mxu0 %v654
        %v751 = vpop.f32.mrb[0].mxu0
        %v752 = vadd.f32 %v680, %v751
        %v753 = vpop.f32.mrb[0].mxu0
        %754 = vdwg.mxu0
        %v755 = vld [vmem:[%s3] sm:$0x1]
        %v756 = vld [vmem:[%s4] sm:$0x1]
        %vm757 = vcmask 1044480
        %v758 = vsel %vm757, %v752, 0.0
        %759 = vadd.xlane.f32.xlu0 %v758
        %v760 = vpop.xlane.xlu0 %759
        %v761 = vrcp.pop 128.0
        %v762 = vmul.f32 %v760, %v761
        %v763 = vsub.f32 %v752, %v762
        %v764 = vmul.f32 %v763, %v763
        %v765 = vsel %vm757, %v764, 0.0
        %766 = vadd.xlane.f32.xlu0 %v765
        %v767 = vpop.xlane.xlu0 %766
        %v768 = vmul.f32 %v767, %v761
        %v769 = vadd.f32 %v768, 1e-06
        %v770 = vrsqrt.pop %v769
        %v771 = vmul.f32 %v763, %v770
        %v773 = vlaneseq
        %v774 = vshrl.u32 %v773, 7
        %v775 = vsub.s32 0, %v774
        %v776 = vrot.slane %v755, %v775
        %v778 = vmul.f32 %v771, %v776
        %v780 = vlaneseq
        %v781 = vshrl.u32 %v780, 7
        %v782 = vsub.s32 0, %v781
        %v783 = vrot.slane %v756, %v782
        %v785 = vadd.f32 %v778, %v783
        %v786 = vld [vmem:[%s5] sm:$0xff]
        %v787 = vld [vmem:[%s5 + $0x8] sm:$0xff]
        %v788 = vld [vmem:[%s5 + $0x10] sm:$0xff]
        %v789 = vld [vmem:[%s5 + $0x18] sm:$0xff]
        %v790 = vld [vmem:[%s5 + $0x20] sm:$0xff]
        %v791 = vld [vmem:[%s5 + $0x28] sm:$0xff]
        %v792 = vld [vmem:[%s5 + $0x30] sm:$0xff]
        %v793 = vld [vmem:[%s5 + $0x38] sm:$0xff]
        %v794 = vld [vmem:[%s5 + $0x40] sm:$0xff]
        %v795 = vld [vmem:[%s5 + $0x48] sm:$0xff]
        %v796 = vld [vmem:[%s5 + $0x50] sm:$0xff]
        %v797 = vld [vmem:[%s5 + $0x58] sm:$0xff]
        %v798 = vld [vmem:[%s5 + $0x60] sm:$0xff]
        %v799 = vld [vmem:[%s5 + $0x68] sm:$0xff]
        %v800 = vld [vmem:[%s5 + $0x70] sm:$0xff]
        %v801 = vld [vmem:[%s5 + $0x78] sm:$0xff]
        %v802 = vld [vmem:[%s6] sm:$0x1]
        %v804 = vlaneseq
        %v805 = vshrl.u32 %v804, 7
        %v806 = vsub.s32 0, %v805
        %v807 = vrot.slane %v802, %v806
        %809 = vmatprep.subr.mxu0 0.0
        %810 = vmatpush1.msra.mxu0 %v786
        %811 = vmatprep.subr.mxu0 0.0
        %812 = vmatpush1.msra.mxu0 %v787
        %813 = vmatprep.subr.mxu0 0.0
        %814 = vmatpush1.msra.mxu0 %v788
        %815 = vmatprep.subr.mxu0 0.0
        %816 = vmatpush1.msra.mxu0 %v789
        %817 = vmatprep.subr.mxu0 0.0
        %818 = vmatpush1.msra.mxu0 %v790
        %819 = vmatprep.subr.mxu0 0.0
        %820 = vmatpush1.msra.mxu0 %v791
        %821 = vmatprep.subr.mxu0 0.0
        %822 = vmatpush1.msra.mxu0 %v792
        %823 = vmatprep.subr.mxu0 0.0
        %824 = vmatpush1.msra.mxu0 %v793
        %825 = vmatprep.subr.mxu0 0.0
        %826 = vmatpush1.msra.mxu0 %v794
        %827 = vmatprep.subr.mxu0 0.0
        %828 = vmatpush1.msra.mxu0 %v795
        %829 = vmatprep.subr.mxu0 0.0
        %830 = vmatpush1.msra.mxu0 %v796
        %831 = vmatprep.subr.mxu0 0.0
        %832 = vmatpush1.msra.mxu0 %v797
        %833 = vmatprep.subr.mxu0 0.0
        %834 = vmatpush1.msra.mxu0 %v798
        %835 = vmatprep.subr.mxu0 0.0
        %836 = vmatpush1.msra.mxu0 %v799
        %837 = vmatprep.subr.mxu0 0.0
        %838 = vmatpush1.msra.mxu0 %v800
        %839 = vmatprep.subr.mxu0 0.0
        %840 = vmatpush1.msra.mxu0 %v801
        %841 = vmatprep.subr.mxu0 0.0
        %842 = vmatpush1.msra.mxu0 0.0
        %843 = vmatprep.subr.mxu0 0.0
        %844 = vmatpush1.msra.mxu0 0.0
        %845 = vmatprep.subr.mxu0 0.0
        %846 = vmatpush1.msra.mxu0 0.0
        %847 = vmatprep.subr.mxu0 0.0
        %848 = vmatpush1.msra.mxu0 0.0
        %849 = vmatprep.subr.mxu0 0.0
        %850 = vmatpush1.msra.mxu0 0.0
        %851 = vmatprep.subr.mxu0 0.0
        %852 = vmatpush1.msra.mxu0 0.0
        %853 = vmatprep.subr.mxu0 0.0
        %854 = vmatpush1.msra.mxu0 0.0
        %855 = vmatprep.subr.mxu0 0.0
        %856 = vmatpush1.msra.mxu0 0.0
        %857 = vmatprep.subr.mxu0 0.0
        %858 = vmatpush1.msra.mxu0 0.0
        %859 = vmatprep.subr.mxu0 0.0
        %860 = vmatpush1.msra.mxu0 0.0
        %861 = vmatprep.subr.mxu0 0.0
        %862 = vmatpush1.msra.mxu0 0.0
        %863 = vmatprep.subr.mxu0 0.0
        %864 = vmatpush1.msra.mxu0 0.0
        %865 = vmatprep.subr.mxu0 0.0
        %866 = vmatpush1.msra.mxu0 0.0
        %867 = vmatprep.subr.mxu0 0.0
        %868 = vmatpush1.msra.mxu0 0.0
        %869 = vmatprep.subr.mxu0 0.0
        %870 = vmatpush1.msra.mxu0 0.0
        %871 = vmatprep.subr.mxu0 0.0
        %872 = vmatpush1.msra.mxu0 0.0
        %873 = vmatprep.mubr.f32.mxu0 0.0
        %874 = vmatmul.mubr.f32.gmra.mrb[0].mxu0 %v785
        %v875 = vpop.f32.mrb[0].mxu0
        %v876 = vadd.f32 %v807, %v875
        %v877 = vpop.f32.mrb[0].mxu0
        %878 = vdwg.mxu0
        %v879 = vld [vmem:[%s7] sm:$0xff]
        %v880 = vld [vmem:[%s7 + $0x8] sm:$0xff]
        %v881 = vld [vmem:[%s7 + $0x10] sm:$0xff]
        %v882 = vld [vmem:[%s7 + $0x18] sm:$0xff]
        %v883 = vld [vmem:[%s7 + $0x20] sm:$0xff]
        %v884 = vld [vmem:[%s7 + $0x28] sm:$0xff]
        %v885 = vld [vmem:[%s7 + $0x30] sm:$0xff]
        %v886 = vld [vmem:[%s7 + $0x38] sm:$0xff]
        %v887 = vld [vmem:[%s7 + $0x40] sm:$0xff]
        %v888 = vld [vmem:[%s7 + $0x48] sm:$0xff]
        %v889 = vld [vmem:[%s7 + $0x50] sm:$0xff]
        %v890 = vld [vmem:[%s7 + $0x58] sm:$0xff]
        %v891 = vld [vmem:[%s7 + $0x60] sm:$0xff]
        %v892 = vld [vmem:[%s7 + $0x68] sm:$0xff]
        %v893 = vld [vmem:[%s7 + $0x70] sm:$0xff]
        %v894 = vld [vmem:[%s7 + $0x78] sm:$0xff]
        %v895 = vld [vmem:[%s8] sm:$0x1]
        %v897 = vlaneseq
        %v898 = vshrl.u32 %v897, 7
        %v899 = vsub.s32 0, %v898
        %v900 = vrot.slane %v895, %v899
        %902 = vmatprep.subr.mxu0 0.0
        %903 = vmatpush1.msra.mxu0 %v879
        %904 = vmatprep.subr.mxu0 0.0
        %905 = vmatpush1.msra.mxu0 %v880
        %906 = vmatprep.subr.mxu0 0.0
        %907 = vmatpush1.msra.mxu0 %v881
        %908 = vmatprep.subr.mxu0 0.0
        %909 = vmatpush1.msra.mxu0 %v882
        %910 = vmatprep.subr.mxu0 0.0
        %911 = vmatpush1.msra.mxu0 %v883
        %912 = vmatprep.subr.mxu0 0.0
        %913 = vmatpush1.msra.mxu0 %v884
        %914 = vmatprep.subr.mxu0 0.0
        %915 = vmatpush1.msra.mxu0 %v885
        %916 = vmatprep.subr.mxu0 0.0
        %917 = vmatpush1.msra.mxu0 %v886
        %918 = vmatprep.subr.mxu0 0.0
        %919 = vmatpush1.msra.mxu0 %v887
        %920 = vmatprep.subr.mxu0 0.0
        %921 = vmatpush1.msra.mxu0 %v888
        %922 = vmatprep.subr.mxu0 0.0
        %923 = vmatpush1.msra.mxu0 %v889
        %924 = vmatprep.subr.mxu0 0.0
        %925 = vmatpush1.msra.mxu0 %v890
        %926 = vmatprep.subr.mxu0 0.0
        %927 = vmatpush1.msra.mxu0 %v891
        %928 = vmatprep.subr.mxu0 0.0
        %929 = vmatpush1.msra.mxu0 %v892
        %930 = vmatprep.subr.mxu0 0.0
        %931 = vmatpush1.msra.mxu0 %v893
        %932 = vmatprep.subr.mxu0 0.0
        %933 = vmatpush1.msra.mxu0 %v894
        %934 = vmatprep.subr.mxu0 0.0
        %935 = vmatpush1.msra.mxu0 0.0
        %936 = vmatprep.subr.mxu0 0.0
        %937 = vmatpush1.msra.mxu0 0.0
        %938 = vmatprep.subr.mxu0 0.0
        %939 = vmatpush1.msra.mxu0 0.0
        %940 = vmatprep.subr.mxu0 0.0
        %941 = vmatpush1.msra.mxu0 0.0
        %942 = vmatprep.subr.mxu0 0.0
        %943 = vmatpush1.msra.mxu0 0.0
        %944 = vmatprep.subr.mxu0 0.0
        %945 = vmatpush1.msra.mxu0 0.0
        %946 = vmatprep.subr.mxu0 0.0
        %947 = vmatpush1.msra.mxu0 0.0
        %948 = vmatprep.subr.mxu0 0.0
        %949 = vmatpush1.msra.mxu0 0.0
        %950 = vmatprep.subr.mxu0 0.0
        %951 = vmatpush1.msra.mxu0 0.0
        %952 = vmatprep.subr.mxu0 0.0
        %953 = vmatpush1.msra.mxu0 0.0
        %954 = vmatprep.subr.mxu0 0.0
        %955 = vmatpush1.msra.mxu0 0.0
        %956 = vmatprep.subr.mxu0 0.0
        %957 = vmatpush1.msra.mxu0 0.0
        %958 = vmatprep.subr.mxu0 0.0
        %959 = vmatpush1.msra.mxu0 0.0
        %960 = vmatprep.subr.mxu0 0.0
        %961 = vmatpush1.msra.mxu0 0.0
        %962 = vmatprep.subr.mxu0 0.0
        %963 = vmatpush1.msra.mxu0 0.0
        %964 = vmatprep.subr.mxu0 0.0
        %965 = vmatpush1.msra.mxu0 0.0
        %966 = vmatprep.mubr.f32.mxu0 0.0
        %967 = vmatmul.mubr.f32.gmra.mrb[0].mxu0 %v785
        %v968 = vpop.f32.mrb[0].mxu0
        %v969 = vadd.f32 %v900, %v968
        %v970 = vpop.f32.mrb[0].mxu0
        %971 = vdwg.mxu0
        %v972 = vld [vmem:[%s9] sm:$0xff]
        %v973 = vld [vmem:[%s9 + $0x8] sm:$0xff]
        %v974 = vld [vmem:[%s9 + $0x10] sm:$0xff]
        %v975 = vld [vmem:[%s9 + $0x18] sm:$0xff]
        %v976 = vld [vmem:[%s9 + $0x20] sm:$0xff]
        %v977 = vld [vmem:[%s9 + $0x28] sm:$0xff]
        %v978 = vld [vmem:[%s9 + $0x30] sm:$0xff]
        %v979 = vld [vmem:[%s9 + $0x38] sm:$0xff]
        %v980 = vld [vmem:[%s9 + $0x40] sm:$0xff]
        %v981 = vld [vmem:[%s9 + $0x48] sm:$0xff]
        %v982 = vld [vmem:[%s9 + $0x50] sm:$0xff]
        %v983 = vld [vmem:[%s9 + $0x58] sm:$0xff]
        %v984 = vld [vmem:[%s9 + $0x60] sm:$0xff]
        %v985 = vld [vmem:[%s9 + $0x68] sm:$0xff]
        %v986 = vld [vmem:[%s9 + $0x70] sm:$0xff]
        %v987 = vld [vmem:[%s9 + $0x78] sm:$0xff]
        %v988 = vld [vmem:[%s10] sm:$0x1]
        %v990 = vlaneseq
        %v991 = vshrl.u32 %v990, 7
        %v992 = vsub.s32 0, %v991
        %v993 = vrot.slane %v988, %v992
        %995 = vmatprep.subr.mxu0 0.0
        %996 = vmatpush1.msra.mxu0 %v972
        %997 = vmatprep.subr.mxu0 0.0
        %998 = vmatpush1.msra.mxu0 %v973
        %999 = vmatprep.subr.mxu0 0.0
        %1000 = vmatpush1.msra.mxu0 %v974
        %1001 = vmatprep.subr.mxu0 0.0
        %1002 = vmatpush1.msra.mxu0 %v975
        %1003 = vmatprep.subr.mxu0 0.0
        %1004 = vmatpush1.msra.mxu0 %v976
        %1005 = vmatprep.subr.mxu0 0.0
        %1006 = vmatpush1.msra.mxu0 %v977
        %1007 = vmatprep.subr.mxu0 0.0
        %1008 = vmatpush1.msra.mxu0 %v978
        %1009 = vmatprep.subr.mxu0 0.0
        %1010 = vmatpush1.msra.mxu0 %v979
        %1011 = vmatprep.subr.mxu0 0.0
        %1012 = vmatpush1.msra.mxu0 %v980
        %1013 = vmatprep.subr.mxu0 0.0
        %1014 = vmatpush1.msra.mxu0 %v981
        %1015 = vmatprep.subr.mxu0 0.0
        %1016 = vmatpush1.msra.mxu0 %v982
        %1017 = vmatprep.subr.mxu0 0.0
        %1018 = vmatpush1.msra.mxu0 %v983
        %1019 = vmatprep.subr.mxu0 0.0
        %1020 = vmatpush1.msra.mxu0 %v984
        %1021 = vmatprep.subr.mxu0 0.0
        %1022 = vmatpush1.msra.mxu0 %v985
        %1023 = vmatprep.subr.mxu0 0.0
        %1024 = vmatpush1.msra.mxu0 %v986
        %1025 = vmatprep.subr.mxu0 0.0
        %1026 = vmatpush1.msra.mxu0 %v987
        %1027 = vmatprep.subr.mxu0 0.0
        %1028 = vmatpush1.msra.mxu0 0.0
        %1029 = vmatprep.subr.mxu0 0.0
        %1030 = vmatpush1.msra.mxu0 0.0
        %1031 = vmatprep.subr.mxu0 0.0
        %1032 = vmatpush1.msra.mxu0 0.0
        %1033 = vmatprep.subr.mxu0 0.0
        %1034 = vmatpush1.msra.mxu0 0.0
        %1035 = vmatprep.subr.mxu0 0.0
        %1036 = vmatpush1.msra.mxu0 0.0
        %1037 = vmatprep.subr.mxu0 0.0
        %1038 = vmatpush1.msra.mxu0 0.0
        %1039 = vmatprep.subr.mxu0 0.0
        %1040 = vmatpush1.msra.mxu0 0.0
        %1041 = vmatprep.subr.mxu0 0.0
        %1042 = vmatpush1.msra.mxu0 0.0
        %1043 = vmatprep.subr.mxu0 0.0
        %1044 = vmatpush1.msra.mxu0 0.0
        %1045 = vmatprep.subr.mxu0 0.0
        %1046 = vmatpush1.msra.mxu0 0.0
        %1047 = vmatprep.subr.mxu0 0.0
        %1048 = vmatpush1.msra.mxu0 0.0
        %1049 = vmatprep.subr.mxu0 0.0
        %1050 = vmatpush1.msra.mxu0 0.0
        %1051 = vmatprep.subr.mxu0 0.0
        %1052 = vmatpush1.msra.mxu0 0.0
        %1053 = vmatprep.subr.mxu0 0.0
        %1054 = vmatpush1.msra.mxu0 0.0
        %1055 = vmatprep.subr.mxu0 0.0
        %1056 = vmatpush1.msra.mxu0 0.0
        %1057 = vmatprep.subr.mxu0 0.0
        %1058 = vmatpush1.msra.mxu0 0.0
        %1059 = vmatprep.mubr.f32.mxu0 0.0
        %1060 = vmatmul.mubr.f32.gmra.mrb[0].mxu0 %v785
        %v1061 = vpop.f32.mrb[0].mxu0
        %v1062 = vadd.f32 %v993, %v1061
        %v1063 = vpop.f32.mrb[0].mxu0
        %1064 = vdwg.mxu0
        %vm1065 = vcmask 261120
        %v1067 = vsel %vm1065, %v876, 0
        %v1070 = vsel %vm1065, %v969, 0
        %1072 = vmatprep.subr.mxu0 0.0
        %1073 = vmatpush1.xpose.msra.mxu0 %v1070
        %1074 = vmatprep.subr.mxu0 0.0
        %1075 = vmatpush1.xpose.msra.mxu0 0.0
        %1076 = vmatprep.subr.mxu0 0.0
        %1077 = vmatpush1.xpose.msra.mxu0 0.0
        %1078 = vmatprep.subr.mxu0 0.0
        %1079 = vmatpush1.xpose.msra.mxu0 0.0
        %1080 = vmatprep.subr.mxu0 0.0
        %1081 = vmatpush1.xpose.msra.mxu0 0.0
        %1082 = vmatprep.subr.mxu0 0.0
        %1083 = vmatpush1.xpose.msra.mxu0 0.0
        %1084 = vmatprep.subr.mxu0 0.0
        %1085 = vmatpush1.xpose.msra.mxu0 0.0
        %1086 = vmatprep.subr.mxu0 0.0
        %1087 = vmatpush1.xpose.msra.mxu0 0.0
        %1088 = vmatprep.subr.mxu0 0.0
        %1089 = vmatpush1.xpose.msra.mxu0 0.0
        %1090 = vmatprep.subr.mxu0 0.0
        %1091 = vmatpush1.xpose.msra.mxu0 0.0
        %1092 = vmatprep.subr.mxu0 0.0
        %1093 = vmatpush1.xpose.msra.mxu0 0.0
        %1094 = vmatprep.subr.mxu0 0.0
        %1095 = vmatpush1.xpose.msra.mxu0 0.0
        %1096 = vmatprep.subr.mxu0 0.0
        %1097 = vmatpush1.xpose.msra.mxu0 0.0
        %1098 = vmatprep.subr.mxu0 0.0
        %1099 = vmatpush1.xpose.msra.mxu0 0.0
        %1100 = vmatprep.subr.mxu0 0.0
        %1101 = vmatpush1.xpose.msra.mxu0 0.0
        %1102 = vmatprep.subr.mxu0 0.0
        %1103 = vmatpush1.xpose.msra.mxu0 0.0
        %1104 = vmatprep.subr.mxu0 0.0
        %1105 = vmatpush1.xpose.msra.mxu0 0.0
        %1106 = vmatprep.subr.mxu0 0.0
        %1107 = vmatpush1.xpose.msra.mxu0 0.0
        %1108 = vmatprep.subr.mxu0 0.0
        %1109 = vmatpush1.xpose.msra.mxu0 0.0
        %1110 = vmatprep.subr.mxu0 0.0
        %1111 = vmatpush1.xpose.msra.mxu0 0.0
        %1112 = vmatprep.subr.mxu0 0.0
        %1113 = vmatpush1.xpose.msra.mxu0 0.0
        %1114 = vmatprep.subr.mxu0 0.0
        %1115 = vmatpush1.xpose.msra.mxu0 0.0
        %1116 = vmatprep.subr.mxu0 0.0
        %1117 = vmatpush1.xpose.msra.mxu0 0.0
        %1118 = vmatprep.subr.mxu0 0.0
        %1119 = vmatpush1.xpose.msra.mxu0 0.0
        %1120 = vmatprep.subr.mxu0 0.0
        %1121 = vmatpush1.xpose.msra.mxu0 0.0
        %1122 = vmatprep.subr.mxu0 0.0
        %1123 = vmatpush1.xpose.msra.mxu0 0.0
        %1124 = vmatprep.subr.mxu0 0.0
        %1125 = vmatpush1.xpose.msra.mxu0 0.0
        %1126 = vmatprep.subr.mxu0 0.0
        %1127 = vmatpush1.xpose.msra.mxu0 0.0
        %1128 = vmatprep.subr.mxu0 0.0
        %1129 = vmatpush1.xpose.msra.mxu0 0.0
        %1130 = vmatprep.subr.mxu0 0.0
        %1131 = vmatpush1.xpose.msra.mxu0 0.0
        %1132 = vmatprep.subr.mxu0 0.0
        %1133 = vmatpush1.xpose.msra.mxu0 0.0
        %1134 = vmatprep.subr.mxu0 0.0
        %1135 = vmatpush1.xpose.msra.mxu0 0.0
        %1136 = vmatprep.mubr.f32.mxu0 0.0
        %1137 = vmatmul.mubr.f32.gmra.mrb[0].mxu0 %v1067
        %v1138 = vpop.f32.mrb[0].mxu0
        %v1139 = vadd.f32 0.0, %v1138
        %v1140 = vpop.f32.mrb[0].mxu0
        %1141 = vdwg.mxu0
        %v1142 = vmul.f32 %v1139, 0.17677669
        %vm1143 = vcmask 36864
        %v1144 = vsel %vm1143, %v1142, -inf
        %1145 = vmax.xlane.f32.xlu0 %v1144
        %v1146 = vpop.xlane.xlu0 %1145
        %v1147 = vsub.f32 %v1142, %v1146
        %v1148 = vmul.f32 %v1147, 1.442695
        %v1149 = vpow.pop %v1148
        %v1150 = vsel %vm1143, %v1149, 0.0
        %1151 = vadd.xlane.f32.xlu0 %v1150
        %v1152 = vpop.xlane.xlu0 %1151
        %v1153 = vrcp.pop %v1152
        %v1154 = vmul.f32 %v1149, %v1153
        %vm1155 = vcmask 39936
        %v1157 = vsel %vm1155, %v1154, 0
        %v1160 = vsel %vm757, %v1062, 0
        %1162 = vmatprep.subr.mxu0 0.0
        %1163 = vmatpush1.msra.mxu0 %v1160
        %1164 = vmatprep.subr.mxu0 0.0
        %1165 = vmatpush1.msra.mxu0 0.0
        %1166 = vmatprep.subr.mxu0 0.0
        %1167 = vmatpush1.msra.mxu0 0.0
        %1168 = vmatprep.subr.mxu0 0.0
        %1169 = vmatpush1.msra.mxu0 0.0
        %1170 = vmatprep.subr.mxu0 0.0
        %1171 = vmatpush1.msra.mxu0 0.0
        %1172 = vmatprep.subr.mxu0 0.0
        %1173 = vmatpush1.msra.mxu0 0.0
        %1174 = vmatprep.subr.mxu0 0.0
        %1175 = vmatpush1.msra.mxu0 0.0
        %1176 = vmatprep.subr.mxu0 0.0
        %1177 = vmatpush1.msra.mxu0 0.0
        %1178 = vmatprep.subr.mxu0 0.0
        %1179 = vmatpush1.msra.mxu0 0.0
        %1180 = vmatprep.subr.mxu0 0.0
        %1181 = vmatpush1.msra.mxu0 0.0
        %1182 = vmatprep.subr.mxu0 0.0
        %1183 = vmatpush1.msra.mxu0 0.0
        %1184 = vmatprep.subr.mxu0 0.0
        %1185 = vmatpush1.msra.mxu0 0.0
        %1186 = vmatprep.subr.mxu0 0.0
        %1187 = vmatpush1.msra.mxu0 0.0
        %1188 = vmatprep.subr.mxu0 0.0
        %1189 = vmatpush1.msra.mxu0 0.0
        %1190 = vmatprep.subr.mxu0 0.0
        %1191 = vmatpush1.msra.mxu0 0.0
        %1192 = vmatprep.subr.mxu0 0.0
        %1193 = vmatpush1.msra.mxu0 0.0
        %1194 = vmatprep.subr.mxu0 0.0
        %1195 = vmatpush1.msra.mxu0 0.0
        %1196 = vmatprep.subr.mxu0 0.0
        %1197 = vmatpush1.msra.mxu0 0.0
        %1198 = vmatprep.subr.mxu0 0.0
        %1199 = vmatpush1.msra.mxu0 0.0
        %1200 = vmatprep.subr.mxu0 0.0
        %1201 = vmatpush1.msra.mxu0 0.0
        %1202 = vmatprep.subr.mxu0 0.0
        %1203 = vmatpush1.msra.mxu0 0.0
        %1204 = vmatprep.subr.mxu0 0.0
        %1205 = vmatpush1.msra.mxu0 0.0
        %1206 = vmatprep.subr.mxu0 0.0
        %1207 = vmatpush1.msra.mxu0 0.0
        %1208 = vmatprep.subr.mxu0 0.0
        %1209 = vmatpush1.msra.mxu0 0.0
        %1210 = vmatprep.subr.mxu0 0.0
        %1211 = vmatpush1.msra.mxu0 0.0
        %1212 = vmatprep.subr.mxu0 0.0
        %1213 = vmatpush1.msra.mxu0 0.0
        %1214 = vmatprep.subr.mxu0 0.0
        %1215 = vmatpush1.msra.mxu0 0.0
        %1216 = vmatprep.subr.mxu0 0.0
        %1217 = vmatpush1.msra.mxu0 0.0
        %1218 = vmatprep.subr.mxu0 0.0
        %1219 = vmatpush1.msra.mxu0 0.0
        %1220 = vmatprep.subr.mxu0 0.0
        %1221 = vmatpush1.msra.mxu0 0.0
        %1222 = vmatprep.subr.mxu0 0.0
        %1223 = vmatpush1.msra.mxu0 0.0
        %1224 = vmatprep.subr.mxu0 0.0
        %1225 = vmatpush1.msra.mxu0 0.0
        %1226 = vmatprep.mubr.f32.mxu0 0.0
        %1227 = vmatmul.mubr.f32.gmra.mrb[0].mxu0 %v1157
        %v1228 = vpop.f32.mrb[0].mxu0
        %v1229 = vadd.f32 0.0, %v1228
        %v1230 = vpop.f32.mrb[0].mxu0
        %1231 = vdwg.mxu0
        %v1232 = vld [vmem:[%s11] sm:$0xff]
        %v1233 = vld [vmem:[%s11 + $0x8] sm:$0xff]
        %v1234 = vld [vmem:[%s11 + $0x10] sm:$0xff]
        %v1235 = vld [vmem:[%s11 + $0x18] sm:$0xff]
        %s1236 = scalar_lea.vmem %s5, 128
        %v1237 = vld [vmem:[%s1236] sm:$0xff]
        %v1238 = vld [vmem:[%s1236 + $0x8] sm:$0xff]
        %v1239 = vld [vmem:[%s1236 + $0x10] sm:$0xff]
        %v1240 = vld [vmem:[%s1236 + $0x18] sm:$0xff]
        %v1241 = vld [vmem:[%s1236 + $0x20] sm:$0xff]
        %v1242 = vld [vmem:[%s1236 + $0x28] sm:$0xff]
        %v1243 = vld [vmem:[%s1236 + $0x30] sm:$0xff]
        %v1244 = vld [vmem:[%s1236 + $0x38] sm:$0xff]
        %v1245 = vld [vmem:[%s1236 + $0x40] sm:$0xff]
        %v1246 = vld [vmem:[%s1236 + $0x48] sm:$0xff]
        %v1247 = vld [vmem:[%s1236 + $0x50] sm:$0xff]
        %v1248 = vld [vmem:[%s1236 + $0x58] sm:$0xff]
        %v1249 = vld [vmem:[%s1236 + $0x60] sm:$0xff]
        %v1250 = vld [vmem:[%s1236 + $0x68] sm:$0xff]
        %v1251 = vld [vmem:[%s1236 + $0x70] sm:$0xff]
        %v1252 = vld [vmem:[%s1236 + $0x78] sm:$0xff]
        %s1253 = scalar_lea.vmem %s6, 1
        %v1254 = vld [vmem:[%s1253] sm:$0x1]
        %v1256 = vlaneseq
        %v1257 = vshrl.u32 %v1256, 7
        %v1258 = vsub.s32 0, %v1257
        %v1259 = vrot.slane %v1254, %v1258
        %1261 = vmatprep.subr.mxu0 0.0
        %1262 = vmatpush1.msra.mxu0 %v1237
        %1263 = vmatprep.subr.mxu0 0.0
        %1264 = vmatpush1.msra.mxu0 %v1238
        %1265 = vmatprep.subr.mxu0 0.0
        %1266 = vmatpush1.msra.mxu0 %v1239
        %1267 = vmatprep.subr.mxu0 0.0
        %1268 = vmatpush1.msra.mxu0 %v1240
        %1269 = vmatprep.subr.mxu0 0.0
        %1270 = vmatpush1.msra.mxu0 %v1241
        %1271 = vmatprep.subr.mxu0 0.0
        %1272 = vmatpush1.msra.mxu0 %v1242
        %1273 = vmatprep.subr.mxu0 0.0
        %1274 = vmatpush1.msra.mxu0 %v1243
        %1275 = vmatprep.subr.mxu0 0.0
        %1276 = vmatpush1.msra.mxu0 %v1244
        %1277 = vmatprep.subr.mxu0 0.0
        %1278 = vmatpush1.msra.mxu0 %v1245
        %1279 = vmatprep.subr.mxu0 0.0
        %1280 = vmatpush1.msra.mxu0 %v1246
        %1281 = vmatprep.subr.mxu0 0.0
        %1282 = vmatpush1.msra.mxu0 %v1247
        %1283 = vmatprep.subr.mxu0 0.0
        %1284 = vmatpush1.msra.mxu0 %v1248
        %1285 = vmatprep.subr.mxu0 0.0
        %1286 = vmatpush1.msra.mxu0 %v1249
        %1287 = vmatprep.subr.mxu0 0.0
        %1288 = vmatpush1.msra.mxu0 %v1250
        %1289 = vmatprep.subr.mxu0 0.0
        %1290 = vmatpush1.msra.mxu0 %v1251
        %1291 = vmatprep.subr.mxu0 0.0
        %1292 = vmatpush1.msra.mxu0 %v1252
        %1293 = vmatprep.subr.mxu0 0.0
        %1294 = vmatpush1.msra.mxu0 0.0
        %1295 = vmatprep.subr.mxu0 0.0
        %1296 = vmatpush1.msra.mxu0 0.0
        %1297 = vmatprep.subr.mxu0 0.0
        %1298 = vmatpush1.msra.mxu0 0.0
        %1299 = vmatprep.subr.mxu0 0.0
        %1300 = vmatpush1.msra.mxu0 0.0
        %1301 = vmatprep.subr.mxu0 0.0
        %1302 = vmatpush1.msra.mxu0 0.0
        %1303 = vmatprep.subr.mxu0 0.0
        %1304 = vmatpush1.msra.mxu0 0.0
        %1305 = vmatprep.subr.mxu0 0.0
        %1306 = vmatpush1.msra.mxu0 0.0
        %1307 = vmatprep.subr.mxu0 0.0
        %1308 = vmatpush1.msra.mxu0 0.0
        %1309 = vmatprep.subr.mxu0 0.0
        %1310 = vmatpush1.msra.mxu0 0.0
        %1311 = vmatprep.subr.mxu0 0.0
        %1312 = vmatpush1.msra.mxu0 0.0
        %1313 = vmatprep.subr.mxu0 0.0
        %1314 = vmatpush1.msra.mxu0 0.0
        %1315 = vmatprep.subr.mxu0 0.0
        %1316 = vmatpush1.msra.mxu0 0.0
        %1317 = vmatprep.subr.mxu0 0.0
        %1318 = vmatpush1.msra.mxu0 0.0
        %1319 = vmatprep.subr.mxu0 0.0
        %1320 = vmatpush1.msra.mxu0 0.0
        %1321 = vmatprep.subr.mxu0 0.0
        %1322 = vmatpush1.msra.mxu0 0.0
        %1323 = vmatprep.subr.mxu0 0.0
        %1324 = vmatpush1.msra.mxu0 0.0
        %1325 = vmatprep.mubr.f32.mxu0 0.0
        %1326 = vmatmul.mubr.f32.gmra.mrb[0].mxu0 %v785
        %v1327 = vpop.f32.mrb[0].mxu0
        %v1328 = vadd.f32 %v1259, %v1327
        %v1329 = vpop.f32.mrb[0].mxu0
        %1330 = vdwg.mxu0
        %s1331 = scalar_lea.vmem %s7, 128
        %v1332 = vld [vmem:[%s1331] sm:$0xff]
        %v1333 = vld [vmem:[%s1331 + $0x8] sm:$0xff]
        %v1334 = vld [vmem:[%s1331 + $0x10] sm:$0xff]
        %v1335 = vld [vmem:[%s1331 + $0x18] sm:$0xff]
        %v1336 = vld [vmem:[%s1331 + $0x20] sm:$0xff]
        %v1337 = vld [vmem:[%s1331 + $0x28] sm:$0xff]
        %v1338 = vld [vmem:[%s1331 + $0x30] sm:$0xff]
        %v1339 = vld [vmem:[%s1331 + $0x38] sm:$0xff]
        %v1340 = vld [vmem:[%s1331 + $0x40] sm:$0xff]
        %v1341 = vld [vmem:[%s1331 + $0x48] sm:$0xff]
        %v1342 = vld [vmem:[%s1331 + $0x50] sm:$0xff]
        %v1343 = vld [vmem:[%s1331 + $0x58] sm:$0xff]
        %v1344 = vld [vmem:[%s1331 + $0x60] sm:$0xff]
        %v1345 = vld [vmem:[%s1331 + $0x68] sm:$0xff]
        %v1346 = vld [vmem:[%s1331 + $0x70] sm:$0xff]
        %v1347 = vld [vmem:[%s1331 + $0x78] sm:$0xff]
        %s1348 = scalar_lea.vmem %s8, 1
        %v1349 = vld [vmem:[%s1348] sm:$0x1]
        %v1351 = vlaneseq
        %v1352 = vshrl.u32 %v1351, 7
        %v1353 = vsub.s32 0, %v1352
        %v1354 = vrot.slane %v1349, %v1353
        %1356 = vmatprep.subr.mxu0 0.0
        %1357 = vmatpush1.msra.mxu0 %v1332
        %1358 = vmatprep.subr.mxu0 0.0
        %1359 = vmatpush1.msra.mxu0 %v1333
        %1360 = vmatprep.subr.mxu0 0.0
        %1361 = vmatpush1.msra.mxu0 %v1334
        %1362 = vmatprep.subr.mxu0 0.0
        %1363 = vmatpush1.msra.mxu0 %v1335
        %1364 = vmatprep.subr.mxu0 0.0
        %1365 = vmatpush1.msra.mxu0 %v1336
        %1366 = vmatprep.subr.mxu0 0.0
        %1367 = vmatpush1.msra.mxu0 %v1337
        %1368 = vmatprep.subr.mxu0 0.0
        %1369 = vmatpush1.msra.mxu0 %v1338
        %1370 = vmatprep.subr.mxu0 0.0
        %1371 = vmatpush1.msra.mxu0 %v1339
        %1372 = vmatprep.subr.mxu0 0.0
        %1373 = vmatpush1.msra.mxu0 %v1340
        %1374 = vmatprep.subr.mxu0 0.0
        %1375 = vmatpush1.msra.mxu0 %v1341
        %1376 = vmatprep.subr.mxu0 0.0
        %1377 = vmatpush1.msra.mxu0 %v1342
        %1378 = vmatprep.subr.mxu0 0.0
        %1379 = vmatpush1.msra.mxu0 %v1343
        %1380 = vmatprep.subr.mxu0 0.0
        %1381 = vmatpush1.msra.mxu0 %v1344
        %1382 = vmatprep.subr.mxu0 0.0
        %1383 = vmatpush1.msra.mxu0 %v1345
        %1384 = vmatprep.subr.mxu0 0.0
        %1385 = vmatpush1.msra.mxu0 %v1346
        %1386 = vmatprep.subr.mxu0 0.0
        %1387 = vmatpush1.msra.mxu0 %v1347
        %1388 = vmatprep.subr.mxu0 0.0
        %1389 = vmatpush1.msra.mxu0 0.0
        %1390 = vmatprep.subr.mxu0 0.0
        %1391 = vmatpush1.msra.mxu0 0.0
        %1392 = vmatprep.subr.mxu0 0.0
        %1393 = vmatpush1.msra.mxu0 0.0
        %1394 = vmatprep.subr.mxu0 0.0
        %1395 = vmatpush1.msra.mxu0 0.0
        %1396 = vmatprep.subr.mxu0 0.0
        %1397 = vmatpush1.msra.mxu0 0.0
        %1398 = vmatprep.subr.mxu0 0.0
        %1399 = vmatpush1.msra.mxu0 0.0
        %1400 = vmatprep.subr.mxu0 0.0
        %1401 = vmatpush1.msra.mxu0 0.0
        %1402 = vmatprep.subr.mxu0 0.0
        %1403 = vmatpush1.msra.mxu0 0.0
        %1404 = vmatprep.subr.mxu0 0.0
        %1405 = vmatpush1.msra.mxu0 0.0
        %1406 = vmatprep.subr.mxu0 0.0
        %1407 = vmatpush1.msra.mxu0 0.0
        %1408 = vmatprep.subr.mxu0 0.0
        %1409 = vmatpush1.msra.mxu0 0.0
        %1410 = vmatprep.subr.mxu0 0.0
        %1411 = vmatpush1.msra.mxu0 0.0
        %1412 = vmatprep.subr.mxu0 0.0
        %1413 = vmatpush1.msra.mxu0 0.0
        %1414 = vmatprep.subr.mxu0 0.0
        %1415 = vmatpush1.msra.mxu0 0.0
        %1416 = vmatprep.subr.mxu0 0.0
        %1417 = vmatpush1.msra.mxu0 0.0
        %1418 = vmatprep.subr.mxu0 0.0
        %1419 = vmatpush1.msra.mxu0 0.0
        %1420 = vmatprep.mubr.f32.mxu0 0.0
        %1421 = vmatmul.mubr.f32.gmra.mrb[0].mxu0 %v785
        %v1422 = vpop.f32.mrb[0].mxu0
        %v1423 = vadd.f32 %v1354, %v1422
        %v1424 = vpop.f32.mrb[0].mxu0
        %1425 = vdwg.mxu0
        %s1426 = scalar_lea.vmem %s9, 128
        %v1427 = vld [vmem:[%s1426] sm:$0xff]
        %v1428 = vld [vmem:[%s1426 + $0x8] sm:$0xff]
        %v1429 = vld [vmem:[%s1426 + $0x10] sm:$0xff]
        %v1430 = vld [vmem:[%s1426 + $0x18] sm:$0xff]
        %v1431 = vld [vmem:[%s1426 + $0x20] sm:$0xff]
        %v1432 = vld [vmem:[%s1426 + $0x28] sm:$0xff]
        %v1433 = vld [vmem:[%s1426 + $0x30] sm:$0xff]
        %v1434 = vld [vmem:[%s1426 + $0x38] sm:$0xff]
        %v1435 = vld [vmem:[%s1426 + $0x40] sm:$0xff]
        %v1436 = vld [vmem:[%s1426 + $0x48] sm:$0xff]
        %v1437 = vld [vmem:[%s1426 + $0x50] sm:$0xff]
        %v1438 = vld [vmem:[%s1426 + $0x58] sm:$0xff]
        %v1439 = vld [vmem:[%s1426 + $0x60] sm:$0xff]
        %v1440 = vld [vmem:[%s1426 + $0x68] sm:$0xff]
        %v1441 = vld [vmem:[%s1426 + $0x70] sm:$0xff]
        %v1442 = vld [vmem:[%s1426 + $0x78] sm:$0xff]
        %s1443 = scalar_lea.vmem %s10, 1
        %v1444 = vld [vmem:[%s1443] sm:$0x1]
        %v1446 = vlaneseq
        %v1447 = vshrl.u32 %v1446, 7
        %v1448 = vsub.s32 0, %v1447
        %v1449 = vrot.slane %v1444, %v1448
        %1451 = vmatprep.subr.mxu0 0.0
        %1452 = vmatpush1.msra.mxu0 %v1427
        %1453 = vmatprep.subr.mxu0 0.0
        %1454 = vmatpush1.msra.mxu0 %v1428
        %1455 = vmatprep.subr.mxu0 0.0
        %1456 = vmatpush1.msra.mxu0 %v1429
        %1457 = vmatprep.subr.mxu0 0.0
        %1458 = vmatpush1.msra.mxu0 %v1430
        %1459 = vmatprep.subr.mxu0 0.0
        %1460 = vmatpush1.msra.mxu0 %v1431
        %1461 = vmatprep.subr.mxu0 0.0
        %1462 = vmatpush1.msra.mxu0 %v1432
        %1463 = vmatprep.subr.mxu0 0.0
        %1464 = vmatpush1.msra.mxu0 %v1433
        %1465 = vmatprep.subr.mxu0 0.0
        %1466 = vmatpush1.msra.mxu0 %v1434
        %1467 = vmatprep.subr.mxu0 0.0
        %1468 = vmatpush1.msra.mxu0 %v1435
        %1469 = vmatprep.subr.mxu0 0.0
        %1470 = vmatpush1.msra.mxu0 %v1436
        %1471 = vmatprep.subr.mxu0 0.0
        %1472 = vmatpush1.msra.mxu0 %v1437
        %1473 = vmatprep.subr.mxu0 0.0
        %1474 = vmatpush1.msra.mxu0 %v1438
        %1475 = vmatprep.subr.mxu0 0.0
        %1476 = vmatpush1.msra.mxu0 %v1439
        %1477 = vmatprep.subr.mxu0 0.0
        %1478 = vmatpush1.msra.mxu0 %v1440
        %1479 = vmatprep.subr.mxu0 0.0
        %1480 = vmatpush1.msra.mxu0 %v1441
        %1481 = vmatprep.subr.mxu0 0.0
        %1482 = vmatpush1.msra.mxu0 %v1442
        %1483 = vmatprep.subr.mxu0 0.0
        %1484 = vmatpush1.msra.mxu0 0.0
        %1485 = vmatprep.subr.mxu0 0.0
        %1486 = vmatpush1.msra.mxu0 0.0
        %1487 = vmatprep.subr.mxu0 0.0
        %1488 = vmatpush1.msra.mxu0 0.0
        %1489 = vmatprep.subr.mxu0 0.0
        %1490 = vmatpush1.msra.mxu0 0.0
        %1491 = vmatprep.subr.mxu0 0.0
        %1492 = vmatpush1.msra.mxu0 0.0
        %1493 = vmatprep.subr.mxu0 0.0
        %1494 = vmatpush1.msra.mxu0 0.0
        %1495 = vmatprep.subr.mxu0 0.0
        %1496 = vmatpush1.msra.mxu0 0.0
        %1497 = vmatprep.subr.mxu0 0.0
        %1498 = vmatpush1.msra.mxu0 0.0
        %1499 = vmatprep.subr.mxu0 0.0
        %1500 = vmatpush1.msra.mxu0 0.0
        %1501 = vmatprep.subr.mxu0 0.0
        %1502 = vmatpush1.msra.mxu0 0.0
        %1503 = vmatprep.subr.mxu0 0.0
        %1504 = vmatpush1.msra.mxu0 0.0
        %1505 = vmatprep.subr.mxu0 0.0
        %1506 = vmatpush1.msra.mxu0 0.0
        %1507 = vmatprep.subr.mxu0 0.0
        %1508 = vmatpush1.msra.mxu0 0.0
        %1509 = vmatprep.subr.mxu0 0.0
        %1510 = vmatpush1.msra.mxu0 0.0
        %1511 = vmatprep.subr.mxu0 0.0
        %1512 = vmatpush1.msra.mxu0 0.0
        %1513 = vmatprep.subr.mxu0 0.0
        %1514 = vmatpush1.msra.mxu0 0.0
        %1515 = vmatprep.mubr.f32.mxu0 0.0
        %1516 = vmatmul.mubr.f32.gmra.mrb[0].mxu0 %v785
        %v1517 = vpop.f32.mrb[0].mxu0
        %v1518 = vadd.f32 %v1449, %v1517
        %v1519 = vpop.f32.mrb[0].mxu0
        %1520 = vdwg.mxu0
        %v1522 = vsel %vm1065, %v1328, 0
        %v1525 = vsel %vm1065, %v1423, 0
        %1527 = vmatprep.subr.mxu0 0.0
        %1528 = vmatpush1.xpose.msra.mxu0 %v1525
        %1529 = vmatprep.subr.mxu0 0.0
        %1530 = vmatpush1.xpose.msra.mxu0 0.0
        %1531 = vmatprep.subr.mxu0 0.0
        %1532 = vmatpush1.xpose.msra.mxu0 0.0
        %1533 = vmatprep.subr.mxu0 0.0
        %1534 = vmatpush1.xpose.msra.mxu0 0.0
        %1535 = vmatprep.subr.mxu0 0.0
        %1536 = vmatpush1.xpose.msra.mxu0 0.0
        %1537 = vmatprep.subr.mxu0 0.0
        %1538 = vmatpush1.xpose.msra.mxu0 0.0
        %1539 = vmatprep.subr.mxu0 0.0
        %1540 = vmatpush1.xpose.msra.mxu0 0.0
        %1541 = vmatprep.subr.mxu0 0.0
        %1542 = vmatpush1.xpose.msra.mxu0 0.0
        %1543 = vmatprep.subr.mxu0 0.0
        %1544 = vmatpush1.xpose.msra.mxu0 0.0
        %1545 = vmatprep.subr.mxu0 0.0
        %1546 = vmatpush1.xpose.msra.mxu0 0.0
        %1547 = vmatprep.subr.mxu0 0.0
        %1548 = vmatpush1.xpose.msra.mxu0 0.0
        %1549 = vmatprep.subr.mxu0 0.0
        %1550 = vmatpush1.xpose.msra.mxu0 0.0
        %1551 = vmatprep.subr.mxu0 0.0
        %1552 = vmatpush1.xpose.msra.mxu0 0.0
        %1553 = vmatprep.subr.mxu0 0.0
        %1554 = vmatpush1.xpose.msra.mxu0 0.0
        %1555 = vmatprep.subr.mxu0 0.0
        %1556 = vmatpush1.xpose.msra.mxu0 0.0
        %1557 = vmatprep.subr.mxu0 0.0
        %1558 = vmatpush1.xpose.msra.mxu0 0.0
        %1559 = vmatprep.subr.mxu0 0.0
        %1560 = vmatpush1.xpose.msra.mxu0 0.0
        %1561 = vmatprep.subr.mxu0 0.0
        %1562 = vmatpush1.xpose.msra.mxu0 0.0
        %1563 = vmatprep.subr.mxu0 0.0
        %1564 = vmatpush1.xpose.msra.mxu0 0.0
        %1565 = vmatprep.subr.mxu0 0.0
        %1566 = vmatpush1.xpose.msra.mxu0 0.0
        %1567 = vmatprep.subr.mxu0 0.0
        %1568 = vmatpush1.xpose.msra.mxu0 0.0
        %1569 = vmatprep.subr.mxu0 0.0
        %1570 = vmatpush1.xpose.msra.mxu0 0.0
        %1571 = vmatprep.subr.mxu0 0.0
        %1572 = vmatpush1.xpose.msra.mxu0 0.0
        %1573 = vmatprep.subr.mxu0 0.0
        %1574 = vmatpush1.xpose.msra.mxu0 0.0
        %1575 = vmatprep.subr.mxu0 0.0
        %1576 = vmatpush1.xpose.msra.mxu0 0.0
        %1577 = vmatprep.subr.mxu0 0.0
        %1578 = vmatpush1.xpose.msra.mxu0 0.0
        %1579 = vmatprep.subr.mxu0 0.0
        %1580 = vmatpush1.xpose.msra.mxu0 0.0
        %1581 = vmatprep.subr.mxu0 0.0
        %1582 = vmatpush1.xpose.msra.mxu0 0.0
        %1583 = vmatprep.subr.mxu0 0.0
        %1584 = vmatpush1.xpose.msra.mxu0 0.0
        %1585 = vmatprep.subr.mxu0 0.0
        %1586 = vmatpush1.xpose.msra.mxu0 0.0
        %1587 = vmatprep.subr.mxu0 0.0
        %1588 = vmatpush1.xpose.msra.mxu0 0.0
        %1589 = vmatprep.subr.mxu0 0.0
        %1590 = vmatpush1.xpose.msra.mxu0 0.0
        %1591 = vmatprep.mubr.f32.mxu0 0.0
        %1592 = vmatmul.mubr.f32.gmra.mrb[0].mxu0 %v1522
        %v1593 = vpop.f32.mrb[0].mxu0
        %v1594 = vadd.f32 0.0, %v1593
        %v1595 = vpop.f32.mrb[0].mxu0
        %1596 = vdwg.mxu0
        %v1597 = vmul.f32 %v1594, 0.17677669
        %v1598 = vsel %vm1143, %v1597, -inf
        %1599 = vmax.xlane.f32.xlu0 %v1598
        %v1600 = vpop.xlane.xlu0 %1599
        %v1601 = vsub.f32 %v1597, %v1600
        %v1602 = vmul.f32 %v1601, 1.442695
        %v1603 = vpow.pop %v1602
        %v1604 = vsel %vm1143, %v1603, 0.0
        %1605 = vadd.xlane.f32.xlu0 %v1604
        %v1606 = vpop.xlane.xlu0 %1605
        %v1607 = vrcp.pop %v1606
        %v1608 = vmul.f32 %v1603, %v1607
        %v1610 = vsel %vm1155, %v1608, 0
        %v1613 = vsel %vm757, %v1518, 0
        %1615 = vmatprep.subr.mxu0 0.0
        %1616 = vmatpush1.msra.mxu0 %v1613
        %1617 = vmatprep.subr.mxu0 0.0
        %1618 = vmatpush1.msra.mxu0 0.0
        %1619 = vmatprep.subr.mxu0 0.0
        %1620 = vmatpush1.msra.mxu0 0.0
        %1621 = vmatprep.subr.mxu0 0.0
        %1622 = vmatpush1.msra.mxu0 0.0
        %1623 = vmatprep.subr.mxu0 0.0
        %1624 = vmatpush1.msra.mxu0 0.0
        %1625 = vmatprep.subr.mxu0 0.0
        %1626 = vmatpush1.msra.mxu0 0.0
        %1627 = vmatprep.subr.mxu0 0.0
        %1628 = vmatpush1.msra.mxu0 0.0
        %1629 = vmatprep.subr.mxu0 0.0
        %1630 = vmatpush1.msra.mxu0 0.0
        %1631 = vmatprep.subr.mxu0 0.0
        %1632 = vmatpush1.msra.mxu0 0.0
        %1633 = vmatprep.subr.mxu0 0.0
        %1634 = vmatpush1.msra.mxu0 0.0
        %1635 = vmatprep.subr.mxu0 0.0
        %1636 = vmatpush1.msra.mxu0 0.0
        %1637 = vmatprep.subr.mxu0 0.0
        %1638 = vmatpush1.msra.mxu0 0.0
        %1639 = vmatprep.subr.mxu0 0.0
        %1640 = vmatpush1.msra.mxu0 0.0
        %1641 = vmatprep.subr.mxu0 0.0
        %1642 = vmatpush1.msra.mxu0 0.0
        %1643 = vmatprep.subr.mxu0 0.0
        %1644 = vmatpush1.msra.mxu0 0.0
        %1645 = vmatprep.subr.mxu0 0.0
        %1646 = vmatpush1.msra.mxu0 0.0
        %1647 = vmatprep.subr.mxu0 0.0
        %1648 = vmatpush1.msra.mxu0 0.0
        %1649 = vmatprep.subr.mxu0 0.0
        %1650 = vmatpush1.msra.mxu0 0.0
        %1651 = vmatprep.subr.mxu0 0.0
        %1652 = vmatpush1.msra.mxu0 0.0
        %1653 = vmatprep.subr.mxu0 0.0
        %1654 = vmatpush1.msra.mxu0 0.0
        %1655 = vmatprep.subr.mxu0 0.0
        %1656 = vmatpush1.msra.mxu0 0.0
        %1657 = vmatprep.subr.mxu0 0.0
        %1658 = vmatpush1.msra.mxu0 0.0
        %1659 = vmatprep.subr.mxu0 0.0
        %1660 = vmatpush1.msra.mxu0 0.0
        %1661 = vmatprep.subr.mxu0 0.0
        %1662 = vmatpush1.msra.mxu0 0.0
        %1663 = vmatprep.subr.mxu0 0.0
        %1664 = vmatpush1.msra.mxu0 0.0
        %1665 = vmatprep.subr.mxu0 0.0
        %1666 = vmatpush1.msra.mxu0 0.0
        %1667 = vmatprep.subr.mxu0 0.0
        %1668 = vmatpush1.msra.mxu0 0.0
        %1669 = vmatprep.subr.mxu0 0.0
        %1670 = vmatpush1.msra.mxu0 0.0
        %1671 = vmatprep.subr.mxu0 0.0
        %1672 = vmatpush1.msra.mxu0 0.0
        %1673 = vmatprep.subr.mxu0 0.0
        %1674 = vmatpush1.msra.mxu0 0.0
        %1675 = vmatprep.subr.mxu0 0.0
        %1676 = vmatpush1.msra.mxu0 0.0
        %1677 = vmatprep.subr.mxu0 0.0
        %1678 = vmatpush1.msra.mxu0 0.0
        %1679 = vmatprep.mubr.f32.mxu0 0.0
        %1680 = vmatmul.mubr.f32.gmra.mrb[0].mxu0 %v1610
        %v1681 = vpop.f32.mrb[0].mxu0
        %v1682 = vadd.f32 0.0, %v1681
        %v1683 = vpop.f32.mrb[0].mxu0
        %1684 = vdwg.mxu0
        %s1685 = scalar_lea.vmem %s11, 32
        %v1686 = vld [vmem:[%s1685] sm:$0xff]
        %v1687 = vld [vmem:[%s1685 + $0x8] sm:$0xff]
        %v1688 = vld [vmem:[%s1685 + $0x10] sm:$0xff]
        %v1689 = vld [vmem:[%s1685 + $0x18] sm:$0xff]
        %v1691 = vsel %vm1065, %v1682, 0
        %1693 = vmatprep.subr.mxu0 0.0
        %1694 = vmatpush1.msra.mxu0 %v1686
        %1695 = vmatprep.subr.mxu0 0.0
        %1696 = vmatpush1.msra.mxu0 %v1687
        %1697 = vmatprep.subr.mxu0 0.0
        %1698 = vmatpush1.msra.mxu0 %v1688
        %1699 = vmatprep.subr.mxu0 0.0
        %1700 = vmatpush1.msra.mxu0 %v1689
        %1701 = vmatprep.subr.mxu0 0.0
        %1702 = vmatpush1.msra.mxu0 0.0
        %1703 = vmatprep.subr.mxu0 0.0
        %1704 = vmatpush1.msra.mxu0 0.0
        %1705 = vmatprep.subr.mxu0 0.0
        %1706 = vmatpush1.msra.mxu0 0.0
        %1707 = vmatprep.subr.mxu0 0.0
        %1708 = vmatpush1.msra.mxu0 0.0
        %1709 = vmatprep.subr.mxu0 0.0
        %1710 = vmatpush1.msra.mxu0 0.0
        %1711 = vmatprep.subr.mxu0 0.0
        %1712 = vmatpush1.msra.mxu0 0.0
        %1713 = vmatprep.subr.mxu0 0.0
        %1714 = vmatpush1.msra.mxu0 0.0
        %1715 = vmatprep.subr.mxu0 0.0
        %1716 = vmatpush1.msra.mxu0 0.0
        %1717 = vmatprep.subr.mxu0 0.0
        %1718 = vmatpush1.msra.mxu0 0.0
        %1719 = vmatprep.subr.mxu0 0.0
        %1720 = vmatpush1.msra.mxu0 0.0
        %1721 = vmatprep.subr.mxu0 0.0
        %1722 = vmatpush1.msra.mxu0 0.0
        %1723 = vmatprep.subr.mxu0 0.0
        %1724 = vmatpush1.msra.mxu0 0.0
        %1725 = vmatprep.subr.mxu0 0.0
        %1726 = vmatpush1.msra.mxu0 0.0
        %1727 = vmatprep.subr.mxu0 0.0
        %1728 = vmatpush1.msra.mxu0 0.0
        %1729 = vmatprep.subr.mxu0 0.0
        %1730 = vmatpush1.msra.mxu0 0.0
        %1731 = vmatprep.subr.mxu0 0.0
        %1732 = vmatpush1.msra.mxu0 0.0
        %1733 = vmatprep.subr.mxu0 0.0
        %1734 = vmatpush1.msra.mxu0 0.0
        %1735 = vmatprep.subr.mxu0 0.0
        %1736 = vmatpush1.msra.mxu0 0.0
        %1737 = vmatprep.subr.mxu0 0.0
        %1738 = vmatpush1.msra.mxu0 0.0
        %1739 = vmatprep.subr.mxu0 0.0
        %1740 = vmatpush1.msra.mxu0 0.0
        %1741 = vmatprep.subr.mxu0 0.0
        %1742 = vmatpush1.msra.mxu0 0.0
        %1743 = vmatprep.subr.mxu0 0.0
        %1744 = vmatpush1.msra.mxu0 0.0
        %1745 = vmatprep.subr.mxu0 0.0
        %1746 = vmatpush1.msra.mxu0 0.0
        %1747 = vmatprep.subr.mxu0 0.0
        %1748 = vmatpush1.msra.mxu0 0.0
        %1749 = vmatprep.subr.mxu0 0.0
        %1750 = vmatpush1.msra.mxu0 0.0
        %1751 = vmatprep.subr.mxu0 0.0
        %1752 = vmatpush1.msra.mxu0 0.0
        %1753 = vmatprep.subr.mxu0 0.0
        %1754 = vmatpush1.msra.mxu0 0.0
        %1755 = vmatprep.subr.mxu0 0.0
        %1756 = vmatpush1.msra.mxu0 0.0
        %1757 = vmatprep.mubr.f32.mxu0 0.0
        %1758 = vmatmul.mubr.f32.gmra.mrb[0].mxu0 %v1691
        %v1759 = vpop.f32.mrb[0].mxu0
        %v1760 = vadd.f32 0.0, %v1759
        %v1761 = vpop.f32.mrb[0].mxu0
        %1762 = vdwg.mxu0
        %v1764 = vsel %vm1065, %v1229, 0
        %1766 = vmatprep.subr.mxu0 0.0
        %1767 = vmatpush1.msra.mxu0 %v1232
        %1768 = vmatprep.subr.mxu0 0.0
        %1769 = vmatpush1.msra.mxu0 %v1233
        %1770 = vmatprep.subr.mxu0 0.0
        %1771 = vmatpush1.msra.mxu0 %v1234
        %1772 = vmatprep.subr.mxu0 0.0
        %1773 = vmatpush1.msra.mxu0 %v1235
        %1774 = vmatprep.subr.mxu0 0.0
        %1775 = vmatpush1.msra.mxu0 0.0
        %1776 = vmatprep.subr.mxu0 0.0
        %1777 = vmatpush1.msra.mxu0 0.0
        %1778 = vmatprep.subr.mxu0 0.0
        %1779 = vmatpush1.msra.mxu0 0.0
        %1780 = vmatprep.subr.mxu0 0.0
        %1781 = vmatpush1.msra.mxu0 0.0
        %1782 = vmatprep.subr.mxu0 0.0
        %1783 = vmatpush1.msra.mxu0 0.0
        %1784 = vmatprep.subr.mxu0 0.0
        %1785 = vmatpush1.msra.mxu0 0.0
        %1786 = vmatprep.subr.mxu0 0.0
        %1787 = vmatpush1.msra.mxu0 0.0
        %1788 = vmatprep.subr.mxu0 0.0
        %1789 = vmatpush1.msra.mxu0 0.0
        %1790 = vmatprep.subr.mxu0 0.0
        %1791 = vmatpush1.msra.mxu0 0.0
        %1792 = vmatprep.subr.mxu0 0.0
        %1793 = vmatpush1.msra.mxu0 0.0
        %1794 = vmatprep.subr.mxu0 0.0
        %1795 = vmatpush1.msra.mxu0 0.0
        %1796 = vmatprep.subr.mxu0 0.0
        %1797 = vmatpush1.msra.mxu0 0.0
        %1798 = vmatprep.subr.mxu0 0.0
        %1799 = vmatpush1.msra.mxu0 0.0
        %1800 = vmatprep.subr.mxu0 0.0
        %1801 = vmatpush1.msra.mxu0 0.0
        %1802 = vmatprep.subr.mxu0 0.0
        %1803 = vmatpush1.msra.mxu0 0.0
        %1804 = vmatprep.subr.mxu0 0.0
        %1805 = vmatpush1.msra.mxu0 0.0
        %1806 = vmatprep.subr.mxu0 0.0
        %1807 = vmatpush1.msra.mxu0 0.0
        %1808 = vmatprep.subr.mxu0 0.0
        %1809 = vmatpush1.msra.mxu0 0.0
        %1810 = vmatprep.subr.mxu0 0.0
        %1811 = vmatpush1.msra.mxu0 0.0
        %1812 = vmatprep.subr.mxu0 0.0
        %1813 = vmatpush1.msra.mxu0 0.0
        %1814 = vmatprep.subr.mxu0 0.0
        %1815 = vmatpush1.msra.mxu0 0.0
        %1816 = vmatprep.subr.mxu0 0.0
        %1817 = vmatpush1.msra.mxu0 0.0
        %1818 = vmatprep.subr.mxu0 0.0
        %1819 = vmatpush1.msra.mxu0 0.0
        %1820 = vmatprep.subr.mxu0 0.0
        %1821 = vmatpush1.msra.mxu0 0.0
        %1822 = vmatprep.subr.mxu0 0.0
        %1823 = vmatpush1.msra.mxu0 0.0
        %1824 = vmatprep.subr.mxu0 0.0
        %1825 = vmatpush1.msra.mxu0 0.0
        %1826 = vmatprep.subr.mxu0 0.0
        %1827 = vmatpush1.msra.mxu0 0.0
        %1828 = vmatprep.subr.mxu0 0.0
        %1829 = vmatpush1.msra.mxu0 0.0
        %1830 = vmatprep.mubr.f32.mxu0 0.0
        %1831 = vmatmul.mubr.f32.gmra.mrb[0].mxu0 %v1764
        %v1832 = vpop.f32.mrb[0].mxu0
        %v1833 = vadd.f32 %v1760, %v1832
        %v1834 = vpop.f32.mrb[0].mxu0
        %1835 = vdwg.mxu0
        %s1836 = scalar_lea.vmem %s5, 256
        %v1837 = vld [vmem:[%s1836] sm:$0xff]
        %v1838 = vld [vmem:[%s1836 + $0x8] sm:$0xff]
        %v1839 = vld [vmem:[%s1836 + $0x10] sm:$0xff]
        %v1840 = vld [vmem:[%s1836 + $0x18] sm:$0xff]
        %v1841 = vld [vmem:[%s1836 + $0x20] sm:$0xff]
        %v1842 = vld [vmem:[%s1836 + $0x28] sm:$0xff]
        %v1843 = vld [vmem:[%s1836 + $0x30] sm:$0xff]
        %v1844 = vld [vmem:[%s1836 + $0x38] sm:$0xff]
        %v1845 = vld [vmem:[%s1836 + $0x40] sm:$0xff]
        %v1846 = vld [vmem:[%s1836 + $0x48] sm:$0xff]
        %v1847 = vld [vmem:[%s1836 + $0x50] sm:$0xff]
        %v1848 = vld [vmem:[%s1836 + $0x58] sm:$0xff]
        %v1849 = vld [vmem:[%s1836 + $0x60] sm:$0xff]
        %v1850 = vld [vmem:[%s1836 + $0x68] sm:$0xff]
        %v1851 = vld [vmem:[%s1836 + $0x70] sm:$0xff]
        %v1852 = vld [vmem:[%s1836 + $0x78] sm:$0xff]
        %s1853 = scalar_lea.vmem %s6, 2
        %v1854 = vld [vmem:[%s1853] sm:$0x1]
        %v1856 = vlaneseq
        %v1857 = vshrl.u32 %v1856, 7
        %v1858 = vsub.s32 0, %v1857
        %v1859 = vrot.slane %v1854, %v1858
        %1861 = vmatprep.subr.mxu0 0.0
        %1862 = vmatpush1.msra.mxu0 %v1837
        %1863 = vmatprep.subr.mxu0 0.0
        %1864 = vmatpush1.msra.mxu0 %v1838
        %1865 = vmatprep.subr.mxu0 0.0
        %1866 = vmatpush1.msra.mxu0 %v1839
        %1867 = vmatprep.subr.mxu0 0.0
        %1868 = vmatpush1.msra.mxu0 %v1840
        %1869 = vmatprep.subr.mxu0 0.0
        %1870 = vmatpush1.msra.mxu0 %v1841
        %1871 = vmatprep.subr.mxu0 0.0
        %1872 = vmatpush1.msra.mxu0 %v1842
        %1873 = vmatprep.subr.mxu0 0.0
        %1874 = vmatpush1.msra.mxu0 %v1843
        %1875 = vmatprep.subr.mxu0 0.0
        %1876 = vmatpush1.msra.mxu0 %v1844
        %1877 = vmatprep.subr.mxu0 0.0
        %1878 = vmatpush1.msra.mxu0 %v1845
        %1879 = vmatprep.subr.mxu0 0.0
        %1880 = vmatpush1.msra.mxu0 %v1846
        %1881 = vmatprep.subr.mxu0 0.0
        %1882 = vmatpush1.msra.mxu0 %v1847
        %1883 = vmatprep.subr.mxu0 0.0
        %1884 = vmatpush1.msra.mxu0 %v1848
        %1885 = vmatprep.subr.mxu0 0.0
        %1886 = vmatpush1.msra.mxu0 %v1849
        %1887 = vmatprep.subr.mxu0 0.0
        %1888 = vmatpush1.msra.mxu0 %v1850
        %1889 = vmatprep.subr.mxu0 0.0
        %1890 = vmatpush1.msra.mxu0 %v1851
        %1891 = vmatprep.subr.mxu0 0.0
        %1892 = vmatpush1.msra.mxu0 %v1852
        %1893 = vmatprep.subr.mxu0 0.0
        %1894 = vmatpush1.msra.mxu0 0.0
        %1895 = vmatprep.subr.mxu0 0.0
        %1896 = vmatpush1.msra.mxu0 0.0
        %1897 = vmatprep.subr.mxu0 0.0
        %1898 = vmatpush1.msra.mxu0 0.0
        %1899 = vmatprep.subr.mxu0 0.0
        %1900 = vmatpush1.msra.mxu0 0.0
        %1901 = vmatprep.subr.mxu0 0.0
        %1902 = vmatpush1.msra.mxu0 0.0
        %1903 = vmatprep.subr.mxu0 0.0
        %1904 = vmatpush1.msra.mxu0 0.0
        %1905 = vmatprep.subr.mxu0 0.0
        %1906 = vmatpush1.msra.mxu0 0.0
        %1907 = vmatprep.subr.mxu0 0.0
        %1908 = vmatpush1.msra.mxu0 0.0
        %1909 = vmatprep.subr.mxu0 0.0
        %1910 = vmatpush1.msra.mxu0 0.0
        %1911 = vmatprep.subr.mxu0 0.0
        %1912 = vmatpush1.msra.mxu0 0.0
        %1913 = vmatprep.subr.mxu0 0.0
        %1914 = vmatpush1.msra.mxu0 0.0
        %1915 = vmatprep.subr.mxu0 0.0
        %1916 = vmatpush1.msra.mxu0 0.0
        %1917 = vmatprep.subr.mxu0 0.0
        %1918 = vmatpush1.msra.mxu0 0.0
        %1919 = vmatprep.subr.mxu0 0.0
        %1920 = vmatpush1.msra.mxu0 0.0
        %1921 = vmatprep.subr.mxu0 0.0
        %1922 = vmatpush1.msra.mxu0 0.0
        %1923 = vmatprep.subr.mxu0 0.0
        %1924 = vmatpush1.msra.mxu0 0.0
        %1925 = vmatprep.mubr.f32.mxu0 0.0
        %1926 = vmatmul.mubr.f32.gmra.mrb[0].mxu0 %v785
        %v1927 = vpop.f32.mrb[0].mxu0
        %v1928 = vadd.f32 %v1859, %v1927
        %v1929 = vpop.f32.mrb[0].mxu0
        %1930 = vdwg.mxu0
        %s1931 = scalar_lea.vmem %s7, 256
        %v1932 = vld [vmem:[%s1931] sm:$0xff]
        %v1933 = vld [vmem:[%s1931 + $0x8] sm:$0xff]
        %v1934 = vld [vmem:[%s1931 + $0x10] sm:$0xff]
        %v1935 = vld [vmem:[%s1931 + $0x18] sm:$0xff]
        %v1936 = vld [vmem:[%s1931 + $0x20] sm:$0xff]
        %v1937 = vld [vmem:[%s1931 + $0x28] sm:$0xff]
        %v1938 = vld [vmem:[%s1931 + $0x30] sm:$0xff]
        %v1939 = vld [vmem:[%s1931 + $0x38] sm:$0xff]
        %v1940 = vld [vmem:[%s1931 + $0x40] sm:$0xff]
        %v1941 = vld [vmem:[%s1931 + $0x48] sm:$0xff]
        %v1942 = vld [vmem:[%s1931 + $0x50] sm:$0xff]
        %v1943 = vld [vmem:[%s1931 + $0x58] sm:$0xff]
        %v1944 = vld [vmem:[%s1931 + $0x60] sm:$0xff]
        %v1945 = vld [vmem:[%s1931 + $0x68] sm:$0xff]
        %v1946 = vld [vmem:[%s1931 + $0x70] sm:$0xff]
        %v1947 = vld [vmem:[%s1931 + $0x78] sm:$0xff]
        %s1948 = scalar_lea.vmem %s8, 2
        %v1949 = vld [vmem:[%s1948] sm:$0x1]
        %v1951 = vlaneseq
        %v1952 = vshrl.u32 %v1951, 7
        %v1953 = vsub.s32 0, %v1952
        %v1954 = vrot.slane %v1949, %v1953
        %1956 = vmatprep.subr.mxu0 0.0
        %1957 = vmatpush1.msra.mxu0 %v1932
        %1958 = vmatprep.subr.mxu0 0.0
        %1959 = vmatpush1.msra.mxu0 %v1933
        %1960 = vmatprep.subr.mxu0 0.0
        %1961 = vmatpush1.msra.mxu0 %v1934
        %1962 = vmatprep.subr.mxu0 0.0
        %1963 = vmatpush1.msra.mxu0 %v1935
        %1964 = vmatprep.subr.mxu0 0.0
        %1965 = vmatpush1.msra.mxu0 %v1936
        %1966 = vmatprep.subr.mxu0 0.0
        %1967 = vmatpush1.msra.mxu0 %v1937
        %1968 = vmatprep.subr.mxu0 0.0
        %1969 = vmatpush1.msra.mxu0 %v1938
        %1970 = vmatprep.subr.mxu0 0.0
        %1971 = vmatpush1.msra.mxu0 %v1939
        %1972 = vmatprep.subr.mxu0 0.0
        %1973 = vmatpush1.msra.mxu0 %v1940
        %1974 = vmatprep.subr.mxu0 0.0
        %1975 = vmatpush1.msra.mxu0 %v1941
        %1976 = vmatprep.subr.mxu0 0.0
        %1977 = vmatpush1.msra.mxu0 %v1942
        %1978 = vmatprep.subr.mxu0 0.0
        %1979 = vmatpush1.msra.mxu0 %v1943
        %1980 = vmatprep.subr.mxu0 0.0
        %1981 = vmatpush1.msra.mxu0 %v1944
        %1982 = vmatprep.subr.mxu0 0.0
        %1983 = vmatpush1.msra.mxu0 %v1945
        %1984 = vmatprep.subr.mxu0 0.0
        %1985 = vmatpush1.msra.mxu0 %v1946
        %1986 = vmatprep.subr.mxu0 0.0
        %1987 = vmatpush1.msra.mxu0 %v1947
        %1988 = vmatprep.subr.mxu0 0.0
        %1989 = vmatpush1.msra.mxu0 0.0
        %1990 = vmatprep.subr.mxu0 0.0
        %1991 = vmatpush1.msra.mxu0 0.0
        %1992 = vmatprep.subr.mxu0 0.0
        %1993 = vmatpush1.msra.mxu0 0.0
        %1994 = vmatprep.subr.mxu0 0.0
        %1995 = vmatpush1.msra.mxu0 0.0
        %1996 = vmatprep.subr.mxu0 0.0
        %1997 = vmatpush1.msra.mxu0 0.0
        %1998 = vmatprep.subr.mxu0 0.0
        %1999 = vmatpush1.msra.mxu0 0.0
        %2000 = vmatprep.subr.mxu0 0.0
        %2001 = vmatpush1.msra.mxu0 0.0
        %2002 = vmatprep.subr.mxu0 0.0
        %2003 = vmatpush1.msra.mxu0 0.0
        %2004 = vmatprep.subr.mxu0 0.0
        %2005 = vmatpush1.msra.mxu0 0.0
        %2006 = vmatprep.subr.mxu0 0.0
        %2007 = vmatpush1.msra.mxu0 0.0
        %2008 = vmatprep.subr.mxu0 0.0
        %2009 = vmatpush1.msra.mxu0 0.0
        %2010 = vmatprep.subr.mxu0 0.0
        %2011 = vmatpush1.msra.mxu0 0.0
        %2012 = vmatprep.subr.mxu0 0.0
        %2013 = vmatpush1.msra.mxu0 0.0
        %2014 = vmatprep.subr.mxu0 0.0
        %2015 = vmatpush1.msra.mxu0 0.0
        %2016 = vmatprep.subr.mxu0 0.0
        %2017 = vmatpush1.msra.mxu0 0.0
        %2018 = vmatprep.subr.mxu0 0.0
        %2019 = vmatpush1.msra.mxu0 0.0
        %2020 = vmatprep.mubr.f32.mxu0 0.0
        %2021 = vmatmul.mubr.f32.gmra.mrb[0].mxu0 %v785
        %v2022 = vpop.f32.mrb[0].mxu0
        %v2023 = vadd.f32 %v1954, %v2022
        %v2024 = vpop.f32.mrb[0].mxu0
        %2025 = vdwg.mxu0
        %s2026 = scalar_lea.vmem %s9, 256
        %v2027 = vld [vmem:[%s2026] sm:$0xff]
        %v2028 = vld [vmem:[%s2026 + $0x8] sm:$0xff]
        %v2029 = vld [vmem:[%s2026 + $0x10] sm:$0xff]
        %v2030 = vld [vmem:[%s2026 + $0x18] sm:$0xff]
        %v2031 = vld [vmem:[%s2026 + $0x20] sm:$0xff]
        %v2032 = vld [vmem:[%s2026 + $0x28] sm:$0xff]
        %v2033 = vld [vmem:[%s2026 + $0x30] sm:$0xff]
        %v2034 = vld [vmem:[%s2026 + $0x38] sm:$0xff]
        %v2035 = vld [vmem:[%s2026 + $0x40] sm:$0xff]
        %v2036 = vld [vmem:[%s2026 + $0x48] sm:$0xff]
        %v2037 = vld [vmem:[%s2026 + $0x50] sm:$0xff]
        %v2038 = vld [vmem:[%s2026 + $0x58] sm:$0xff]
        %v2039 = vld [vmem:[%s2026 + $0x60] sm:$0xff]
        %v2040 = vld [vmem:[%s2026 + $0x68] sm:$0xff]
        %v2041 = vld [vmem:[%s2026 + $0x70] sm:$0xff]
        %v2042 = vld [vmem:[%s2026 + $0x78] sm:$0xff]
        %s2043 = scalar_lea.vmem %s10, 2
        %v2044 = vld [vmem:[%s2043] sm:$0x1]
        %v2046 = vlaneseq
        %v2047 = vshrl.u32 %v2046, 7
        %v2048 = vsub.s32 0, %v2047
        %v2049 = vrot.slane %v2044, %v2048
        %2051 = vmatprep.subr.mxu0 0.0
        %2052 = vmatpush1.msra.mxu0 %v2027
        %2053 = vmatprep.subr.mxu0 0.0
        %2054 = vmatpush1.msra.mxu0 %v2028
        %2055 = vmatprep.subr.mxu0 0.0
        %2056 = vmatpush1.msra.mxu0 %v2029
        %2057 = vmatprep.subr.mxu0 0.0
        %2058 = vmatpush1.msra.mxu0 %v2030
        %2059 = vmatprep.subr.mxu0 0.0
        %2060 = vmatpush1.msra.mxu0 %v2031
        %2061 = vmatprep.subr.mxu0 0.0
        %2062 = vmatpush1.msra.mxu0 %v2032
        %2063 = vmatprep.subr.mxu0 0.0
        %2064 = vmatpush1.msra.mxu0 %v2033
        %2065 = vmatprep.subr.mxu0 0.0
        %2066 = vmatpush1.msra.mxu0 %v2034
        %2067 = vmatprep.subr.mxu0 0.0
        %2068 = vmatpush1.msra.mxu0 %v2035
        %2069 = vmatprep.subr.mxu0 0.0
        %2070 = vmatpush1.msra.mxu0 %v2036
        %2071 = vmatprep.subr.mxu0 0.0
        %2072 = vmatpush1.msra.mxu0 %v2037
        %2073 = vmatprep.subr.mxu0 0.0
        %2074 = vmatpush1.msra.mxu0 %v2038
        %2075 = vmatprep.subr.mxu0 0.0
        %2076 = vmatpush1.msra.mxu0 %v2039
        %2077 = vmatprep.subr.mxu0 0.0
        %2078 = vmatpush1.msra.mxu0 %v2040
        %2079 = vmatprep.subr.mxu0 0.0
        %2080 = vmatpush1.msra.mxu0 %v2041
        %2081 = vmatprep.subr.mxu0 0.0
        %2082 = vmatpush1.msra.mxu0 %v2042
        %2083 = vmatprep.subr.mxu0 0.0
        %2084 = vmatpush1.msra.mxu0 0.0
        %2085 = vmatprep.subr.mxu0 0.0
        %2086 = vmatpush1.msra.mxu0 0.0
        %2087 = vmatprep.subr.mxu0 0.0
        %2088 = vmatpush1.msra.mxu0 0.0
        %2089 = vmatprep.subr.mxu0 0.0
        %2090 = vmatpush1.msra.mxu0 0.0
        %2091 = vmatprep.subr.mxu0 0.0
        %2092 = vmatpush1.msra.mxu0 0.0
        %2093 = vmatprep.subr.mxu0 0.0
        %2094 = vmatpush1.msra.mxu0 0.0
        %2095 = vmatprep.subr.mxu0 0.0
        %2096 = vmatpush1.msra.mxu0 0.0
        %2097 = vmatprep.subr.mxu0 0.0
        %2098 = vmatpush1.msra.mxu0 0.0
        %2099 = vmatprep.subr.mxu0 0.0
        %2100 = vmatpush1.msra.mxu0 0.0
        %2101 = vmatprep.subr.mxu0 0.0
        %2102 = vmatpush1.msra.mxu0 0.0
        %2103 = vmatprep.subr.mxu0 0.0
        %2104 = vmatpush1.msra.mxu0 0.0
        %2105 = vmatprep.subr.mxu0 0.0
        %2106 = vmatpush1.msra.mxu0 0.0
        %2107 = vmatprep.subr.mxu0 0.0
        %2108 = vmatpush1.msra.mxu0 0.0
        %2109 = vmatprep.subr.mxu0 0.0
        %2110 = vmatpush1.msra.mxu0 0.0
        %2111 = vmatprep.subr.mxu0 0.0
        %2112 = vmatpush1.msra.mxu0 0.0
        %2113 = vmatprep.subr.mxu0 0.0
        %2114 = vmatpush1.msra.mxu0 0.0
        %2115 = vmatprep.mubr.f32.mxu0 0.0
        %2116 = vmatmul.mubr.f32.gmra.mrb[0].mxu0 %v785
        %v2117 = vpop.f32.mrb[0].mxu0
        %v2118 = vadd.f32 %v2049, %v2117
        %v2119 = vpop.f32.mrb[0].mxu0
        %2120 = vdwg.mxu0
        %v2122 = vsel %vm1065, %v1928, 0
        %v2125 = vsel %vm1065, %v2023, 0
        %2127 = vmatprep.subr.mxu0 0.0
        %2128 = vmatpush1.xpose.msra.mxu0 %v2125
        %2129 = vmatprep.subr.mxu0 0.0
        %2130 = vmatpush1.xpose.msra.mxu0 0.0
        %2131 = vmatprep.subr.mxu0 0.0
        %2132 = vmatpush1.xpose.msra.mxu0 0.0
        %2133 = vmatprep.subr.mxu0 0.0
        %2134 = vmatpush1.xpose.msra.mxu0 0.0
        %2135 = vmatprep.subr.mxu0 0.0
        %2136 = vmatpush1.xpose.msra.mxu0 0.0
        %2137 = vmatprep.subr.mxu0 0.0
        %2138 = vmatpush1.xpose.msra.mxu0 0.0
        %2139 = vmatprep.subr.mxu0 0.0
        %2140 = vmatpush1.xpose.msra.mxu0 0.0
        %2141 = vmatprep.subr.mxu0 0.0
        %2142 = vmatpush1.xpose.msra.mxu0 0.0
        %2143 = vmatprep.subr.mxu0 0.0
        %2144 = vmatpush1.xpose.msra.mxu0 0.0
        %2145 = vmatprep.subr.mxu0 0.0
        %2146 = vmatpush1.xpose.msra.mxu0 0.0
        %2147 = vmatprep.subr.mxu0 0.0
        %2148 = vmatpush1.xpose.msra.mxu0 0.0
        %2149 = vmatprep.subr.mxu0 0.0
        %2150 = vmatpush1.xpose.msra.mxu0 0.0
        %2151 = vmatprep.subr.mxu0 0.0
        %2152 = vmatpush1.xpose.msra.mxu0 0.0
        %2153 = vmatprep.subr.mxu0 0.0
        %2154 = vmatpush1.xpose.msra.mxu0 0.0
        %2155 = vmatprep.subr.mxu0 0.0
        %2156 = vmatpush1.xpose.msra.mxu0 0.0
        %2157 = vmatprep.subr.mxu0 0.0
        %2158 = vmatpush1.xpose.msra.mxu0 0.0
        %2159 = vmatprep.subr.mxu0 0.0
        %2160 = vmatpush1.xpose.msra.mxu0 0.0
        %2161 = vmatprep.subr.mxu0 0.0
        %2162 = vmatpush1.xpose.msra.mxu0 0.0
        %2163 = vmatprep.subr.mxu0 0.0
        %2164 = vmatpush1.xpose.msra.mxu0 0.0
        %2165 = vmatprep.subr.mxu0 0.0
        %2166 = vmatpush1.xpose.msra.mxu0 0.0
        %2167 = vmatprep.subr.mxu0 0.0
        %2168 = vmatpush1.xpose.msra.mxu0 0.0
        %2169 = vmatprep.subr.mxu0 0.0
        %2170 = vmatpush1.xpose.msra.mxu0 0.0
        %2171 = vmatprep.subr.mxu0 0.0
        %2172 = vmatpush1.xpose.msra.mxu0 0.0
        %2173 = vmatprep.subr.mxu0 0.0
        %2174 = vmatpush1.xpose.msra.mxu0 0.0
        %2175 = vmatprep.subr.mxu0 0.0
        %2176 = vmatpush1.xpose.msra.mxu0 0.0
        %2177 = vmatprep.subr.mxu0 0.0
        %2178 = vmatpush1.xpose.msra.mxu0 0.0
        %2179 = vmatprep.subr.mxu0 0.0
        %2180 = vmatpush1.xpose.msra.mxu0 0.0
        %2181 = vmatprep.subr.mxu0 0.0
        %2182 = vmatpush1.xpose.msra.mxu0 0.0
        %2183 = vmatprep.subr.mxu0 0.0
        %2184 = vmatpush1.xpose.msra.mxu0 0.0
        %2185 = vmatprep.subr.mxu0 0.0
        %2186 = vmatpush1.xpose.msra.mxu0 0.0
        %2187 = vmatprep.subr.mxu0 0.0
        %2188 = vmatpush1.xpose.msra.mxu0 0.0
        %2189 = vmatprep.subr.mxu0 0.0
        %2190 = vmatpush1.xpose.msra.mxu0 0.0
        %2191 = vmatprep.mubr.f32.mxu0 0.0
        %2192 = vmatmul.mubr.f32.gmra.mrb[0].mxu0 %v2122
        %v2193 = vpop.f32.mrb[0].mxu0
        %v2194 = vadd.f32 0.0, %v2193
        %v2195 = vpop.f32.mrb[0].mxu0
        %2196 = vdwg.mxu0
        %v2197 = vmul.f32 %v2194, 0.17677669
        %v2198 = vsel %vm1143, %v2197, -inf
        %2199 = vmax.xlane.f32.xlu0 %v2198
        %v2200 = vpop.xlane.xlu0 %2199
        %v2201 = vsub.f32 %v2197, %v2200
        %v2202 = vmul.f32 %v2201, 1.442695
        %v2203 = vpow.pop %v2202
        %v2204 = vsel %vm1143, %v2203, 0.0
        %2205 = vadd.xlane.f32.xlu0 %v2204
        %v2206 = vpop.xlane.xlu0 %2205
        %v2207 = vrcp.pop %v2206
        %v2208 = vmul.f32 %v2203, %v2207
        %v2210 = vsel %vm1155, %v2208, 0
        %v2213 = vsel %vm757, %v2118, 0
        %2215 = vmatprep.subr.mxu0 0.0
        %2216 = vmatpush1.msra.mxu0 %v2213
        %2217 = vmatprep.subr.mxu0 0.0
        %2218 = vmatpush1.msra.mxu0 0.0
        %2219 = vmatprep.subr.mxu0 0.0
        %2220 = vmatpush1.msra.mxu0 0.0
        %2221 = vmatprep.subr.mxu0 0.0
        %2222 = vmatpush1.msra.mxu0 0.0
        %2223 = vmatprep.subr.mxu0 0.0
        %2224 = vmatpush1.msra.mxu0 0.0
        %2225 = vmatprep.subr.mxu0 0.0
        %2226 = vmatpush1.msra.mxu0 0.0
        %2227 = vmatprep.subr.mxu0 0.0
        %2228 = vmatpush1.msra.mxu0 0.0
        %2229 = vmatprep.subr.mxu0 0.0
        %2230 = vmatpush1.msra.mxu0 0.0
        %2231 = vmatprep.subr.mxu0 0.0
        %2232 = vmatpush1.msra.mxu0 0.0
        %2233 = vmatprep.subr.mxu0 0.0
        %2234 = vmatpush1.msra.mxu0 0.0
        %2235 = vmatprep.subr.mxu0 0.0
        %2236 = vmatpush1.msra.mxu0 0.0
        %2237 = vmatprep.subr.mxu0 0.0
        %2238 = vmatpush1.msra.mxu0 0.0
        %2239 = vmatprep.subr.mxu0 0.0
        %2240 = vmatpush1.msra.mxu0 0.0
        %2241 = vmatprep.subr.mxu0 0.0
        %2242 = vmatpush1.msra.mxu0 0.0
        %2243 = vmatprep.subr.mxu0 0.0
        %2244 = vmatpush1.msra.mxu0 0.0
        %2245 = vmatprep.subr.mxu0 0.0
        %2246 = vmatpush1.msra.mxu0 0.0
        %2247 = vmatprep.subr.mxu0 0.0
        %2248 = vmatpush1.msra.mxu0 0.0
        %2249 = vmatprep.subr.mxu0 0.0
        %2250 = vmatpush1.msra.mxu0 0.0
        %2251 = vmatprep.subr.mxu0 0.0
        %2252 = vmatpush1.msra.mxu0 0.0
        %2253 = vmatprep.subr.mxu0 0.0
        %2254 = vmatpush1.msra.mxu0 0.0
        %2255 = vmatprep.subr.mxu0 0.0
        %2256 = vmatpush1.msra.mxu0 0.0
        %2257 = vmatprep.subr.mxu0 0.0
        %2258 = vmatpush1.msra.mxu0 0.0
        %2259 = vmatprep.subr.mxu0 0.0
        %2260 = vmatpush1.msra.mxu0 0.0
        %2261 = vmatprep.subr.mxu0 0.0
        %2262 = vmatpush1.msra.mxu0 0.0
        %2263 = vmatprep.subr.mxu0 0.0
        %2264 = vmatpush1.msra.mxu0 0.0
        %2265 = vmatprep.subr.mxu0 0.0
        %2266 = vmatpush1.msra.mxu0 0.0
        %2267 = vmatprep.subr.mxu0 0.0
        %2268 = vmatpush1.msra.mxu0 0.0
        %2269 = vmatprep.subr.mxu0 0.0
        %2270 = vmatpush1.msra.mxu0 0.0
        %2271 = vmatprep.subr.mxu0 0.0
        %2272 = vmatpush1.msra.mxu0 0.0
        %2273 = vmatprep.subr.mxu0 0.0
        %2274 = vmatpush1.msra.mxu0 0.0
        %2275 = vmatprep.subr.mxu0 0.0
        %2276 = vmatpush1.msra.mxu0 0.0
        %2277 = vmatprep.subr.mxu0 0.0
        %2278 = vmatpush1.msra.mxu0 0.0
        %2279 = vmatprep.mubr.f32.mxu0 0.0
        %2280 = vmatmul.mubr.f32.gmra.mrb[0].mxu0 %v2210
        %v2281 = vpop.f32.mrb[0].mxu0
        %v2282 = vadd.f32 0.0, %v2281
        %v2283 = vpop.f32.mrb[0].mxu0
        %2284 = vdwg.mxu0
        %s2285 = scalar_lea.vmem %s11, 64
        %v2286 = vld [vmem:[%s2285] sm:$0xff]
        %v2287 = vld [vmem:[%s2285 + $0x8] sm:$0xff]
        %v2288 = vld [vmem:[%s2285 + $0x10] sm:$0xff]
        %v2289 = vld [vmem:[%s2285 + $0x18] sm:$0xff]
        %v2291 = vsel %vm1065, %v2282, 0
        %2293 = vmatprep.subr.mxu0 0.0
        %2294 = vmatpush1.msra.mxu0 %v2286
        %2295 = vmatprep.subr.mxu0 0.0
        %2296 = vmatpush1.msra.mxu0 %v2287
        %2297 = vmatprep.subr.mxu0 0.0
        %2298 = vmatpush1.msra.mxu0 %v2288
        %2299 = vmatprep.subr.mxu0 0.0
        %2300 = vmatpush1.msra.mxu0 %v2289
        %2301 = vmatprep.subr.mxu0 0.0
        %2302 = vmatpush1.msra.mxu0 0.0
        %2303 = vmatprep.subr.mxu0 0.0
        %2304 = vmatpush1.msra.mxu0 0.0
        %2305 = vmatprep.subr.mxu0 0.0
        %2306 = vmatpush1.msra.mxu0 0.0
        %2307 = vmatprep.subr.mxu0 0.0
        %2308 = vmatpush1.msra.mxu0 0.0
        %2309 = vmatprep.subr.mxu0 0.0
        %2310 = vmatpush1.msra.mxu0 0.0
        %2311 = vmatprep.subr.mxu0 0.0
        %2312 = vmatpush1.msra.mxu0 0.0
        %2313 = vmatprep.subr.mxu0 0.0
        %2314 = vmatpush1.msra.mxu0 0.0
        %2315 = vmatprep.subr.mxu0 0.0
        %2316 = vmatpush1.msra.mxu0 0.0
        %2317 = vmatprep.subr.mxu0 0.0
        %2318 = vmatpush1.msra.mxu0 0.0
        %2319 = vmatprep.subr.mxu0 0.0
        %2320 = vmatpush1.msra.mxu0 0.0
        %2321 = vmatprep.subr.mxu0 0.0
        %2322 = vmatpush1.msra.mxu0 0.0
        %2323 = vmatprep.subr.mxu0 0.0
        %2324 = vmatpush1.msra.mxu0 0.0
        %2325 = vmatprep.subr.mxu0 0.0
        %2326 = vmatpush1.msra.mxu0 0.0
        %2327 = vmatprep.subr.mxu0 0.0
        %2328 = vmatpush1.msra.mxu0 0.0
        %2329 = vmatprep.subr.mxu0 0.0
        %2330 = vmatpush1.msra.mxu0 0.0
        %2331 = vmatprep.subr.mxu0 0.0
        %2332 = vmatpush1.msra.mxu0 0.0
        %2333 = vmatprep.subr.mxu0 0.0
        %2334 = vmatpush1.msra.mxu0 0.0
        %2335 = vmatprep.subr.mxu0 0.0
        %2336 = vmatpush1.msra.mxu0 0.0
        %2337 = vmatprep.subr.mxu0 0.0
        %2338 = vmatpush1.msra.mxu0 0.0
        %2339 = vmatprep.subr.mxu0 0.0
        %2340 = vmatpush1.msra.mxu0 0.0
        %2341 = vmatprep.subr.mxu0 0.0
        %2342 = vmatpush1.msra.mxu0 0.0
        %2343 = vmatprep.subr.mxu0 0.0
        %2344 = vmatpush1.msra.mxu0 0.0
        %2345 = vmatprep.subr.mxu0 0.0
        %2346 = vmatpush1.msra.mxu0 0.0
        %2347 = vmatprep.subr.mxu0 0.0
        %2348 = vmatpush1.msra.mxu0 0.0
        %2349 = vmatprep.subr.mxu0 0.0
        %2350 = vmatpush1.msra.mxu0 0.0
        %2351 = vmatprep.subr.mxu0 0.0
        %2352 = vmatpush1.msra.mxu0 0.0
        %2353 = vmatprep.subr.mxu0 0.0
        %2354 = vmatpush1.msra.mxu0 0.0
        %2355 = vmatprep.subr.mxu0 0.0
        %2356 = vmatpush1.msra.mxu0 0.0
        %2357 = vmatprep.mubr.f32.mxu0 0.0
        %2358 = vmatmul.mubr.f32.gmra.mrb[0].mxu0 %v2291
        %v2359 = vpop.f32.mrb[0].mxu0
        %v2360 = vadd.f32 0.0, %v2359
        %v2361 = vpop.f32.mrb[0].mxu0
        %2362 = vdwg.mxu0
        %v2363 = vadd.f32 %v1833, %v2360
        %s2364 = scalar_lea.vmem %s5, 384
        %v2365 = vld [vmem:[%s2364] sm:$0xff]
        %v2366 = vld [vmem:[%s2364 + $0x8] sm:$0xff]
        %v2367 = vld [vmem:[%s2364 + $0x10] sm:$0xff]
        %v2368 = vld [vmem:[%s2364 + $0x18] sm:$0xff]
        %v2369 = vld [vmem:[%s2364 + $0x20] sm:$0xff]
        %v2370 = vld [vmem:[%s2364 + $0x28] sm:$0xff]
        %v2371 = vld [vmem:[%s2364 + $0x30] sm:$0xff]
        %v2372 = vld [vmem:[%s2364 + $0x38] sm:$0xff]
        %v2373 = vld [vmem:[%s2364 + $0x40] sm:$0xff]
        %v2374 = vld [vmem:[%s2364 + $0x48] sm:$0xff]
        %v2375 = vld [vmem:[%s2364 + $0x50] sm:$0xff]
        %v2376 = vld [vmem:[%s2364 + $0x58] sm:$0xff]
        %v2377 = vld [vmem:[%s2364 + $0x60] sm:$0xff]
        %v2378 = vld [vmem:[%s2364 + $0x68] sm:$0xff]
        %v2379 = vld [vmem:[%s2364 + $0x70] sm:$0xff]
        %v2380 = vld [vmem:[%s2364 + $0x78] sm:$0xff]
        %s2381 = scalar_lea.vmem %s6, 3
        %v2382 = vld [vmem:[%s2381] sm:$0x1]
        %v2384 = vlaneseq
        %v2385 = vshrl.u32 %v2384, 7
        %v2386 = vsub.s32 0, %v2385
        %v2387 = vrot.slane %v2382, %v2386
        %2389 = vmatprep.subr.mxu0 0.0
        %2390 = vmatpush1.msra.mxu0 %v2365
        %2391 = vmatprep.subr.mxu0 0.0
        %2392 = vmatpush1.msra.mxu0 %v2366
        %2393 = vmatprep.subr.mxu0 0.0
        %2394 = vmatpush1.msra.mxu0 %v2367
        %2395 = vmatprep.subr.mxu0 0.0
        %2396 = vmatpush1.msra.mxu0 %v2368
        %2397 = vmatprep.subr.mxu0 0.0
        %2398 = vmatpush1.msra.mxu0 %v2369
        %2399 = vmatprep.subr.mxu0 0.0
        %2400 = vmatpush1.msra.mxu0 %v2370
        %2401 = vmatprep.subr.mxu0 0.0
        %2402 = vmatpush1.msra.mxu0 %v2371
        %2403 = vmatprep.subr.mxu0 0.0
        %2404 = vmatpush1.msra.mxu0 %v2372
        %2405 = vmatprep.subr.mxu0 0.0
        %2406 = vmatpush1.msra.mxu0 %v2373
        %2407 = vmatprep.subr.mxu0 0.0
        %2408 = vmatpush1.msra.mxu0 %v2374
        %2409 = vmatprep.subr.mxu0 0.0
        %2410 = vmatpush1.msra.mxu0 %v2375
        %2411 = vmatprep.subr.mxu0 0.0
        %2412 = vmatpush1.msra.mxu0 %v2376
        %2413 = vmatprep.subr.mxu0 0.0
        %2414 = vmatpush1.msra.mxu0 %v2377
        %2415 = vmatprep.subr.mxu0 0.0
        %2416 = vmatpush1.msra.mxu0 %v2378
        %2417 = vmatprep.subr.mxu0 0.0
        %2418 = vmatpush1.msra.mxu0 %v2379
        %2419 = vmatprep.subr.mxu0 0.0
        %2420 = vmatpush1.msra.mxu0 %v2380
        %2421 = vmatprep.subr.mxu0 0.0
        %2422 = vmatpush1.msra.mxu0 0.0
        %2423 = vmatprep.subr.mxu0 0.0
        %2424 = vmatpush1.msra.mxu0 0.0
        %2425 = vmatprep.subr.mxu0 0.0
        %2426 = vmatpush1.msra.mxu0 0.0
        %2427 = vmatprep.subr.mxu0 0.0
        %2428 = vmatpush1.msra.mxu0 0.0
        %2429 = vmatprep.subr.mxu0 0.0
        %2430 = vmatpush1.msra.mxu0 0.0
        %2431 = vmatprep.subr.mxu0 0.0
        %2432 = vmatpush1.msra.mxu0 0.0
        %2433 = vmatprep.subr.mxu0 0.0
        %2434 = vmatpush1.msra.mxu0 0.0
        %2435 = vmatprep.subr.mxu0 0.0
        %2436 = vmatpush1.msra.mxu0 0.0
        %2437 = vmatprep.subr.mxu0 0.0
        %2438 = vmatpush1.msra.mxu0 0.0
        %2439 = vmatprep.subr.mxu0 0.0
        %2440 = vmatpush1.msra.mxu0 0.0
        %2441 = vmatprep.subr.mxu0 0.0
        %2442 = vmatpush1.msra.mxu0 0.0
        %2443 = vmatprep.subr.mxu0 0.0
        %2444 = vmatpush1.msra.mxu0 0.0
        %2445 = vmatprep.subr.mxu0 0.0
        %2446 = vmatpush1.msra.mxu0 0.0
        %2447 = vmatprep.subr.mxu0 0.0
        %2448 = vmatpush1.msra.mxu0 0.0
        %2449 = vmatprep.subr.mxu0 0.0
        %2450 = vmatpush1.msra.mxu0 0.0
        %2451 = vmatprep.subr.mxu0 0.0
        %2452 = vmatpush1.msra.mxu0 0.0
        %2453 = vmatprep.mubr.f32.mxu0 0.0
        %2454 = vmatmul.mubr.f32.gmra.mrb[0].mxu0 %v785
        %v2455 = vpop.f32.mrb[0].mxu0
        %v2456 = vadd.f32 %v2387, %v2455
        %v2457 = vpop.f32.mrb[0].mxu0
        %2458 = vdwg.mxu0
        %s2459 = scalar_lea.vmem %s7, 384
        %v2460 = vld [vmem:[%s2459] sm:$0xff]
        %v2461 = vld [vmem:[%s2459 + $0x8] sm:$0xff]
        %v2462 = vld [vmem:[%s2459 + $0x10] sm:$0xff]
        %v2463 = vld [vmem:[%s2459 + $0x18] sm:$0xff]
        %v2464 = vld [vmem:[%s2459 + $0x20] sm:$0xff]
        %v2465 = vld [vmem:[%s2459 + $0x28] sm:$0xff]
        %v2466 = vld [vmem:[%s2459 + $0x30] sm:$0xff]
        %v2467 = vld [vmem:[%s2459 + $0x38] sm:$0xff]
        %v2468 = vld [vmem:[%s2459 + $0x40] sm:$0xff]
        %v2469 = vld [vmem:[%s2459 + $0x48] sm:$0xff]
        %v2470 = vld [vmem:[%s2459 + $0x50] sm:$0xff]
        %v2471 = vld [vmem:[%s2459 + $0x58] sm:$0xff]
        %v2472 = vld [vmem:[%s2459 + $0x60] sm:$0xff]
        %v2473 = vld [vmem:[%s2459 + $0x68] sm:$0xff]
        %v2474 = vld [vmem:[%s2459 + $0x70] sm:$0xff]
        %v2475 = vld [vmem:[%s2459 + $0x78] sm:$0xff]
        %s2476 = scalar_lea.vmem %s8, 3
        %v2477 = vld [vmem:[%s2476] sm:$0x1]
        %v2479 = vlaneseq
        %v2480 = vshrl.u32 %v2479, 7
        %v2481 = vsub.s32 0, %v2480
        %v2482 = vrot.slane %v2477, %v2481
        %2484 = vmatprep.subr.mxu0 0.0
        %2485 = vmatpush1.msra.mxu0 %v2460
        %2486 = vmatprep.subr.mxu0 0.0
        %2487 = vmatpush1.msra.mxu0 %v2461
        %2488 = vmatprep.subr.mxu0 0.0
        %2489 = vmatpush1.msra.mxu0 %v2462
        %2490 = vmatprep.subr.mxu0 0.0
        %2491 = vmatpush1.msra.mxu0 %v2463
        %2492 = vmatprep.subr.mxu0 0.0
        %2493 = vmatpush1.msra.mxu0 %v2464
        %2494 = vmatprep.subr.mxu0 0.0
        %2495 = vmatpush1.msra.mxu0 %v2465
        %2496 = vmatprep.subr.mxu0 0.0
        %2497 = vmatpush1.msra.mxu0 %v2466
        %2498 = vmatprep.subr.mxu0 0.0
        %2499 = vmatpush1.msra.mxu0 %v2467
        %2500 = vmatprep.subr.mxu0 0.0
        %2501 = vmatpush1.msra.mxu0 %v2468
        %2502 = vmatprep.subr.mxu0 0.0
        %2503 = vmatpush1.msra.mxu0 %v2469
        %2504 = vmatprep.subr.mxu0 0.0
        %2505 = vmatpush1.msra.mxu0 %v2470
        %2506 = vmatprep.subr.mxu0 0.0
        %2507 = vmatpush1.msra.mxu0 %v2471
        %2508 = vmatprep.subr.mxu0 0.0
        %2509 = vmatpush1.msra.mxu0 %v2472
        %2510 = vmatprep.subr.mxu0 0.0
        %2511 = vmatpush1.msra.mxu0 %v2473
        %2512 = vmatprep.subr.mxu0 0.0
        %2513 = vmatpush1.msra.mxu0 %v2474
        %2514 = vmatprep.subr.mxu0 0.0
        %2515 = vmatpush1.msra.mxu0 %v2475
        %2516 = vmatprep.subr.mxu0 0.0
        %2517 = vmatpush1.msra.mxu0 0.0
        %2518 = vmatprep.subr.mxu0 0.0
        %2519 = vmatpush1.msra.mxu0 0.0
        %2520 = vmatprep.subr.mxu0 0.0
        %2521 = vmatpush1.msra.mxu0 0.0
        %2522 = vmatprep.subr.mxu0 0.0
        %2523 = vmatpush1.msra.mxu0 0.0
        %2524 = vmatprep.subr.mxu0 0.0
        %2525 = vmatpush1.msra.mxu0 0.0
        %2526 = vmatprep.subr.mxu0 0.0
        %2527 = vmatpush1.msra.mxu0 0.0
        %2528 = vmatprep.subr.mxu0 0.0
        %2529 = vmatpush1.msra.mxu0 0.0
        %2530 = vmatprep.subr.mxu0 0.0
        %2531 = vmatpush1.msra.mxu0 0.0
        %2532 = vmatprep.subr.mxu0 0.0
        %2533 = vmatpush1.msra.mxu0 0.0
        %2534 = vmatprep.subr.mxu0 0.0
        %2535 = vmatpush1.msra.mxu0 0.0
        %2536 = vmatprep.subr.mxu0 0.0
        %2537 = vmatpush1.msra.mxu0 0.0
        %2538 = vmatprep.subr.mxu0 0.0
        %2539 = vmatpush1.msra.mxu0 0.0
        %2540 = vmatprep.subr.mxu0 0.0
        %2541 = vmatpush1.msra.mxu0 0.0
        %2542 = vmatprep.subr.mxu0 0.0
        %2543 = vmatpush1.msra.mxu0 0.0
        %2544 = vmatprep.subr.mxu0 0.0
        %2545 = vmatpush1.msra.mxu0 0.0
        %2546 = vmatprep.subr.mxu0 0.0
        %2547 = vmatpush1.msra.mxu0 0.0
        %2548 = vmatprep.mubr.f32.mxu0 0.0
        %2549 = vmatmul.mubr.f32.gmra.mrb[0].mxu0 %v785
        %v2550 = vpop.f32.mrb[0].mxu0
        %v2551 = vadd.f32 %v2482, %v2550
        %v2552 = vpop.f32.mrb[0].mxu0
        %2553 = vdwg.mxu0
        %s2554 = scalar_lea.vmem %s9, 384
        %v2555 = vld [vmem:[%s2554] sm:$0xff]
        %v2556 = vld [vmem:[%s2554 + $0x8] sm:$0xff]
        %v2557 = vld [vmem:[%s2554 + $0x10] sm:$0xff]
        %v2558 = vld [vmem:[%s2554 + $0x18] sm:$0xff]
        %v2559 = vld [vmem:[%s2554 + $0x20] sm:$0xff]
        %v2560 = vld [vmem:[%s2554 + $0x28] sm:$0xff]
        %v2561 = vld [vmem:[%s2554 + $0x30] sm:$0xff]
        %v2562 = vld [vmem:[%s2554 + $0x38] sm:$0xff]
        %v2563 = vld [vmem:[%s2554 + $0x40] sm:$0xff]
        %v2564 = vld [vmem:[%s2554 + $0x48] sm:$0xff]
        %v2565 = vld [vmem:[%s2554 + $0x50] sm:$0xff]
        %v2566 = vld [vmem:[%s2554 + $0x58] sm:$0xff]
        %v2567 = vld [vmem:[%s2554 + $0x60] sm:$0xff]
        %v2568 = vld [vmem:[%s2554 + $0x68] sm:$0xff]
        %v2569 = vld [vmem:[%s2554 + $0x70] sm:$0xff]
        %v2570 = vld [vmem:[%s2554 + $0x78] sm:$0xff]
        %s2571 = scalar_lea.vmem %s10, 3
        %v2572 = vld [vmem:[%s2571] sm:$0x1]
        %v2574 = vlaneseq
        %v2575 = vshrl.u32 %v2574, 7
        %v2576 = vsub.s32 0, %v2575
        %v2577 = vrot.slane %v2572, %v2576
        %2579 = vmatprep.subr.mxu0 0.0
        %2580 = vmatpush1.msra.mxu0 %v2555
        %2581 = vmatprep.subr.mxu0 0.0
        %2582 = vmatpush1.msra.mxu0 %v2556
        %2583 = vmatprep.subr.mxu0 0.0
        %2584 = vmatpush1.msra.mxu0 %v2557
        %2585 = vmatprep.subr.mxu0 0.0
        %2586 = vmatpush1.msra.mxu0 %v2558
        %2587 = vmatprep.subr.mxu0 0.0
        %2588 = vmatpush1.msra.mxu0 %v2559
        %2589 = vmatprep.subr.mxu0 0.0
        %2590 = vmatpush1.msra.mxu0 %v2560
        %2591 = vmatprep.subr.mxu0 0.0
        %2592 = vmatpush1.msra.mxu0 %v2561
        %2593 = vmatprep.subr.mxu0 0.0
        %2594 = vmatpush1.msra.mxu0 %v2562
        %2595 = vmatprep.subr.mxu0 0.0
        %2596 = vmatpush1.msra.mxu0 %v2563
        %2597 = vmatprep.subr.mxu0 0.0
        %2598 = vmatpush1.msra.mxu0 %v2564
        %2599 = vmatprep.subr.mxu0 0.0
        %2600 = vmatpush1.msra.mxu0 %v2565
        %2601 = vmatprep.subr.mxu0 0.0
        %2602 = vmatpush1.msra.mxu0 %v2566
        %2603 = vmatprep.subr.mxu0 0.0
        %2604 = vmatpush1.msra.mxu0 %v2567
        %2605 = vmatprep.subr.mxu0 0.0
        %2606 = vmatpush1.msra.mxu0 %v2568
        %2607 = vmatprep.subr.mxu0 0.0
        %2608 = vmatpush1.msra.mxu0 %v2569
        %2609 = vmatprep.subr.mxu0 0.0
        %2610 = vmatpush1.msra.mxu0 %v2570
        %2611 = vmatprep.subr.mxu0 0.0
        %2612 = vmatpush1.msra.mxu0 0.0
        %2613 = vmatprep.subr.mxu0 0.0
        %2614 = vmatpush1.msra.mxu0 0.0
        %2615 = vmatprep.subr.mxu0 0.0
        %2616 = vmatpush1.msra.mxu0 0.0
        %2617 = vmatprep.subr.mxu0 0.0
        %2618 = vmatpush1.msra.mxu0 0.0
        %2619 = vmatprep.subr.mxu0 0.0
        %2620 = vmatpush1.msra.mxu0 0.0
        %2621 = vmatprep.subr.mxu0 0.0
        %2622 = vmatpush1.msra.mxu0 0.0
        %2623 = vmatprep.subr.mxu0 0.0
        %2624 = vmatpush1.msra.mxu0 0.0
        %2625 = vmatprep.subr.mxu0 0.0
        %2626 = vmatpush1.msra.mxu0 0.0
        %2627 = vmatprep.subr.mxu0 0.0
        %2628 = vmatpush1.msra.mxu0 0.0
        %2629 = vmatprep.subr.mxu0 0.0
        %2630 = vmatpush1.msra.mxu0 0.0
        %2631 = vmatprep.subr.mxu0 0.0
        %2632 = vmatpush1.msra.mxu0 0.0
        %2633 = vmatprep.subr.mxu0 0.0
        %2634 = vmatpush1.msra.mxu0 0.0
        %2635 = vmatprep.subr.mxu0 0.0
        %2636 = vmatpush1.msra.mxu0 0.0
        %2637 = vmatprep.subr.mxu0 0.0
        %2638 = vmatpush1.msra.mxu0 0.0
        %2639 = vmatprep.subr.mxu0 0.0
        %2640 = vmatpush1.msra.mxu0 0.0
        %2641 = vmatprep.subr.mxu0 0.0
        %2642 = vmatpush1.msra.mxu0 0.0
        %2643 = vmatprep.mubr.f32.mxu0 0.0
        %2644 = vmatmul.mubr.f32.gmra.mrb[0].mxu0 %v785
        %v2645 = vpop.f32.mrb[0].mxu0
        %v2646 = vadd.f32 %v2577, %v2645
        %v2647 = vpop.f32.mrb[0].mxu0
        %2648 = vdwg.mxu0
        %v2650 = vsel %vm1065, %v2456, 0
        %v2653 = vsel %vm1065, %v2551, 0
        %2655 = vmatprep.subr.mxu0 0.0
        %2656 = vmatpush1.xpose.msra.mxu0 %v2653
        %2657 = vmatprep.subr.mxu0 0.0
        %2658 = vmatpush1.xpose.msra.mxu0 0.0
        %2659 = vmatprep.subr.mxu0 0.0
        %2660 = vmatpush1.xpose.msra.mxu0 0.0
        %2661 = vmatprep.subr.mxu0 0.0
        %2662 = vmatpush1.xpose.msra.mxu0 0.0
        %2663 = vmatprep.subr.mxu0 0.0
        %2664 = vmatpush1.xpose.msra.mxu0 0.0
        %2665 = vmatprep.subr.mxu0 0.0
        %2666 = vmatpush1.xpose.msra.mxu0 0.0
        %2667 = vmatprep.subr.mxu0 0.0
        %2668 = vmatpush1.xpose.msra.mxu0 0.0
        %2669 = vmatprep.subr.mxu0 0.0
        %2670 = vmatpush1.xpose.msra.mxu0 0.0
        %2671 = vmatprep.subr.mxu0 0.0
        %2672 = vmatpush1.xpose.msra.mxu0 0.0
        %2673 = vmatprep.subr.mxu0 0.0
        %2674 = vmatpush1.xpose.msra.mxu0 0.0
        %2675 = vmatprep.subr.mxu0 0.0
        %2676 = vmatpush1.xpose.msra.mxu0 0.0
        %2677 = vmatprep.subr.mxu0 0.0
        %2678 = vmatpush1.xpose.msra.mxu0 0.0
        %2679 = vmatprep.subr.mxu0 0.0
        %2680 = vmatpush1.xpose.msra.mxu0 0.0
        %2681 = vmatprep.subr.mxu0 0.0
        %2682 = vmatpush1.xpose.msra.mxu0 0.0
        %2683 = vmatprep.subr.mxu0 0.0
        %2684 = vmatpush1.xpose.msra.mxu0 0.0
        %2685 = vmatprep.subr.mxu0 0.0
        %2686 = vmatpush1.xpose.msra.mxu0 0.0
        %2687 = vmatprep.subr.mxu0 0.0
        %2688 = vmatpush1.xpose.msra.mxu0 0.0
        %2689 = vmatprep.subr.mxu0 0.0
        %2690 = vmatpush1.xpose.msra.mxu0 0.0
        %2691 = vmatprep.subr.mxu0 0.0
        %2692 = vmatpush1.xpose.msra.mxu0 0.0
        %2693 = vmatprep.subr.mxu0 0.0
        %2694 = vmatpush1.xpose.msra.mxu0 0.0
        %2695 = vmatprep.subr.mxu0 0.0
        %2696 = vmatpush1.xpose.msra.mxu0 0.0
        %2697 = vmatprep.subr.mxu0 0.0
        %2698 = vmatpush1.xpose.msra.mxu0 0.0
        %2699 = vmatprep.subr.mxu0 0.0
        %2700 = vmatpush1.xpose.msra.mxu0 0.0
        %2701 = vmatprep.subr.mxu0 0.0
        %2702 = vmatpush1.xpose.msra.mxu0 0.0
        %2703 = vmatprep.subr.mxu0 0.0
        %2704 = vmatpush1.xpose.msra.mxu0 0.0
        %2705 = vmatprep.subr.mxu0 0.0
        %2706 = vmatpush1.xpose.msra.mxu0 0.0
        %2707 = vmatprep.subr.mxu0 0.0
        %2708 = vmatpush1.xpose.msra.mxu0 0.0
        %2709 = vmatprep.subr.mxu0 0.0
        %2710 = vmatpush1.xpose.msra.mxu0 0.0
        %2711 = vmatprep.subr.mxu0 0.0
        %2712 = vmatpush1.xpose.msra.mxu0 0.0
        %2713 = vmatprep.subr.mxu0 0.0
        %2714 = vmatpush1.xpose.msra.mxu0 0.0
        %2715 = vmatprep.subr.mxu0 0.0
        %2716 = vmatpush1.xpose.msra.mxu0 0.0
        %2717 = vmatprep.subr.mxu0 0.0
        %2718 = vmatpush1.xpose.msra.mxu0 0.0
        %2719 = vmatprep.mubr.f32.mxu0 0.0
        %2720 = vmatmul.mubr.f32.gmra.mrb[0].mxu0 %v2650
        %v2721 = vpop.f32.mrb[0].mxu0
        %v2722 = vadd.f32 0.0, %v2721
        %v2723 = vpop.f32.mrb[0].mxu0
        %2724 = vdwg.mxu0
        %v2725 = vmul.f32 %v2722, 0.17677669
        %v2726 = vsel %vm1143, %v2725, -inf
        %2727 = vmax.xlane.f32.xlu0 %v2726
        %v2728 = vpop.xlane.xlu0 %2727
        %v2729 = vsub.f32 %v2725, %v2728
        %v2730 = vmul.f32 %v2729, 1.442695
        %v2731 = vpow.pop %v2730
        %v2732 = vsel %vm1143, %v2731, 0.0
        %2733 = vadd.xlane.f32.xlu0 %v2732
        %v2734 = vpop.xlane.xlu0 %2733
        %v2735 = vrcp.pop %v2734
        %v2736 = vmul.f32 %v2731, %v2735
        %v2738 = vsel %vm1155, %v2736, 0
        %v2741 = vsel %vm757, %v2646, 0
        %2743 = vmatprep.subr.mxu0 0.0
        %2744 = vmatpush1.msra.mxu0 %v2741
        %2745 = vmatprep.subr.mxu0 0.0
        %2746 = vmatpush1.msra.mxu0 0.0
        %2747 = vmatprep.subr.mxu0 0.0
        %2748 = vmatpush1.msra.mxu0 0.0
        %2749 = vmatprep.subr.mxu0 0.0
        %2750 = vmatpush1.msra.mxu0 0.0
        %2751 = vmatprep.subr.mxu0 0.0
        %2752 = vmatpush1.msra.mxu0 0.0
        %2753 = vmatprep.subr.mxu0 0.0
        %2754 = vmatpush1.msra.mxu0 0.0
        %2755 = vmatprep.subr.mxu0 0.0
        %2756 = vmatpush1.msra.mxu0 0.0
        %2757 = vmatprep.subr.mxu0 0.0
        %2758 = vmatpush1.msra.mxu0 0.0
        %2759 = vmatprep.subr.mxu0 0.0
        %2760 = vmatpush1.msra.mxu0 0.0
        %2761 = vmatprep.subr.mxu0 0.0
        %2762 = vmatpush1.msra.mxu0 0.0
        %2763 = vmatprep.subr.mxu0 0.0
        %2764 = vmatpush1.msra.mxu0 0.0
        %2765 = vmatprep.subr.mxu0 0.0
        %2766 = vmatpush1.msra.mxu0 0.0
        %2767 = vmatprep.subr.mxu0 0.0
        %2768 = vmatpush1.msra.mxu0 0.0
        %2769 = vmatprep.subr.mxu0 0.0
        %2770 = vmatpush1.msra.mxu0 0.0
        %2771 = vmatprep.subr.mxu0 0.0
        %2772 = vmatpush1.msra.mxu0 0.0
        %2773 = vmatprep.subr.mxu0 0.0
        %2774 = vmatpush1.msra.mxu0 0.0
        %2775 = vmatprep.subr.mxu0 0.0
        %2776 = vmatpush1.msra.mxu0 0.0
        %2777 = vmatprep.subr.mxu0 0.0
        %2778 = vmatpush1.msra.mxu0 0.0
        %2779 = vmatprep.subr.mxu0 0.0
        %2780 = vmatpush1.msra.mxu0 0.0
        %2781 = vmatprep.subr.mxu0 0.0
        %2782 = vmatpush1.msra.mxu0 0.0
        %2783 = vmatprep.subr.mxu0 0.0
        %2784 = vmatpush1.msra.mxu0 0.0
        %2785 = vmatprep.subr.mxu0 0.0
        %2786 = vmatpush1.msra.mxu0 0.0
        %2787 = vmatprep.subr.mxu0 0.0
        %2788 = vmatpush1.msra.mxu0 0.0
        %2789 = vmatprep.subr.mxu0 0.0
        %2790 = vmatpush1.msra.mxu0 0.0
        %2791 = vmatprep.subr.mxu0 0.0
        %2792 = vmatpush1.msra.mxu0 0.0
        %2793 = vmatprep.subr.mxu0 0.0
        %2794 = vmatpush1.msra.mxu0 0.0
        %2795 = vmatprep.subr.mxu0 0.0
        %2796 = vmatpush1.msra.mxu0 0.0
        %2797 = vmatprep.subr.mxu0 0.0
        %2798 = vmatpush1.msra.mxu0 0.0
        %2799 = vmatprep.subr.mxu0 0.0
        %2800 = vmatpush1.msra.mxu0 0.0
        %2801 = vmatprep.subr.mxu0 0.0
        %2802 = vmatpush1.msra.mxu0 0.0
        %2803 = vmatprep.subr.mxu0 0.0
        %2804 = vmatpush1.msra.mxu0 0.0
        %2805 = vmatprep.subr.mxu0 0.0
        %2806 = vmatpush1.msra.mxu0 0.0
        %2807 = vmatprep.mubr.f32.mxu0 0.0
        %2808 = vmatmul.mubr.f32.gmra.mrb[0].mxu0 %v2738
        %v2809 = vpop.f32.mrb[0].mxu0
        %v2810 = vadd.f32 0.0, %v2809
        %v2811 = vpop.f32.mrb[0].mxu0
        %2812 = vdwg.mxu0
        %s2813 = scalar_lea.vmem %s11, 96
        %v2814 = vld [vmem:[%s2813] sm:$0xff]
        %v2815 = vld [vmem:[%s2813 + $0x8] sm:$0xff]
        %v2816 = vld [vmem:[%s2813 + $0x10] sm:$0xff]
        %v2817 = vld [vmem:[%s2813 + $0x18] sm:$0xff]
        %v2819 = vsel %vm1065, %v2810, 0
        %2821 = vmatprep.subr.mxu0 0.0
        %2822 = vmatpush1.msra.mxu0 %v2814
        %2823 = vmatprep.subr.mxu0 0.0
        %2824 = vmatpush1.msra.mxu0 %v2815
        %2825 = vmatprep.subr.mxu0 0.0
        %2826 = vmatpush1.msra.mxu0 %v2816
        %2827 = vmatprep.subr.mxu0 0.0
        %2828 = vmatpush1.msra.mxu0 %v2817
        %2829 = vmatprep.subr.mxu0 0.0
        %2830 = vmatpush1.msra.mxu0 0.0
        %2831 = vmatprep.subr.mxu0 0.0
        %2832 = vmatpush1.msra.mxu0 0.0
        %2833 = vmatprep.subr.mxu0 0.0
        %2834 = vmatpush1.msra.mxu0 0.0
        %2835 = vmatprep.subr.mxu0 0.0
        %2836 = vmatpush1.msra.mxu0 0.0
        %2837 = vmatprep.subr.mxu0 0.0
        %2838 = vmatpush1.msra.mxu0 0.0
        %2839 = vmatprep.subr.mxu0 0.0
        %2840 = vmatpush1.msra.mxu0 0.0
        %2841 = vmatprep.subr.mxu0 0.0
        %2842 = vmatpush1.msra.mxu0 0.0
        %2843 = vmatprep.subr.mxu0 0.0
        %2844 = vmatpush1.msra.mxu0 0.0
        %2845 = vmatprep.subr.mxu0 0.0
        %2846 = vmatpush1.msra.mxu0 0.0
        %2847 = vmatprep.subr.mxu0 0.0
        %2848 = vmatpush1.msra.mxu0 0.0
        %2849 = vmatprep.subr.mxu0 0.0
        %2850 = vmatpush1.msra.mxu0 0.0
        %2851 = vmatprep.subr.mxu0 0.0
        %2852 = vmatpush1.msra.mxu0 0.0
        %2853 = vmatprep.subr.mxu0 0.0
        %2854 = vmatpush1.msra.mxu0 0.0
        %2855 = vmatprep.subr.mxu0 0.0
        %2856 = vmatpush1.msra.mxu0 0.0
        %2857 = vmatprep.subr.mxu0 0.0
        %2858 = vmatpush1.msra.mxu0 0.0
        %2859 = vmatprep.subr.mxu0 0.0
        %2860 = vmatpush1.msra.mxu0 0.0
        %2861 = vmatprep.subr.mxu0 0.0
        %2862 = vmatpush1.msra.mxu0 0.0
        %2863 = vmatprep.subr.mxu0 0.0
        %2864 = vmatpush1.msra.mxu0 0.0
        %2865 = vmatprep.subr.mxu0 0.0
        %2866 = vmatpush1.msra.mxu0 0.0
        %2867 = vmatprep.subr.mxu0 0.0
        %2868 = vmatpush1.msra.mxu0 0.0
        %2869 = vmatprep.subr.mxu0 0.0
        %2870 = vmatpush1.msra.mxu0 0.0
        %2871 = vmatprep.subr.mxu0 0.0
        %2872 = vmatpush1.msra.mxu0 0.0
        %2873 = vmatprep.subr.mxu0 0.0
        %2874 = vmatpush1.msra.mxu0 0.0
        %2875 = vmatprep.subr.mxu0 0.0
        %2876 = vmatpush1.msra.mxu0 0.0
        %2877 = vmatprep.subr.mxu0 0.0
        %2878 = vmatpush1.msra.mxu0 0.0
        %2879 = vmatprep.subr.mxu0 0.0
        %2880 = vmatpush1.msra.mxu0 0.0
        %2881 = vmatprep.subr.mxu0 0.0
        %2882 = vmatpush1.msra.mxu0 0.0
        %2883 = vmatprep.subr.mxu0 0.0
        %2884 = vmatpush1.msra.mxu0 0.0
        %2885 = vmatprep.mubr.f32.mxu0 0.0
        %2886 = vmatmul.mubr.f32.gmra.mrb[0].mxu0 %v2819
        %v2887 = vpop.f32.mrb[0].mxu0
        %v2888 = vadd.f32 0.0, %v2887
        %v2889 = vpop.f32.mrb[0].mxu0
        %2890 = vdwg.mxu0
        %v2891 = vadd.f32 %v2363, %v2888
        %v2892 = vadd.f32 %v752, %v2891
        %v2893 = vld [vmem:[%s12] sm:$0x1]
        %v2895 = vlaneseq
        %v2896 = vshrl.u32 %v2895, 7
        %v2897 = vsub.s32 0, %v2896
        %v2898 = vrot.slane %v2893, %v2897
        %v2900 = vadd.f32 %v2892, %v2898
        %v2901 = vld [vmem:[%s13] sm:$0x1]
        %v2902 = vld [vmem:[%s14] sm:$0x1]
        %v2903 = vsel %vm757, %v2900, 0.0
        %2904 = vadd.xlane.f32.xlu0 %v2903
        %v2905 = vpop.xlane.xlu0 %2904
        %v2906 = vmul.f32 %v2905, %v761
        %v2907 = vsub.f32 %v2900, %v2906
        %v2908 = vmul.f32 %v2907, %v2907
        %v2909 = vsel %vm757, %v2908, 0.0
        %2910 = vadd.xlane.f32.xlu0 %v2909
        %v2911 = vpop.xlane.xlu0 %2910
        %v2912 = vmul.f32 %v2911, %v761
        %v2913 = vadd.f32 %v2912, 1e-06
        %v2914 = vrsqrt.pop %v2913
        %v2915 = vmul.f32 %v2907, %v2914
        %v2917 = vlaneseq
        %v2918 = vshrl.u32 %v2917, 7
        %v2919 = vsub.s32 0, %v2918
        %v2920 = vrot.slane %v2901, %v2919
        %v2922 = vmul.f32 %v2915, %v2920
        %v2924 = vlaneseq
        %v2925 = vshrl.u32 %v2924, 7
        %v2926 = vsub.s32 0, %v2925
        %v2927 = vrot.slane %v2902, %v2926
        %v2929 = vadd.f32 %v2922, %v2927
        %v2930 = vld [vmem:[%s15] sm:$0xff]
        %v2931 = vld [vmem:[%s15 + $0x8] sm:$0xff]
        %v2932 = vld [vmem:[%s15 + $0x10] sm:$0xff]
        %v2933 = vld [vmem:[%s15 + $0x18] sm:$0xff]
        %v2934 = vld [vmem:[%s15 + $0x20] sm:$0xff]
        %v2935 = vld [vmem:[%s15 + $0x28] sm:$0xff]
        %v2936 = vld [vmem:[%s15 + $0x30] sm:$0xff]
        %v2937 = vld [vmem:[%s15 + $0x38] sm:$0xff]
        %v2938 = vld [vmem:[%s15 + $0x40] sm:$0xff]
        %v2939 = vld [vmem:[%s15 + $0x48] sm:$0xff]
        %v2940 = vld [vmem:[%s15 + $0x50] sm:$0xff]
        %v2941 = vld [vmem:[%s15 + $0x58] sm:$0xff]
        %v2942 = vld [vmem:[%s15 + $0x60] sm:$0xff]
        %v2943 = vld [vmem:[%s15 + $0x68] sm:$0xff]
        %v2944 = vld [vmem:[%s15 + $0x70] sm:$0xff]
        %v2945 = vld [vmem:[%s15 + $0x78] sm:$0xff]
        %v2946 = vld [vmem:[%s15 + $0x80] sm:$0xff]
        %v2947 = vld [vmem:[%s15 + $0x88] sm:$0xff]
        %v2948 = vld [vmem:[%s15 + $0x90] sm:$0xff]
        %v2949 = vld [vmem:[%s15 + $0x98] sm:$0xff]
        %v2950 = vld [vmem:[%s15 + $0xa0] sm:$0xff]
        %v2951 = vld [vmem:[%s15 + $0xa8] sm:$0xff]
        %v2952 = vld [vmem:[%s15 + $0xb0] sm:$0xff]
        %v2953 = vld [vmem:[%s15 + $0xb8] sm:$0xff]
        %v2954 = vld [vmem:[%s15 + $0xc0] sm:$0xff]
        %v2955 = vld [vmem:[%s15 + $0xc8] sm:$0xff]
        %v2956 = vld [vmem:[%s15 + $0xd0] sm:$0xff]
        %v2957 = vld [vmem:[%s15 + $0xd8] sm:$0xff]
        %v2958 = vld [vmem:[%s15 + $0xe0] sm:$0xff]
        %v2959 = vld [vmem:[%s15 + $0xe8] sm:$0xff]
        %v2960 = vld [vmem:[%s15 + $0xf0] sm:$0xff]
        %v2961 = vld [vmem:[%s15 + $0xf8] sm:$0xff]
        %v2962 = vld [vmem:[%s16] sm:$0x3]
        %v2964 = vlaneseq
        %v2965 = vshrl.u32 %v2964, 7
        %v2966 = vsub.s32 0, %v2965
        %v2967 = vrot.slane %v2962, %v2966
        %v2968 = vlaneseq
        %v2969 = vshrl.u32 %v2968, 7
        %v2970 = vsub.s32 1, %v2969
        %v2971 = vrot.slane %v2962, %v2970
        %2974 = vmatprep.subr.mxu0 %v2931
        %2975 = vmatpush1.msra.mxu0 %v2930
        %2976 = vmatprep.subr.mxu0 %v2933
        %2977 = vmatpush1.msra.mxu0 %v2932
        %2978 = vmatprep.subr.mxu0 %v2935
        %2979 = vmatpush1.msra.mxu0 %v2934
        %2980 = vmatprep.subr.mxu0 %v2937
        %2981 = vmatpush1.msra.mxu0 %v2936
        %2982 = vmatprep.subr.mxu0 %v2939
        %2983 = vmatpush1.msra.mxu0 %v2938
        %2984 = vmatprep.subr.mxu0 %v2941
        %2985 = vmatpush1.msra.mxu0 %v2940
        %2986 = vmatprep.subr.mxu0 %v2943
        %2987 = vmatpush1.msra.mxu0 %v2942
        %2988 = vmatprep.subr.mxu0 %v2945
        %2989 = vmatpush1.msra.mxu0 %v2944
        %2990 = vmatprep.subr.mxu0 %v2947
        %2991 = vmatpush1.msra.mxu0 %v2946
        %2992 = vmatprep.subr.mxu0 %v2949
        %2993 = vmatpush1.msra.mxu0 %v2948
        %2994 = vmatprep.subr.mxu0 %v2951
        %2995 = vmatpush1.msra.mxu0 %v2950
        %2996 = vmatprep.subr.mxu0 %v2953
        %2997 = vmatpush1.msra.mxu0 %v2952
        %2998 = vmatprep.subr.mxu0 %v2955
        %2999 = vmatpush1.msra.mxu0 %v2954
        %3000 = vmatprep.subr.mxu0 %v2957
        %3001 = vmatpush1.msra.mxu0 %v2956
        %3002 = vmatprep.subr.mxu0 %v2959
        %3003 = vmatpush1.msra.mxu0 %v2958
        %3004 = vmatprep.subr.mxu0 %v2961
        %3005 = vmatpush1.msra.mxu0 %v2960
        %3006 = vmatprep.subr.mxu0 0.0
        %3007 = vmatpush1.msra.mxu0 0.0
        %3008 = vmatprep.subr.mxu0 0.0
        %3009 = vmatpush1.msra.mxu0 0.0
        %3010 = vmatprep.subr.mxu0 0.0
        %3011 = vmatpush1.msra.mxu0 0.0
        %3012 = vmatprep.subr.mxu0 0.0
        %3013 = vmatpush1.msra.mxu0 0.0
        %3014 = vmatprep.subr.mxu0 0.0
        %3015 = vmatpush1.msra.mxu0 0.0
        %3016 = vmatprep.subr.mxu0 0.0
        %3017 = vmatpush1.msra.mxu0 0.0
        %3018 = vmatprep.subr.mxu0 0.0
        %3019 = vmatpush1.msra.mxu0 0.0
        %3020 = vmatprep.subr.mxu0 0.0
        %3021 = vmatpush1.msra.mxu0 0.0
        %3022 = vmatprep.subr.mxu0 0.0
        %3023 = vmatpush1.msra.mxu0 0.0
        %3024 = vmatprep.subr.mxu0 0.0
        %3025 = vmatpush1.msra.mxu0 0.0
        %3026 = vmatprep.subr.mxu0 0.0
        %3027 = vmatpush1.msra.mxu0 0.0
        %3028 = vmatprep.subr.mxu0 0.0
        %3029 = vmatpush1.msra.mxu0 0.0
        %3030 = vmatprep.subr.mxu0 0.0
        %3031 = vmatpush1.msra.mxu0 0.0
        %3032 = vmatprep.subr.mxu0 0.0
        %3033 = vmatpush1.msra.mxu0 0.0
        %3034 = vmatprep.subr.mxu0 0.0
        %3035 = vmatpush1.msra.mxu0 0.0
        %3036 = vmatprep.subr.mxu0 0.0
        %3037 = vmatpush1.msra.mxu0 0.0
        %3038 = vmatprep.mubr.f32.mxu0 0.0
        %3039 = vmatmul.mubr.f32.gmra.mrb[0].mxu0 %v2929
        %v3040 = vpop.f32.mrb[0].mxu0
        %v3041 = vadd.f32 %v2967, %v3040
        %v3042 = vpop.f32.mrb[0].mxu0
        %v3043 = vadd.f32 %v2971, %v3042
        %3044 = vdwg.mxu0
        %v3045 = vmul.f32 %v3041, 0.5
        %v3046 = vmul.f32 %v3043, 0.5
        %v3047 = vmul.f32 %v3041, 0.70710677
        %v3048 = vmul.f32 %v3043, 0.70710677
        %vm3049 = vcmp.ge.f32.partialorder %v3047, 0.0
        %vm3050 = vcmp.ge.f32.partialorder %v3048, 0.0
        %v3051 = vsub.f32 0.0, %v3047
        %v3052 = vsub.f32 0.0, %v3048
        %v3053 = vsel %vm3049, %v3047, %v3051
        %v3054 = vsel %vm3050, %v3048, %v3052
        %v3055 = vmul.f32 %v3053, 0.3275911
        %v3056 = vmul.f32 %v3054, 0.3275911
        %v3057 = vadd.f32 %v3055, 1.0
        %v3058 = vadd.f32 %v3056, 1.0
        %v3059 = vrcp.pop %v3057
        %v3060 = vmul.f32 1.0, %v3059
        %v3061 = vrcp.pop %v3058
        %v3062 = vmul.f32 1.0, %v3061
        %v3063 = vmul.f32 %v3060, 1.0614054
        %v3064 = vmul.f32 %v3062, 1.0614054
        %v3065 = vsub.f32 %v3063, 1.4531521
        %v3066 = vsub.f32 %v3064, 1.4531521
        %v3067 = vmul.f32 %v3065, %v3060
        %v3068 = vmul.f32 %v3066, %v3062
        %v3069 = vadd.f32 %v3067, 1.4214138
        %v3070 = vadd.f32 %v3068, 1.4214138
        %v3071 = vmul.f32 %v3069, %v3060
        %v3072 = vmul.f32 %v3070, %v3062
        %v3073 = vsub.f32 %v3071, 0.28449672
        %v3074 = vsub.f32 %v3072, 0.28449672
        %v3075 = vmul.f32 %v3073, %v3060
        %v3076 = vmul.f32 %v3074, %v3062
        %v3077 = vadd.f32 %v3075, 0.2548296
        %v3078 = vadd.f32 %v3076, 0.2548296
        %v3079 = vmul.f32 %v3077, %v3060
        %v3080 = vmul.f32 %v3078, %v3062
        %v3081 = vsub.f32 0.0, %v3053
        %v3082 = vsub.f32 0.0, %v3054
        %v3083 = vmul.f32 %v3081, %v3053
        %v3084 = vmul.f32 %v3082, %v3054
        %v3085 = vmul.f32 %v3083, 1.442695
        %v3086 = vpow.pop %v3085
        %v3087 = vmul.f32 %v3084, 1.442695
        %v3088 = vpow.pop %v3087
        %v3089 = vmul.f32 %v3079, %v3086
        %v3090 = vmul.f32 %v3080, %v3088
        %v3091 = vsub.f32 1.0, %v3089
        %v3092 = vsub.f32 1.0, %v3090
        %v3093 = vsub.f32 0.0, %v3091
        %v3094 = vsub.f32 0.0, %v3092
        %v3095 = vsel %vm3049, %v3091, %v3093
        %v3096 = vsel %vm3050, %v3092, %v3094
        %v3097 = vadd.f32 %v3095, 1.0
        %v3098 = vadd.f32 %v3096, 1.0
        %v3099 = vmul.f32 %v3045, %v3097
        %v3100 = vmul.f32 %v3046, %v3098
        %v3101 = vld [vmem:[%s17] sm:$0xff]
        %v3102 = vld [vmem:[%s17 + $0x8] sm:$0xff]
        %v3103 = vld [vmem:[%s17 + $0x10] sm:$0xff]
        %v3104 = vld [vmem:[%s17 + $0x18] sm:$0xff]
        %v3105 = vld [vmem:[%s17 + $0x20] sm:$0xff]
        %v3106 = vld [vmem:[%s17 + $0x28] sm:$0xff]
        %v3107 = vld [vmem:[%s17 + $0x30] sm:$0xff]
        %v3108 = vld [vmem:[%s17 + $0x38] sm:$0xff]
        %v3109 = vld [vmem:[%s17 + $0x40] sm:$0xff]
        %v3110 = vld [vmem:[%s17 + $0x48] sm:$0xff]
        %v3111 = vld [vmem:[%s17 + $0x50] sm:$0xff]
        %v3112 = vld [vmem:[%s17 + $0x58] sm:$0xff]
        %v3113 = vld [vmem:[%s17 + $0x60] sm:$0xff]
        %v3114 = vld [vmem:[%s17 + $0x68] sm:$0xff]
        %v3115 = vld [vmem:[%s17 + $0x70] sm:$0xff]
        %v3116 = vld [vmem:[%s17 + $0x78] sm:$0xff]
        %v3117 = vld [vmem:[%s17 + $0x80] sm:$0xff]
        %v3118 = vld [vmem:[%s17 + $0x88] sm:$0xff]
        %v3119 = vld [vmem:[%s17 + $0x90] sm:$0xff]
        %v3120 = vld [vmem:[%s17 + $0x98] sm:$0xff]
        %v3121 = vld [vmem:[%s17 + $0xa0] sm:$0xff]
        %v3122 = vld [vmem:[%s17 + $0xa8] sm:$0xff]
        %v3123 = vld [vmem:[%s17 + $0xb0] sm:$0xff]
        %v3124 = vld [vmem:[%s17 + $0xb8] sm:$0xff]
        %v3125 = vld [vmem:[%s17 + $0xc0] sm:$0xff]
        %v3126 = vld [vmem:[%s17 + $0xc8] sm:$0xff]
        %v3127 = vld [vmem:[%s17 + $0xd0] sm:$0xff]
        %v3128 = vld [vmem:[%s17 + $0xd8] sm:$0xff]
        %v3129 = vld [vmem:[%s17 + $0xe0] sm:$0xff]
        %v3130 = vld [vmem:[%s17 + $0xe8] sm:$0xff]
        %v3131 = vld [vmem:[%s17 + $0xf0] sm:$0xff]
        %v3132 = vld [vmem:[%s17 + $0xf8] sm:$0xff]
        %3133 = vmatprep.subr.mxu0 0.0
        %3134 = vmatpush1.msra.mxu0 %v3101
        %3135 = vmatprep.subr.mxu0 0.0
        %3136 = vmatpush1.msra.mxu0 %v3102
        %3137 = vmatprep.subr.mxu0 0.0
        %3138 = vmatpush1.msra.mxu0 %v3103
        %3139 = vmatprep.subr.mxu0 0.0
        %3140 = vmatpush1.msra.mxu0 %v3104
        %3141 = vmatprep.subr.mxu0 0.0
        %3142 = vmatpush1.msra.mxu0 %v3105
        %3143 = vmatprep.subr.mxu0 0.0
        %3144 = vmatpush1.msra.mxu0 %v3106
        %3145 = vmatprep.subr.mxu0 0.0
        %3146 = vmatpush1.msra.mxu0 %v3107
        %3147 = vmatprep.subr.mxu0 0.0
        %3148 = vmatpush1.msra.mxu0 %v3108
        %3149 = vmatprep.subr.mxu0 0.0
        %3150 = vmatpush1.msra.mxu0 %v3109
        %3151 = vmatprep.subr.mxu0 0.0
        %3152 = vmatpush1.msra.mxu0 %v3110
        %3153 = vmatprep.subr.mxu0 0.0
        %3154 = vmatpush1.msra.mxu0 %v3111
        %3155 = vmatprep.subr.mxu0 0.0
        %3156 = vmatpush1.msra.mxu0 %v3112
        %3157 = vmatprep.subr.mxu0 0.0
        %3158 = vmatpush1.msra.mxu0 %v3113
        %3159 = vmatprep.subr.mxu0 0.0
        %3160 = vmatpush1.msra.mxu0 %v3114
        %3161 = vmatprep.subr.mxu0 0.0
        %3162 = vmatpush1.msra.mxu0 %v3115
        %3163 = vmatprep.subr.mxu0 0.0
        %3164 = vmatpush1.msra.mxu0 %v3116
        %3165 = vmatprep.subr.mxu0 0.0
        %3166 = vmatpush1.msra.mxu0 %v3117
        %3167 = vmatprep.subr.mxu0 0.0
        %3168 = vmatpush1.msra.mxu0 %v3118
        %3169 = vmatprep.subr.mxu0 0.0
        %3170 = vmatpush1.msra.mxu0 %v3119
        %3171 = vmatprep.subr.mxu0 0.0
        %3172 = vmatpush1.msra.mxu0 %v3120
        %3173 = vmatprep.subr.mxu0 0.0
        %3174 = vmatpush1.msra.mxu0 %v3121
        %3175 = vmatprep.subr.mxu0 0.0
        %3176 = vmatpush1.msra.mxu0 %v3122
        %3177 = vmatprep.subr.mxu0 0.0
        %3178 = vmatpush1.msra.mxu0 %v3123
        %3179 = vmatprep.subr.mxu0 0.0
        %3180 = vmatpush1.msra.mxu0 %v3124
        %3181 = vmatprep.subr.mxu0 0.0
        %3182 = vmatpush1.msra.mxu0 %v3125
        %3183 = vmatprep.subr.mxu0 0.0
        %3184 = vmatpush1.msra.mxu0 %v3126
        %3185 = vmatprep.subr.mxu0 0.0
        %3186 = vmatpush1.msra.mxu0 %v3127
        %3187 = vmatprep.subr.mxu0 0.0
        %3188 = vmatpush1.msra.mxu0 %v3128
        %3189 = vmatprep.subr.mxu0 0.0
        %3190 = vmatpush1.msra.mxu0 %v3129
        %3191 = vmatprep.subr.mxu0 0.0
        %3192 = vmatpush1.msra.mxu0 %v3130
        %3193 = vmatprep.subr.mxu0 0.0
        %3194 = vmatpush1.msra.mxu0 %v3131
        %3195 = vmatprep.subr.mxu0 0.0
        %3196 = vmatpush1.msra.mxu0 %v3132
        %3197 = vmatprep.mubr.f32.mxu0 %v3100
        %3198 = vmatmul.mubr.f32.gmra.mrb[0].mxu0 %v3099
        %v3199 = vpop.f32.mrb[0].mxu0
        %v3200 = vadd.f32 0.0, %v3199
        %v3201 = vpop.f32.mrb[0].mxu0
        %3202 = vdwg.mxu0
        %v3203 = vadd.f32 %v2900, %v3200
        %v3204 = vld [vmem:[%s18] sm:$0x1]
        %v3206 = vlaneseq
        %v3207 = vshrl.u32 %v3206, 7
        %v3208 = vsub.s32 0, %v3207
        %v3209 = vrot.slane %v3204, %v3208
        %v3211 = vadd.f32 %v3203, %v3209
        %s3212 = scalar_lea.vmem %s3, 1
        %v3213 = vld [vmem:[%s3212] sm:$0x1]
        %s3214 = scalar_lea.vmem %s4, 1
        %v3215 = vld [vmem:[%s3214] sm:$0x1]
        %v3216 = vsel %vm757, %v3211, 0.0
        %3217 = vadd.xlane.f32.xlu0 %v3216
        %v3218 = vpop.xlane.xlu0 %3217
        %v3219 = vmul.f32 %v3218, %v761
        %v3220 = vsub.f32 %v3211, %v3219
        %v3221 = vmul.f32 %v3220, %v3220
        %v3222 = vsel %vm757, %v3221, 0.0
        %3223 = vadd.xlane.f32.xlu0 %v3222
        %v3224 = vpop.xlane.xlu0 %3223
        %v3225 = vmul.f32 %v3224, %v761
        %v3226 = vadd.f32 %v3225, 1e-06
        %v3227 = vrsqrt.pop %v3226
        %v3228 = vmul.f32 %v3220, %v3227
        %v3230 = vlaneseq
        %v3231 = vshrl.u32 %v3230, 7
        %v3232 = vsub.s32 0, %v3231
        %v3233 = vrot.slane %v3213, %v3232
        %v3235 = vmul.f32 %v3228, %v3233
        %v3237 = vlaneseq
        %v3238 = vshrl.u32 %v3237, 7
        %v3239 = vsub.s32 0, %v3238
        %v3240 = vrot.slane %v3215, %v3239
        %v3242 = vadd.f32 %v3235, %v3240
        %s3243 = scalar_lea.vmem %s5, 512
        %v3244 = vld [vmem:[%s3243] sm:$0xff]
        %v3245 = vld [vmem:[%s3243 + $0x8] sm:$0xff]
        %v3246 = vld [vmem:[%s3243 + $0x10] sm:$0xff]
        %v3247 = vld [vmem:[%s3243 + $0x18] sm:$0xff]
        %v3248 = vld [vmem:[%s3243 + $0x20] sm:$0xff]
        %v3249 = vld [vmem:[%s3243 + $0x28] sm:$0xff]
        %v3250 = vld [vmem:[%s3243 + $0x30] sm:$0xff]
        %v3251 = vld [vmem:[%s3243 + $0x38] sm:$0xff]
        %v3252 = vld [vmem:[%s3243 + $0x40] sm:$0xff]
        %v3253 = vld [vmem:[%s3243 + $0x48] sm:$0xff]
        %v3254 = vld [vmem:[%s3243 + $0x50] sm:$0xff]
        %v3255 = vld [vmem:[%s3243 + $0x58] sm:$0xff]
        %v3256 = vld [vmem:[%s3243 + $0x60] sm:$0xff]
        %v3257 = vld [vmem:[%s3243 + $0x68] sm:$0xff]
        %v3258 = vld [vmem:[%s3243 + $0x70] sm:$0xff]
        %v3259 = vld [vmem:[%s3243 + $0x78] sm:$0xff]
        %s3260 = scalar_lea.vmem %s6, 4
        %v3261 = vld [vmem:[%s3260] sm:$0x1]
        %v3263 = vlaneseq
        %v3264 = vshrl.u32 %v3263, 7
        %v3265 = vsub.s32 0, %v3264
        %v3266 = vrot.slane %v3261, %v3265
        %3268 = vmatprep.subr.mxu0 0.0
        %3269 = vmatpush1.msra.mxu0 %v3244
        %3270 = vmatprep.subr.mxu0 0.0
        %3271 = vmatpush1.msra.mxu0 %v3245
        %3272 = vmatprep.subr.mxu0 0.0
        %3273 = vmatpush1.msra.mxu0 %v3246
        %3274 = vmatprep.subr.mxu0 0.0
        %3275 = vmatpush1.msra.mxu0 %v3247
        %3276 = vmatprep.subr.mxu0 0.0
        %3277 = vmatpush1.msra.mxu0 %v3248
        %3278 = vmatprep.subr.mxu0 0.0
        %3279 = vmatpush1.msra.mxu0 %v3249
        %3280 = vmatprep.subr.mxu0 0.0
        %3281 = vmatpush1.msra.mxu0 %v3250
        %3282 = vmatprep.subr.mxu0 0.0
        %3283 = vmatpush1.msra.mxu0 %v3251
        %3284 = vmatprep.subr.mxu0 0.0
        %3285 = vmatpush1.msra.mxu0 %v3252
        %3286 = vmatprep.subr.mxu0 0.0
        %3287 = vmatpush1.msra.mxu0 %v3253
        %3288 = vmatprep.subr.mxu0 0.0
        %3289 = vmatpush1.msra.mxu0 %v3254
        %3290 = vmatprep.subr.mxu0 0.0
        %3291 = vmatpush1.msra.mxu0 %v3255
        %3292 = vmatprep.subr.mxu0 0.0
        %3293 = vmatpush1.msra.mxu0 %v3256
        %3294 = vmatprep.subr.mxu0 0.0
        %3295 = vmatpush1.msra.mxu0 %v3257
        %3296 = vmatprep.subr.mxu0 0.0
        %3297 = vmatpush1.msra.mxu0 %v3258
        %3298 = vmatprep.subr.mxu0 0.0
        %3299 = vmatpush1.msra.mxu0 %v3259
        %3300 = vmatprep.subr.mxu0 0.0
        %3301 = vmatpush1.msra.mxu0 0.0
        %3302 = vmatprep.subr.mxu0 0.0
        %3303 = vmatpush1.msra.mxu0 0.0
        %3304 = vmatprep.subr.mxu0 0.0
        %3305 = vmatpush1.msra.mxu0 0.0
        %3306 = vmatprep.subr.mxu0 0.0
        %3307 = vmatpush1.msra.mxu0 0.0
        %3308 = vmatprep.subr.mxu0 0.0
        %3309 = vmatpush1.msra.mxu0 0.0
        %3310 = vmatprep.subr.mxu0 0.0
        %3311 = vmatpush1.msra.mxu0 0.0
        %3312 = vmatprep.subr.mxu0 0.0
        %3313 = vmatpush1.msra.mxu0 0.0
        %3314 = vmatprep.subr.mxu0 0.0
        %3315 = vmatpush1.msra.mxu0 0.0
        %3316 = vmatprep.subr.mxu0 0.0
        %3317 = vmatpush1.msra.mxu0 0.0
        %3318 = vmatprep.subr.mxu0 0.0
        %3319 = vmatpush1.msra.mxu0 0.0
        %3320 = vmatprep.subr.mxu0 0.0
        %3321 = vmatpush1.msra.mxu0 0.0
        %3322 = vmatprep.subr.mxu0 0.0
        %3323 = vmatpush1.msra.mxu0 0.0
        %3324 = vmatprep.subr.mxu0 0.0
        %3325 = vmatpush1.msra.mxu0 0.0
        %3326 = vmatprep.subr.mxu0 0.0
        %3327 = vmatpush1.msra.mxu0 0.0
        %3328 = vmatprep.subr.mxu0 0.0
        %3329 = vmatpush1.msra.mxu0 0.0
        %3330 = vmatprep.subr.mxu0 0.0
        %3331 = vmatpush1.msra.mxu0 0.0
        %3332 = vmatprep.mubr.f32.mxu0 0.0
        %3333 = vmatmul.mubr.f32.gmra.mrb[0].mxu0 %v3242
        %v3334 = vpop.f32.mrb[0].mxu0
        %v3335 = vadd.f32 %v3266, %v3334
        %v3336 = vpop.f32.mrb[0].mxu0
        %3337 = vdwg.mxu0
        %s3338 = scalar_lea.vmem %s7, 512
        %v3339 = vld [vmem:[%s3338] sm:$0xff]
        %v3340 = vld [vmem:[%s3338 + $0x8] sm:$0xff]
        %v3341 = vld [vmem:[%s3338 + $0x10] sm:$0xff]
        %v3342 = vld [vmem:[%s3338 + $0x18] sm:$0xff]
        %v3343 = vld [vmem:[%s3338 + $0x20] sm:$0xff]
        %v3344 = vld [vmem:[%s3338 + $0x28] sm:$0xff]
        %v3345 = vld [vmem:[%s3338 + $0x30] sm:$0xff]
        %v3346 = vld [vmem:[%s3338 + $0x38] sm:$0xff]
        %v3347 = vld [vmem:[%s3338 + $0x40] sm:$0xff]
        %v3348 = vld [vmem:[%s3338 + $0x48] sm:$0xff]
        %v3349 = vld [vmem:[%s3338 + $0x50] sm:$0xff]
        %v3350 = vld [vmem:[%s3338 + $0x58] sm:$0xff]
        %v3351 = vld [vmem:[%s3338 + $0x60] sm:$0xff]
        %v3352 = vld [vmem:[%s3338 + $0x68] sm:$0xff]
        %v3353 = vld [vmem:[%s3338 + $0x70] sm:$0xff]
        %v3354 = vld [vmem:[%s3338 + $0x78] sm:$0xff]
        %s3355 = scalar_lea.vmem %s8, 4
        %v3356 = vld [vmem:[%s3355] sm:$0x1]
        %v3358 = vlaneseq
        %v3359 = vshrl.u32 %v3358, 7
        %v3360 = vsub.s32 0, %v3359
        %v3361 = vrot.slane %v3356, %v3360
        %3363 = vmatprep.subr.mxu0 0.0
        %3364 = vmatpush1.msra.mxu0 %v3339
        %3365 = vmatprep.subr.mxu0 0.0
        %3366 = vmatpush1.msra.mxu0 %v3340
        %3367 = vmatprep.subr.mxu0 0.0
        %3368 = vmatpush1.msra.mxu0 %v3341
        %3369 = vmatprep.subr.mxu0 0.0
        %3370 = vmatpush1.msra.mxu0 %v3342
        %3371 = vmatprep.subr.mxu0 0.0
        %3372 = vmatpush1.msra.mxu0 %v3343
        %3373 = vmatprep.subr.mxu0 0.0
        %3374 = vmatpush1.msra.mxu0 %v3344
        %3375 = vmatprep.subr.mxu0 0.0
        %3376 = vmatpush1.msra.mxu0 %v3345
        %3377 = vmatprep.subr.mxu0 0.0
        %3378 = vmatpush1.msra.mxu0 %v3346
        %3379 = vmatprep.subr.mxu0 0.0
        %3380 = vmatpush1.msra.mxu0 %v3347
        %3381 = vmatprep.subr.mxu0 0.0
        %3382 = vmatpush1.msra.mxu0 %v3348
        %3383 = vmatprep.subr.mxu0 0.0
        %3384 = vmatpush1.msra.mxu0 %v3349
        %3385 = vmatprep.subr.mxu0 0.0
        %3386 = vmatpush1.msra.mxu0 %v3350
        %3387 = vmatprep.subr.mxu0 0.0
        %3388 = vmatpush1.msra.mxu0 %v3351
        %3389 = vmatprep.subr.mxu0 0.0
        %3390 = vmatpush1.msra.mxu0 %v3352
        %3391 = vmatprep.subr.mxu0 0.0
        %3392 = vmatpush1.msra.mxu0 %v3353
        %3393 = vmatprep.subr.mxu0 0.0
        %3394 = vmatpush1.msra.mxu0 %v3354
        %3395 = vmatprep.subr.mxu0 0.0
        %3396 = vmatpush1.msra.mxu0 0.0
        %3397 = vmatprep.subr.mxu0 0.0
        %3398 = vmatpush1.msra.mxu0 0.0
        %3399 = vmatprep.subr.mxu0 0.0
        %3400 = vmatpush1.msra.mxu0 0.0
        %3401 = vmatprep.subr.mxu0 0.0
        %3402 = vmatpush1.msra.mxu0 0.0
        %3403 = vmatprep.subr.mxu0 0.0
        %3404 = vmatpush1.msra.mxu0 0.0
        %3405 = vmatprep.subr.mxu0 0.0
        %3406 = vmatpush1.msra.mxu0 0.0
        %3407 = vmatprep.subr.mxu0 0.0
        %3408 = vmatpush1.msra.mxu0 0.0
        %3409 = vmatprep.subr.mxu0 0.0
        %3410 = vmatpush1.msra.mxu0 0.0
        %3411 = vmatprep.subr.mxu0 0.0
        %3412 = vmatpush1.msra.mxu0 0.0
        %3413 = vmatprep.subr.mxu0 0.0
        %3414 = vmatpush1.msra.mxu0 0.0
        %3415 = vmatprep.subr.mxu0 0.0
        %3416 = vmatpush1.msra.mxu0 0.0
        %3417 = vmatprep.subr.mxu0 0.0
        %3418 = vmatpush1.msra.mxu0 0.0
        %3419 = vmatprep.subr.mxu0 0.0
        %3420 = vmatpush1.msra.mxu0 0.0
        %3421 = vmatprep.subr.mxu0 0.0
        %3422 = vmatpush1.msra.mxu0 0.0
        %3423 = vmatprep.subr.mxu0 0.0
        %3424 = vmatpush1.msra.mxu0 0.0
        %3425 = vmatprep.subr.mxu0 0.0
        %3426 = vmatpush1.msra.mxu0 0.0
        %3427 = vmatprep.mubr.f32.mxu0 0.0
        %3428 = vmatmul.mubr.f32.gmra.mrb[0].mxu0 %v3242
        %v3429 = vpop.f32.mrb[0].mxu0
        %v3430 = vadd.f32 %v3361, %v3429
        %v3431 = vpop.f32.mrb[0].mxu0
        %3432 = vdwg.mxu0
        %s3433 = scalar_lea.vmem %s9, 512
        %v3434 = vld [vmem:[%s3433] sm:$0xff]
        %v3435 = vld [vmem:[%s3433 + $0x8] sm:$0xff]
        %v3436 = vld [vmem:[%s3433 + $0x10] sm:$0xff]
        %v3437 = vld [vmem:[%s3433 + $0x18] sm:$0xff]
        %v3438 = vld [vmem:[%s3433 + $0x20] sm:$0xff]
        %v3439 = vld [vmem:[%s3433 + $0x28] sm:$0xff]
        %v3440 = vld [vmem:[%s3433 + $0x30] sm:$0xff]
        %v3441 = vld [vmem:[%s3433 + $0x38] sm:$0xff]
        %v3442 = vld [vmem:[%s3433 + $0x40] sm:$0xff]
        %v3443 = vld [vmem:[%s3433 + $0x48] sm:$0xff]
        %v3444 = vld [vmem:[%s3433 + $0x50] sm:$0xff]
        %v3445 = vld [vmem:[%s3433 + $0x58] sm:$0xff]
        %v3446 = vld [vmem:[%s3433 + $0x60] sm:$0xff]
        %v3447 = vld [vmem:[%s3433 + $0x68] sm:$0xff]
        %v3448 = vld [vmem:[%s3433 + $0x70] sm:$0xff]
        %v3449 = vld [vmem:[%s3433 + $0x78] sm:$0xff]
        %s3450 = scalar_lea.vmem %s10, 4
        %v3451 = vld [vmem:[%s3450] sm:$0x1]
        %v3453 = vlaneseq
        %v3454 = vshrl.u32 %v3453, 7
        %v3455 = vsub.s32 0, %v3454
        %v3456 = vrot.slane %v3451, %v3455
        %3458 = vmatprep.subr.mxu0 0.0
        %3459 = vmatpush1.msra.mxu0 %v3434
        %3460 = vmatprep.subr.mxu0 0.0
        %3461 = vmatpush1.msra.mxu0 %v3435
        %3462 = vmatprep.subr.mxu0 0.0
        %3463 = vmatpush1.msra.mxu0 %v3436
        %3464 = vmatprep.subr.mxu0 0.0
        %3465 = vmatpush1.msra.mxu0 %v3437
        %3466 = vmatprep.subr.mxu0 0.0
        %3467 = vmatpush1.msra.mxu0 %v3438
        %3468 = vmatprep.subr.mxu0 0.0
        %3469 = vmatpush1.msra.mxu0 %v3439
        %3470 = vmatprep.subr.mxu0 0.0
        %3471 = vmatpush1.msra.mxu0 %v3440
        %3472 = vmatprep.subr.mxu0 0.0
        %3473 = vmatpush1.msra.mxu0 %v3441
        %3474 = vmatprep.subr.mxu0 0.0
        %3475 = vmatpush1.msra.mxu0 %v3442
        %3476 = vmatprep.subr.mxu0 0.0
        %3477 = vmatpush1.msra.mxu0 %v3443
        %3478 = vmatprep.subr.mxu0 0.0
        %3479 = vmatpush1.msra.mxu0 %v3444
        %3480 = vmatprep.subr.mxu0 0.0
        %3481 = vmatpush1.msra.mxu0 %v3445
        %3482 = vmatprep.subr.mxu0 0.0
        %3483 = vmatpush1.msra.mxu0 %v3446
        %3484 = vmatprep.subr.mxu0 0.0
        %3485 = vmatpush1.msra.mxu0 %v3447
        %3486 = vmatprep.subr.mxu0 0.0
        %3487 = vmatpush1.msra.mxu0 %v3448
        %3488 = vmatprep.subr.mxu0 0.0
        %3489 = vmatpush1.msra.mxu0 %v3449
        %3490 = vmatprep.subr.mxu0 0.0
        %3491 = vmatpush1.msra.mxu0 0.0
        %3492 = vmatprep.subr.mxu0 0.0
        %3493 = vmatpush1.msra.mxu0 0.0
        %3494 = vmatprep.subr.mxu0 0.0
        %3495 = vmatpush1.msra.mxu0 0.0
        %3496 = vmatprep.subr.mxu0 0.0
        %3497 = vmatpush1.msra.mxu0 0.0
        %3498 = vmatprep.subr.mxu0 0.0
        %3499 = vmatpush1.msra.mxu0 0.0
        %3500 = vmatprep.subr.mxu0 0.0
        %3501 = vmatpush1.msra.mxu0 0.0
        %3502 = vmatprep.subr.mxu0 0.0
        %3503 = vmatpush1.msra.mxu0 0.0
        %3504 = vmatprep.subr.mxu0 0.0
        %3505 = vmatpush1.msra.mxu0 0.0
        %3506 = vmatprep.subr.mxu0 0.0
        %3507 = vmatpush1.msra.mxu0 0.0
        %3508 = vmatprep.subr.mxu0 0.0
        %3509 = vmatpush1.msra.mxu0 0.0
        %3510 = vmatprep.subr.mxu0 0.0
        %3511 = vmatpush1.msra.mxu0 0.0
        %3512 = vmatprep.subr.mxu0 0.0
        %3513 = vmatpush1.msra.mxu0 0.0
        %3514 = vmatprep.subr.mxu0 0.0
        %3515 = vmatpush1.msra.mxu0 0.0
        %3516 = vmatprep.subr.mxu0 0.0
        %3517 = vmatpush1.msra.mxu0 0.0
        %3518 = vmatprep.subr.mxu0 0.0
        %3519 = vmatpush1.msra.mxu0 0.0
        %3520 = vmatprep.subr.mxu0 0.0
        %3521 = vmatpush1.msra.mxu0 0.0
        %3522 = vmatprep.mubr.f32.mxu0 0.0
        %3523 = vmatmul.mubr.f32.gmra.mrb[0].mxu0 %v3242
        %v3524 = vpop.f32.mrb[0].mxu0
        %v3525 = vadd.f32 %v3456, %v3524
        %v3526 = vpop.f32.mrb[0].mxu0
        %3527 = vdwg.mxu0
        %v3529 = vsel %vm1065, %v3335, 0
        %v3532 = vsel %vm1065, %v3430, 0
        %3534 = vmatprep.subr.mxu0 0.0
        %3535 = vmatpush1.xpose.msra.mxu0 %v3532
        %3536 = vmatprep.subr.mxu0 0.0
        %3537 = vmatpush1.xpose.msra.mxu0 0.0
        %3538 = vmatprep.subr.mxu0 0.0
        %3539 = vmatpush1.xpose.msra.mxu0 0.0
        %3540 = vmatprep.subr.mxu0 0.0
        %3541 = vmatpush1.xpose.msra.mxu0 0.0
        %3542 = vmatprep.subr.mxu0 0.0
        %3543 = vmatpush1.xpose.msra.mxu0 0.0
        %3544 = vmatprep.subr.mxu0 0.0
        %3545 = vmatpush1.xpose.msra.mxu0 0.0
        %3546 = vmatprep.subr.mxu0 0.0
        %3547 = vmatpush1.xpose.msra.mxu0 0.0
        %3548 = vmatprep.subr.mxu0 0.0
        %3549 = vmatpush1.xpose.msra.mxu0 0.0
        %3550 = vmatprep.subr.mxu0 0.0
        %3551 = vmatpush1.xpose.msra.mxu0 0.0
        %3552 = vmatprep.subr.mxu0 0.0
        %3553 = vmatpush1.xpose.msra.mxu0 0.0
        %3554 = vmatprep.subr.mxu0 0.0
        %3555 = vmatpush1.xpose.msra.mxu0 0.0
        %3556 = vmatprep.subr.mxu0 0.0
        %3557 = vmatpush1.xpose.msra.mxu0 0.0
        %3558 = vmatprep.subr.mxu0 0.0
        %3559 = vmatpush1.xpose.msra.mxu0 0.0
        %3560 = vmatprep.subr.mxu0 0.0
        %3561 = vmatpush1.xpose.msra.mxu0 0.0
        %3562 = vmatprep.subr.mxu0 0.0
        %3563 = vmatpush1.xpose.msra.mxu0 0.0
        %3564 = vmatprep.subr.mxu0 0.0
        %3565 = vmatpush1.xpose.msra.mxu0 0.0
        %3566 = vmatprep.subr.mxu0 0.0
        %3567 = vmatpush1.xpose.msra.mxu0 0.0
        %3568 = vmatprep.subr.mxu0 0.0
        %3569 = vmatpush1.xpose.msra.mxu0 0.0
        %3570 = vmatprep.subr.mxu0 0.0
        %3571 = vmatpush1.xpose.msra.mxu0 0.0
        %3572 = vmatprep.subr.mxu0 0.0
        %3573 = vmatpush1.xpose.msra.mxu0 0.0
        %3574 = vmatprep.subr.mxu0 0.0
        %3575 = vmatpush1.xpose.msra.mxu0 0.0
        %3576 = vmatprep.subr.mxu0 0.0
        %3577 = vmatpush1.xpose.msra.mxu0 0.0
        %3578 = vmatprep.subr.mxu0 0.0
        %3579 = vmatpush1.xpose.msra.mxu0 0.0
        %3580 = vmatprep.subr.mxu0 0.0
        %3581 = vmatpush1.xpose.msra.mxu0 0.0
        %3582 = vmatprep.subr.mxu0 0.0
        %3583 = vmatpush1.xpose.msra.mxu0 0.0
        %3584 = vmatprep.subr.mxu0 0.0
        %3585 = vmatpush1.xpose.msra.mxu0 0.0
        %3586 = vmatprep.subr.mxu0 0.0
        %3587 = vmatpush1.xpose.msra.mxu0 0.0
        %3588 = vmatprep.subr.mxu0 0.0
        %3589 = vmatpush1.xpose.msra.mxu0 0.0
        %3590 = vmatprep.subr.mxu0 0.0
        %3591 = vmatpush1.xpose.msra.mxu0 0.0
        %3592 = vmatprep.subr.mxu0 0.0
        %3593 = vmatpush1.xpose.msra.mxu0 0.0
        %3594 = vmatprep.subr.mxu0 0.0
        %3595 = vmatpush1.xpose.msra.mxu0 0.0
        %3596 = vmatprep.subr.mxu0 0.0
        %3597 = vmatpush1.xpose.msra.mxu0 0.0
        %3598 = vmatprep.mubr.f32.mxu0 0.0
        %3599 = vmatmul.mubr.f32.gmra.mrb[0].mxu0 %v3529
        %v3600 = vpop.f32.mrb[0].mxu0
        %v3601 = vadd.f32 0.0, %v3600
        %v3602 = vpop.f32.mrb[0].mxu0
        %3603 = vdwg.mxu0
        %v3604 = vmul.f32 %v3601, 0.17677669
        %v3605 = vsel %vm1143, %v3604, -inf
        %3606 = vmax.xlane.f32.xlu0 %v3605
        %v3607 = vpop.xlane.xlu0 %3606
        %v3608 = vsub.f32 %v3604, %v3607
        %v3609 = vmul.f32 %v3608, 1.442695
        %v3610 = vpow.pop %v3609
        %v3611 = vsel %vm1143, %v3610, 0.0
        %3612 = vadd.xlane.f32.xlu0 %v3611
        %v3613 = vpop.xlane.xlu0 %3612
        %v3614 = vrcp.pop %v3613
        %v3615 = vmul.f32 %v3610, %v3614
        %v3617 = vsel %vm1155, %v3615, 0
        %v3620 = vsel %vm757, %v3525, 0
        %3622 = vmatprep.subr.mxu0 0.0
        %3623 = vmatpush1.msra.mxu0 %v3620
        %3624 = vmatprep.subr.mxu0 0.0
        %3625 = vmatpush1.msra.mxu0 0.0
        %3626 = vmatprep.subr.mxu0 0.0
        %3627 = vmatpush1.msra.mxu0 0.0
        %3628 = vmatprep.subr.mxu0 0.0
        %3629 = vmatpush1.msra.mxu0 0.0
        %3630 = vmatprep.subr.mxu0 0.0
        %3631 = vmatpush1.msra.mxu0 0.0
        %3632 = vmatprep.subr.mxu0 0.0
        %3633 = vmatpush1.msra.mxu0 0.0
        %3634 = vmatprep.subr.mxu0 0.0
        %3635 = vmatpush1.msra.mxu0 0.0
        %3636 = vmatprep.subr.mxu0 0.0
        %3637 = vmatpush1.msra.mxu0 0.0
        %3638 = vmatprep.subr.mxu0 0.0
        %3639 = vmatpush1.msra.mxu0 0.0
        %3640 = vmatprep.subr.mxu0 0.0
        %3641 = vmatpush1.msra.mxu0 0.0
        %3642 = vmatprep.subr.mxu0 0.0
        %3643 = vmatpush1.msra.mxu0 0.0
        %3644 = vmatprep.subr.mxu0 0.0
        %3645 = vmatpush1.msra.mxu0 0.0
        %3646 = vmatprep.subr.mxu0 0.0
        %3647 = vmatpush1.msra.mxu0 0.0
        %3648 = vmatprep.subr.mxu0 0.0
        %3649 = vmatpush1.msra.mxu0 0.0
        %3650 = vmatprep.subr.mxu0 0.0
        %3651 = vmatpush1.msra.mxu0 0.0
        %3652 = vmatprep.subr.mxu0 0.0
        %3653 = vmatpush1.msra.mxu0 0.0
        %3654 = vmatprep.subr.mxu0 0.0
        %3655 = vmatpush1.msra.mxu0 0.0
        %3656 = vmatprep.subr.mxu0 0.0
        %3657 = vmatpush1.msra.mxu0 0.0
        %3658 = vmatprep.subr.mxu0 0.0
        %3659 = vmatpush1.msra.mxu0 0.0
        %3660 = vmatprep.subr.mxu0 0.0
        %3661 = vmatpush1.msra.mxu0 0.0
        %3662 = vmatprep.subr.mxu0 0.0
        %3663 = vmatpush1.msra.mxu0 0.0
        %3664 = vmatprep.subr.mxu0 0.0
        %3665 = vmatpush1.msra.mxu0 0.0
        %3666 = vmatprep.subr.mxu0 0.0
        %3667 = vmatpush1.msra.mxu0 0.0
        %3668 = vmatprep.subr.mxu0 0.0
        %3669 = vmatpush1.msra.mxu0 0.0
        %3670 = vmatprep.subr.mxu0 0.0
        %3671 = vmatpush1.msra.mxu0 0.0
        %3672 = vmatprep.subr.mxu0 0.0
        %3673 = vmatpush1.msra.mxu0 0.0
        %3674 = vmatprep.subr.mxu0 0.0
        %3675 = vmatpush1.msra.mxu0 0.0
        %3676 = vmatprep.subr.mxu0 0.0
        %3677 = vmatpush1.msra.mxu0 0.0
        %3678 = vmatprep.subr.mxu0 0.0
        %3679 = vmatpush1.msra.mxu0 0.0
        %3680 = vmatprep.subr.mxu0 0.0
        %3681 = vmatpush1.msra.mxu0 0.0
        %3682 = vmatprep.subr.mxu0 0.0
        %3683 = vmatpush1.msra.mxu0 0.0
        %3684 = vmatprep.subr.mxu0 0.0
        %3685 = vmatpush1.msra.mxu0 0.0
        %3686 = vmatprep.mubr.f32.mxu0 0.0
        %3687 = vmatmul.mubr.f32.gmra.mrb[0].mxu0 %v3617
        %v3688 = vpop.f32.mrb[0].mxu0
        %v3689 = vadd.f32 0.0, %v3688
        %v3690 = vpop.f32.mrb[0].mxu0
        %3691 = vdwg.mxu0
        %s3692 = scalar_lea.vmem %s11, 128
        %v3693 = vld [vmem:[%s3692] sm:$0xff]
        %v3694 = vld [vmem:[%s3692 + $0x8] sm:$0xff]
        %v3695 = vld [vmem:[%s3692 + $0x10] sm:$0xff]
        %v3696 = vld [vmem:[%s3692 + $0x18] sm:$0xff]
        %s3697 = scalar_lea.vmem %s5, 640
        %v3698 = vld [vmem:[%s3697] sm:$0xff]
        %v3699 = vld [vmem:[%s3697 + $0x8] sm:$0xff]
        %v3700 = vld [vmem:[%s3697 + $0x10] sm:$0xff]
        %v3701 = vld [vmem:[%s3697 + $0x18] sm:$0xff]
        %v3702 = vld [vmem:[%s3697 + $0x20] sm:$0xff]
        %v3703 = vld [vmem:[%s3697 + $0x28] sm:$0xff]
        %v3704 = vld [vmem:[%s3697 + $0x30] sm:$0xff]
        %v3705 = vld [vmem:[%s3697 + $0x38] sm:$0xff]
        %v3706 = vld [vmem:[%s3697 + $0x40] sm:$0xff]
        %v3707 = vld [vmem:[%s3697 + $0x48] sm:$0xff]
        %v3708 = vld [vmem:[%s3697 + $0x50] sm:$0xff]
        %v3709 = vld [vmem:[%s3697 + $0x58] sm:$0xff]
        %v3710 = vld [vmem:[%s3697 + $0x60] sm:$0xff]
        %v3711 = vld [vmem:[%s3697 + $0x68] sm:$0xff]
        %v3712 = vld [vmem:[%s3697 + $0x70] sm:$0xff]
        %v3713 = vld [vmem:[%s3697 + $0x78] sm:$0xff]
        %s3714 = scalar_lea.vmem %s6, 5
        %v3715 = vld [vmem:[%s3714] sm:$0x1]
        %v3717 = vlaneseq
        %v3718 = vshrl.u32 %v3717, 7
        %v3719 = vsub.s32 0, %v3718
        %v3720 = vrot.slane %v3715, %v3719
        %3722 = vmatprep.subr.mxu0 0.0
        %3723 = vmatpush1.msra.mxu0 %v3698
        %3724 = vmatprep.subr.mxu0 0.0
        %3725 = vmatpush1.msra.mxu0 %v3699
        %3726 = vmatprep.subr.mxu0 0.0
        %3727 = vmatpush1.msra.mxu0 %v3700
        %3728 = vmatprep.subr.mxu0 0.0
        %3729 = vmatpush1.msra.mxu0 %v3701
        %3730 = vmatprep.subr.mxu0 0.0
        %3731 = vmatpush1.msra.mxu0 %v3702
        %3732 = vmatprep.subr.mxu0 0.0
        %3733 = vmatpush1.msra.mxu0 %v3703
        %3734 = vmatprep.subr.mxu0 0.0
        %3735 = vmatpush1.msra.mxu0 %v3704
        %3736 = vmatprep.subr.mxu0 0.0
        %3737 = vmatpush1.msra.mxu0 %v3705
        %3738 = vmatprep.subr.mxu0 0.0
        %3739 = vmatpush1.msra.mxu0 %v3706
        %3740 = vmatprep.subr.mxu0 0.0
        %3741 = vmatpush1.msra.mxu0 %v3707
        %3742 = vmatprep.subr.mxu0 0.0
        %3743 = vmatpush1.msra.mxu0 %v3708
        %3744 = vmatprep.subr.mxu0 0.0
        %3745 = vmatpush1.msra.mxu0 %v3709
        %3746 = vmatprep.subr.mxu0 0.0
        %3747 = vmatpush1.msra.mxu0 %v3710
        %3748 = vmatprep.subr.mxu0 0.0
        %3749 = vmatpush1.msra.mxu0 %v3711
        %3750 = vmatprep.subr.mxu0 0.0
        %3751 = vmatpush1.msra.mxu0 %v3712
        %3752 = vmatprep.subr.mxu0 0.0
        %3753 = vmatpush1.msra.mxu0 %v3713
        %3754 = vmatprep.subr.mxu0 0.0
        %3755 = vmatpush1.msra.mxu0 0.0
        %3756 = vmatprep.subr.mxu0 0.0
        %3757 = vmatpush1.msra.mxu0 0.0
        %3758 = vmatprep.subr.mxu0 0.0
        %3759 = vmatpush1.msra.mxu0 0.0
        %3760 = vmatprep.subr.mxu0 0.0
        %3761 = vmatpush1.msra.mxu0 0.0
        %3762 = vmatprep.subr.mxu0 0.0
        %3763 = vmatpush1.msra.mxu0 0.0
        %3764 = vmatprep.subr.mxu0 0.0
        %3765 = vmatpush1.msra.mxu0 0.0
        %3766 = vmatprep.subr.mxu0 0.0
        %3767 = vmatpush1.msra.mxu0 0.0
        %3768 = vmatprep.subr.mxu0 0.0
        %3769 = vmatpush1.msra.mxu0 0.0
        %3770 = vmatprep.subr.mxu0 0.0
        %3771 = vmatpush1.msra.mxu0 0.0
        %3772 = vmatprep.subr.mxu0 0.0
        %3773 = vmatpush1.msra.mxu0 0.0
        %3774 = vmatprep.subr.mxu0 0.0
        %3775 = vmatpush1.msra.mxu0 0.0
        %3776 = vmatprep.subr.mxu0 0.0
        %3777 = vmatpush1.msra.mxu0 0.0
        %3778 = vmatprep.subr.mxu0 0.0
        %3779 = vmatpush1.msra.mxu0 0.0
        %3780 = vmatprep.subr.mxu0 0.0
        %3781 = vmatpush1.msra.mxu0 0.0
        %3782 = vmatprep.subr.mxu0 0.0
        %3783 = vmatpush1.msra.mxu0 0.0
        %3784 = vmatprep.subr.mxu0 0.0
        %3785 = vmatpush1.msra.mxu0 0.0
        %3786 = vmatprep.mubr.f32.mxu0 0.0
        %3787 = vmatmul.mubr.f32.gmra.mrb[0].mxu0 %v3242
        %v3788 = vpop.f32.mrb[0].mxu0
        %v3789 = vadd.f32 %v3720, %v3788
        %v3790 = vpop.f32.mrb[0].mxu0
        %3791 = vdwg.mxu0
        %s3792 = scalar_lea.vmem %s7, 640
        %v3793 = vld [vmem:[%s3792] sm:$0xff]
        %v3794 = vld [vmem:[%s3792 + $0x8] sm:$0xff]
        %v3795 = vld [vmem:[%s3792 + $0x10] sm:$0xff]
        %v3796 = vld [vmem:[%s3792 + $0x18] sm:$0xff]
        %v3797 = vld [vmem:[%s3792 + $0x20] sm:$0xff]
        %v3798 = vld [vmem:[%s3792 + $0x28] sm:$0xff]
        %v3799 = vld [vmem:[%s3792 + $0x30] sm:$0xff]
        %v3800 = vld [vmem:[%s3792 + $0x38] sm:$0xff]
        %v3801 = vld [vmem:[%s3792 + $0x40] sm:$0xff]
        %v3802 = vld [vmem:[%s3792 + $0x48] sm:$0xff]
        %v3803 = vld [vmem:[%s3792 + $0x50] sm:$0xff]
        %v3804 = vld [vmem:[%s3792 + $0x58] sm:$0xff]
        %v3805 = vld [vmem:[%s3792 + $0x60] sm:$0xff]
        %v3806 = vld [vmem:[%s3792 + $0x68] sm:$0xff]
        %v3807 = vld [vmem:[%s3792 + $0x70] sm:$0xff]
        %v3808 = vld [vmem:[%s3792 + $0x78] sm:$0xff]
        %s3809 = scalar_lea.vmem %s8, 5
        %v3810 = vld [vmem:[%s3809] sm:$0x1]
        %v3812 = vlaneseq
        %v3813 = vshrl.u32 %v3812, 7
        %v3814 = vsub.s32 0, %v3813
        %v3815 = vrot.slane %v3810, %v3814
        %3817 = vmatprep.subr.mxu0 0.0
        %3818 = vmatpush1.msra.mxu0 %v3793
        %3819 = vmatprep.subr.mxu0 0.0
        %3820 = vmatpush1.msra.mxu0 %v3794
        %3821 = vmatprep.subr.mxu0 0.0
        %3822 = vmatpush1.msra.mxu0 %v3795
        %3823 = vmatprep.subr.mxu0 0.0
        %3824 = vmatpush1.msra.mxu0 %v3796
        %3825 = vmatprep.subr.mxu0 0.0
        %3826 = vmatpush1.msra.mxu0 %v3797
        %3827 = vmatprep.subr.mxu0 0.0
        %3828 = vmatpush1.msra.mxu0 %v3798
        %3829 = vmatprep.subr.mxu0 0.0
        %3830 = vmatpush1.msra.mxu0 %v3799
        %3831 = vmatprep.subr.mxu0 0.0
        %3832 = vmatpush1.msra.mxu0 %v3800
        %3833 = vmatprep.subr.mxu0 0.0
        %3834 = vmatpush1.msra.mxu0 %v3801
        %3835 = vmatprep.subr.mxu0 0.0
        %3836 = vmatpush1.msra.mxu0 %v3802
        %3837 = vmatprep.subr.mxu0 0.0
        %3838 = vmatpush1.msra.mxu0 %v3803
        %3839 = vmatprep.subr.mxu0 0.0
        %3840 = vmatpush1.msra.mxu0 %v3804
        %3841 = vmatprep.subr.mxu0 0.0
        %3842 = vmatpush1.msra.mxu0 %v3805
        %3843 = vmatprep.subr.mxu0 0.0
        %3844 = vmatpush1.msra.mxu0 %v3806
        %3845 = vmatprep.subr.mxu0 0.0
        %3846 = vmatpush1.msra.mxu0 %v3807
        %3847 = vmatprep.subr.mxu0 0.0
        %3848 = vmatpush1.msra.mxu0 %v3808
        %3849 = vmatprep.subr.mxu0 0.0
        %3850 = vmatpush1.msra.mxu0 0.0
        %3851 = vmatprep.subr.mxu0 0.0
        %3852 = vmatpush1.msra.mxu0 0.0
        %3853 = vmatprep.subr.mxu0 0.0
        %3854 = vmatpush1.msra.mxu0 0.0
        %3855 = vmatprep.subr.mxu0 0.0
        %3856 = vmatpush1.msra.mxu0 0.0
        %3857 = vmatprep.subr.mxu0 0.0
        %3858 = vmatpush1.msra.mxu0 0.0
        %3859 = vmatprep.subr.mxu0 0.0
        %3860 = vmatpush1.msra.mxu0 0.0
        %3861 = vmatprep.subr.mxu0 0.0
        %3862 = vmatpush1.msra.mxu0 0.0
        %3863 = vmatprep.subr.mxu0 0.0
        %3864 = vmatpush1.msra.mxu0 0.0
        %3865 = vmatprep.subr.mxu0 0.0
        %3866 = vmatpush1.msra.mxu0 0.0
        %3867 = vmatprep.subr.mxu0 0.0
        %3868 = vmatpush1.msra.mxu0 0.0
        %3869 = vmatprep.subr.mxu0 0.0
        %3870 = vmatpush1.msra.mxu0 0.0
        %3871 = vmatprep.subr.mxu0 0.0
        %3872 = vmatpush1.msra.mxu0 0.0
        %3873 = vmatprep.subr.mxu0 0.0
        %3874 = vmatpush1.msra.mxu0 0.0
        %3875 = vmatprep.subr.mxu0 0.0
        %3876 = vmatpush1.msra.mxu0 0.0
        %3877 = vmatprep.subr.mxu0 0.0
        %3878 = vmatpush1.msra.mxu0 0.0
        %3879 = vmatprep.subr.mxu0 0.0
        %3880 = vmatpush1.msra.mxu0 0.0
        %3881 = vmatprep.mubr.f32.mxu0 0.0
        %3882 = vmatmul.mubr.f32.gmra.mrb[0].mxu0 %v3242
        %v3883 = vpop.f32.mrb[0].mxu0
        %v3884 = vadd.f32 %v3815, %v3883
        %v3885 = vpop.f32.mrb[0].mxu0
        %3886 = vdwg.mxu0
        %s3887 = scalar_lea.vmem %s9, 640
        %v3888 = vld [vmem:[%s3887] sm:$0xff]
        %v3889 = vld [vmem:[%s3887 + $0x8] sm:$0xff]
        %v3890 = vld [vmem:[%s3887 + $0x10] sm:$0xff]
        %v3891 = vld [vmem:[%s3887 + $0x18] sm:$0xff]
        %v3892 = vld [vmem:[%s3887 + $0x20] sm:$0xff]
        %v3893 = vld [vmem:[%s3887 + $0x28] sm:$0xff]
        %v3894 = vld [vmem:[%s3887 + $0x30] sm:$0xff]
        %v3895 = vld [vmem:[%s3887 + $0x38] sm:$0xff]
        %v3896 = vld [vmem:[%s3887 + $0x40] sm:$0xff]
        %v3897 = vld [vmem:[%s3887 + $0x48] sm:$0xff]
        %v3898 = vld [vmem:[%s3887 + $0x50] sm:$0xff]
        %v3899 = vld [vmem:[%s3887 + $0x58] sm:$0xff]
        %v3900 = vld [vmem:[%s3887 + $0x60] sm:$0xff]
        %v3901 = vld [vmem:[%s3887 + $0x68] sm:$0xff]
        %v3902 = vld [vmem:[%s3887 + $0x70] sm:$0xff]
        %v3903 = vld [vmem:[%s3887 + $0x78] sm:$0xff]
        %s3904 = scalar_lea.vmem %s10, 5
        %v3905 = vld [vmem:[%s3904] sm:$0x1]
        %v3907 = vlaneseq
        %v3908 = vshrl.u32 %v3907, 7
        %v3909 = vsub.s32 0, %v3908
        %v3910 = vrot.slane %v3905, %v3909
        %3912 = vmatprep.subr.mxu0 0.0
        %3913 = vmatpush1.msra.mxu0 %v3888
        %3914 = vmatprep.subr.mxu0 0.0
        %3915 = vmatpush1.msra.mxu0 %v3889
        %3916 = vmatprep.subr.mxu0 0.0
        %3917 = vmatpush1.msra.mxu0 %v3890
        %3918 = vmatprep.subr.mxu0 0.0
        %3919 = vmatpush1.msra.mxu0 %v3891
        %3920 = vmatprep.subr.mxu0 0.0
        %3921 = vmatpush1.msra.mxu0 %v3892
        %3922 = vmatprep.subr.mxu0 0.0
        %3923 = vmatpush1.msra.mxu0 %v3893
        %3924 = vmatprep.subr.mxu0 0.0
        %3925 = vmatpush1.msra.mxu0 %v3894
        %3926 = vmatprep.subr.mxu0 0.0
        %3927 = vmatpush1.msra.mxu0 %v3895
        %3928 = vmatprep.subr.mxu0 0.0
        %3929 = vmatpush1.msra.mxu0 %v3896
        %3930 = vmatprep.subr.mxu0 0.0
        %3931 = vmatpush1.msra.mxu0 %v3897
        %3932 = vmatprep.subr.mxu0 0.0
        %3933 = vmatpush1.msra.mxu0 %v3898
        %3934 = vmatprep.subr.mxu0 0.0
        %3935 = vmatpush1.msra.mxu0 %v3899
        %3936 = vmatprep.subr.mxu0 0.0
        %3937 = vmatpush1.msra.mxu0 %v3900
        %3938 = vmatprep.subr.mxu0 0.0
        %3939 = vmatpush1.msra.mxu0 %v3901
        %3940 = vmatprep.subr.mxu0 0.0
        %3941 = vmatpush1.msra.mxu0 %v3902
        %3942 = vmatprep.subr.mxu0 0.0
        %3943 = vmatpush1.msra.mxu0 %v3903
        %3944 = vmatprep.subr.mxu0 0.0
        %3945 = vmatpush1.msra.mxu0 0.0
        %3946 = vmatprep.subr.mxu0 0.0
        %3947 = vmatpush1.msra.mxu0 0.0
        %3948 = vmatprep.subr.mxu0 0.0
        %3949 = vmatpush1.msra.mxu0 0.0
        %3950 = vmatprep.subr.mxu0 0.0
        %3951 = vmatpush1.msra.mxu0 0.0
        %3952 = vmatprep.subr.mxu0 0.0
        %3953 = vmatpush1.msra.mxu0 0.0
        %3954 = vmatprep.subr.mxu0 0.0
        %3955 = vmatpush1.msra.mxu0 0.0
        %3956 = vmatprep.subr.mxu0 0.0
        %3957 = vmatpush1.msra.mxu0 0.0
        %3958 = vmatprep.subr.mxu0 0.0
        %3959 = vmatpush1.msra.mxu0 0.0
        %3960 = vmatprep.subr.mxu0 0.0
        %3961 = vmatpush1.msra.mxu0 0.0
        %3962 = vmatprep.subr.mxu0 0.0
        %3963 = vmatpush1.msra.mxu0 0.0
        %3964 = vmatprep.subr.mxu0 0.0
        %3965 = vmatpush1.msra.mxu0 0.0
        %3966 = vmatprep.subr.mxu0 0.0
        %3967 = vmatpush1.msra.mxu0 0.0
        %3968 = vmatprep.subr.mxu0 0.0
        %3969 = vmatpush1.msra.mxu0 0.0
        %3970 = vmatprep.subr.mxu0 0.0
        %3971 = vmatpush1.msra.mxu0 0.0
        %3972 = vmatprep.subr.mxu0 0.0
        %3973 = vmatpush1.msra.mxu0 0.0
        %3974 = vmatprep.subr.mxu0 0.0
        %3975 = vmatpush1.msra.mxu0 0.0
        %3976 = vmatprep.mubr.f32.mxu0 0.0
        %3977 = vmatmul.mubr.f32.gmra.mrb[0].mxu0 %v3242
        %v3978 = vpop.f32.mrb[0].mxu0
        %v3979 = vadd.f32 %v3910, %v3978
        %v3980 = vpop.f32.mrb[0].mxu0
        %3981 = vdwg.mxu0
        %v3983 = vsel %vm1065, %v3789, 0
        %v3986 = vsel %vm1065, %v3884, 0
        %3988 = vmatprep.subr.mxu0 0.0
        %3989 = vmatpush1.xpose.msra.mxu0 %v3986
        %3990 = vmatprep.subr.mxu0 0.0
        %3991 = vmatpush1.xpose.msra.mxu0 0.0
        %3992 = vmatprep.subr.mxu0 0.0
        %3993 = vmatpush1.xpose.msra.mxu0 0.0
        %3994 = vmatprep.subr.mxu0 0.0
        %3995 = vmatpush1.xpose.msra.mxu0 0.0
        %3996 = vmatprep.subr.mxu0 0.0
        %3997 = vmatpush1.xpose.msra.mxu0 0.0
        %3998 = vmatprep.subr.mxu0 0.0
        %3999 = vmatpush1.xpose.msra.mxu0 0.0
        %4000 = vmatprep.subr.mxu0 0.0
        %4001 = vmatpush1.xpose.msra.mxu0 0.0
        %4002 = vmatprep.subr.mxu0 0.0
        %4003 = vmatpush1.xpose.msra.mxu0 0.0
        %4004 = vmatprep.subr.mxu0 0.0
        %4005 = vmatpush1.xpose.msra.mxu0 0.0
        %4006 = vmatprep.subr.mxu0 0.0
        %4007 = vmatpush1.xpose.msra.mxu0 0.0
        %4008 = vmatprep.subr.mxu0 0.0
        %4009 = vmatpush1.xpose.msra.mxu0 0.0
        %4010 = vmatprep.subr.mxu0 0.0
        %4011 = vmatpush1.xpose.msra.mxu0 0.0
        %4012 = vmatprep.subr.mxu0 0.0
        %4013 = vmatpush1.xpose.msra.mxu0 0.0
        %4014 = vmatprep.subr.mxu0 0.0
        %4015 = vmatpush1.xpose.msra.mxu0 0.0
        %4016 = vmatprep.subr.mxu0 0.0
        %4017 = vmatpush1.xpose.msra.mxu0 0.0
        %4018 = vmatprep.subr.mxu0 0.0
        %4019 = vmatpush1.xpose.msra.mxu0 0.0
        %4020 = vmatprep.subr.mxu0 0.0
        %4021 = vmatpush1.xpose.msra.mxu0 0.0
        %4022 = vmatprep.subr.mxu0 0.0
        %4023 = vmatpush1.xpose.msra.mxu0 0.0
        %4024 = vmatprep.subr.mxu0 0.0
        %4025 = vmatpush1.xpose.msra.mxu0 0.0
        %4026 = vmatprep.subr.mxu0 0.0
        %4027 = vmatpush1.xpose.msra.mxu0 0.0
        %4028 = vmatprep.subr.mxu0 0.0
        %4029 = vmatpush1.xpose.msra.mxu0 0.0
        %4030 = vmatprep.subr.mxu0 0.0
        %4031 = vmatpush1.xpose.msra.mxu0 0.0
        %4032 = vmatprep.subr.mxu0 0.0
        %4033 = vmatpush1.xpose.msra.mxu0 0.0
        %4034 = vmatprep.subr.mxu0 0.0
        %4035 = vmatpush1.xpose.msra.mxu0 0.0
        %4036 = vmatprep.subr.mxu0 0.0
        %4037 = vmatpush1.xpose.msra.mxu0 0.0
        %4038 = vmatprep.subr.mxu0 0.0
        %4039 = vmatpush1.xpose.msra.mxu0 0.0
        %4040 = vmatprep.subr.mxu0 0.0
        %4041 = vmatpush1.xpose.msra.mxu0 0.0
        %4042 = vmatprep.subr.mxu0 0.0
        %4043 = vmatpush1.xpose.msra.mxu0 0.0
        %4044 = vmatprep.subr.mxu0 0.0
        %4045 = vmatpush1.xpose.msra.mxu0 0.0
        %4046 = vmatprep.subr.mxu0 0.0
        %4047 = vmatpush1.xpose.msra.mxu0 0.0
        %4048 = vmatprep.subr.mxu0 0.0
        %4049 = vmatpush1.xpose.msra.mxu0 0.0
        %4050 = vmatprep.subr.mxu0 0.0
        %4051 = vmatpush1.xpose.msra.mxu0 0.0
        %4052 = vmatprep.mubr.f32.mxu0 0.0
        %4053 = vmatmul.mubr.f32.gmra.mrb[0].mxu0 %v3983
        %v4054 = vpop.f32.mrb[0].mxu0
        %v4055 = vadd.f32 0.0, %v4054
        %v4056 = vpop.f32.mrb[0].mxu0
        %4057 = vdwg.mxu0
        %v4058 = vmul.f32 %v4055, 0.17677669
        %v4059 = vsel %vm1143, %v4058, -inf
        %4060 = vmax.xlane.f32.xlu0 %v4059
        %v4061 = vpop.xlane.xlu0 %4060
        %v4062 = vsub.f32 %v4058, %v4061
        %v4063 = vmul.f32 %v4062, 1.442695
        %v4064 = vpow.pop %v4063
        %v4065 = vsel %vm1143, %v4064, 0.0
        %4066 = vadd.xlane.f32.xlu0 %v4065
        %v4067 = vpop.xlane.xlu0 %4066
        %v4068 = vrcp.pop %v4067
        %v4069 = vmul.f32 %v4064, %v4068
        %v4071 = vsel %vm1155, %v4069, 0
        %v4074 = vsel %vm757, %v3979, 0
        %4076 = vmatprep.subr.mxu0 0.0
        %4077 = vmatpush1.msra.mxu0 %v4074
        %4078 = vmatprep.subr.mxu0 0.0
        %4079 = vmatpush1.msra.mxu0 0.0
        %4080 = vmatprep.subr.mxu0 0.0
        %4081 = vmatpush1.msra.mxu0 0.0
        %4082 = vmatprep.subr.mxu0 0.0
        %4083 = vmatpush1.msra.mxu0 0.0
        %4084 = vmatprep.subr.mxu0 0.0
        %4085 = vmatpush1.msra.mxu0 0.0
        %4086 = vmatprep.subr.mxu0 0.0
        %4087 = vmatpush1.msra.mxu0 0.0
        %4088 = vmatprep.subr.mxu0 0.0
        %4089 = vmatpush1.msra.mxu0 0.0
        %4090 = vmatprep.subr.mxu0 0.0
        %4091 = vmatpush1.msra.mxu0 0.0
        %4092 = vmatprep.subr.mxu0 0.0
        %4093 = vmatpush1.msra.mxu0 0.0
        %4094 = vmatprep.subr.mxu0 0.0
        %4095 = vmatpush1.msra.mxu0 0.0
        %4096 = vmatprep.subr.mxu0 0.0
        %4097 = vmatpush1.msra.mxu0 0.0
        %4098 = vmatprep.subr.mxu0 0.0
        %4099 = vmatpush1.msra.mxu0 0.0
        %4100 = vmatprep.subr.mxu0 0.0
        %4101 = vmatpush1.msra.mxu0 0.0
        %4102 = vmatprep.subr.mxu0 0.0
        %4103 = vmatpush1.msra.mxu0 0.0
        %4104 = vmatprep.subr.mxu0 0.0
        %4105 = vmatpush1.msra.mxu0 0.0
        %4106 = vmatprep.subr.mxu0 0.0
        %4107 = vmatpush1.msra.mxu0 0.0
        %4108 = vmatprep.subr.mxu0 0.0
        %4109 = vmatpush1.msra.mxu0 0.0
        %4110 = vmatprep.subr.mxu0 0.0
        %4111 = vmatpush1.msra.mxu0 0.0
        %4112 = vmatprep.subr.mxu0 0.0
        %4113 = vmatpush1.msra.mxu0 0.0
        %4114 = vmatprep.subr.mxu0 0.0
        %4115 = vmatpush1.msra.mxu0 0.0
        %4116 = vmatprep.subr.mxu0 0.0
        %4117 = vmatpush1.msra.mxu0 0.0
        %4118 = vmatprep.subr.mxu0 0.0
        %4119 = vmatpush1.msra.mxu0 0.0
        %4120 = vmatprep.subr.mxu0 0.0
        %4121 = vmatpush1.msra.mxu0 0.0
        %4122 = vmatprep.subr.mxu0 0.0
        %4123 = vmatpush1.msra.mxu0 0.0
        %4124 = vmatprep.subr.mxu0 0.0
        %4125 = vmatpush1.msra.mxu0 0.0
        %4126 = vmatprep.subr.mxu0 0.0
        %4127 = vmatpush1.msra.mxu0 0.0
        %4128 = vmatprep.subr.mxu0 0.0
        %4129 = vmatpush1.msra.mxu0 0.0
        %4130 = vmatprep.subr.mxu0 0.0
        %4131 = vmatpush1.msra.mxu0 0.0
        %4132 = vmatprep.subr.mxu0 0.0
        %4133 = vmatpush1.msra.mxu0 0.0
        %4134 = vmatprep.subr.mxu0 0.0
        %4135 = vmatpush1.msra.mxu0 0.0
        %4136 = vmatprep.subr.mxu0 0.0
        %4137 = vmatpush1.msra.mxu0 0.0
        %4138 = vmatprep.subr.mxu0 0.0
        %4139 = vmatpush1.msra.mxu0 0.0
        %4140 = vmatprep.mubr.f32.mxu0 0.0
        %4141 = vmatmul.mubr.f32.gmra.mrb[0].mxu0 %v4071
        %v4142 = vpop.f32.mrb[0].mxu0
        %v4143 = vadd.f32 0.0, %v4142
        %v4144 = vpop.f32.mrb[0].mxu0
        %4145 = vdwg.mxu0
        %s4146 = scalar_lea.vmem %s11, 160
        %v4147 = vld [vmem:[%s4146] sm:$0xff]
        %v4148 = vld [vmem:[%s4146 + $0x8] sm:$0xff]
        %v4149 = vld [vmem:[%s4146 + $0x10] sm:$0xff]
        %v4150 = vld [vmem:[%s4146 + $0x18] sm:$0xff]
        %v4152 = vsel %vm1065, %v4143, 0
        %4154 = vmatprep.subr.mxu0 0.0
        %4155 = vmatpush1.msra.mxu0 %v4147
        %4156 = vmatprep.subr.mxu0 0.0
        %4157 = vmatpush1.msra.mxu0 %v4148
        %4158 = vmatprep.subr.mxu0 0.0
        %4159 = vmatpush1.msra.mxu0 %v4149
        %4160 = vmatprep.subr.mxu0 0.0
        %4161 = vmatpush1.msra.mxu0 %v4150
        %4162 = vmatprep.subr.mxu0 0.0
        %4163 = vmatpush1.msra.mxu0 0.0
        %4164 = vmatprep.subr.mxu0 0.0
        %4165 = vmatpush1.msra.mxu0 0.0
        %4166 = vmatprep.subr.mxu0 0.0
        %4167 = vmatpush1.msra.mxu0 0.0
        %4168 = vmatprep.subr.mxu0 0.0
        %4169 = vmatpush1.msra.mxu0 0.0
        %4170 = vmatprep.subr.mxu0 0.0
        %4171 = vmatpush1.msra.mxu0 0.0
        %4172 = vmatprep.subr.mxu0 0.0
        %4173 = vmatpush1.msra.mxu0 0.0
        %4174 = vmatprep.subr.mxu0 0.0
        %4175 = vmatpush1.msra.mxu0 0.0
        %4176 = vmatprep.subr.mxu0 0.0
        %4177 = vmatpush1.msra.mxu0 0.0
        %4178 = vmatprep.subr.mxu0 0.0
        %4179 = vmatpush1.msra.mxu0 0.0
        %4180 = vmatprep.subr.mxu0 0.0
        %4181 = vmatpush1.msra.mxu0 0.0
        %4182 = vmatprep.subr.mxu0 0.0
        %4183 = vmatpush1.msra.mxu0 0.0
        %4184 = vmatprep.subr.mxu0 0.0
        %4185 = vmatpush1.msra.mxu0 0.0
        %4186 = vmatprep.subr.mxu0 0.0
        %4187 = vmatpush1.msra.mxu0 0.0
        %4188 = vmatprep.subr.mxu0 0.0
        %4189 = vmatpush1.msra.mxu0 0.0
        %4190 = vmatprep.subr.mxu0 0.0
        %4191 = vmatpush1.msra.mxu0 0.0
        %4192 = vmatprep.subr.mxu0 0.0
        %4193 = vmatpush1.msra.mxu0 0.0
        %4194 = vmatprep.subr.mxu0 0.0
        %4195 = vmatpush1.msra.mxu0 0.0
        %4196 = vmatprep.subr.mxu0 0.0
        %4197 = vmatpush1.msra.mxu0 0.0
        %4198 = vmatprep.subr.mxu0 0.0
        %4199 = vmatpush1.msra.mxu0 0.0
        %4200 = vmatprep.subr.mxu0 0.0
        %4201 = vmatpush1.msra.mxu0 0.0
        %4202 = vmatprep.subr.mxu0 0.0
        %4203 = vmatpush1.msra.mxu0 0.0
        %4204 = vmatprep.subr.mxu0 0.0
        %4205 = vmatpush1.msra.mxu0 0.0
        %4206 = vmatprep.subr.mxu0 0.0
        %4207 = vmatpush1.msra.mxu0 0.0
        %4208 = vmatprep.subr.mxu0 0.0
        %4209 = vmatpush1.msra.mxu0 0.0
        %4210 = vmatprep.subr.mxu0 0.0
        %4211 = vmatpush1.msra.mxu0 0.0
        %4212 = vmatprep.subr.mxu0 0.0
        %4213 = vmatpush1.msra.mxu0 0.0
        %4214 = vmatprep.subr.mxu0 0.0
        %4215 = vmatpush1.msra.mxu0 0.0
        %4216 = vmatprep.subr.mxu0 0.0
        %4217 = vmatpush1.msra.mxu0 0.0
        %4218 = vmatprep.mubr.f32.mxu0 0.0
        %4219 = vmatmul.mubr.f32.gmra.mrb[0].mxu0 %v4152
        %v4220 = vpop.f32.mrb[0].mxu0
        %v4221 = vadd.f32 0.0, %v4220
        %v4222 = vpop.f32.mrb[0].mxu0
        %4223 = vdwg.mxu0
        %v4225 = vsel %vm1065, %v3689, 0
        %4227 = vmatprep.subr.mxu0 0.0
        %4228 = vmatpush1.msra.mxu0 %v3693
        %4229 = vmatprep.subr.mxu0 0.0
        %4230 = vmatpush1.msra.mxu0 %v3694
        %4231 = vmatprep.subr.mxu0 0.0
        %4232 = vmatpush1.msra.mxu0 %v3695
        %4233 = vmatprep.subr.mxu0 0.0
        %4234 = vmatpush1.msra.mxu0 %v3696
        %4235 = vmatprep.subr.mxu0 0.0
        %4236 = vmatpush1.msra.mxu0 0.0
        %4237 = vmatprep.subr.mxu0 0.0
        %4238 = vmatpush1.msra.mxu0 0.0
        %4239 = vmatprep.subr.mxu0 0.0
        %4240 = vmatpush1.msra.mxu0 0.0
        %4241 = vmatprep.subr.mxu0 0.0
        %4242 = vmatpush1.msra.mxu0 0.0
        %4243 = vmatprep.subr.mxu0 0.0
        %4244 = vmatpush1.msra.mxu0 0.0
        %4245 = vmatprep.subr.mxu0 0.0
        %4246 = vmatpush1.msra.mxu0 0.0
        %4247 = vmatprep.subr.mxu0 0.0
        %4248 = vmatpush1.msra.mxu0 0.0
        %4249 = vmatprep.subr.mxu0 0.0
        %4250 = vmatpush1.msra.mxu0 0.0
        %4251 = vmatprep.subr.mxu0 0.0
        %4252 = vmatpush1.msra.mxu0 0.0
        %4253 = vmatprep.subr.mxu0 0.0
        %4254 = vmatpush1.msra.mxu0 0.0
        %4255 = vmatprep.subr.mxu0 0.0
        %4256 = vmatpush1.msra.mxu0 0.0
        %4257 = vmatprep.subr.mxu0 0.0
        %4258 = vmatpush1.msra.mxu0 0.0
        %4259 = vmatprep.subr.mxu0 0.0
        %4260 = vmatpush1.msra.mxu0 0.0
        %4261 = vmatprep.subr.mxu0 0.0
        %4262 = vmatpush1.msra.mxu0 0.0
        %4263 = vmatprep.subr.mxu0 0.0
        %4264 = vmatpush1.msra.mxu0 0.0
        %4265 = vmatprep.subr.mxu0 0.0
        %4266 = vmatpush1.msra.mxu0 0.0
        %4267 = vmatprep.subr.mxu0 0.0
        %4268 = vmatpush1.msra.mxu0 0.0
        %4269 = vmatprep.subr.mxu0 0.0
        %4270 = vmatpush1.msra.mxu0 0.0
        %4271 = vmatprep.subr.mxu0 0.0
        %4272 = vmatpush1.msra.mxu0 0.0
        %4273 = vmatprep.subr.mxu0 0.0
        %4274 = vmatpush1.msra.mxu0 0.0
        %4275 = vmatprep.subr.mxu0 0.0
        %4276 = vmatpush1.msra.mxu0 0.0
        %4277 = vmatprep.subr.mxu0 0.0
        %4278 = vmatpush1.msra.mxu0 0.0
        %4279 = vmatprep.subr.mxu0 0.0
        %4280 = vmatpush1.msra.mxu0 0.0
        %4281 = vmatprep.subr.mxu0 0.0
        %4282 = vmatpush1.msra.mxu0 0.0
        %4283 = vmatprep.subr.mxu0 0.0
        %4284 = vmatpush1.msra.mxu0 0.0
        %4285 = vmatprep.subr.mxu0 0.0
        %4286 = vmatpush1.msra.mxu0 0.0
        %4287 = vmatprep.subr.mxu0 0.0
        %4288 = vmatpush1.msra.mxu0 0.0
        %4289 = vmatprep.subr.mxu0 0.0
        %4290 = vmatpush1.msra.mxu0 0.0
        %4291 = vmatprep.mubr.f32.mxu0 0.0
        %4292 = vmatmul.mubr.f32.gmra.mrb[0].mxu0 %v4225
        %v4293 = vpop.f32.mrb[0].mxu0
        %v4294 = vadd.f32 %v4221, %v4293
        %v4295 = vpop.f32.mrb[0].mxu0
        %4296 = vdwg.mxu0
        %s4297 = scalar_lea.vmem %s5, 768
        %v4298 = vld [vmem:[%s4297] sm:$0xff]
        %v4299 = vld [vmem:[%s4297 + $0x8] sm:$0xff]
        %v4300 = vld [vmem:[%s4297 + $0x10] sm:$0xff]
        %v4301 = vld [vmem:[%s4297 + $0x18] sm:$0xff]
        %v4302 = vld [vmem:[%s4297 + $0x20] sm:$0xff]
        %v4303 = vld [vmem:[%s4297 + $0x28] sm:$0xff]
        %v4304 = vld [vmem:[%s4297 + $0x30] sm:$0xff]
        %v4305 = vld [vmem:[%s4297 + $0x38] sm:$0xff]
        %v4306 = vld [vmem:[%s4297 + $0x40] sm:$0xff]
        %v4307 = vld [vmem:[%s4297 + $0x48] sm:$0xff]
        %v4308 = vld [vmem:[%s4297 + $0x50] sm:$0xff]
        %v4309 = vld [vmem:[%s4297 + $0x58] sm:$0xff]
        %v4310 = vld [vmem:[%s4297 + $0x60] sm:$0xff]
        %v4311 = vld [vmem:[%s4297 + $0x68] sm:$0xff]
        %v4312 = vld [vmem:[%s4297 + $0x70] sm:$0xff]
        %v4313 = vld [vmem:[%s4297 + $0x78] sm:$0xff]
        %s4314 = scalar_lea.vmem %s6, 6
        %v4315 = vld [vmem:[%s4314] sm:$0x1]
        %v4317 = vlaneseq
        %v4318 = vshrl.u32 %v4317, 7
        %v4319 = vsub.s32 0, %v4318
        %v4320 = vrot.slane %v4315, %v4319
        %4322 = vmatprep.subr.mxu0 0.0
        %4323 = vmatpush1.msra.mxu0 %v4298
        %4324 = vmatprep.subr.mxu0 0.0
        %4325 = vmatpush1.msra.mxu0 %v4299
        %4326 = vmatprep.subr.mxu0 0.0
        %4327 = vmatpush1.msra.mxu0 %v4300
        %4328 = vmatprep.subr.mxu0 0.0
        %4329 = vmatpush1.msra.mxu0 %v4301
        %4330 = vmatprep.subr.mxu0 0.0
        %4331 = vmatpush1.msra.mxu0 %v4302
        %4332 = vmatprep.subr.mxu0 0.0
        %4333 = vmatpush1.msra.mxu0 %v4303
        %4334 = vmatprep.subr.mxu0 0.0
        %4335 = vmatpush1.msra.mxu0 %v4304
        %4336 = vmatprep.subr.mxu0 0.0
        %4337 = vmatpush1.msra.mxu0 %v4305
        %4338 = vmatprep.subr.mxu0 0.0
        %4339 = vmatpush1.msra.mxu0 %v4306
        %4340 = vmatprep.subr.mxu0 0.0
        %4341 = vmatpush1.msra.mxu0 %v4307
        %4342 = vmatprep.subr.mxu0 0.0
        %4343 = vmatpush1.msra.mxu0 %v4308
        %4344 = vmatprep.subr.mxu0 0.0
        %4345 = vmatpush1.msra.mxu0 %v4309
        %4346 = vmatprep.subr.mxu0 0.0
        %4347 = vmatpush1.msra.mxu0 %v4310
        %4348 = vmatprep.subr.mxu0 0.0
        %4349 = vmatpush1.msra.mxu0 %v4311
        %4350 = vmatprep.subr.mxu0 0.0
        %4351 = vmatpush1.msra.mxu0 %v4312
        %4352 = vmatprep.subr.mxu0 0.0
        %4353 = vmatpush1.msra.mxu0 %v4313
        %4354 = vmatprep.subr.mxu0 0.0
        %4355 = vmatpush1.msra.mxu0 0.0
        %4356 = vmatprep.subr.mxu0 0.0
        %4357 = vmatpush1.msra.mxu0 0.0
        %4358 = vmatprep.subr.mxu0 0.0
        %4359 = vmatpush1.msra.mxu0 0.0
        %4360 = vmatprep.subr.mxu0 0.0
        %4361 = vmatpush1.msra.mxu0 0.0
        %4362 = vmatprep.subr.mxu0 0.0
        %4363 = vmatpush1.msra.mxu0 0.0
        %4364 = vmatprep.subr.mxu0 0.0
        %4365 = vmatpush1.msra.mxu0 0.0
        %4366 = vmatprep.subr.mxu0 0.0
        %4367 = vmatpush1.msra.mxu0 0.0
        %4368 = vmatprep.subr.mxu0 0.0
        %4369 = vmatpush1.msra.mxu0 0.0
        %4370 = vmatprep.subr.mxu0 0.0
        %4371 = vmatpush1.msra.mxu0 0.0
        %4372 = vmatprep.subr.mxu0 0.0
        %4373 = vmatpush1.msra.mxu0 0.0
        %4374 = vmatprep.subr.mxu0 0.0
        %4375 = vmatpush1.msra.mxu0 0.0
        %4376 = vmatprep.subr.mxu0 0.0
        %4377 = vmatpush1.msra.mxu0 0.0
        %4378 = vmatprep.subr.mxu0 0.0
        %4379 = vmatpush1.msra.mxu0 0.0
        %4380 = vmatprep.subr.mxu0 0.0
        %4381 = vmatpush1.msra.mxu0 0.0
        %4382 = vmatprep.subr.mxu0 0.0
        %4383 = vmatpush1.msra.mxu0 0.0
        %4384 = vmatprep.subr.mxu0 0.0
        %4385 = vmatpush1.msra.mxu0 0.0
        %4386 = vmatprep.mubr.f32.mxu0 0.0
        %4387 = vmatmul.mubr.f32.gmra.mrb[0].mxu0 %v3242
        %v4388 = vpop.f32.mrb[0].mxu0
        %v4389 = vadd.f32 %v4320, %v4388
        %v4390 = vpop.f32.mrb[0].mxu0
        %4391 = vdwg.mxu0
        %s4392 = scalar_lea.vmem %s7, 768
        %v4393 = vld [vmem:[%s4392] sm:$0xff]
        %v4394 = vld [vmem:[%s4392 + $0x8] sm:$0xff]
        %v4395 = vld [vmem:[%s4392 + $0x10] sm:$0xff]
        %v4396 = vld [vmem:[%s4392 + $0x18] sm:$0xff]
        %v4397 = vld [vmem:[%s4392 + $0x20] sm:$0xff]
        %v4398 = vld [vmem:[%s4392 + $0x28] sm:$0xff]
        %v4399 = vld [vmem:[%s4392 + $0x30] sm:$0xff]
        %v4400 = vld [vmem:[%s4392 + $0x38] sm:$0xff]
        %v4401 = vld [vmem:[%s4392 + $0x40] sm:$0xff]
        %v4402 = vld [vmem:[%s4392 + $0x48] sm:$0xff]
        %v4403 = vld [vmem:[%s4392 + $0x50] sm:$0xff]
        %v4404 = vld [vmem:[%s4392 + $0x58] sm:$0xff]
        %v4405 = vld [vmem:[%s4392 + $0x60] sm:$0xff]
        %v4406 = vld [vmem:[%s4392 + $0x68] sm:$0xff]
        %v4407 = vld [vmem:[%s4392 + $0x70] sm:$0xff]
        %v4408 = vld [vmem:[%s4392 + $0x78] sm:$0xff]
        %s4409 = scalar_lea.vmem %s8, 6
        %v4410 = vld [vmem:[%s4409] sm:$0x1]
        %v4412 = vlaneseq
        %v4413 = vshrl.u32 %v4412, 7
        %v4414 = vsub.s32 0, %v4413
        %v4415 = vrot.slane %v4410, %v4414
        %4417 = vmatprep.subr.mxu0 0.0
        %4418 = vmatpush1.msra.mxu0 %v4393
        %4419 = vmatprep.subr.mxu0 0.0
        %4420 = vmatpush1.msra.mxu0 %v4394
        %4421 = vmatprep.subr.mxu0 0.0
        %4422 = vmatpush1.msra.mxu0 %v4395
        %4423 = vmatprep.subr.mxu0 0.0
        %4424 = vmatpush1.msra.mxu0 %v4396
        %4425 = vmatprep.subr.mxu0 0.0
        %4426 = vmatpush1.msra.mxu0 %v4397
        %4427 = vmatprep.subr.mxu0 0.0
        %4428 = vmatpush1.msra.mxu0 %v4398
        %4429 = vmatprep.subr.mxu0 0.0
        %4430 = vmatpush1.msra.mxu0 %v4399
        %4431 = vmatprep.subr.mxu0 0.0
        %4432 = vmatpush1.msra.mxu0 %v4400
        %4433 = vmatprep.subr.mxu0 0.0
        %4434 = vmatpush1.msra.mxu0 %v4401
        %4435 = vmatprep.subr.mxu0 0.0
        %4436 = vmatpush1.msra.mxu0 %v4402
        %4437 = vmatprep.subr.mxu0 0.0
        %4438 = vmatpush1.msra.mxu0 %v4403
        %4439 = vmatprep.subr.mxu0 0.0
        %4440 = vmatpush1.msra.mxu0 %v4404
        %4441 = vmatprep.subr.mxu0 0.0
        %4442 = vmatpush1.msra.mxu0 %v4405
        %4443 = vmatprep.subr.mxu0 0.0
        %4444 = vmatpush1.msra.mxu0 %v4406
        %4445 = vmatprep.subr.mxu0 0.0
        %4446 = vmatpush1.msra.mxu0 %v4407
        %4447 = vmatprep.subr.mxu0 0.0
        %4448 = vmatpush1.msra.mxu0 %v4408
        %4449 = vmatprep.subr.mxu0 0.0
        %4450 = vmatpush1.msra.mxu0 0.0
        %4451 = vmatprep.subr.mxu0 0.0
        %4452 = vmatpush1.msra.mxu0 0.0
        %4453 = vmatprep.subr.mxu0 0.0
        %4454 = vmatpush1.msra.mxu0 0.0
        %4455 = vmatprep.subr.mxu0 0.0
        %4456 = vmatpush1.msra.mxu0 0.0
        %4457 = vmatprep.subr.mxu0 0.0
        %4458 = vmatpush1.msra.mxu0 0.0
        %4459 = vmatprep.subr.mxu0 0.0
        %4460 = vmatpush1.msra.mxu0 0.0
        %4461 = vmatprep.subr.mxu0 0.0
        %4462 = vmatpush1.msra.mxu0 0.0
        %4463 = vmatprep.subr.mxu0 0.0
        %4464 = vmatpush1.msra.mxu0 0.0
        %4465 = vmatprep.subr.mxu0 0.0
        %4466 = vmatpush1.msra.mxu0 0.0
        %4467 = vmatprep.subr.mxu0 0.0
        %4468 = vmatpush1.msra.mxu0 0.0
        %4469 = vmatprep.subr.mxu0 0.0
        %4470 = vmatpush1.msra.mxu0 0.0
        %4471 = vmatprep.subr.mxu0 0.0
        %4472 = vmatpush1.msra.mxu0 0.0
        %4473 = vmatprep.subr.mxu0 0.0
        %4474 = vmatpush1.msra.mxu0 0.0
        %4475 = vmatprep.subr.mxu0 0.0
        %4476 = vmatpush1.msra.mxu0 0.0
        %4477 = vmatprep.subr.mxu0 0.0
        %4478 = vmatpush1.msra.mxu0 0.0
        %4479 = vmatprep.subr.mxu0 0.0
        %4480 = vmatpush1.msra.mxu0 0.0
        %4481 = vmatprep.mubr.f32.mxu0 0.0
        %4482 = vmatmul.mubr.f32.gmra.mrb[0].mxu0 %v3242
        %v4483 = vpop.f32.mrb[0].mxu0
        %v4484 = vadd.f32 %v4415, %v4483
        %v4485 = vpop.f32.mrb[0].mxu0
        %4486 = vdwg.mxu0
        %s4487 = scalar_lea.vmem %s9, 768
        %v4488 = vld [vmem:[%s4487] sm:$0xff]
        %v4489 = vld [vmem:[%s4487 + $0x8] sm:$0xff]
        %v4490 = vld [vmem:[%s4487 + $0x10] sm:$0xff]
        %v4491 = vld [vmem:[%s4487 + $0x18] sm:$0xff]
        %v4492 = vld [vmem:[%s4487 + $0x20] sm:$0xff]
        %v4493 = vld [vmem:[%s4487 + $0x28] sm:$0xff]
        %v4494 = vld [vmem:[%s4487 + $0x30] sm:$0xff]
        %v4495 = vld [vmem:[%s4487 + $0x38] sm:$0xff]
        %v4496 = vld [vmem:[%s4487 + $0x40] sm:$0xff]
        %v4497 = vld [vmem:[%s4487 + $0x48] sm:$0xff]
        %v4498 = vld [vmem:[%s4487 + $0x50] sm:$0xff]
        %v4499 = vld [vmem:[%s4487 + $0x58] sm:$0xff]
        %v4500 = vld [vmem:[%s4487 + $0x60] sm:$0xff]
        %v4501 = vld [vmem:[%s4487 + $0x68] sm:$0xff]
        %v4502 = vld [vmem:[%s4487 + $0x70] sm:$0xff]
        %v4503 = vld [vmem:[%s4487 + $0x78] sm:$0xff]
        %s4504 = scalar_lea.vmem %s10, 6
        %v4505 = vld [vmem:[%s4504] sm:$0x1]
        %v4507 = vlaneseq
        %v4508 = vshrl.u32 %v4507, 7
        %v4509 = vsub.s32 0, %v4508
        %v4510 = vrot.slane %v4505, %v4509
        %4512 = vmatprep.subr.mxu0 0.0
        %4513 = vmatpush1.msra.mxu0 %v4488
        %4514 = vmatprep.subr.mxu0 0.0
        %4515 = vmatpush1.msra.mxu0 %v4489
        %4516 = vmatprep.subr.mxu0 0.0
        %4517 = vmatpush1.msra.mxu0 %v4490
        %4518 = vmatprep.subr.mxu0 0.0
        %4519 = vmatpush1.msra.mxu0 %v4491
        %4520 = vmatprep.subr.mxu0 0.0
        %4521 = vmatpush1.msra.mxu0 %v4492
        %4522 = vmatprep.subr.mxu0 0.0
        %4523 = vmatpush1.msra.mxu0 %v4493
        %4524 = vmatprep.subr.mxu0 0.0
        %4525 = vmatpush1.msra.mxu0 %v4494
        %4526 = vmatprep.subr.mxu0 0.0
        %4527 = vmatpush1.msra.mxu0 %v4495
        %4528 = vmatprep.subr.mxu0 0.0
        %4529 = vmatpush1.msra.mxu0 %v4496
        %4530 = vmatprep.subr.mxu0 0.0
        %4531 = vmatpush1.msra.mxu0 %v4497
        %4532 = vmatprep.subr.mxu0 0.0
        %4533 = vmatpush1.msra.mxu0 %v4498
        %4534 = vmatprep.subr.mxu0 0.0
        %4535 = vmatpush1.msra.mxu0 %v4499
        %4536 = vmatprep.subr.mxu0 0.0
        %4537 = vmatpush1.msra.mxu0 %v4500
        %4538 = vmatprep.subr.mxu0 0.0
        %4539 = vmatpush1.msra.mxu0 %v4501
        %4540 = vmatprep.subr.mxu0 0.0
        %4541 = vmatpush1.msra.mxu0 %v4502
        %4542 = vmatprep.subr.mxu0 0.0
        %4543 = vmatpush1.msra.mxu0 %v4503
        %4544 = vmatprep.subr.mxu0 0.0
        %4545 = vmatpush1.msra.mxu0 0.0
        %4546 = vmatprep.subr.mxu0 0.0
        %4547 = vmatpush1.msra.mxu0 0.0
        %4548 = vmatprep.subr.mxu0 0.0
        %4549 = vmatpush1.msra.mxu0 0.0
        %4550 = vmatprep.subr.mxu0 0.0
        %4551 = vmatpush1.msra.mxu0 0.0
        %4552 = vmatprep.subr.mxu0 0.0
        %4553 = vmatpush1.msra.mxu0 0.0
        %4554 = vmatprep.subr.mxu0 0.0
        %4555 = vmatpush1.msra.mxu0 0.0
        %4556 = vmatprep.subr.mxu0 0.0
        %4557 = vmatpush1.msra.mxu0 0.0
        %4558 = vmatprep.subr.mxu0 0.0
        %4559 = vmatpush1.msra.mxu0 0.0
        %4560 = vmatprep.subr.mxu0 0.0
        %4561 = vmatpush1.msra.mxu0 0.0
        %4562 = vmatprep.subr.mxu0 0.0
        %4563 = vmatpush1.msra.mxu0 0.0
        %4564 = vmatprep.subr.mxu0 0.0
        %4565 = vmatpush1.msra.mxu0 0.0
        %4566 = vmatprep.subr.mxu0 0.0
        %4567 = vmatpush1.msra.mxu0 0.0
        %4568 = vmatprep.subr.mxu0 0.0
        %4569 = vmatpush1.msra.mxu0 0.0
        %4570 = vmatprep.subr.mxu0 0.0
        %4571 = vmatpush1.msra.mxu0 0.0
        %4572 = vmatprep.subr.mxu0 0.0
        %4573 = vmatpush1.msra.mxu0 0.0
        %4574 = vmatprep.subr.mxu0 0.0
        %4575 = vmatpush1.msra.mxu0 0.0
        %4576 = vmatprep.mubr.f32.mxu0 0.0
        %4577 = vmatmul.mubr.f32.gmra.mrb[0].mxu0 %v3242
        %v4578 = vpop.f32.mrb[0].mxu0
        %v4579 = vadd.f32 %v4510, %v4578
        %v4580 = vpop.f32.mrb[0].mxu0
        %4581 = vdwg.mxu0
        %v4583 = vsel %vm1065, %v4389, 0
        %v4586 = vsel %vm1065, %v4484, 0
        %4588 = vmatprep.subr.mxu0 0.0
        %4589 = vmatpush1.xpose.msra.mxu0 %v4586
        %4590 = vmatprep.subr.mxu0 0.0
        %4591 = vmatpush1.xpose.msra.mxu0 0.0
        %4592 = vmatprep.subr.mxu0 0.0
        %4593 = vmatpush1.xpose.msra.mxu0 0.0
        %4594 = vmatprep.subr.mxu0 0.0
        %4595 = vmatpush1.xpose.msra.mxu0 0.0
        %4596 = vmatprep.subr.mxu0 0.0
        %4597 = vmatpush1.xpose.msra.mxu0 0.0
        %4598 = vmatprep.subr.mxu0 0.0
        %4599 = vmatpush1.xpose.msra.mxu0 0.0
        %4600 = vmatprep.subr.mxu0 0.0
        %4601 = vmatpush1.xpose.msra.mxu0 0.0
        %4602 = vmatprep.subr.mxu0 0.0
        %4603 = vmatpush1.xpose.msra.mxu0 0.0
        %4604 = vmatprep.subr.mxu0 0.0
        %4605 = vmatpush1.xpose.msra.mxu0 0.0
        %4606 = vmatprep.subr.mxu0 0.0
        %4607 = vmatpush1.xpose.msra.mxu0 0.0
        %4608 = vmatprep.subr.mxu0 0.0
        %4609 = vmatpush1.xpose.msra.mxu0 0.0
        %4610 = vmatprep.subr.mxu0 0.0
        %4611 = vmatpush1.xpose.msra.mxu0 0.0
        %4612 = vmatprep.subr.mxu0 0.0
        %4613 = vmatpush1.xpose.msra.mxu0 0.0
        %4614 = vmatprep.subr.mxu0 0.0
        %4615 = vmatpush1.xpose.msra.mxu0 0.0
        %4616 = vmatprep.subr.mxu0 0.0
        %4617 = vmatpush1.xpose.msra.mxu0 0.0
        %4618 = vmatprep.subr.mxu0 0.0
        %4619 = vmatpush1.xpose.msra.mxu0 0.0
        %4620 = vmatprep.subr.mxu0 0.0
        %4621 = vmatpush1.xpose.msra.mxu0 0.0
        %4622 = vmatprep.subr.mxu0 0.0
        %4623 = vmatpush1.xpose.msra.mxu0 0.0
        %4624 = vmatprep.subr.mxu0 0.0
        %4625 = vmatpush1.xpose.msra.mxu0 0.0
        %4626 = vmatprep.subr.mxu0 0.0
        %4627 = vmatpush1.xpose.msra.mxu0 0.0
        %4628 = vmatprep.subr.mxu0 0.0
        %4629 = vmatpush1.xpose.msra.mxu0 0.0
        %4630 = vmatprep.subr.mxu0 0.0
        %4631 = vmatpush1.xpose.msra.mxu0 0.0
        %4632 = vmatprep.subr.mxu0 0.0
        %4633 = vmatpush1.xpose.msra.mxu0 0.0
        %4634 = vmatprep.subr.mxu0 0.0
        %4635 = vmatpush1.xpose.msra.mxu0 0.0
        %4636 = vmatprep.subr.mxu0 0.0
        %4637 = vmatpush1.xpose.msra.mxu0 0.0
        %4638 = vmatprep.subr.mxu0 0.0
        %4639 = vmatpush1.xpose.msra.mxu0 0.0
        %4640 = vmatprep.subr.mxu0 0.0
        %4641 = vmatpush1.xpose.msra.mxu0 0.0
        %4642 = vmatprep.subr.mxu0 0.0
        %4643 = vmatpush1.xpose.msra.mxu0 0.0
        %4644 = vmatprep.subr.mxu0 0.0
        %4645 = vmatpush1.xpose.msra.mxu0 0.0
        %4646 = vmatprep.subr.mxu0 0.0
        %4647 = vmatpush1.xpose.msra.mxu0 0.0
        %4648 = vmatprep.subr.mxu0 0.0
        %4649 = vmatpush1.xpose.msra.mxu0 0.0
        %4650 = vmatprep.subr.mxu0 0.0
        %4651 = vmatpush1.xpose.msra.mxu0 0.0
        %4652 = vmatprep.mubr.f32.mxu0 0.0
        %4653 = vmatmul.mubr.f32.gmra.mrb[0].mxu0 %v4583
        %v4654 = vpop.f32.mrb[0].mxu0
        %v4655 = vadd.f32 0.0, %v4654
        %v4656 = vpop.f32.mrb[0].mxu0
        %4657 = vdwg.mxu0
        %v4658 = vmul.f32 %v4655, 0.17677669
        %v4659 = vsel %vm1143, %v4658, -inf
        %4660 = vmax.xlane.f32.xlu0 %v4659
        %v4661 = vpop.xlane.xlu0 %4660
        %v4662 = vsub.f32 %v4658, %v4661
        %v4663 = vmul.f32 %v4662, 1.442695
        %v4664 = vpow.pop %v4663
        %v4665 = vsel %vm1143, %v4664, 0.0
        %4666 = vadd.xlane.f32.xlu0 %v4665
        %v4667 = vpop.xlane.xlu0 %4666
        %v4668 = vrcp.pop %v4667
        %v4669 = vmul.f32 %v4664, %v4668
        %v4671 = vsel %vm1155, %v4669, 0
        %v4674 = vsel %vm757, %v4579, 0
        %4676 = vmatprep.subr.mxu0 0.0
        %4677 = vmatpush1.msra.mxu0 %v4674
        %4678 = vmatprep.subr.mxu0 0.0
        %4679 = vmatpush1.msra.mxu0 0.0
        %4680 = vmatprep.subr.mxu0 0.0
        %4681 = vmatpush1.msra.mxu0 0.0
        %4682 = vmatprep.subr.mxu0 0.0
        %4683 = vmatpush1.msra.mxu0 0.0
        %4684 = vmatprep.subr.mxu0 0.0
        %4685 = vmatpush1.msra.mxu0 0.0
        %4686 = vmatprep.subr.mxu0 0.0
        %4687 = vmatpush1.msra.mxu0 0.0
        %4688 = vmatprep.subr.mxu0 0.0
        %4689 = vmatpush1.msra.mxu0 0.0
        %4690 = vmatprep.subr.mxu0 0.0
        %4691 = vmatpush1.msra.mxu0 0.0
        %4692 = vmatprep.subr.mxu0 0.0
        %4693 = vmatpush1.msra.mxu0 0.0
        %4694 = vmatprep.subr.mxu0 0.0
        %4695 = vmatpush1.msra.mxu0 0.0
        %4696 = vmatprep.subr.mxu0 0.0
        %4697 = vmatpush1.msra.mxu0 0.0
        %4698 = vmatprep.subr.mxu0 0.0
        %4699 = vmatpush1.msra.mxu0 0.0
        %4700 = vmatprep.subr.mxu0 0.0
        %4701 = vmatpush1.msra.mxu0 0.0
        %4702 = vmatprep.subr.mxu0 0.0
        %4703 = vmatpush1.msra.mxu0 0.0
        %4704 = vmatprep.subr.mxu0 0.0
        %4705 = vmatpush1.msra.mxu0 0.0
        %4706 = vmatprep.subr.mxu0 0.0
        %4707 = vmatpush1.msra.mxu0 0.0
        %4708 = vmatprep.subr.mxu0 0.0
        %4709 = vmatpush1.msra.mxu0 0.0
        %4710 = vmatprep.subr.mxu0 0.0
        %4711 = vmatpush1.msra.mxu0 0.0
        %4712 = vmatprep.subr.mxu0 0.0
        %4713 = vmatpush1.msra.mxu0 0.0
        %4714 = vmatprep.subr.mxu0 0.0
        %4715 = vmatpush1.msra.mxu0 0.0
        %4716 = vmatprep.subr.mxu0 0.0
        %4717 = vmatpush1.msra.mxu0 0.0
        %4718 = vmatprep.subr.mxu0 0.0
        %4719 = vmatpush1.msra.mxu0 0.0
        %4720 = vmatprep.subr.mxu0 0.0
        %4721 = vmatpush1.msra.mxu0 0.0
        %4722 = vmatprep.subr.mxu0 0.0
        %4723 = vmatpush1.msra.mxu0 0.0
        %4724 = vmatprep.subr.mxu0 0.0
        %4725 = vmatpush1.msra.mxu0 0.0
        %4726 = vmatprep.subr.mxu0 0.0
        %4727 = vmatpush1.msra.mxu0 0.0
        %4728 = vmatprep.subr.mxu0 0.0
        %4729 = vmatpush1.msra.mxu0 0.0
        %4730 = vmatprep.subr.mxu0 0.0
        %4731 = vmatpush1.msra.mxu0 0.0
        %4732 = vmatprep.subr.mxu0 0.0
        %4733 = vmatpush1.msra.mxu0 0.0
        %4734 = vmatprep.subr.mxu0 0.0
        %4735 = vmatpush1.msra.mxu0 0.0
        %4736 = vmatprep.subr.mxu0 0.0
        %4737 = vmatpush1.msra.mxu0 0.0
        %4738 = vmatprep.subr.mxu0 0.0
        %4739 = vmatpush1.msra.mxu0 0.0
        %4740 = vmatprep.mubr.f32.mxu0 0.0
        %4741 = vmatmul.mubr.f32.gmra.mrb[0].mxu0 %v4671
        %v4742 = vpop.f32.mrb[0].mxu0
        %v4743 = vadd.f32 0.0, %v4742
        %v4744 = vpop.f32.mrb[0].mxu0
        %4745 = vdwg.mxu0
        %s4746 = scalar_lea.vmem %s11, 192
        %v4747 = vld [vmem:[%s4746] sm:$0xff]
        %v4748 = vld [vmem:[%s4746 + $0x8] sm:$0xff]
        %v4749 = vld [vmem:[%s4746 + $0x10] sm:$0xff]
        %v4750 = vld [vmem:[%s4746 + $0x18] sm:$0xff]
        %v4752 = vsel %vm1065, %v4743, 0
        %4754 = vmatprep.subr.mxu0 0.0
        %4755 = vmatpush1.msra.mxu0 %v4747
        %4756 = vmatprep.subr.mxu0 0.0
        %4757 = vmatpush1.msra.mxu0 %v4748
        %4758 = vmatprep.subr.mxu0 0.0
        %4759 = vmatpush1.msra.mxu0 %v4749
        %4760 = vmatprep.subr.mxu0 0.0
        %4761 = vmatpush1.msra.mxu0 %v4750
        %4762 = vmatprep.subr.mxu0 0.0
        %4763 = vmatpush1.msra.mxu0 0.0
        %4764 = vmatprep.subr.mxu0 0.0
        %4765 = vmatpush1.msra.mxu0 0.0
        %4766 = vmatprep.subr.mxu0 0.0
        %4767 = vmatpush1.msra.mxu0 0.0
        %4768 = vmatprep.subr.mxu0 0.0
        %4769 = vmatpush1.msra.mxu0 0.0
        %4770 = vmatprep.subr.mxu0 0.0
        %4771 = vmatpush1.msra.mxu0 0.0
        %4772 = vmatprep.subr.mxu0 0.0
        %4773 = vmatpush1.msra.mxu0 0.0
        %4774 = vmatprep.subr.mxu0 0.0
        %4775 = vmatpush1.msra.mxu0 0.0
        %4776 = vmatprep.subr.mxu0 0.0
        %4777 = vmatpush1.msra.mxu0 0.0
        %4778 = vmatprep.subr.mxu0 0.0
        %4779 = vmatpush1.msra.mxu0 0.0
        %4780 = vmatprep.subr.mxu0 0.0
        %4781 = vmatpush1.msra.mxu0 0.0
        %4782 = vmatprep.subr.mxu0 0.0
        %4783 = vmatpush1.msra.mxu0 0.0
        %4784 = vmatprep.subr.mxu0 0.0
        %4785 = vmatpush1.msra.mxu0 0.0
        %4786 = vmatprep.subr.mxu0 0.0
        %4787 = vmatpush1.msra.mxu0 0.0
        %4788 = vmatprep.subr.mxu0 0.0
        %4789 = vmatpush1.msra.mxu0 0.0
        %4790 = vmatprep.subr.mxu0 0.0
        %4791 = vmatpush1.msra.mxu0 0.0
        %4792 = vmatprep.subr.mxu0 0.0
        %4793 = vmatpush1.msra.mxu0 0.0
        %4794 = vmatprep.subr.mxu0 0.0
        %4795 = vmatpush1.msra.mxu0 0.0
        %4796 = vmatprep.subr.mxu0 0.0
        %4797 = vmatpush1.msra.mxu0 0.0
        %4798 = vmatprep.subr.mxu0 0.0
        %4799 = vmatpush1.msra.mxu0 0.0
        %4800 = vmatprep.subr.mxu0 0.0
        %4801 = vmatpush1.msra.mxu0 0.0
        %4802 = vmatprep.subr.mxu0 0.0
        %4803 = vmatpush1.msra.mxu0 0.0
        %4804 = vmatprep.subr.mxu0 0.0
        %4805 = vmatpush1.msra.mxu0 0.0
        %4806 = vmatprep.subr.mxu0 0.0
        %4807 = vmatpush1.msra.mxu0 0.0
        %4808 = vmatprep.subr.mxu0 0.0
        %4809 = vmatpush1.msra.mxu0 0.0
        %4810 = vmatprep.subr.mxu0 0.0
        %4811 = vmatpush1.msra.mxu0 0.0
        %4812 = vmatprep.subr.mxu0 0.0
        %4813 = vmatpush1.msra.mxu0 0.0
        %4814 = vmatprep.subr.mxu0 0.0
        %4815 = vmatpush1.msra.mxu0 0.0
        %4816 = vmatprep.subr.mxu0 0.0
        %4817 = vmatpush1.msra.mxu0 0.0
        %4818 = vmatprep.mubr.f32.mxu0 0.0
        %4819 = vmatmul.mubr.f32.gmra.mrb[0].mxu0 %v4752
        %v4820 = vpop.f32.mrb[0].mxu0
        %v4821 = vadd.f32 0.0, %v4820
        %v4822 = vpop.f32.mrb[0].mxu0
        %4823 = vdwg.mxu0
        %v4824 = vadd.f32 %v4294, %v4821
        %s4825 = scalar_lea.vmem %s5, 896
        %v4826 = vld [vmem:[%s4825] sm:$0xff]
        %v4827 = vld [vmem:[%s4825 + $0x8] sm:$0xff]
        %v4828 = vld [vmem:[%s4825 + $0x10] sm:$0xff]
        %v4829 = vld [vmem:[%s4825 + $0x18] sm:$0xff]
        %v4830 = vld [vmem:[%s4825 + $0x20] sm:$0xff]
        %v4831 = vld [vmem:[%s4825 + $0x28] sm:$0xff]
        %v4832 = vld [vmem:[%s4825 + $0x30] sm:$0xff]
        %v4833 = vld [vmem:[%s4825 + $0x38] sm:$0xff]
        %v4834 = vld [vmem:[%s4825 + $0x40] sm:$0xff]
        %v4835 = vld [vmem:[%s4825 + $0x48] sm:$0xff]
        %v4836 = vld [vmem:[%s4825 + $0x50] sm:$0xff]
        %v4837 = vld [vmem:[%s4825 + $0x58] sm:$0xff]
        %v4838 = vld [vmem:[%s4825 + $0x60] sm:$0xff]
        %v4839 = vld [vmem:[%s4825 + $0x68] sm:$0xff]
        %v4840 = vld [vmem:[%s4825 + $0x70] sm:$0xff]
        %v4841 = vld [vmem:[%s4825 + $0x78] sm:$0xff]
        %s4842 = scalar_lea.vmem %s6, 7
        %v4843 = vld [vmem:[%s4842] sm:$0x1]
        %v4845 = vlaneseq
        %v4846 = vshrl.u32 %v4845, 7
        %v4847 = vsub.s32 0, %v4846
        %v4848 = vrot.slane %v4843, %v4847
        %4850 = vmatprep.subr.mxu0 0.0
        %4851 = vmatpush1.msra.mxu0 %v4826
        %4852 = vmatprep.subr.mxu0 0.0
        %4853 = vmatpush1.msra.mxu0 %v4827
        %4854 = vmatprep.subr.mxu0 0.0
        %4855 = vmatpush1.msra.mxu0 %v4828
        %4856 = vmatprep.subr.mxu0 0.0
        %4857 = vmatpush1.msra.mxu0 %v4829
        %4858 = vmatprep.subr.mxu0 0.0
        %4859 = vmatpush1.msra.mxu0 %v4830
        %4860 = vmatprep.subr.mxu0 0.0
        %4861 = vmatpush1.msra.mxu0 %v4831
        %4862 = vmatprep.subr.mxu0 0.0
        %4863 = vmatpush1.msra.mxu0 %v4832
        %4864 = vmatprep.subr.mxu0 0.0
        %4865 = vmatpush1.msra.mxu0 %v4833
        %4866 = vmatprep.subr.mxu0 0.0
        %4867 = vmatpush1.msra.mxu0 %v4834
        %4868 = vmatprep.subr.mxu0 0.0
        %4869 = vmatpush1.msra.mxu0 %v4835
        %4870 = vmatprep.subr.mxu0 0.0
        %4871 = vmatpush1.msra.mxu0 %v4836
        %4872 = vmatprep.subr.mxu0 0.0
        %4873 = vmatpush1.msra.mxu0 %v4837
        %4874 = vmatprep.subr.mxu0 0.0
        %4875 = vmatpush1.msra.mxu0 %v4838
        %4876 = vmatprep.subr.mxu0 0.0
        %4877 = vmatpush1.msra.mxu0 %v4839
        %4878 = vmatprep.subr.mxu0 0.0
        %4879 = vmatpush1.msra.mxu0 %v4840
        %4880 = vmatprep.subr.mxu0 0.0
        %4881 = vmatpush1.msra.mxu0 %v4841
        %4882 = vmatprep.subr.mxu0 0.0
        %4883 = vmatpush1.msra.mxu0 0.0
        %4884 = vmatprep.subr.mxu0 0.0
        %4885 = vmatpush1.msra.mxu0 0.0
        %4886 = vmatprep.subr.mxu0 0.0
        %4887 = vmatpush1.msra.mxu0 0.0
        %4888 = vmatprep.subr.mxu0 0.0
        %4889 = vmatpush1.msra.mxu0 0.0
        %4890 = vmatprep.subr.mxu0 0.0
        %4891 = vmatpush1.msra.mxu0 0.0
        %4892 = vmatprep.subr.mxu0 0.0
        %4893 = vmatpush1.msra.mxu0 0.0
        %4894 = vmatprep.subr.mxu0 0.0
        %4895 = vmatpush1.msra.mxu0 0.0
        %4896 = vmatprep.subr.mxu0 0.0
        %4897 = vmatpush1.msra.mxu0 0.0
        %4898 = vmatprep.subr.mxu0 0.0
        %4899 = vmatpush1.msra.mxu0 0.0
        %4900 = vmatprep.subr.mxu0 0.0
        %4901 = vmatpush1.msra.mxu0 0.0
        %4902 = vmatprep.subr.mxu0 0.0
        %4903 = vmatpush1.msra.mxu0 0.0
        %4904 = vmatprep.subr.mxu0 0.0
        %4905 = vmatpush1.msra.mxu0 0.0
        %4906 = vmatprep.subr.mxu0 0.0
        %4907 = vmatpush1.msra.mxu0 0.0
        %4908 = vmatprep.subr.mxu0 0.0
        %4909 = vmatpush1.msra.mxu0 0.0
        %4910 = vmatprep.subr.mxu0 0.0
        %4911 = vmatpush1.msra.mxu0 0.0
        %4912 = vmatprep.subr.mxu0 0.0
        %4913 = vmatpush1.msra.mxu0 0.0
        %4914 = vmatprep.mubr.f32.mxu0 0.0
        %4915 = vmatmul.mubr.f32.gmra.mrb[0].mxu0 %v3242
        %v4916 = vpop.f32.mrb[0].mxu0
        %v4917 = vadd.f32 %v4848, %v4916
        %v4918 = vpop.f32.mrb[0].mxu0
        %4919 = vdwg.mxu0
        %s4920 = scalar_lea.vmem %s7, 896
        %v4921 = vld [vmem:[%s4920] sm:$0xff]
        %v4922 = vld [vmem:[%s4920 + $0x8] sm:$0xff]
        %v4923 = vld [vmem:[%s4920 + $0x10] sm:$0xff]
        %v4924 = vld [vmem:[%s4920 + $0x18] sm:$0xff]
        %v4925 = vld [vmem:[%s4920 + $0x20] sm:$0xff]
        %v4926 = vld [vmem:[%s4920 + $0x28] sm:$0xff]
        %v4927 = vld [vmem:[%s4920 + $0x30] sm:$0xff]
        %v4928 = vld [vmem:[%s4920 + $0x38] sm:$0xff]
        %v4929 = vld [vmem:[%s4920 + $0x40] sm:$0xff]
        %v4930 = vld [vmem:[%s4920 + $0x48] sm:$0xff]
        %v4931 = vld [vmem:[%s4920 + $0x50] sm:$0xff]
        %v4932 = vld [vmem:[%s4920 + $0x58] sm:$0xff]
        %v4933 = vld [vmem:[%s4920 + $0x60] sm:$0xff]
        %v4934 = vld [vmem:[%s4920 + $0x68] sm:$0xff]
        %v4935 = vld [vmem:[%s4920 + $0x70] sm:$0xff]
        %v4936 = vld [vmem:[%s4920 + $0x78] sm:$0xff]
        %s4937 = scalar_lea.vmem %s8, 7
        %v4938 = vld [vmem:[%s4937] sm:$0x1]
        %v4940 = vlaneseq
        %v4941 = vshrl.u32 %v4940, 7
        %v4942 = vsub.s32 0, %v4941
        %v4943 = vrot.slane %v4938, %v4942
        %4945 = vmatprep.subr.mxu0 0.0
        %4946 = vmatpush1.msra.mxu0 %v4921
        %4947 = vmatprep.subr.mxu0 0.0
        %4948 = vmatpush1.msra.mxu0 %v4922
        %4949 = vmatprep.subr.mxu0 0.0
        %4950 = vmatpush1.msra.mxu0 %v4923
        %4951 = vmatprep.subr.mxu0 0.0
        %4952 = vmatpush1.msra.mxu0 %v4924
        %4953 = vmatprep.subr.mxu0 0.0
        %4954 = vmatpush1.msra.mxu0 %v4925
        %4955 = vmatprep.subr.mxu0 0.0
        %4956 = vmatpush1.msra.mxu0 %v4926
        %4957 = vmatprep.subr.mxu0 0.0
        %4958 = vmatpush1.msra.mxu0 %v4927
        %4959 = vmatprep.subr.mxu0 0.0
        %4960 = vmatpush1.msra.mxu0 %v4928
        %4961 = vmatprep.subr.mxu0 0.0
        %4962 = vmatpush1.msra.mxu0 %v4929
        %4963 = vmatprep.subr.mxu0 0.0
        %4964 = vmatpush1.msra.mxu0 %v4930
        %4965 = vmatprep.subr.mxu0 0.0
        %4966 = vmatpush1.msra.mxu0 %v4931
        %4967 = vmatprep.subr.mxu0 0.0
        %4968 = vmatpush1.msra.mxu0 %v4932
        %4969 = vmatprep.subr.mxu0 0.0
        %4970 = vmatpush1.msra.mxu0 %v4933
        %4971 = vmatprep.subr.mxu0 0.0
        %4972 = vmatpush1.msra.mxu0 %v4934
        %4973 = vmatprep.subr.mxu0 0.0
        %4974 = vmatpush1.msra.mxu0 %v4935
        %4975 = vmatprep.subr.mxu0 0.0
        %4976 = vmatpush1.msra.mxu0 %v4936
        %4977 = vmatprep.subr.mxu0 0.0
        %4978 = vmatpush1.msra.mxu0 0.0
        %4979 = vmatprep.subr.mxu0 0.0
        %4980 = vmatpush1.msra.mxu0 0.0
        %4981 = vmatprep.subr.mxu0 0.0
        %4982 = vmatpush1.msra.mxu0 0.0
        %4983 = vmatprep.subr.mxu0 0.0
        %4984 = vmatpush1.msra.mxu0 0.0
        %4985 = vmatprep.subr.mxu0 0.0
        %4986 = vmatpush1.msra.mxu0 0.0
        %4987 = vmatprep.subr.mxu0 0.0
        %4988 = vmatpush1.msra.mxu0 0.0
        %4989 = vmatprep.subr.mxu0 0.0
        %4990 = vmatpush1.msra.mxu0 0.0
        %4991 = vmatprep.subr.mxu0 0.0
        %4992 = vmatpush1.msra.mxu0 0.0
        %4993 = vmatprep.subr.mxu0 0.0
        %4994 = vmatpush1.msra.mxu0 0.0
        %4995 = vmatprep.subr.mxu0 0.0
        %4996 = vmatpush1.msra.mxu0 0.0
        %4997 = vmatprep.subr.mxu0 0.0
        %4998 = vmatpush1.msra.mxu0 0.0
        %4999 = vmatprep.subr.mxu0 0.0
        %5000 = vmatpush1.msra.mxu0 0.0
        %5001 = vmatprep.subr.mxu0 0.0
        %5002 = vmatpush1.msra.mxu0 0.0
        %5003 = vmatprep.subr.mxu0 0.0
        %5004 = vmatpush1.msra.mxu0 0.0
        %5005 = vmatprep.subr.mxu0 0.0
        %5006 = vmatpush1.msra.mxu0 0.0
        %5007 = vmatprep.subr.mxu0 0.0
        %5008 = vmatpush1.msra.mxu0 0.0
        %5009 = vmatprep.mubr.f32.mxu0 0.0
        %5010 = vmatmul.mubr.f32.gmra.mrb[0].mxu0 %v3242
        %v5011 = vpop.f32.mrb[0].mxu0
        %v5012 = vadd.f32 %v4943, %v5011
        %v5013 = vpop.f32.mrb[0].mxu0
        %5014 = vdwg.mxu0
        %s5015 = scalar_lea.vmem %s9, 896
        %v5016 = vld [vmem:[%s5015] sm:$0xff]
        %v5017 = vld [vmem:[%s5015 + $0x8] sm:$0xff]
        %v5018 = vld [vmem:[%s5015 + $0x10] sm:$0xff]
        %v5019 = vld [vmem:[%s5015 + $0x18] sm:$0xff]
        %v5020 = vld [vmem:[%s5015 + $0x20] sm:$0xff]
        %v5021 = vld [vmem:[%s5015 + $0x28] sm:$0xff]
        %v5022 = vld [vmem:[%s5015 + $0x30] sm:$0xff]
        %v5023 = vld [vmem:[%s5015 + $0x38] sm:$0xff]
        %v5024 = vld [vmem:[%s5015 + $0x40] sm:$0xff]
        %v5025 = vld [vmem:[%s5015 + $0x48] sm:$0xff]
        %v5026 = vld [vmem:[%s5015 + $0x50] sm:$0xff]
        %v5027 = vld [vmem:[%s5015 + $0x58] sm:$0xff]
        %v5028 = vld [vmem:[%s5015 + $0x60] sm:$0xff]
        %v5029 = vld [vmem:[%s5015 + $0x68] sm:$0xff]
        %v5030 = vld [vmem:[%s5015 + $0x70] sm:$0xff]
        %v5031 = vld [vmem:[%s5015 + $0x78] sm:$0xff]
        %s5032 = scalar_lea.vmem %s10, 7
        %v5033 = vld [vmem:[%s5032] sm:$0x1]
        %v5035 = vlaneseq
        %v5036 = vshrl.u32 %v5035, 7
        %v5037 = vsub.s32 0, %v5036
        %v5038 = vrot.slane %v5033, %v5037
        %5040 = vmatprep.subr.mxu0 0.0
        %5041 = vmatpush1.msra.mxu0 %v5016
        %5042 = vmatprep.subr.mxu0 0.0
        %5043 = vmatpush1.msra.mxu0 %v5017
        %5044 = vmatprep.subr.mxu0 0.0
        %5045 = vmatpush1.msra.mxu0 %v5018
        %5046 = vmatprep.subr.mxu0 0.0
        %5047 = vmatpush1.msra.mxu0 %v5019
        %5048 = vmatprep.subr.mxu0 0.0
        %5049 = vmatpush1.msra.mxu0 %v5020
        %5050 = vmatprep.subr.mxu0 0.0
        %5051 = vmatpush1.msra.mxu0 %v5021
        %5052 = vmatprep.subr.mxu0 0.0
        %5053 = vmatpush1.msra.mxu0 %v5022
        %5054 = vmatprep.subr.mxu0 0.0
        %5055 = vmatpush1.msra.mxu0 %v5023
        %5056 = vmatprep.subr.mxu0 0.0
        %5057 = vmatpush1.msra.mxu0 %v5024
        %5058 = vmatprep.subr.mxu0 0.0
        %5059 = vmatpush1.msra.mxu0 %v5025
        %5060 = vmatprep.subr.mxu0 0.0
        %5061 = vmatpush1.msra.mxu0 %v5026
        %5062 = vmatprep.subr.mxu0 0.0
        %5063 = vmatpush1.msra.mxu0 %v5027
        %5064 = vmatprep.subr.mxu0 0.0
        %5065 = vmatpush1.msra.mxu0 %v5028
        %5066 = vmatprep.subr.mxu0 0.0
        %5067 = vmatpush1.msra.mxu0 %v5029
        %5068 = vmatprep.subr.mxu0 0.0
        %5069 = vmatpush1.msra.mxu0 %v5030
        %5070 = vmatprep.subr.mxu0 0.0
        %5071 = vmatpush1.msra.mxu0 %v5031
        %5072 = vmatprep.subr.mxu0 0.0
        %5073 = vmatpush1.msra.mxu0 0.0
        %5074 = vmatprep.subr.mxu0 0.0
        %5075 = vmatpush1.msra.mxu0 0.0
        %5076 = vmatprep.subr.mxu0 0.0
        %5077 = vmatpush1.msra.mxu0 0.0
        %5078 = vmatprep.subr.mxu0 0.0
        %5079 = vmatpush1.msra.mxu0 0.0
        %5080 = vmatprep.subr.mxu0 0.0
        %5081 = vmatpush1.msra.mxu0 0.0
        %5082 = vmatprep.subr.mxu0 0.0
        %5083 = vmatpush1.msra.mxu0 0.0
        %5084 = vmatprep.subr.mxu0 0.0
        %5085 = vmatpush1.msra.mxu0 0.0
        %5086 = vmatprep.subr.mxu0 0.0
        %5087 = vmatpush1.msra.mxu0 0.0
        %5088 = vmatprep.subr.mxu0 0.0
        %5089 = vmatpush1.msra.mxu0 0.0
        %5090 = vmatprep.subr.mxu0 0.0
        %5091 = vmatpush1.msra.mxu0 0.0
        %5092 = vmatprep.subr.mxu0 0.0
        %5093 = vmatpush1.msra.mxu0 0.0
        %5094 = vmatprep.subr.mxu0 0.0
        %5095 = vmatpush1.msra.mxu0 0.0
        %5096 = vmatprep.subr.mxu0 0.0
        %5097 = vmatpush1.msra.mxu0 0.0
        %5098 = vmatprep.subr.mxu0 0.0
        %5099 = vmatpush1.msra.mxu0 0.0
        %5100 = vmatprep.subr.mxu0 0.0
        %5101 = vmatpush1.msra.mxu0 0.0
        %5102 = vmatprep.subr.mxu0 0.0
        %5103 = vmatpush1.msra.mxu0 0.0
        %5104 = vmatprep.mubr.f32.mxu0 0.0
        %5105 = vmatmul.mubr.f32.gmra.mrb[0].mxu0 %v3242
        %v5106 = vpop.f32.mrb[0].mxu0
        %v5107 = vadd.f32 %v5038, %v5106
        %v5108 = vpop.f32.mrb[0].mxu0
        %5109 = vdwg.mxu0
        %v5111 = vsel %vm1065, %v4917, 0
        %v5114 = vsel %vm1065, %v5012, 0
        %5116 = vmatprep.subr.mxu0 0.0
        %5117 = vmatpush1.xpose.msra.mxu0 %v5114
        %5118 = vmatprep.subr.mxu0 0.0
        %5119 = vmatpush1.xpose.msra.mxu0 0.0
        %5120 = vmatprep.subr.mxu0 0.0
        %5121 = vmatpush1.xpose.msra.mxu0 0.0
        %5122 = vmatprep.subr.mxu0 0.0
        %5123 = vmatpush1.xpose.msra.mxu0 0.0
        %5124 = vmatprep.subr.mxu0 0.0
        %5125 = vmatpush1.xpose.msra.mxu0 0.0
        %5126 = vmatprep.subr.mxu0 0.0
        %5127 = vmatpush1.xpose.msra.mxu0 0.0
        %5128 = vmatprep.subr.mxu0 0.0
        %5129 = vmatpush1.xpose.msra.mxu0 0.0
        %5130 = vmatprep.subr.mxu0 0.0
        %5131 = vmatpush1.xpose.msra.mxu0 0.0
        %5132 = vmatprep.subr.mxu0 0.0
        %5133 = vmatpush1.xpose.msra.mxu0 0.0
        %5134 = vmatprep.subr.mxu0 0.0
        %5135 = vmatpush1.xpose.msra.mxu0 0.0
        %5136 = vmatprep.subr.mxu0 0.0
        %5137 = vmatpush1.xpose.msra.mxu0 0.0
        %5138 = vmatprep.subr.mxu0 0.0
        %5139 = vmatpush1.xpose.msra.mxu0 0.0
        %5140 = vmatprep.subr.mxu0 0.0
        %5141 = vmatpush1.xpose.msra.mxu0 0.0
        %5142 = vmatprep.subr.mxu0 0.0
        %5143 = vmatpush1.xpose.msra.mxu0 0.0
        %5144 = vmatprep.subr.mxu0 0.0
        %5145 = vmatpush1.xpose.msra.mxu0 0.0
        %5146 = vmatprep.subr.mxu0 0.0
        %5147 = vmatpush1.xpose.msra.mxu0 0.0
        %5148 = vmatprep.subr.mxu0 0.0
        %5149 = vmatpush1.xpose.msra.mxu0 0.0
        %5150 = vmatprep.subr.mxu0 0.0
        %5151 = vmatpush1.xpose.msra.mxu0 0.0
        %5152 = vmatprep.subr.mxu0 0.0
        %5153 = vmatpush1.xpose.msra.mxu0 0.0
        %5154 = vmatprep.subr.mxu0 0.0
        %5155 = vmatpush1.xpose.msra.mxu0 0.0
        %5156 = vmatprep.subr.mxu0 0.0
        %5157 = vmatpush1.xpose.msra.mxu0 0.0
        %5158 = vmatprep.subr.mxu0 0.0
        %5159 = vmatpush1.xpose.msra.mxu0 0.0
        %5160 = vmatprep.subr.mxu0 0.0
        %5161 = vmatpush1.xpose.msra.mxu0 0.0
        %5162 = vmatprep.subr.mxu0 0.0
        %5163 = vmatpush1.xpose.msra.mxu0 0.0
        %5164 = vmatprep.subr.mxu0 0.0
        %5165 = vmatpush1.xpose.msra.mxu0 0.0
        %5166 = vmatprep.subr.mxu0 0.0
        %5167 = vmatpush1.xpose.msra.mxu0 0.0
        %5168 = vmatprep.subr.mxu0 0.0
        %5169 = vmatpush1.xpose.msra.mxu0 0.0
        %5170 = vmatprep.subr.mxu0 0.0
        %5171 = vmatpush1.xpose.msra.mxu0 0.0
        %5172 = vmatprep.subr.mxu0 0.0
        %5173 = vmatpush1.xpose.msra.mxu0 0.0
        %5174 = vmatprep.subr.mxu0 0.0
        %5175 = vmatpush1.xpose.msra.mxu0 0.0
        %5176 = vmatprep.subr.mxu0 0.0
        %5177 = vmatpush1.xpose.msra.mxu0 0.0
        %5178 = vmatprep.subr.mxu0 0.0
        %5179 = vmatpush1.xpose.msra.mxu0 0.0
        %5180 = vmatprep.mubr.f32.mxu0 0.0
        %5181 = vmatmul.mubr.f32.gmra.mrb[0].mxu0 %v5111
        %v5182 = vpop.f32.mrb[0].mxu0
        %v5183 = vadd.f32 0.0, %v5182
        %v5184 = vpop.f32.mrb[0].mxu0
        %5185 = vdwg.mxu0
        %v5186 = vmul.f32 %v5183, 0.17677669
        %v5187 = vsel %vm1143, %v5186, -inf
        %5188 = vmax.xlane.f32.xlu0 %v5187
        %v5189 = vpop.xlane.xlu0 %5188
        %v5190 = vsub.f32 %v5186, %v5189
        %v5191 = vmul.f32 %v5190, 1.442695
        %v5192 = vpow.pop %v5191
        %v5193 = vsel %vm1143, %v5192, 0.0
        %5194 = vadd.xlane.f32.xlu0 %v5193
        %v5195 = vpop.xlane.xlu0 %5194
        %v5196 = vrcp.pop %v5195
        %v5197 = vmul.f32 %v5192, %v5196
        %v5199 = vsel %vm1155, %v5197, 0
        %v5202 = vsel %vm757, %v5107, 0
        %5204 = vmatprep.subr.mxu0 0.0
        %5205 = vmatpush1.msra.mxu0 %v5202
        %5206 = vmatprep.subr.mxu0 0.0
        %5207 = vmatpush1.msra.mxu0 0.0
        %5208 = vmatprep.subr.mxu0 0.0
        %5209 = vmatpush1.msra.mxu0 0.0
        %5210 = vmatprep.subr.mxu0 0.0
        %5211 = vmatpush1.msra.mxu0 0.0
        %5212 = vmatprep.subr.mxu0 0.0
        %5213 = vmatpush1.msra.mxu0 0.0
        %5214 = vmatprep.subr.mxu0 0.0
        %5215 = vmatpush1.msra.mxu0 0.0
        %5216 = vmatprep.subr.mxu0 0.0
        %5217 = vmatpush1.msra.mxu0 0.0
        %5218 = vmatprep.subr.mxu0 0.0
        %5219 = vmatpush1.msra.mxu0 0.0
        %5220 = vmatprep.subr.mxu0 0.0
        %5221 = vmatpush1.msra.mxu0 0.0
        %5222 = vmatprep.subr.mxu0 0.0
        %5223 = vmatpush1.msra.mxu0 0.0
        %5224 = vmatprep.subr.mxu0 0.0
        %5225 = vmatpush1.msra.mxu0 0.0
        %5226 = vmatprep.subr.mxu0 0.0
        %5227 = vmatpush1.msra.mxu0 0.0
        %5228 = vmatprep.subr.mxu0 0.0
        %5229 = vmatpush1.msra.mxu0 0.0
        %5230 = vmatprep.subr.mxu0 0.0
        %5231 = vmatpush1.msra.mxu0 0.0
        %5232 = vmatprep.subr.mxu0 0.0
        %5233 = vmatpush1.msra.mxu0 0.0
        %5234 = vmatprep.subr.mxu0 0.0
        %5235 = vmatpush1.msra.mxu0 0.0
        %5236 = vmatprep.subr.mxu0 0.0
        %5237 = vmatpush1.msra.mxu0 0.0
        %5238 = vmatprep.subr.mxu0 0.0
        %5239 = vmatpush1.msra.mxu0 0.0
        %5240 = vmatprep.subr.mxu0 0.0
        %5241 = vmatpush1.msra.mxu0 0.0
        %5242 = vmatprep.subr.mxu0 0.0
        %5243 = vmatpush1.msra.mxu0 0.0
        %5244 = vmatprep.subr.mxu0 0.0
        %5245 = vmatpush1.msra.mxu0 0.0
        %5246 = vmatprep.subr.mxu0 0.0
        %5247 = vmatpush1.msra.mxu0 0.0
        %5248 = vmatprep.subr.mxu0 0.0
        %5249 = vmatpush1.msra.mxu0 0.0
        %5250 = vmatprep.subr.mxu0 0.0
        %5251 = vmatpush1.msra.mxu0 0.0
        %5252 = vmatprep.subr.mxu0 0.0
        %5253 = vmatpush1.msra.mxu0 0.0
        %5254 = vmatprep.subr.mxu0 0.0
        %5255 = vmatpush1.msra.mxu0 0.0
        %5256 = vmatprep.subr.mxu0 0.0
        %5257 = vmatpush1.msra.mxu0 0.0
        %5258 = vmatprep.subr.mxu0 0.0
        %5259 = vmatpush1.msra.mxu0 0.0
        %5260 = vmatprep.subr.mxu0 0.0
        %5261 = vmatpush1.msra.mxu0 0.0
        %5262 = vmatprep.subr.mxu0 0.0
        %5263 = vmatpush1.msra.mxu0 0.0
        %5264 = vmatprep.subr.mxu0 0.0
        %5265 = vmatpush1.msra.mxu0 0.0
        %5266 = vmatprep.subr.mxu0 0.0
        %5267 = vmatpush1.msra.mxu0 0.0
        %5268 = vmatprep.mubr.f32.mxu0 0.0
        %5269 = vmatmul.mubr.f32.gmra.mrb[0].mxu0 %v5199
        %v5270 = vpop.f32.mrb[0].mxu0
        %v5271 = vadd.f32 0.0, %v5270
        %v5272 = vpop.f32.mrb[0].mxu0
        %5273 = vdwg.mxu0
        %s5274 = scalar_lea.vmem %s11, 224
        %v5275 = vld [vmem:[%s5274] sm:$0xff]
        %v5276 = vld [vmem:[%s5274 + $0x8] sm:$0xff]
        %v5277 = vld [vmem:[%s5274 + $0x10] sm:$0xff]
        %v5278 = vld [vmem:[%s5274 + $0x18] sm:$0xff]
        %v5280 = vsel %vm1065, %v5271, 0
        %5282 = vmatprep.subr.mxu0 0.0
        %5283 = vmatpush1.msra.mxu0 %v5275
        %5284 = vmatprep.subr.mxu0 0.0
        %5285 = vmatpush1.msra.mxu0 %v5276
        %5286 = vmatprep.subr.mxu0 0.0
        %5287 = vmatpush1.msra.mxu0 %v5277
        %5288 = vmatprep.subr.mxu0 0.0
        %5289 = vmatpush1.msra.mxu0 %v5278
        %5290 = vmatprep.subr.mxu0 0.0
        %5291 = vmatpush1.msra.mxu0 0.0
        %5292 = vmatprep.subr.mxu0 0.0
        %5293 = vmatpush1.msra.mxu0 0.0
        %5294 = vmatprep.subr.mxu0 0.0
        %5295 = vmatpush1.msra.mxu0 0.0
        %5296 = vmatprep.subr.mxu0 0.0
        %5297 = vmatpush1.msra.mxu0 0.0
        %5298 = vmatprep.subr.mxu0 0.0
        %5299 = vmatpush1.msra.mxu0 0.0
        %5300 = vmatprep.subr.mxu0 0.0
        %5301 = vmatpush1.msra.mxu0 0.0
        %5302 = vmatprep.subr.mxu0 0.0
        %5303 = vmatpush1.msra.mxu0 0.0
        %5304 = vmatprep.subr.mxu0 0.0
        %5305 = vmatpush1.msra.mxu0 0.0
        %5306 = vmatprep.subr.mxu0 0.0
        %5307 = vmatpush1.msra.mxu0 0.0
        %5308 = vmatprep.subr.mxu0 0.0
        %5309 = vmatpush1.msra.mxu0 0.0
        %5310 = vmatprep.subr.mxu0 0.0
        %5311 = vmatpush1.msra.mxu0 0.0
        %5312 = vmatprep.subr.mxu0 0.0
        %5313 = vmatpush1.msra.mxu0 0.0
        %5314 = vmatprep.subr.mxu0 0.0
        %5315 = vmatpush1.msra.mxu0 0.0
        %5316 = vmatprep.subr.mxu0 0.0
        %5317 = vmatpush1.msra.mxu0 0.0
        %5318 = vmatprep.subr.mxu0 0.0
        %5319 = vmatpush1.msra.mxu0 0.0
        %5320 = vmatprep.subr.mxu0 0.0
        %5321 = vmatpush1.msra.mxu0 0.0
        %5322 = vmatprep.subr.mxu0 0.0
        %5323 = vmatpush1.msra.mxu0 0.0
        %5324 = vmatprep.subr.mxu0 0.0
        %5325 = vmatpush1.msra.mxu0 0.0
        %5326 = vmatprep.subr.mxu0 0.0
        %5327 = vmatpush1.msra.mxu0 0.0
        %5328 = vmatprep.subr.mxu0 0.0
        %5329 = vmatpush1.msra.mxu0 0.0
        %5330 = vmatprep.subr.mxu0 0.0
        %5331 = vmatpush1.msra.mxu0 0.0
        %5332 = vmatprep.subr.mxu0 0.0
        %5333 = vmatpush1.msra.mxu0 0.0
        %5334 = vmatprep.subr.mxu0 0.0
        %5335 = vmatpush1.msra.mxu0 0.0
        %5336 = vmatprep.subr.mxu0 0.0
        %5337 = vmatpush1.msra.mxu0 0.0
        %5338 = vmatprep.subr.mxu0 0.0
        %5339 = vmatpush1.msra.mxu0 0.0
        %5340 = vmatprep.subr.mxu0 0.0
        %5341 = vmatpush1.msra.mxu0 0.0
        %5342 = vmatprep.subr.mxu0 0.0
        %5343 = vmatpush1.msra.mxu0 0.0
        %5344 = vmatprep.subr.mxu0 0.0
        %5345 = vmatpush1.msra.mxu0 0.0
        %5346 = vmatprep.mubr.f32.mxu0 0.0
        %5347 = vmatmul.mubr.f32.gmra.mrb[0].mxu0 %v5280
        %v5348 = vpop.f32.mrb[0].mxu0
        %v5349 = vadd.f32 0.0, %v5348
        %v5350 = vpop.f32.mrb[0].mxu0
        %5351 = vdwg.mxu0
        %v5352 = vadd.f32 %v4824, %v5349
        %v5353 = vadd.f32 %v3211, %v5352
        %s5354 = scalar_lea.vmem %s12, 1
        %v5355 = vld [vmem:[%s5354] sm:$0x1]
        %v5357 = vlaneseq
        %v5358 = vshrl.u32 %v5357, 7
        %v5359 = vsub.s32 0, %v5358
        %v5360 = vrot.slane %v5355, %v5359
        %v5362 = vadd.f32 %v5353, %v5360
        %s5363 = scalar_lea.vmem %s13, 1
        %v5364 = vld [vmem:[%s5363] sm:$0x1]
        %s5365 = scalar_lea.vmem %s14, 1
        %v5366 = vld [vmem:[%s5365] sm:$0x1]
        %v5367 = vsel %vm757, %v5362, 0.0
        %5368 = vadd.xlane.f32.xlu0 %v5367
        %v5369 = vpop.xlane.xlu0 %5368
        %v5370 = vmul.f32 %v5369, %v761
        %v5371 = vsub.f32 %v5362, %v5370
        %v5372 = vmul.f32 %v5371, %v5371
        %v5373 = vsel %vm757, %v5372, 0.0
        %5374 = vadd.xlane.f32.xlu0 %v5373
        %v5375 = vpop.xlane.xlu0 %5374
        %v5376 = vmul.f32 %v5375, %v761
        %v5377 = vadd.f32 %v5376, 1e-06
        %v5378 = vrsqrt.pop %v5377
        %v5379 = vmul.f32 %v5371, %v5378
        %v5381 = vlaneseq
        %v5382 = vshrl.u32 %v5381, 7
        %v5383 = vsub.s32 0, %v5382
        %v5384 = vrot.slane %v5364, %v5383
        %v5386 = vmul.f32 %v5379, %v5384
        %v5388 = vlaneseq
        %v5389 = vshrl.u32 %v5388, 7
        %v5390 = vsub.s32 0, %v5389
        %v5391 = vrot.slane %v5366, %v5390
        %v5393 = vadd.f32 %v5386, %v5391
        %s5394 = scalar_lea.vmem %s15, 256
        %v5395 = vld [vmem:[%s5394] sm:$0xff]
        %v5396 = vld [vmem:[%s5394 + $0x8] sm:$0xff]
        %v5397 = vld [vmem:[%s5394 + $0x10] sm:$0xff]
        %v5398 = vld [vmem:[%s5394 + $0x18] sm:$0xff]
        %v5399 = vld [vmem:[%s5394 + $0x20] sm:$0xff]
        %v5400 = vld [vmem:[%s5394 + $0x28] sm:$0xff]
        %v5401 = vld [vmem:[%s5394 + $0x30] sm:$0xff]
        %v5402 = vld [vmem:[%s5394 + $0x38] sm:$0xff]
        %v5403 = vld [vmem:[%s5394 + $0x40] sm:$0xff]
        %v5404 = vld [vmem:[%s5394 + $0x48] sm:$0xff]
        %v5405 = vld [vmem:[%s5394 + $0x50] sm:$0xff]
        %v5406 = vld [vmem:[%s5394 + $0x58] sm:$0xff]
        %v5407 = vld [vmem:[%s5394 + $0x60] sm:$0xff]
        %v5408 = vld [vmem:[%s5394 + $0x68] sm:$0xff]
        %v5409 = vld [vmem:[%s5394 + $0x70] sm:$0xff]
        %v5410 = vld [vmem:[%s5394 + $0x78] sm:$0xff]
        %v5411 = vld [vmem:[%s5394 + $0x80] sm:$0xff]
        %v5412 = vld [vmem:[%s5394 + $0x88] sm:$0xff]
        %v5413 = vld [vmem:[%s5394 + $0x90] sm:$0xff]
        %v5414 = vld [vmem:[%s5394 + $0x98] sm:$0xff]
        %v5415 = vld [vmem:[%s5394 + $0xa0] sm:$0xff]
        %v5416 = vld [vmem:[%s5394 + $0xa8] sm:$0xff]
        %v5417 = vld [vmem:[%s5394 + $0xb0] sm:$0xff]
        %v5418 = vld [vmem:[%s5394 + $0xb8] sm:$0xff]
        %v5419 = vld [vmem:[%s5394 + $0xc0] sm:$0xff]
        %v5420 = vld [vmem:[%s5394 + $0xc8] sm:$0xff]
        %v5421 = vld [vmem:[%s5394 + $0xd0] sm:$0xff]
        %v5422 = vld [vmem:[%s5394 + $0xd8] sm:$0xff]
        %v5423 = vld [vmem:[%s5394 + $0xe0] sm:$0xff]
        %v5424 = vld [vmem:[%s5394 + $0xe8] sm:$0xff]
        %v5425 = vld [vmem:[%s5394 + $0xf0] sm:$0xff]
        %v5426 = vld [vmem:[%s5394 + $0xf8] sm:$0xff]
        %s5427 = scalar_lea.vmem %s16, 2
        %v5428 = vld [vmem:[%s5427] sm:$0x3]
        %v5430 = vlaneseq
        %v5431 = vshrl.u32 %v5430, 7
        %v5432 = vsub.s32 0, %v5431
        %v5433 = vrot.slane %v5428, %v5432
        %v5434 = vlaneseq
        %v5435 = vshrl.u32 %v5434, 7
        %v5436 = vsub.s32 1, %v5435
        %v5437 = vrot.slane %v5428, %v5436
        %5440 = vmatprep.subr.mxu0 %v5396
        %5441 = vmatpush1.msra.mxu0 %v5395
        %5442 = vmatprep.subr.mxu0 %v5398
        %5443 = vmatpush1.msra.mxu0 %v5397
        %5444 = vmatprep.subr.mxu0 %v5400
        %5445 = vmatpush1.msra.mxu0 %v5399
        %5446 = vmatprep.subr.mxu0 %v5402
        %5447 = vmatpush1.msra.mxu0 %v5401
        %5448 = vmatprep.subr.mxu0 %v5404
        %5449 = vmatpush1.msra.mxu0 %v5403
        %5450 = vmatprep.subr.mxu0 %v5406
        %5451 = vmatpush1.msra.mxu0 %v5405
        %5452 = vmatprep.subr.mxu0 %v5408
        %5453 = vmatpush1.msra.mxu0 %v5407
        %5454 = vmatprep.subr.mxu0 %v5410
        %5455 = vmatpush1.msra.mxu0 %v5409
        %5456 = vmatprep.subr.mxu0 %v5412
        %5457 = vmatpush1.msra.mxu0 %v5411
        %5458 = vmatprep.subr.mxu0 %v5414
        %5459 = vmatpush1.msra.mxu0 %v5413
        %5460 = vmatprep.subr.mxu0 %v5416
        %5461 = vmatpush1.msra.mxu0 %v5415
        %5462 = vmatprep.subr.mxu0 %v5418
        %5463 = vmatpush1.msra.mxu0 %v5417
        %5464 = vmatprep.subr.mxu0 %v5420
        %5465 = vmatpush1.msra.mxu0 %v5419
        %5466 = vmatprep.subr.mxu0 %v5422
        %5467 = vmatpush1.msra.mxu0 %v5421
        %5468 = vmatprep.subr.mxu0 %v5424
        %5469 = vmatpush1.msra.mxu0 %v5423
        %5470 = vmatprep.subr.mxu0 %v5426
        %5471 = vmatpush1.msra.mxu0 %v5425
        %5472 = vmatprep.subr.mxu0 0.0
        %5473 = vmatpush1.msra.mxu0 0.0
        %5474 = vmatprep.subr.mxu0 0.0
        %5475 = vmatpush1.msra.mxu0 0.0
        %5476 = vmatprep.subr.mxu0 0.0
        %5477 = vmatpush1.msra.mxu0 0.0
        %5478 = vmatprep.subr.mxu0 0.0
        %5479 = vmatpush1.msra.mxu0 0.0
        %5480 = vmatprep.subr.mxu0 0.0
        %5481 = vmatpush1.msra.mxu0 0.0
        %5482 = vmatprep.subr.mxu0 0.0
        %5483 = vmatpush1.msra.mxu0 0.0
        %5484 = vmatprep.subr.mxu0 0.0
        %5485 = vmatpush1.msra.mxu0 0.0
        %5486 = vmatprep.subr.mxu0 0.0
        %5487 = vmatpush1.msra.mxu0 0.0
        %5488 = vmatprep.subr.mxu0 0.0
        %5489 = vmatpush1.msra.mxu0 0.0
        %5490 = vmatprep.subr.mxu0 0.0
        %5491 = vmatpush1.msra.mxu0 0.0
        %5492 = vmatprep.subr.mxu0 0.0
        %5493 = vmatpush1.msra.mxu0 0.0
        %5494 = vmatprep.subr.mxu0 0.0
        %5495 = vmatpush1.msra.mxu0 0.0
        %5496 = vmatprep.subr.mxu0 0.0
        %5497 = vmatpush1.msra.mxu0 0.0
        %5498 = vmatprep.subr.mxu0 0.0
        %5499 = vmatpush1.msra.mxu0 0.0
        %5500 = vmatprep.subr.mxu0 0.0
        %5501 = vmatpush1.msra.mxu0 0.0
        %5502 = vmatprep.subr.mxu0 0.0
        %5503 = vmatpush1.msra.mxu0 0.0
        %5504 = vmatprep.mubr.f32.mxu0 0.0
        %5505 = vmatmul.mubr.f32.gmra.mrb[0].mxu0 %v5393
        %v5506 = vpop.f32.mrb[0].mxu0
        %v5507 = vadd.f32 %v5433, %v5506
        %v5508 = vpop.f32.mrb[0].mxu0
        %v5509 = vadd.f32 %v5437, %v5508
        %5510 = vdwg.mxu0
        %v5511 = vmul.f32 %v5507, 0.5
        %v5512 = vmul.f32 %v5509, 0.5
        %v5513 = vmul.f32 %v5507, 0.70710677
        %v5514 = vmul.f32 %v5509, 0.70710677
        %vm5515 = vcmp.ge.f32.partialorder %v5513, 0.0
        %vm5516 = vcmp.ge.f32.partialorder %v5514, 0.0
        %v5517 = vsub.f32 0.0, %v5513
        %v5518 = vsub.f32 0.0, %v5514
        %v5519 = vsel %vm5515, %v5513, %v5517
        %v5520 = vsel %vm5516, %v5514, %v5518
        %v5521 = vmul.f32 %v5519, 0.3275911
        %v5522 = vmul.f32 %v5520, 0.3275911
        %v5523 = vadd.f32 %v5521, 1.0
        %v5524 = vadd.f32 %v5522, 1.0
        %v5525 = vrcp.pop %v5523
        %v5526 = vmul.f32 1.0, %v5525
        %v5527 = vrcp.pop %v5524
        %v5528 = vmul.f32 1.0, %v5527
        %v5529 = vmul.f32 %v5526, 1.0614054
        %v5530 = vmul.f32 %v5528, 1.0614054
        %v5531 = vsub.f32 %v5529, 1.4531521
        %v5532 = vsub.f32 %v5530, 1.4531521
        %v5533 = vmul.f32 %v5531, %v5526
        %v5534 = vmul.f32 %v5532, %v5528
        %v5535 = vadd.f32 %v5533, 1.4214138
        %v5536 = vadd.f32 %v5534, 1.4214138
        %v5537 = vmul.f32 %v5535, %v5526
        %v5538 = vmul.f32 %v5536, %v5528
        %v5539 = vsub.f32 %v5537, 0.28449672
        %v5540 = vsub.f32 %v5538, 0.28449672
        %v5541 = vmul.f32 %v5539, %v5526
        %v5542 = vmul.f32 %v5540, %v5528
        %v5543 = vadd.f32 %v5541, 0.2548296
        %v5544 = vadd.f32 %v5542, 0.2548296
        %v5545 = vmul.f32 %v5543, %v5526
        %v5546 = vmul.f32 %v5544, %v5528
        %v5547 = vsub.f32 0.0, %v5519
        %v5548 = vsub.f32 0.0, %v5520
        %v5549 = vmul.f32 %v5547, %v5519
        %v5550 = vmul.f32 %v5548, %v5520
        %v5551 = vmul.f32 %v5549, 1.442695
        %v5552 = vpow.pop %v5551
        %v5553 = vmul.f32 %v5550, 1.442695
        %v5554 = vpow.pop %v5553
        %v5555 = vmul.f32 %v5545, %v5552
        %v5556 = vmul.f32 %v5546, %v5554
        %v5557 = vsub.f32 1.0, %v5555
        %v5558 = vsub.f32 1.0, %v5556
        %v5559 = vsub.f32 0.0, %v5557
        %v5560 = vsub.f32 0.0, %v5558
        %v5561 = vsel %vm5515, %v5557, %v5559
        %v5562 = vsel %vm5516, %v5558, %v5560
        %v5563 = vadd.f32 %v5561, 1.0
        %v5564 = vadd.f32 %v5562, 1.0
        %v5565 = vmul.f32 %v5511, %v5563
        %v5566 = vmul.f32 %v5512, %v5564
        %s5567 = scalar_lea.vmem %s17, 256
        %v5568 = vld [vmem:[%s5567] sm:$0xff]
        %v5569 = vld [vmem:[%s5567 + $0x8] sm:$0xff]
        %v5570 = vld [vmem:[%s5567 + $0x10] sm:$0xff]
        %v5571 = vld [vmem:[%s5567 + $0x18] sm:$0xff]
        %v5572 = vld [vmem:[%s5567 + $0x20] sm:$0xff]
        %v5573 = vld [vmem:[%s5567 + $0x28] sm:$0xff]
        %v5574 = vld [vmem:[%s5567 + $0x30] sm:$0xff]
        %v5575 = vld [vmem:[%s5567 + $0x38] sm:$0xff]
        %v5576 = vld [vmem:[%s5567 + $0x40] sm:$0xff]
        %v5577 = vld [vmem:[%s5567 + $0x48] sm:$0xff]
        %v5578 = vld [vmem:[%s5567 + $0x50] sm:$0xff]
        %v5579 = vld [vmem:[%s5567 + $0x58] sm:$0xff]
        %v5580 = vld [vmem:[%s5567 + $0x60] sm:$0xff]
        %v5581 = vld [vmem:[%s5567 + $0x68] sm:$0xff]
        %v5582 = vld [vmem:[%s5567 + $0x70] sm:$0xff]
        %v5583 = vld [vmem:[%s5567 + $0x78] sm:$0xff]
        %v5584 = vld [vmem:[%s5567 + $0x80] sm:$0xff]
        %v5585 = vld [vmem:[%s5567 + $0x88] sm:$0xff]
        %v5586 = vld [vmem:[%s5567 + $0x90] sm:$0xff]
        %v5587 = vld [vmem:[%s5567 + $0x98] sm:$0xff]
        %v5588 = vld [vmem:[%s5567 + $0xa0] sm:$0xff]
        %v5589 = vld [vmem:[%s5567 + $0xa8] sm:$0xff]
        %v5590 = vld [vmem:[%s5567 + $0xb0] sm:$0xff]
        %v5591 = vld [vmem:[%s5567 + $0xb8] sm:$0xff]
        %v5592 = vld [vmem:[%s5567 + $0xc0] sm:$0xff]
        %v5593 = vld [vmem:[%s5567 + $0xc8] sm:$0xff]
        %v5594 = vld [vmem:[%s5567 + $0xd0] sm:$0xff]
        %v5595 = vld [vmem:[%s5567 + $0xd8] sm:$0xff]
        %v5596 = vld [vmem:[%s5567 + $0xe0] sm:$0xff]
        %v5597 = vld [vmem:[%s5567 + $0xe8] sm:$0xff]
        %v5598 = vld [vmem:[%s5567 + $0xf0] sm:$0xff]
        %v5599 = vld [vmem:[%s5567 + $0xf8] sm:$0xff]
        %5600 = vmatprep.subr.mxu0 0.0
        %5601 = vmatpush1.msra.mxu0 %v5568
        %5602 = vmatprep.subr.mxu0 0.0
        %5603 = vmatpush1.msra.mxu0 %v5569
        %5604 = vmatprep.subr.mxu0 0.0
        %5605 = vmatpush1.msra.mxu0 %v5570
        %5606 = vmatprep.subr.mxu0 0.0
        %5607 = vmatpush1.msra.mxu0 %v5571
        %5608 = vmatprep.subr.mxu0 0.0
        %5609 = vmatpush1.msra.mxu0 %v5572
        %5610 = vmatprep.subr.mxu0 0.0
        %5611 = vmatpush1.msra.mxu0 %v5573
        %5612 = vmatprep.subr.mxu0 0.0
        %5613 = vmatpush1.msra.mxu0 %v5574
        %5614 = vmatprep.subr.mxu0 0.0
        %5615 = vmatpush1.msra.mxu0 %v5575
        %5616 = vmatprep.subr.mxu0 0.0
        %5617 = vmatpush1.msra.mxu0 %v5576
        %5618 = vmatprep.subr.mxu0 0.0
        %5619 = vmatpush1.msra.mxu0 %v5577
        %5620 = vmatprep.subr.mxu0 0.0
        %5621 = vmatpush1.msra.mxu0 %v5578
        %5622 = vmatprep.subr.mxu0 0.0
        %5623 = vmatpush1.msra.mxu0 %v5579
        %5624 = vmatprep.subr.mxu0 0.0
        %5625 = vmatpush1.msra.mxu0 %v5580
        %5626 = vmatprep.subr.mxu0 0.0
        %5627 = vmatpush1.msra.mxu0 %v5581
        %5628 = vmatprep.subr.mxu0 0.0
        %5629 = vmatpush1.msra.mxu0 %v5582
        %5630 = vmatprep.subr.mxu0 0.0
        %5631 = vmatpush1.msra.mxu0 %v5583
        %5632 = vmatprep.subr.mxu0 0.0
        %5633 = vmatpush1.msra.mxu0 %v5584
        %5634 = vmatprep.subr.mxu0 0.0
        %5635 = vmatpush1.msra.mxu0 %v5585
        %5636 = vmatprep.subr.mxu0 0.0
        %5637 = vmatpush1.msra.mxu0 %v5586
        %5638 = vmatprep.subr.mxu0 0.0
        %5639 = vmatpush1.msra.mxu0 %v5587
        %5640 = vmatprep.subr.mxu0 0.0
        %5641 = vmatpush1.msra.mxu0 %v5588
        %5642 = vmatprep.subr.mxu0 0.0
        %5643 = vmatpush1.msra.mxu0 %v5589
        %5644 = vmatprep.subr.mxu0 0.0
        %5645 = vmatpush1.msra.mxu0 %v5590
        %5646 = vmatprep.subr.mxu0 0.0
        %5647 = vmatpush1.msra.mxu0 %v5591
        %5648 = vmatprep.subr.mxu0 0.0
        %5649 = vmatpush1.msra.mxu0 %v5592
        %5650 = vmatprep.subr.mxu0 0.0
        %5651 = vmatpush1.msra.mxu0 %v5593
        %5652 = vmatprep.subr.mxu0 0.0
        %5653 = vmatpush1.msra.mxu0 %v5594
        %5654 = vmatprep.subr.mxu0 0.0
        %5655 = vmatpush1.msra.mxu0 %v5595
        %5656 = vmatprep.subr.mxu0 0.0
        %5657 = vmatpush1.msra.mxu0 %v5596
        %5658 = vmatprep.subr.mxu0 0.0
        %5659 = vmatpush1.msra.mxu0 %v5597
        %5660 = vmatprep.subr.mxu0 0.0
        %5661 = vmatpush1.msra.mxu0 %v5598
        %5662 = vmatprep.subr.mxu0 0.0
        %5663 = vmatpush1.msra.mxu0 %v5599
        %5664 = vmatprep.mubr.f32.mxu0 %v5566
        %5665 = vmatmul.mubr.f32.gmra.mrb[0].mxu0 %v5565
        %v5666 = vpop.f32.mrb[0].mxu0
        %v5667 = vadd.f32 0.0, %v5666
        %v5668 = vpop.f32.mrb[0].mxu0
        %5669 = vdwg.mxu0
        %v5670 = vadd.f32 %v5362, %v5667
        %s5671 = scalar_lea.vmem %s18, 1
        %v5672 = vld [vmem:[%s5671] sm:$0x1]
        %v5674 = vlaneseq
        %v5675 = vshrl.u32 %v5674, 7
        %v5676 = vsub.s32 0, %v5675
        %v5677 = vrot.slane %v5672, %v5676
        %v5679 = vadd.f32 %v5670, %v5677
        %v5680 = vld [vmem:[%s19] sm:$0x1]
        %v5681 = vld [vmem:[%s20] sm:$0x1]
        %vm5682 = vcmask 1040384
        %v5683 = vsel %vm5682, %v5679, 0.0
        %5684 = vadd.xlane.f32.xlu0 %v5683
        %v5685 = vpop.xlane.xlu0 %5684
        %v5686 = vmul.f32 %v5685, %v761
        %v5687 = vsub.f32 %v5679, %v5686
        %v5688 = vmul.f32 %v5687, %v5687
        %v5689 = vsel %vm5682, %v5688, 0.0
        %5690 = vadd.xlane.f32.xlu0 %v5689
        %v5691 = vpop.xlane.xlu0 %5690
        %v5692 = vmul.f32 %v5691, %v761
        %v5693 = vadd.f32 %v5692, 1e-06
        %v5694 = vrsqrt.pop %v5693
        %v5695 = vmul.f32 %v5687, %v5694
        %v5696 = vmul.f32 %v5695, %v5680
        %v5697 = vadd.f32 %v5696, %v5681
        %5698 = vst [vmem:[%s648] sm:$0x1] %v5697
        %s5699 = sand.u32 %s489, 1
        %s5700 = scalar_lea.sflag [#allocation3], %s5699
        %s5701 = sand.u32 %s489, 1
        %s5702 = scalar_lea.vmem [#allocation2], %s5701
        // Predicated region
        $region105: #{tpu_custom_call.1} parent=103 // pred_check
          %p5703 = pneg %p499
        $region106: #{tpu_custom_call.1} parent=103 // pred_check_branch
          %5705 = sbr.rel (%p5703) target = $region108
        $region107: #{tpu_custom_call.1} parent=103 // pred_region
          %s5707 = ssub.s32 16, 16
          %5708 = vsyncadd %s5700, %s5707
          %s5709 = smul.addr %s35, 16
          %s5710 = scalar_lea.hbm %s21, %s5709
          %s5712 = sshll.u32 %s5702, 4
          %s5713 = int_to_ptr.vmem [resolvable:$true] %s5712
          %5715 = dma.vmem_to_hbm [thread:$0]  %s5713, 16, %s5710, %s5700
        $region108: #{tpu_custom_call.1} parent=103 // pred_fallthru
          _
      $region104: #{tpu_custom_call.1} parent=5 // pred_fallthru
        _
      %p5716 = scmp.le.s32.totalorder 2, %s30
      // Predicated region
      $region109: #{tpu_custom_call.1} parent=5 // pred_check
        %p5717 = pneg %p5716
      $region110: #{tpu_custom_call.1} parent=5 // pred_check_branch
        %5719 = sbr.rel (%p5717) target = $region112
      $region111: #{tpu_custom_call.1} parent=5 // pred_region
        %s5720 = ssub.s32 %s30, 2
        // Predicated region
        $region113: #{tpu_custom_call.1} parent=111 // pred_check
          %p5721 = pneg %p505
        $region114: #{tpu_custom_call.1} parent=111 // pred_check_branch
          %5723 = sbr.rel (%p5721) target = $region116
        $region115: #{tpu_custom_call.1} parent=111 // pred_region
          %s5724 = sand.u32 %s490, 1
          %s5725 = scalar_lea.sflag [#allocation3], %s5724
          %s5726 = sand.u32 %s490, 1
          %s5727 = scalar_lea.vmem [#allocation2], %s5726
          %5728 = dma.done %s5725, 16
        $region116: #{tpu_custom_call.1} parent=111 // pred_fallthru
          _
      $region112: #{tpu_custom_call.1} parent=5 // pred_fallthru
        _
    $region6: #{tpu_custom_call.1} parent=1 // loop_footer
      %s34 = sadd.s32 1, %s30
    $region7: #{tpu_custom_call.1} parent=1 // loop_footer_branch
      %29 = sbr.rel target = $region3
    $region8: #{tpu_custom_call.1} parent=1 // loop_exit
      _
    %5729 = vsyncpa [#allocation3], 1
    %s5730 = scalar_lea.sflag [#allocation3], 1
    %5731 = vsyncpa %s5730, 1

</llo_original>
